<compile_context>
chip_gen: v5e
topology: v5e:2x2
jax: 0.10.0
libtpu: 0.0.40
codegen_flags: <defaults>
</compile_context>

<pallas_src>
import functools
import math

import jax
import jax.numpy as jnp
from jax.experimental import pallas as pl
from jax.experimental.pallas import tpu as pltpu


# ---------------------------------------------------------------------------
# Positional encoding (deterministic stand-in for get_or_generate_encoding)
# ---------------------------------------------------------------------------
def get_or_generate_encoding(d_model, board_size=8):
    n = board_size * board_size
    pos = jnp.arange(n, dtype=jnp.float32)[:, None]
    div = jnp.exp(jnp.arange(0, d_model, 2, dtype=jnp.float32)
                  * (-math.log(10000.0) / d_model))
    pe = jnp.zeros((n, d_model), dtype=jnp.float32)
    pe = pe.at[:, 0::2].set(jnp.sin(pos * div))
    pe = pe.at[:, 1::2].set(jnp.cos(pos * div))
    return pe


# ---------------------------------------------------------------------------
# Pallas kernel: whole (folded) batch in one grid step, everything in VMEM.
# ---------------------------------------------------------------------------
def chess_transformer_kernel(x_ref, pos_ref, w_emb_ref, b_emb_ref, mask_ref,
                             wq_ref, bq_ref, wk_ref, bk_ref, wv_ref, bv_ref,
                             wo_ref, bo_ref,
                             ln1_g_ref, ln1_b_ref, ln2_g_ref, ln2_b_ref,
                             w1_ref, b1_ref, w2_ref, b2_ref,
                             wc_ref, bc_ref, pool_ref,
                             out_ref,
                             *, num_layers, num_heads, batch_tile, seq_len):
    f32, bf16 = jnp.float32, jnp.bfloat16
    S, Bt, nh = seq_len, batch_tile, num_heads

    # ---- embedding + positional encoding on the folded (M, H) slab ----
    h = jnp.dot(x_ref[...], w_emb_ref[...], preferred_element_type=f32)
    h = h + b_emb_ref[...] + pos_ref[...]                    # (M, H) f32

    M, H = h.shape
    hd = H // nh
    scale = 1.0 / math.sqrt(hd)
    mask = mask_ref[...]                                     # (nh, 1, H) f32

    def layer_norm(x, g, b, eps=1e-5):
        mu = jnp.mean(x, axis=-1, keepdims=True)
        xc = x - mu
        var = jnp.mean(xc * xc, axis=-1, keepdims=True)
        return xc * jax.lax.rsqrt(var + eps) * g + b

    for l in range(num_layers):
        # ---- self-attention: Q/K/V projections on the full (M, H) slab ----
        hb = h.astype(bf16)
        q = (jnp.dot(hb, wq_ref[l], preferred_element_type=f32)
             + bq_ref[l]) * scale                            # scale folded into Q
        k = jnp.dot(hb, wk_ref[l], preferred_element_type=f32) + bk_ref[l]
        v = jnp.dot(hb, wv_ref[l], preferred_element_type=f32) + bv_ref[l]

        ctx_parts = []
        for b in range(Bt):                                  # tiny static loop
            r0 = b * S
            qb = q[r0:r0 + S]                                # (S, H) sublane slice
            kb = k[r0:r0 + S]
            vb = v[r0:r0 + S]
            # All heads at once: zero Q columns outside each head, contract
            # over the full H — equals the per-head hd-wide contraction.
            qm = (jnp.broadcast_to(qb[None], (nh, S, H)) * mask).astype(bf16)
            kg = jnp.broadcast_to(kb[None], (nh, S, H)).astype(bf16)
            vg = jnp.broadcast_to(vb[None], (nh, S, H)).astype(bf16)
            s = jnp.einsum('nqd,nkd->nqk', qm, kg,
                           preferred_element_type=f32)       # (nh, S, S)
            s = s - jnp.max(s, axis=-1, keepdims=True)
            e = jnp.exp(s)
            p = e * pl.reciprocal(jnp.sum(e, axis=-1, keepdims=True), approx=True)
            cf = jnp.einsum('nqk,nkd->nqd', p.astype(bf16), vg,
                            preferred_element_type=f32)      # (nh, S, H)
            # head-select the correct hd-wide column group from each head
            ctx_parts.append(jnp.sum(cf * mask, axis=0))     # (S, H)
        ctx = ctx_parts[0] if Bt == 1 else jnp.concatenate(ctx_parts, axis=0)

        attn = jnp.dot(ctx.astype(bf16), wo_ref[l],
                       preferred_element_type=f32) + bo_ref[l]
        # post-LN residual (PyTorch default norm_first=False)
        h = layer_norm(h + attn, ln1_g_ref[l], ln1_b_ref[l])

        # ---- feed forward (ReLU) ----
        f = jnp.dot(h.astype(bf16), w1_ref[l], preferred_element_type=f32) + b1_ref[l]
        f = jnp.maximum(f, 0.0)
        f = jnp.dot(f.astype(bf16), w2_ref[l], preferred_element_type=f32) + b2_ref[l]
        h = layer_norm(h + f, ln2_g_ref[l], ln2_b_ref[l])

    # ---- mean pool over the sequence (as a matmul) + classifier ----
    pooled = jnp.dot(pool_ref[...], h.astype(bf16), preferred_element_type=f32)
    logits = jnp.dot(pooled.astype(bf16), wc_ref[...],
                     preferred_element_type=f32) + bc_ref[...]   # (Bt, C)
    out_ref[...] = logits


# ---------------------------------------------------------------------------
# Wrapper
# ---------------------------------------------------------------------------
def minimal_chess_transformer(board, params, *, num_layers, num_heads):
    B, S, D_in = board.shape
    H = params['w_emb'].shape[1]
    FF = params['w1'].shape[2]
    C = params['wc'].shape[1]
    nh = num_heads
    hd = H // nh

    Bt = B                       # fold the whole batch into one grid step
    M = Bt * S
    n_tiles = pl.cdiv(B, Bt)     # == 1 here

    f32, bf16 = jnp.float32, jnp.bfloat16

    # Wrapper-side layout plumbing (plain XLA ops, free relative to the kernel).
    x2d = board.reshape(B * S, D_in).astype(bf16)
    pos_t = jnp.tile(params['pos'], (Bt, 1)).astype(f32)              # (M, H)

    wqkv, bqkv = params['wqkv'], params['bqkv']
    wq, wk, wv = wqkv[:, :, :H], wqkv[:, :, H:2 * H], wqkv[:, :, 2 * H:]
    bq, bk, bv = bqkv[:, :, :H], bqkv[:, :, H:2 * H], bqkv[:, :, 2 * H:]

    head_mask = (jnp.arange(H)[None, None, :] // hd
                 == jnp.arange(nh)[:, None, None]).astype(f32)        # (nh, 1, H)
    pool = ((jnp.arange(M)[None, :] // S
             == jnp.arange(Bt)[:, None]).astype(f32) / S).astype(bf16)  # (Bt, M)

    args = [x2d, pos_t,
            params['w_emb'].astype(bf16), params['b_emb'],
            head_mask,
            wq.astype(bf16), bq, wk.astype(bf16), bk, wv.astype(bf16), bv,
            params['wo'].astype(bf16), params['bo'],
            params['ln1_g'], params['ln1_b'], params['ln2_g'], params['ln2_b'],
            params['w1'].astype(bf16), params['b1'],
            params['w2'].astype(bf16), params['b2'],
            params['wc'].astype(bf16), params['bc'],
            pool]

    def full_spec(a):
        nd = a.ndim
        return pl.BlockSpec(a.shape, lambda i, _nd=nd: (0,) * _nd)

    in_specs = [pl.BlockSpec((M, D_in), lambda i: (i, 0))]
    in_specs += [full_spec(a) for a in args[1:]]

    # Rough cost hint for XLA's scheduler.
    layer_flops = (2 * M * H * 3 * H                # Q/K/V projections
                   + Bt * nh * 2 * 2 * S * S * H    # scores + context (masked full-H)
                   + 2 * M * H * H                  # output projection
                   + 2 * 2 * M * H * FF)            # FFN
    flops = (2 * M * D_in * H + num_layers * layer_flops
             + 2 * Bt * M * H + 2 * Bt * H * C)
    transcendentals = num_layers * Bt * nh * S * S
    bytes_accessed = int(sum(int(a.size) * a.dtype.itemsize for a in args)
                         + B * C * 4)

    kernel = functools.partial(chess_transformer_kernel,
                               num_layers=num_layers, num_heads=num_heads,
                               batch_tile=Bt, seq_len=S)

    out = pl.pallas_call(
        kernel,
        out_shape=jax.ShapeDtypeStruct((B, C), f32),
        grid_spec=pltpu.PrefetchScalarGridSpec(
            num_scalar_prefetch=0,
            grid=(n_tiles,),
            in_specs=in_specs,
            out_specs=pl.BlockSpec((Bt, C), lambda i: (i, 0)),
        ),
        compiler_params=pltpu.CompilerParams(
            dimension_semantics=("parallel",)),
        cost_estimate=pl.CostEstimate(flops=int(flops),
                                      transcendentals=int(transcendentals),
                                      bytes_accessed=bytes_accessed),
    )(*args)
    return out


# ---------------------------------------------------------------------------
# Pure-JAX reference (f32, for correctness check)
# ---------------------------------------------------------------------------
def reference_forward(board, params, *, num_layers, num_heads):
    def ln(x, g, b, eps=1e-5):
        mu = jnp.mean(x, axis=-1, keepdims=True)
        var = jnp.mean((x - mu) ** 2, axis=-1, keepdims=True)
        return (x - mu) * jax.lax.rsqrt(var + eps) * g + b

    h = board @ params['w_emb'] + params['b_emb']
    h = h + params['pos'][None]
    B, S, H = h.shape
    hd = H // num_heads
    scale = 1.0 / math.sqrt(hd)
    for l in range(num_layers):
        qkv = h @ params['wqkv'][l] + params['bqkv'][l]
        q, k, v = qkv[..., :H], qkv[..., H:2 * H], qkv[..., 2 * H:]
        q = q.reshape(B, S, num_heads, hd)
        k = k.reshape(B, S, num_heads, hd)
        v = v.reshape(B, S, num_heads, hd)
        s = jnp.einsum('bqnd,bknd->bnqk', q, k) * scale
        p = jax.nn.softmax(s, axis=-1)
        ctx = jnp.einsum('bnqk,bknd->bqnd', p, v).reshape(B, S, H)
        attn_out = ctx @ params['wo'][l] + params['bo'][l]
        h = ln(h + attn_out, params['ln1_g'][l], params['ln1_b'][l])
        f = jnp.maximum(h @ params['w1'][l] + params['b1'][l], 0.0)
        f = f @ params['w2'][l] + params['b2'][l]
        h = ln(h + f, params['ln2_g'][l], params['ln2_b'][l])
    pooled = jnp.mean(h, axis=1)
    return pooled @ params['wc'] + params['bc']


# ---------------------------------------------------------------------------
# Deterministic parameter init (synthetic; shapes follow the module __init__)
# ---------------------------------------------------------------------------
def init_params(key, *, input_dim, hidden_dim, num_layers, num_classes):
    ff = hidden_dim * 4
    ks = jax.random.split(key, 8)
    sc = 0.1
    p = {
        'pos':   get_or_generate_encoding(hidden_dim, board_size=8),
        'w_emb': sc * jax.random.normal(ks[0], (input_dim, hidden_dim), jnp.float32),
        'b_emb': jnp.zeros((1, hidden_dim), jnp.float32),
        'wqkv':  sc * jax.random.normal(ks[1], (num_layers, hidden_dim, 3 * hidden_dim), jnp.float32),
        'bqkv':  jnp.zeros((num_layers, 1, 3 * hidden_dim), jnp.float32),
        'wo':    sc * jax.random.normal(ks[2], (num_layers, hidden_dim, hidden_dim), jnp.float32),
        'bo':    jnp.zeros((num_layers, 1, hidden_dim), jnp.float32),
        'ln1_g': jnp.ones((num_layers, 1, hidden_dim), jnp.float32),
        'ln1_b': jnp.zeros((num_layers, 1, hidden_dim), jnp.float32),
        'ln2_g': jnp.ones((num_layers, 1, hidden_dim), jnp.float32),
        'ln2_b': jnp.zeros((num_layers, 1, hidden_dim), jnp.float32),
        'w1':    sc * jax.random.normal(ks[3], (num_layers, hidden_dim, ff), jnp.float32),
        'b1':    jnp.zeros((num_layers, 1, ff), jnp.float32),
        'w2':    sc * jax.random.normal(ks[4], (num_layers, ff, hidden_dim), jnp.float32),
        'b2':    jnp.zeros((num_layers, 1, hidden_dim), jnp.float32),
        'wc':    sc * jax.random.normal(ks[5], (hidden_dim, num_classes), jnp.float32),
        'bc':    jnp.zeros((1, num_classes), jnp.float32),
    }
    return p


if __name__ == "__main__":
    # Small config consistent with the module (board = 8x8 = 64 tokens).
    B, S, INPUT_DIM = 2, 64, 13
    HIDDEN, LAYERS, HEADS, CLASSES = 32, 2, 4, 256

    key = jax.random.PRNGKey(0)
    k_board, k_params = jax.random.split(key)
    board = jax.random.normal(k_board, (B, S, INPUT_DIM), jnp.float32)
    params = init_params(k_params, input_dim=INPUT_DIM, hidden_dim=HIDDEN,
                         num_layers=LAYERS, num_classes=CLASSES)

    logits = minimal_chess_transformer(board, params,
                                       num_layers=LAYERS, num_heads=HEADS)
    logits = jax.block_until_ready(logits)
    assert logits.shape == (B, CLASSES)

    ref = reference_forward(board, params, num_layers=LAYERS, num_heads=HEADS)
    ref = jax.block_until_ready(ref)
    max_err = float(jnp.max(jnp.abs(logits - ref)))
    assert max_err < 5e-2, f"mismatch vs reference: {max_err}"

    # TODO(synk): training-mode dropout of nn.TransformerEncoderLayer is not
    # implemented (eval-mode semantics only).
    print("KERNEL_OK")
</pallas_src>

<mosaic_0001>
module attributes {stable_mosaic.version = 11 : i64} {
  func.func @chess_transformer_kernel(%arg0: i32, %arg1: memref<128x13xbf16, #tpu.memory_space<vmem>>, %arg2: memref<128x32xf32, #tpu.memory_space<vmem>>, %arg3: memref<13x32xbf16, #tpu.memory_space<vmem>>, %arg4: memref<1x32xf32, #tpu.memory_space<vmem>>, %arg5: memref<4x1x32xf32, #tpu.memory_space<vmem>>, %arg6: memref<2x32x32xbf16, #tpu.memory_space<vmem>>, %arg7: memref<2x1x32xf32, #tpu.memory_space<vmem>>, %arg8: memref<2x32x32xbf16, #tpu.memory_space<vmem>>, %arg9: memref<2x1x32xf32, #tpu.memory_space<vmem>>, %arg10: memref<2x32x32xbf16, #tpu.memory_space<vmem>>, %arg11: memref<2x1x32xf32, #tpu.memory_space<vmem>>, %arg12: memref<2x32x32xbf16, #tpu.memory_space<vmem>>, %arg13: memref<2x1x32xf32, #tpu.memory_space<vmem>>, %arg14: memref<2x1x32xf32, #tpu.memory_space<vmem>>, %arg15: memref<2x1x32xf32, #tpu.memory_space<vmem>>, %arg16: memref<2x1x32xf32, #tpu.memory_space<vmem>>, %arg17: memref<2x1x32xf32, #tpu.memory_space<vmem>>, %arg18: memref<2x32x128xbf16, #tpu.memory_space<vmem>>, %arg19: memref<2x1x128xf32, #tpu.memory_space<vmem>>, %arg20: memref<2x128x32xbf16, #tpu.memory_space<vmem>>, %arg21: memref<2x1x32xf32, #tpu.memory_space<vmem>>, %arg22: memref<32x256xbf16, #tpu.memory_space<vmem>>, %arg23: memref<1x256xf32, #tpu.memory_space<vmem>>, %arg24: memref<2x128xbf16, #tpu.memory_space<vmem>>, %arg25: memref<2x256xf32, #tpu.memory_space<vmem>>) attributes {dimension_semantics = [#tpu.dimension_semantics<parallel>], iteration_bounds = array<i64: 1>, scalar_prefetch = 0 : i64, scratch_operands = 0 : i64, tpu.core_type = #tpu.core_type<tc>, window_params = [{transform_indices = @transform_0, window_bounds = array<i64: 128, 13>}, {pipeline_mode = #tpu.pipeline_mode<synchronous>, transform_indices = @transform_1, window_bounds = array<i64: 128, 32>}, {pipeline_mode = #tpu.pipeline_mode<synchronous>, transform_indices = @transform_2, window_bounds = array<i64: 13, 32>}, {pipeline_mode = #tpu.pipeline_mode<synchronous>, transform_indices = @transform_3, window_bounds = array<i64: 1, 32>}, {pipeline_mode = #tpu.pipeline_mode<synchronous>, transform_indices = @transform_4, window_bounds = array<i64: 4, 1, 32>}, {pipeline_mode = #tpu.pipeline_mode<synchronous>, transform_indices = @transform_5, window_bounds = array<i64: 2, 32, 32>}, {pipeline_mode = #tpu.pipeline_mode<synchronous>, transform_indices = @transform_6, window_bounds = array<i64: 2, 1, 32>}, {pipeline_mode = #tpu.pipeline_mode<synchronous>, transform_indices = @transform_7, window_bounds = array<i64: 2, 32, 32>}, {pipeline_mode = #tpu.pipeline_mode<synchronous>, transform_indices = @transform_8, window_bounds = array<i64: 2, 1, 32>}, {pipeline_mode = #tpu.pipeline_mode<synchronous>, transform_indices = @transform_9, window_bounds = array<i64: 2, 32, 32>}, {pipeline_mode = #tpu.pipeline_mode<synchronous>, transform_indices = @transform_10, window_bounds = array<i64: 2, 1, 32>}, {pipeline_mode = #tpu.pipeline_mode<synchronous>, transform_indices = @transform_11, window_bounds = array<i64: 2, 32, 32>}, {pipeline_mode = #tpu.pipeline_mode<synchronous>, transform_indices = @transform_12, window_bounds = array<i64: 2, 1, 32>}, {pipeline_mode = #tpu.pipeline_mode<synchronous>, transform_indices = @transform_13, window_bounds = array<i64: 2, 1, 32>}, {pipeline_mode = #tpu.pipeline_mode<synchronous>, transform_indices = @transform_14, window_bounds = array<i64: 2, 1, 32>}, {pipeline_mode = #tpu.pipeline_mode<synchronous>, transform_indices = @transform_15, window_bounds = array<i64: 2, 1, 32>}, {pipeline_mode = #tpu.pipeline_mode<synchronous>, transform_indices = @transform_16, window_bounds = array<i64: 2, 1, 32>}, {pipeline_mode = #tpu.pipeline_mode<synchronous>, transform_indices = @transform_17, window_bounds = array<i64: 2, 32, 128>}, {pipeline_mode = #tpu.pipeline_mode<synchronous>, transform_indices = @transform_18, window_bounds = array<i64: 2, 1, 128>}, {pipeline_mode = #tpu.pipeline_mode<synchronous>, transform_indices = @transform_19, window_bounds = array<i64: 2, 128, 32>}, {pipeline_mode = #tpu.pipeline_mode<synchronous>, transform_indices = @transform_20, window_bounds = array<i64: 2, 1, 32>}, {pipeline_mode = #tpu.pipeline_mode<synchronous>, transform_indices = @transform_21, window_bounds = array<i64: 32, 256>}, {pipeline_mode = #tpu.pipeline_mode<synchronous>, transform_indices = @transform_22, window_bounds = array<i64: 1, 256>}, {pipeline_mode = #tpu.pipeline_mode<synchronous>, transform_indices = @transform_23, window_bounds = array<i64: 2, 128>}, {transform_indices = @transform_24, window_bounds = array<i64: 2, 256>}]} {
    %c0 = arith.constant 0 : index
    %c0_0 = arith.constant 0 : index
    %0 = vector.load %arg1[%c0, %c0_0] : memref<128x13xbf16, #tpu.memory_space<vmem>>, vector<128x13xbf16>
    %c0_1 = arith.constant 0 : index
    %c0_2 = arith.constant 0 : index
    %1 = vector.load %arg3[%c0_1, %c0_2] : memref<13x32xbf16, #tpu.memory_space<vmem>>, vector<13x32xbf16>
    %cst = arith.constant dense<0.000000e+00> : vector<128x32xf32>
    %2 = tpu.matmul %0, %1, %cst {dimension_numbers = #tpu.dot_dimension_numbers<[1], [0], [0], [1], [0, 0, 1, 1], [], []>} : vector<128x13xbf16>, vector<13x32xbf16>, vector<128x32xf32> -> vector<128x32xf32>
    %c0_3 = arith.constant 0 : index
    %c0_4 = arith.constant 0 : index
    %3 = vector.load %arg4[%c0_3, %c0_4] : memref<1x32xf32, #tpu.memory_space<vmem>>, vector<1x32xf32>
    %4 = vector.broadcast %3 : vector<1x32xf32> to vector<128x32xf32>
    %5 = arith.addf %2, %4 : vector<128x32xf32>
    %c0_5 = arith.constant 0 : index
    %c0_6 = arith.constant 0 : index
    %6 = vector.load %arg2[%c0_5, %c0_6] : memref<128x32xf32, #tpu.memory_space<vmem>>, vector<128x32xf32>
    %7 = arith.addf %5, %6 : vector<128x32xf32>
    %c0_7 = arith.constant 0 : index
    %c0_8 = arith.constant 0 : index
    %c0_9 = arith.constant 0 : index
    %8 = vector.load %arg5[%c0_7, %c0_8, %c0_9] : memref<4x1x32xf32, #tpu.memory_space<vmem>>, vector<4x1x32xf32>
    %9 = arith.truncf %7 : vector<128x32xf32> to vector<128x32xbf16>
    %c0_10 = arith.constant 0 : index
    %c0_11 = arith.constant 0 : index
    %c0_12 = arith.constant 0 : index
    %10 = vector.load %arg6[%c0_10, %c0_11, %c0_12] : memref<2x32x32xbf16, #tpu.memory_space<vmem>>, vector<1x32x32xbf16>
    %11 = vector.shape_cast %10 : vector<1x32x32xbf16> to vector<32x32xbf16>
    %cst_13 = arith.constant dense<0.000000e+00> : vector<128x32xf32>
    %12 = tpu.matmul %9, %11, %cst_13 {dimension_numbers = #tpu.dot_dimension_numbers<[1], [0], [0], [1], [0, 0, 1, 1], [], []>} : vector<128x32xbf16>, vector<32x32xbf16>, vector<128x32xf32> -> vector<128x32xf32>
    %c0_14 = arith.constant 0 : index
    %c0_15 = arith.constant 0 : index
    %c0_16 = arith.constant 0 : index
    %13 = vector.load %arg7[%c0_14, %c0_15, %c0_16] : memref<2x1x32xf32, #tpu.memory_space<vmem>>, vector<1x1x32xf32>
    %14 = vector.shape_cast %13 : vector<1x1x32xf32> to vector<1x32xf32>
    %15 = vector.broadcast %14 : vector<1x32xf32> to vector<128x32xf32>
    %16 = arith.addf %12, %15 : vector<128x32xf32>
    %cst_17 = arith.constant 0.353553385 : f32
    %17 = vector.broadcast %cst_17 : f32 to vector<128x32xf32>
    %18 = arith.mulf %16, %17 : vector<128x32xf32>
    %c0_18 = arith.constant 0 : index
    %c0_19 = arith.constant 0 : index
    %c0_20 = arith.constant 0 : index
    %19 = vector.load %arg8[%c0_18, %c0_19, %c0_20] : memref<2x32x32xbf16, #tpu.memory_space<vmem>>, vector<1x32x32xbf16>
    %20 = vector.shape_cast %19 : vector<1x32x32xbf16> to vector<32x32xbf16>
    %cst_21 = arith.constant dense<0.000000e+00> : vector<128x32xf32>
    %21 = tpu.matmul %9, %20, %cst_21 {dimension_numbers = #tpu.dot_dimension_numbers<[1], [0], [0], [1], [0, 0, 1, 1], [], []>} : vector<128x32xbf16>, vector<32x32xbf16>, vector<128x32xf32> -> vector<128x32xf32>
    %c0_22 = arith.constant 0 : index
    %c0_23 = arith.constant 0 : index
    %c0_24 = arith.constant 0 : index
    %22 = vector.load %arg9[%c0_22, %c0_23, %c0_24] : memref<2x1x32xf32, #tpu.memory_space<vmem>>, vector<1x1x32xf32>
    %23 = vector.shape_cast %22 : vector<1x1x32xf32> to vector<1x32xf32>
    %24 = vector.broadcast %23 : vector<1x32xf32> to vector<128x32xf32>
    %25 = arith.addf %21, %24 : vector<128x32xf32>
    %c0_25 = arith.constant 0 : index
    %c0_26 = arith.constant 0 : index
    %c0_27 = arith.constant 0 : index
    %26 = vector.load %arg10[%c0_25, %c0_26, %c0_27] : memref<2x32x32xbf16, #tpu.memory_space<vmem>>, vector<1x32x32xbf16>
    %27 = vector.shape_cast %26 : vector<1x32x32xbf16> to vector<32x32xbf16>
    %cst_28 = arith.constant dense<0.000000e+00> : vector<128x32xf32>
    %28 = tpu.matmul %9, %27, %cst_28 {dimension_numbers = #tpu.dot_dimension_numbers<[1], [0], [0], [1], [0, 0, 1, 1], [], []>} : vector<128x32xbf16>, vector<32x32xbf16>, vector<128x32xf32> -> vector<128x32xf32>
    %c0_29 = arith.constant 0 : index
    %c0_30 = arith.constant 0 : index
    %c0_31 = arith.constant 0 : index
    %29 = vector.load %arg11[%c0_29, %c0_30, %c0_31] : memref<2x1x32xf32, #tpu.memory_space<vmem>>, vector<1x1x32xf32>
    %30 = vector.shape_cast %29 : vector<1x1x32xf32> to vector<1x32xf32>
    %31 = vector.broadcast %30 : vector<1x32xf32> to vector<128x32xf32>
    %32 = arith.addf %28, %31 : vector<128x32xf32>
    %33 = vector.extract_strided_slice %18 {offsets = [0, 0], sizes = [64, 32], strides = [1, 1]} : vector<128x32xf32> to vector<64x32xf32>
    %34 = vector.extract_strided_slice %25 {offsets = [0, 0], sizes = [64, 32], strides = [1, 1]} : vector<128x32xf32> to vector<64x32xf32>
    %35 = vector.extract_strided_slice %32 {offsets = [0, 0], sizes = [64, 32], strides = [1, 1]} : vector<128x32xf32> to vector<64x32xf32>
    %36 = vector.shape_cast %33 : vector<64x32xf32> to vector<1x64x32xf32>
    %37 = vector.shape_cast %36 : vector<1x64x32xf32> to vector<1x64x32xf32>
    %38 = vector.broadcast %37 : vector<1x64x32xf32> to vector<4x64x32xf32>
    %39 = vector.broadcast %8 : vector<4x1x32xf32> to vector<4x64x32xf32>
    %40 = arith.mulf %38, %39 : vector<4x64x32xf32>
    %41 = arith.truncf %40 : vector<4x64x32xf32> to vector<4x64x32xbf16>
    %42 = vector.shape_cast %34 : vector<64x32xf32> to vector<1x64x32xf32>
    %43 = vector.shape_cast %42 : vector<1x64x32xf32> to vector<1x64x32xf32>
    %44 = vector.broadcast %43 : vector<1x64x32xf32> to vector<4x64x32xf32>
    %45 = arith.truncf %44 : vector<4x64x32xf32> to vector<4x64x32xbf16>
    %46 = vector.shape_cast %35 : vector<64x32xf32> to vector<1x64x32xf32>
    %47 = vector.shape_cast %46 : vector<1x64x32xf32> to vector<1x64x32xf32>
    %48 = vector.broadcast %47 : vector<1x64x32xf32> to vector<4x64x32xf32>
    %49 = arith.truncf %48 : vector<4x64x32xf32> to vector<4x64x32xbf16>
    "tpu.trace_start"() <{level = 10 : i32, message = "nqd,nkd->nqk"}> : () -> ()
    %cst_32 = arith.constant dense<0.000000e+00> : vector<4x64x64xf32>
    %50 = tpu.matmul %41, %45, %cst_32 {dimension_numbers = #tpu.dot_dimension_numbers<[2], [2], [1], [1], [0, 0, 0, 1, 1, 1], [0], [0]>} : vector<4x64x32xbf16>, vector<4x64x32xbf16>, vector<4x64x64xf32> -> vector<4x64x64xf32>
    "tpu.trace_stop"() : () -> ()
    %cst_33 = arith.constant dense<0xFF800000> : vector<4x64xf32>
    %51 = vector.multi_reduction <maximumf>, %50, %cst_33 [2] : vector<4x64x64xf32> to vector<4x64xf32>
    %52 = vector.shape_cast %51 : vector<4x64xf32> to vector<4x64x1xf32>
    %53 = vector.broadcast %52 : vector<4x64x1xf32> to vector<4x64x64xf32>
    %54 = arith.subf %50, %53 : vector<4x64x64xf32>
    %55 = math.exp %54 : vector<4x64x64xf32>
    %cst_34 = arith.constant dense<0.000000e+00> : vector<4x64xf32>
    %56 = vector.multi_reduction <add>, %55, %cst_34 [2] : vector<4x64x64xf32> to vector<4x64xf32>
    %57 = vector.shape_cast %56 : vector<4x64xf32> to vector<4x64x1xf32>
    %58 = tpu.reciprocal %57 {approx = true} : vector<4x64x1xf32> -> vector<4x64x1xf32>
    %59 = vector.broadcast %58 : vector<4x64x1xf32> to vector<4x64x64xf32>
    %60 = arith.mulf %55, %59 : vector<4x64x64xf32>
    %61 = arith.truncf %60 : vector<4x64x64xf32> to vector<4x64x64xbf16>
    "tpu.trace_start"() <{level = 10 : i32, message = "nqk,nkd->nqd"}> : () -> ()
    %cst_35 = arith.constant dense<0.000000e+00> : vector<4x64x32xf32>
    %62 = tpu.matmul %61, %49, %cst_35 {dimension_numbers = #tpu.dot_dimension_numbers<[2], [1], [1], [2], [0, 0, 0, 1, 1, 2], [0], [0]>} : vector<4x64x64xbf16>, vector<4x64x32xbf16>, vector<4x64x32xf32> -> vector<4x64x32xf32>
    "tpu.trace_stop"() : () -> ()
    %63 = vector.broadcast %8 : vector<4x1x32xf32> to vector<4x64x32xf32>
    %64 = arith.mulf %62, %63 : vector<4x64x32xf32>
    %cst_36 = arith.constant dense<0.000000e+00> : vector<64x32xf32>
    %65 = vector.multi_reduction <add>, %64, %cst_36 [0] : vector<4x64x32xf32> to vector<64x32xf32>
    %66 = vector.extract_strided_slice %18 {offsets = [64, 0], sizes = [64, 32], strides = [1, 1]} : vector<128x32xf32> to vector<64x32xf32>
    %67 = vector.extract_strided_slice %25 {offsets = [64, 0], sizes = [64, 32], strides = [1, 1]} : vector<128x32xf32> to vector<64x32xf32>
    %68 = vector.extract_strided_slice %32 {offsets = [64, 0], sizes = [64, 32], strides = [1, 1]} : vector<128x32xf32> to vector<64x32xf32>
    %69 = vector.shape_cast %66 : vector<64x32xf32> to vector<1x64x32xf32>
    %70 = vector.shape_cast %69 : vector<1x64x32xf32> to vector<1x64x32xf32>
    %71 = vector.broadcast %70 : vector<1x64x32xf32> to vector<4x64x32xf32>
    %72 = vector.broadcast %8 : vector<4x1x32xf32> to vector<4x64x32xf32>
    %73 = arith.mulf %71, %72 : vector<4x64x32xf32>
    %74 = arith.truncf %73 : vector<4x64x32xf32> to vector<4x64x32xbf16>
    %75 = vector.shape_cast %67 : vector<64x32xf32> to vector<1x64x32xf32>
    %76 = vector.shape_cast %75 : vector<1x64x32xf32> to vector<1x64x32xf32>
    %77 = vector.broadcast %76 : vector<1x64x32xf32> to vector<4x64x32xf32>
    %78 = arith.truncf %77 : vector<4x64x32xf32> to vector<4x64x32xbf16>
    %79 = vector.shape_cast %68 : vector<64x32xf32> to vector<1x64x32xf32>
    %80 = vector.shape_cast %79 : vector<1x64x32xf32> to vector<1x64x32xf32>
    %81 = vector.broadcast %80 : vector<1x64x32xf32> to vector<4x64x32xf32>
    %82 = arith.truncf %81 : vector<4x64x32xf32> to vector<4x64x32xbf16>
    "tpu.trace_start"() <{level = 10 : i32, message = "nqd,nkd->nqk"}> : () -> ()
    %cst_37 = arith.constant dense<0.000000e+00> : vector<4x64x64xf32>
    %83 = tpu.matmul %74, %78, %cst_37 {dimension_numbers = #tpu.dot_dimension_numbers<[2], [2], [1], [1], [0, 0, 0, 1, 1, 1], [0], [0]>} : vector<4x64x32xbf16>, vector<4x64x32xbf16>, vector<4x64x64xf32> -> vector<4x64x64xf32>
    "tpu.trace_stop"() : () -> ()
    %cst_38 = arith.constant dense<0xFF800000> : vector<4x64xf32>
    %84 = vector.multi_reduction <maximumf>, %83, %cst_38 [2] : vector<4x64x64xf32> to vector<4x64xf32>
    %85 = vector.shape_cast %84 : vector<4x64xf32> to vector<4x64x1xf32>
    %86 = vector.broadcast %85 : vector<4x64x1xf32> to vector<4x64x64xf32>
    %87 = arith.subf %83, %86 : vector<4x64x64xf32>
    %88 = math.exp %87 : vector<4x64x64xf32>
    %cst_39 = arith.constant dense<0.000000e+00> : vector<4x64xf32>
    %89 = vector.multi_reduction <add>, %88, %cst_39 [2] : vector<4x64x64xf32> to vector<4x64xf32>
    %90 = vector.shape_cast %89 : vector<4x64xf32> to vector<4x64x1xf32>
    %91 = tpu.reciprocal %90 {approx = true} : vector<4x64x1xf32> -> vector<4x64x1xf32>
    %92 = vector.broadcast %91 : vector<4x64x1xf32> to vector<4x64x64xf32>
    %93 = arith.mulf %88, %92 : vector<4x64x64xf32>
    %94 = arith.truncf %93 : vector<4x64x64xf32> to vector<4x64x64xbf16>
    "tpu.trace_start"() <{level = 10 : i32, message = "nqk,nkd->nqd"}> : () -> ()
    %cst_40 = arith.constant dense<0.000000e+00> : vector<4x64x32xf32>
    %95 = tpu.matmul %94, %82, %cst_40 {dimension_numbers = #tpu.dot_dimension_numbers<[2], [1], [1], [2], [0, 0, 0, 1, 1, 2], [0], [0]>} : vector<4x64x64xbf16>, vector<4x64x32xbf16>, vector<4x64x32xf32> -> vector<4x64x32xf32>
    "tpu.trace_stop"() : () -> ()
    %96 = vector.broadcast %8 : vector<4x1x32xf32> to vector<4x64x32xf32>
    %97 = arith.mulf %95, %96 : vector<4x64x32xf32>
    %cst_41 = arith.constant dense<0.000000e+00> : vector<64x32xf32>
    %98 = vector.multi_reduction <add>, %97, %cst_41 [0] : vector<4x64x32xf32> to vector<64x32xf32>
    %99 = tpu.concatenate %65, %98 in 0 : vector<64x32xf32>, vector<64x32xf32> -> vector<128x32xf32>
    %100 = arith.truncf %99 : vector<128x32xf32> to vector<128x32xbf16>
    %c0_42 = arith.constant 0 : index
    %c0_43 = arith.constant 0 : index
    %c0_44 = arith.constant 0 : index
    %101 = vector.load %arg12[%c0_42, %c0_43, %c0_44] : memref<2x32x32xbf16, #tpu.memory_space<vmem>>, vector<1x32x32xbf16>
    %102 = vector.shape_cast %101 : vector<1x32x32xbf16> to vector<32x32xbf16>
    %cst_45 = arith.constant dense<0.000000e+00> : vector<128x32xf32>
    %103 = tpu.matmul %100, %102, %cst_45 {dimension_numbers = #tpu.dot_dimension_numbers<[1], [0], [0], [1], [0, 0, 1, 1], [], []>} : vector<128x32xbf16>, vector<32x32xbf16>, vector<128x32xf32> -> vector<128x32xf32>
    %c0_46 = arith.constant 0 : index
    %c0_47 = arith.constant 0 : index
    %c0_48 = arith.constant 0 : index
    %104 = vector.load %arg13[%c0_46, %c0_47, %c0_48] : memref<2x1x32xf32, #tpu.memory_space<vmem>>, vector<1x1x32xf32>
    %105 = vector.shape_cast %104 : vector<1x1x32xf32> to vector<1x32xf32>
    %106 = vector.broadcast %105 : vector<1x32xf32> to vector<128x32xf32>
    %107 = arith.addf %103, %106 : vector<128x32xf32>
    %108 = arith.addf %7, %107 : vector<128x32xf32>
    %c0_49 = arith.constant 0 : index
    %c0_50 = arith.constant 0 : index
    %c0_51 = arith.constant 0 : index
    %109 = vector.load %arg14[%c0_49, %c0_50, %c0_51] : memref<2x1x32xf32, #tpu.memory_space<vmem>>, vector<1x1x32xf32>
    %110 = vector.shape_cast %109 : vector<1x1x32xf32> to vector<1x32xf32>
    %c0_52 = arith.constant 0 : index
    %c0_53 = arith.constant 0 : index
    %c0_54 = arith.constant 0 : index
    %111 = vector.load %arg15[%c0_52, %c0_53, %c0_54] : memref<2x1x32xf32, #tpu.memory_space<vmem>>, vector<1x1x32xf32>
    %112 = vector.shape_cast %111 : vector<1x1x32xf32> to vector<1x32xf32>
    %cst_55 = arith.constant dense<0.000000e+00> : vector<128xf32>
    %113 = vector.multi_reduction <add>, %108, %cst_55 [1] : vector<128x32xf32> to vector<128xf32>
    %114 = vector.shape_cast %113 : vector<128xf32> to vector<128x1xf32>
    %cst_56 = arith.constant 3.200000e+01 : f32
    %115 = vector.broadcast %cst_56 : f32 to vector<128x1xf32>
    %116 = arith.divf %114, %115 : vector<128x1xf32>
    %117 = vector.broadcast %116 : vector<128x1xf32> to vector<128x32xf32>
    %118 = arith.subf %108, %117 : vector<128x32xf32>
    %119 = arith.mulf %118, %118 : vector<128x32xf32>
    %cst_57 = arith.constant dense<0.000000e+00> : vector<128xf32>
    %120 = vector.multi_reduction <add>, %119, %cst_57 [1] : vector<128x32xf32> to vector<128xf32>
    %121 = vector.shape_cast %120 : vector<128xf32> to vector<128x1xf32>
    %cst_58 = arith.constant 3.200000e+01 : f32
    %122 = vector.broadcast %cst_58 : f32 to vector<128x1xf32>
    %123 = arith.divf %121, %122 : vector<128x1xf32>
    %cst_59 = arith.constant 9.99999974E-6 : f32
    %124 = vector.broadcast %cst_59 : f32 to vector<128x1xf32>
    %125 = arith.addf %123, %124 : vector<128x1xf32>
    %126 = math.rsqrt %125 : vector<128x1xf32>
    %127 = vector.broadcast %126 : vector<128x1xf32> to vector<128x32xf32>
    %128 = arith.mulf %118, %127 : vector<128x32xf32>
    %129 = vector.broadcast %110 : vector<1x32xf32> to vector<128x32xf32>
    %130 = arith.mulf %128, %129 : vector<128x32xf32>
    %131 = vector.broadcast %112 : vector<1x32xf32> to vector<128x32xf32>
    %132 = arith.addf %130, %131 : vector<128x32xf32>
    %133 = arith.truncf %132 : vector<128x32xf32> to vector<128x32xbf16>
    %c0_60 = arith.constant 0 : index
    %c0_61 = arith.constant 0 : index
    %c0_62 = arith.constant 0 : index
    %134 = vector.load %arg18[%c0_60, %c0_61, %c0_62] : memref<2x32x128xbf16, #tpu.memory_space<vmem>>, vector<1x32x128xbf16>
    %135 = vector.shape_cast %134 : vector<1x32x128xbf16> to vector<32x128xbf16>
    %cst_63 = arith.constant dense<0.000000e+00> : vector<128x128xf32>
    %136 = tpu.matmul %133, %135, %cst_63 {dimension_numbers = #tpu.dot_dimension_numbers<[1], [0], [0], [1], [0, 0, 1, 1], [], []>} : vector<128x32xbf16>, vector<32x128xbf16>, vector<128x128xf32> -> vector<128x128xf32>
    %c0_64 = arith.constant 0 : index
    %c0_65 = arith.constant 0 : index
    %c0_66 = arith.constant 0 : index
    %137 = vector.load %arg19[%c0_64, %c0_65, %c0_66] : memref<2x1x128xf32, #tpu.memory_space<vmem>>, vector<1x1x128xf32>
    %138 = vector.shape_cast %137 : vector<1x1x128xf32> to vector<1x128xf32>
    %139 = vector.broadcast %138 : vector<1x128xf32> to vector<128x128xf32>
    %140 = arith.addf %136, %139 : vector<128x128xf32>
    %cst_67 = arith.constant 0.000000e+00 : f32
    %141 = vector.broadcast %cst_67 : f32 to vector<128x128xf32>
    %142 = arith.maximumf %140, %141 : vector<128x128xf32>
    %143 = arith.truncf %142 : vector<128x128xf32> to vector<128x128xbf16>
    %c0_68 = arith.constant 0 : index
    %c0_69 = arith.constant 0 : index
    %c0_70 = arith.constant 0 : index
    %144 = vector.load %arg20[%c0_68, %c0_69, %c0_70] : memref<2x128x32xbf16, #tpu.memory_space<vmem>>, vector<1x128x32xbf16>
    %145 = vector.shape_cast %144 : vector<1x128x32xbf16> to vector<128x32xbf16>
    %cst_71 = arith.constant dense<0.000000e+00> : vector<128x32xf32>
    %146 = tpu.matmul %143, %145, %cst_71 {dimension_numbers = #tpu.dot_dimension_numbers<[1], [0], [0], [1], [0, 0, 1, 1], [], []>} : vector<128x128xbf16>, vector<128x32xbf16>, vector<128x32xf32> -> vector<128x32xf32>
    %c0_72 = arith.constant 0 : index
    %c0_73 = arith.constant 0 : index
    %c0_74 = arith.constant 0 : index
    %147 = vector.load %arg21[%c0_72, %c0_73, %c0_74] : memref<2x1x32xf32, #tpu.memory_space<vmem>>, vector<1x1x32xf32>
    %148 = vector.shape_cast %147 : vector<1x1x32xf32> to vector<1x32xf32>
    %149 = vector.broadcast %148 : vector<1x32xf32> to vector<128x32xf32>
    %150 = arith.addf %146, %149 : vector<128x32xf32>
    %151 = arith.addf %132, %150 : vector<128x32xf32>
    %c0_75 = arith.constant 0 : index
    %c0_76 = arith.constant 0 : index
    %c0_77 = arith.constant 0 : index
    %152 = vector.load %arg16[%c0_75, %c0_76, %c0_77] : memref<2x1x32xf32, #tpu.memory_space<vmem>>, vector<1x1x32xf32>
    %153 = vector.shape_cast %152 : vector<1x1x32xf32> to vector<1x32xf32>
    %c0_78 = arith.constant 0 : index
    %c0_79 = arith.constant 0 : index
    %c0_80 = arith.constant 0 : index
    %154 = vector.load %arg17[%c0_78, %c0_79, %c0_80] : memref<2x1x32xf32, #tpu.memory_space<vmem>>, vector<1x1x32xf32>
    %155 = vector.shape_cast %154 : vector<1x1x32xf32> to vector<1x32xf32>
    %cst_81 = arith.constant dense<0.000000e+00> : vector<128xf32>
    %156 = vector.multi_reduction <add>, %151, %cst_81 [1] : vector<128x32xf32> to vector<128xf32>
    %157 = vector.shape_cast %156 : vector<128xf32> to vector<128x1xf32>
    %cst_82 = arith.constant 3.200000e+01 : f32
    %158 = vector.broadcast %cst_82 : f32 to vector<128x1xf32>
    %159 = arith.divf %157, %158 : vector<128x1xf32>
    %160 = vector.broadcast %159 : vector<128x1xf32> to vector<128x32xf32>
    %161 = arith.subf %151, %160 : vector<128x32xf32>
    %162 = arith.mulf %161, %161 : vector<128x32xf32>
    %cst_83 = arith.constant dense<0.000000e+00> : vector<128xf32>
    %163 = vector.multi_reduction <add>, %162, %cst_83 [1] : vector<128x32xf32> to vector<128xf32>
    %164 = vector.shape_cast %163 : vector<128xf32> to vector<128x1xf32>
    %cst_84 = arith.constant 3.200000e+01 : f32
    %165 = vector.broadcast %cst_84 : f32 to vector<128x1xf32>
    %166 = arith.divf %164, %165 : vector<128x1xf32>
    %cst_85 = arith.constant 9.99999974E-6 : f32
    %167 = vector.broadcast %cst_85 : f32 to vector<128x1xf32>
    %168 = arith.addf %166, %167 : vector<128x1xf32>
    %169 = math.rsqrt %168 : vector<128x1xf32>
    %170 = vector.broadcast %169 : vector<128x1xf32> to vector<128x32xf32>
    %171 = arith.mulf %161, %170 : vector<128x32xf32>
    %172 = vector.broadcast %153 : vector<1x32xf32> to vector<128x32xf32>
    %173 = arith.mulf %171, %172 : vector<128x32xf32>
    %174 = vector.broadcast %155 : vector<1x32xf32> to vector<128x32xf32>
    %175 = arith.addf %173, %174 : vector<128x32xf32>
    %176 = arith.truncf %175 : vector<128x32xf32> to vector<128x32xbf16>
    %c1 = arith.constant 1 : index
    %c0_86 = arith.constant 0 : index
    %c0_87 = arith.constant 0 : index
    %177 = vector.load %arg6[%c1, %c0_86, %c0_87] : memref<2x32x32xbf16, #tpu.memory_space<vmem>>, vector<1x32x32xbf16>
    %178 = vector.shape_cast %177 : vector<1x32x32xbf16> to vector<32x32xbf16>
    %cst_88 = arith.constant dense<0.000000e+00> : vector<128x32xf32>
    %179 = tpu.matmul %176, %178, %cst_88 {dimension_numbers = #tpu.dot_dimension_numbers<[1], [0], [0], [1], [0, 0, 1, 1], [], []>} : vector<128x32xbf16>, vector<32x32xbf16>, vector<128x32xf32> -> vector<128x32xf32>
    %c1_89 = arith.constant 1 : index
    %c0_90 = arith.constant 0 : index
    %c0_91 = arith.constant 0 : index
    %180 = vector.load %arg7[%c1_89, %c0_90, %c0_91] : memref<2x1x32xf32, #tpu.memory_space<vmem>>, vector<1x1x32xf32>
    %181 = vector.shape_cast %180 : vector<1x1x32xf32> to vector<1x32xf32>
    %182 = vector.broadcast %181 : vector<1x32xf32> to vector<128x32xf32>
    %183 = arith.addf %179, %182 : vector<128x32xf32>
    %cst_92 = arith.constant 0.353553385 : f32
    %184 = vector.broadcast %cst_92 : f32 to vector<128x32xf32>
    %185 = arith.mulf %183, %184 : vector<128x32xf32>
    %c1_93 = arith.constant 1 : index
    %c0_94 = arith.constant 0 : index
    %c0_95 = arith.constant 0 : index
    %186 = vector.load %arg8[%c1_93, %c0_94, %c0_95] : memref<2x32x32xbf16, #tpu.memory_space<vmem>>, vector<1x32x32xbf16>
    %187 = vector.shape_cast %186 : vector<1x32x32xbf16> to vector<32x32xbf16>
    %cst_96 = arith.constant dense<0.000000e+00> : vector<128x32xf32>
    %188 = tpu.matmul %176, %187, %cst_96 {dimension_numbers = #tpu.dot_dimension_numbers<[1], [0], [0], [1], [0, 0, 1, 1], [], []>} : vector<128x32xbf16>, vector<32x32xbf16>, vector<128x32xf32> -> vector<128x32xf32>
    %c1_97 = arith.constant 1 : index
    %c0_98 = arith.constant 0 : index
    %c0_99 = arith.constant 0 : index
    %189 = vector.load %arg9[%c1_97, %c0_98, %c0_99] : memref<2x1x32xf32, #tpu.memory_space<vmem>>, vector<1x1x32xf32>
    %190 = vector.shape_cast %189 : vector<1x1x32xf32> to vector<1x32xf32>
    %191 = vector.broadcast %190 : vector<1x32xf32> to vector<128x32xf32>
    %192 = arith.addf %188, %191 : vector<128x32xf32>
    %c1_100 = arith.constant 1 : index
    %c0_101 = arith.constant 0 : index
    %c0_102 = arith.constant 0 : index
    %193 = vector.load %arg10[%c1_100, %c0_101, %c0_102] : memref<2x32x32xbf16, #tpu.memory_space<vmem>>, vector<1x32x32xbf16>
    %194 = vector.shape_cast %193 : vector<1x32x32xbf16> to vector<32x32xbf16>
    %cst_103 = arith.constant dense<0.000000e+00> : vector<128x32xf32>
    %195 = tpu.matmul %176, %194, %cst_103 {dimension_numbers = #tpu.dot_dimension_numbers<[1], [0], [0], [1], [0, 0, 1, 1], [], []>} : vector<128x32xbf16>, vector<32x32xbf16>, vector<128x32xf32> -> vector<128x32xf32>
    %c1_104 = arith.constant 1 : index
    %c0_105 = arith.constant 0 : index
    %c0_106 = arith.constant 0 : index
    %196 = vector.load %arg11[%c1_104, %c0_105, %c0_106] : memref<2x1x32xf32, #tpu.memory_space<vmem>>, vector<1x1x32xf32>
    %197 = vector.shape_cast %196 : vector<1x1x32xf32> to vector<1x32xf32>
    %198 = vector.broadcast %197 : vector<1x32xf32> to vector<128x32xf32>
    %199 = arith.addf %195, %198 : vector<128x32xf32>
    %200 = vector.extract_strided_slice %185 {offsets = [0, 0], sizes = [64, 32], strides = [1, 1]} : vector<128x32xf32> to vector<64x32xf32>
    %201 = vector.extract_strided_slice %192 {offsets = [0, 0], sizes = [64, 32], strides = [1, 1]} : vector<128x32xf32> to vector<64x32xf32>
    %202 = vector.extract_strided_slice %199 {offsets = [0, 0], sizes = [64, 32], strides = [1, 1]} : vector<128x32xf32> to vector<64x32xf32>
    %203 = vector.shape_cast %200 : vector<64x32xf32> to vector<1x64x32xf32>
    %204 = vector.shape_cast %203 : vector<1x64x32xf32> to vector<1x64x32xf32>
    %205 = vector.broadcast %204 : vector<1x64x32xf32> to vector<4x64x32xf32>
    %206 = vector.broadcast %8 : vector<4x1x32xf32> to vector<4x64x32xf32>
    %207 = arith.mulf %205, %206 : vector<4x64x32xf32>
    %208 = arith.truncf %207 : vector<4x64x32xf32> to vector<4x64x32xbf16>
    %209 = vector.shape_cast %201 : vector<64x32xf32> to vector<1x64x32xf32>
    %210 = vector.shape_cast %209 : vector<1x64x32xf32> to vector<1x64x32xf32>
    %211 = vector.broadcast %210 : vector<1x64x32xf32> to vector<4x64x32xf32>
    %212 = arith.truncf %211 : vector<4x64x32xf32> to vector<4x64x32xbf16>
    %213 = vector.shape_cast %202 : vector<64x32xf32> to vector<1x64x32xf32>
    %214 = vector.shape_cast %213 : vector<1x64x32xf32> to vector<1x64x32xf32>
    %215 = vector.broadcast %214 : vector<1x64x32xf32> to vector<4x64x32xf32>
    %216 = arith.truncf %215 : vector<4x64x32xf32> to vector<4x64x32xbf16>
    "tpu.trace_start"() <{level = 10 : i32, message = "nqd,nkd->nqk"}> : () -> ()
    %cst_107 = arith.constant dense<0.000000e+00> : vector<4x64x64xf32>
    %217 = tpu.matmul %208, %212, %cst_107 {dimension_numbers = #tpu.dot_dimension_numbers<[2], [2], [1], [1], [0, 0, 0, 1, 1, 1], [0], [0]>} : vector<4x64x32xbf16>, vector<4x64x32xbf16>, vector<4x64x64xf32> -> vector<4x64x64xf32>
    "tpu.trace_stop"() : () -> ()
    %cst_108 = arith.constant dense<0xFF800000> : vector<4x64xf32>
    %218 = vector.multi_reduction <maximumf>, %217, %cst_108 [2] : vector<4x64x64xf32> to vector<4x64xf32>
    %219 = vector.shape_cast %218 : vector<4x64xf32> to vector<4x64x1xf32>
    %220 = vector.broadcast %219 : vector<4x64x1xf32> to vector<4x64x64xf32>
    %221 = arith.subf %217, %220 : vector<4x64x64xf32>
    %222 = math.exp %221 : vector<4x64x64xf32>
    %cst_109 = arith.constant dense<0.000000e+00> : vector<4x64xf32>
    %223 = vector.multi_reduction <add>, %222, %cst_109 [2] : vector<4x64x64xf32> to vector<4x64xf32>
    %224 = vector.shape_cast %223 : vector<4x64xf32> to vector<4x64x1xf32>
    %225 = tpu.reciprocal %224 {approx = true} : vector<4x64x1xf32> -> vector<4x64x1xf32>
    %226 = vector.broadcast %225 : vector<4x64x1xf32> to vector<4x64x64xf32>
    %227 = arith.mulf %222, %226 : vector<4x64x64xf32>
    %228 = arith.truncf %227 : vector<4x64x64xf32> to vector<4x64x64xbf16>
    "tpu.trace_start"() <{level = 10 : i32, message = "nqk,nkd->nqd"}> : () -> ()
    %cst_110 = arith.constant dense<0.000000e+00> : vector<4x64x32xf32>
    %229 = tpu.matmul %228, %216, %cst_110 {dimension_numbers = #tpu.dot_dimension_numbers<[2], [1], [1], [2], [0, 0, 0, 1, 1, 2], [0], [0]>} : vector<4x64x64xbf16>, vector<4x64x32xbf16>, vector<4x64x32xf32> -> vector<4x64x32xf32>
    "tpu.trace_stop"() : () -> ()
    %230 = vector.broadcast %8 : vector<4x1x32xf32> to vector<4x64x32xf32>
    %231 = arith.mulf %229, %230 : vector<4x64x32xf32>
    %cst_111 = arith.constant dense<0.000000e+00> : vector<64x32xf32>
    %232 = vector.multi_reduction <add>, %231, %cst_111 [0] : vector<4x64x32xf32> to vector<64x32xf32>
    %233 = vector.extract_strided_slice %185 {offsets = [64, 0], sizes = [64, 32], strides = [1, 1]} : vector<128x32xf32> to vector<64x32xf32>
    %234 = vector.extract_strided_slice %192 {offsets = [64, 0], sizes = [64, 32], strides = [1, 1]} : vector<128x32xf32> to vector<64x32xf32>
    %235 = vector.extract_strided_slice %199 {offsets = [64, 0], sizes = [64, 32], strides = [1, 1]} : vector<128x32xf32> to vector<64x32xf32>
    %236 = vector.shape_cast %233 : vector<64x32xf32> to vector<1x64x32xf32>
    %237 = vector.shape_cast %236 : vector<1x64x32xf32> to vector<1x64x32xf32>
    %238 = vector.broadcast %237 : vector<1x64x32xf32> to vector<4x64x32xf32>
    %239 = vector.broadcast %8 : vector<4x1x32xf32> to vector<4x64x32xf32>
    %240 = arith.mulf %238, %239 : vector<4x64x32xf32>
    %241 = arith.truncf %240 : vector<4x64x32xf32> to vector<4x64x32xbf16>
    %242 = vector.shape_cast %234 : vector<64x32xf32> to vector<1x64x32xf32>
    %243 = vector.shape_cast %242 : vector<1x64x32xf32> to vector<1x64x32xf32>
    %244 = vector.broadcast %243 : vector<1x64x32xf32> to vector<4x64x32xf32>
    %245 = arith.truncf %244 : vector<4x64x32xf32> to vector<4x64x32xbf16>
    %246 = vector.shape_cast %235 : vector<64x32xf32> to vector<1x64x32xf32>
    %247 = vector.shape_cast %246 : vector<1x64x32xf32> to vector<1x64x32xf32>
    %248 = vector.broadcast %247 : vector<1x64x32xf32> to vector<4x64x32xf32>
    %249 = arith.truncf %248 : vector<4x64x32xf32> to vector<4x64x32xbf16>
    "tpu.trace_start"() <{level = 10 : i32, message = "nqd,nkd->nqk"}> : () -> ()
    %cst_112 = arith.constant dense<0.000000e+00> : vector<4x64x64xf32>
    %250 = tpu.matmul %241, %245, %cst_112 {dimension_numbers = #tpu.dot_dimension_numbers<[2], [2], [1], [1], [0, 0, 0, 1, 1, 1], [0], [0]>} : vector<4x64x32xbf16>, vector<4x64x32xbf16>, vector<4x64x64xf32> -> vector<4x64x64xf32>
    "tpu.trace_stop"() : () -> ()
    %cst_113 = arith.constant dense<0xFF800000> : vector<4x64xf32>
    %251 = vector.multi_reduction <maximumf>, %250, %cst_113 [2] : vector<4x64x64xf32> to vector<4x64xf32>
    %252 = vector.shape_cast %251 : vector<4x64xf32> to vector<4x64x1xf32>
    %253 = vector.broadcast %252 : vector<4x64x1xf32> to vector<4x64x64xf32>
    %254 = arith.subf %250, %253 : vector<4x64x64xf32>
    %255 = math.exp %254 : vector<4x64x64xf32>
    %cst_114 = arith.constant dense<0.000000e+00> : vector<4x64xf32>
    %256 = vector.multi_reduction <add>, %255, %cst_114 [2] : vector<4x64x64xf32> to vector<4x64xf32>
    %257 = vector.shape_cast %256 : vector<4x64xf32> to vector<4x64x1xf32>
    %258 = tpu.reciprocal %257 {approx = true} : vector<4x64x1xf32> -> vector<4x64x1xf32>
    %259 = vector.broadcast %258 : vector<4x64x1xf32> to vector<4x64x64xf32>
    %260 = arith.mulf %255, %259 : vector<4x64x64xf32>
    %261 = arith.truncf %260 : vector<4x64x64xf32> to vector<4x64x64xbf16>
    "tpu.trace_start"() <{level = 10 : i32, message = "nqk,nkd->nqd"}> : () -> ()
    %cst_115 = arith.constant dense<0.000000e+00> : vector<4x64x32xf32>
    %262 = tpu.matmul %261, %249, %cst_115 {dimension_numbers = #tpu.dot_dimension_numbers<[2], [1], [1], [2], [0, 0, 0, 1, 1, 2], [0], [0]>} : vector<4x64x64xbf16>, vector<4x64x32xbf16>, vector<4x64x32xf32> -> vector<4x64x32xf32>
    "tpu.trace_stop"() : () -> ()
    %263 = vector.broadcast %8 : vector<4x1x32xf32> to vector<4x64x32xf32>
    %264 = arith.mulf %262, %263 : vector<4x64x32xf32>
    %cst_116 = arith.constant dense<0.000000e+00> : vector<64x32xf32>
    %265 = vector.multi_reduction <add>, %264, %cst_116 [0] : vector<4x64x32xf32> to vector<64x32xf32>
    %266 = tpu.concatenate %232, %265 in 0 : vector<64x32xf32>, vector<64x32xf32> -> vector<128x32xf32>
    %267 = arith.truncf %266 : vector<128x32xf32> to vector<128x32xbf16>
    %c1_117 = arith.constant 1 : index
    %c0_118 = arith.constant 0 : index
    %c0_119 = arith.constant 0 : index
    %268 = vector.load %arg12[%c1_117, %c0_118, %c0_119] : memref<2x32x32xbf16, #tpu.memory_space<vmem>>, vector<1x32x32xbf16>
    %269 = vector.shape_cast %268 : vector<1x32x32xbf16> to vector<32x32xbf16>
    %cst_120 = arith.constant dense<0.000000e+00> : vector<128x32xf32>
    %270 = tpu.matmul %267, %269, %cst_120 {dimension_numbers = #tpu.dot_dimension_numbers<[1], [0], [0], [1], [0, 0, 1, 1], [], []>} : vector<128x32xbf16>, vector<32x32xbf16>, vector<128x32xf32> -> vector<128x32xf32>
    %c1_121 = arith.constant 1 : index
    %c0_122 = arith.constant 0 : index
    %c0_123 = arith.constant 0 : index
    %271 = vector.load %arg13[%c1_121, %c0_122, %c0_123] : memref<2x1x32xf32, #tpu.memory_space<vmem>>, vector<1x1x32xf32>
    %272 = vector.shape_cast %271 : vector<1x1x32xf32> to vector<1x32xf32>
    %273 = vector.broadcast %272 : vector<1x32xf32> to vector<128x32xf32>
    %274 = arith.addf %270, %273 : vector<128x32xf32>
    %275 = arith.addf %175, %274 : vector<128x32xf32>
    %c1_124 = arith.constant 1 : index
    %c0_125 = arith.constant 0 : index
    %c0_126 = arith.constant 0 : index
    %276 = vector.load %arg14[%c1_124, %c0_125, %c0_126] : memref<2x1x32xf32, #tpu.memory_space<vmem>>, vector<1x1x32xf32>
    %277 = vector.shape_cast %276 : vector<1x1x32xf32> to vector<1x32xf32>
    %c1_127 = arith.constant 1 : index
    %c0_128 = arith.constant 0 : index
    %c0_129 = arith.constant 0 : index
    %278 = vector.load %arg15[%c1_127, %c0_128, %c0_129] : memref<2x1x32xf32, #tpu.memory_space<vmem>>, vector<1x1x32xf32>
    %279 = vector.shape_cast %278 : vector<1x1x32xf32> to vector<1x32xf32>
    %cst_130 = arith.constant dense<0.000000e+00> : vector<128xf32>
    %280 = vector.multi_reduction <add>, %275, %cst_130 [1] : vector<128x32xf32> to vector<128xf32>
    %281 = vector.shape_cast %280 : vector<128xf32> to vector<128x1xf32>
    %cst_131 = arith.constant 3.200000e+01 : f32
    %282 = vector.broadcast %cst_131 : f32 to vector<128x1xf32>
    %283 = arith.divf %281, %282 : vector<128x1xf32>
    %284 = vector.broadcast %283 : vector<128x1xf32> to vector<128x32xf32>
    %285 = arith.subf %275, %284 : vector<128x32xf32>
    %286 = arith.mulf %285, %285 : vector<128x32xf32>
    %cst_132 = arith.constant dense<0.000000e+00> : vector<128xf32>
    %287 = vector.multi_reduction <add>, %286, %cst_132 [1] : vector<128x32xf32> to vector<128xf32>
    %288 = vector.shape_cast %287 : vector<128xf32> to vector<128x1xf32>
    %cst_133 = arith.constant 3.200000e+01 : f32
    %289 = vector.broadcast %cst_133 : f32 to vector<128x1xf32>
    %290 = arith.divf %288, %289 : vector<128x1xf32>
    %cst_134 = arith.constant 9.99999974E-6 : f32
    %291 = vector.broadcast %cst_134 : f32 to vector<128x1xf32>
    %292 = arith.addf %290, %291 : vector<128x1xf32>
    %293 = math.rsqrt %292 : vector<128x1xf32>
    %294 = vector.broadcast %293 : vector<128x1xf32> to vector<128x32xf32>
    %295 = arith.mulf %285, %294 : vector<128x32xf32>
    %296 = vector.broadcast %277 : vector<1x32xf32> to vector<128x32xf32>
    %297 = arith.mulf %295, %296 : vector<128x32xf32>
    %298 = vector.broadcast %279 : vector<1x32xf32> to vector<128x32xf32>
    %299 = arith.addf %297, %298 : vector<128x32xf32>
    %300 = arith.truncf %299 : vector<128x32xf32> to vector<128x32xbf16>
    %c1_135 = arith.constant 1 : index
    %c0_136 = arith.constant 0 : index
    %c0_137 = arith.constant 0 : index
    %301 = vector.load %arg18[%c1_135, %c0_136, %c0_137] : memref<2x32x128xbf16, #tpu.memory_space<vmem>>, vector<1x32x128xbf16>
    %302 = vector.shape_cast %301 : vector<1x32x128xbf16> to vector<32x128xbf16>
    %cst_138 = arith.constant dense<0.000000e+00> : vector<128x128xf32>
    %303 = tpu.matmul %300, %302, %cst_138 {dimension_numbers = #tpu.dot_dimension_numbers<[1], [0], [0], [1], [0, 0, 1, 1], [], []>} : vector<128x32xbf16>, vector<32x128xbf16>, vector<128x128xf32> -> vector<128x128xf32>
    %c1_139 = arith.constant 1 : index
    %c0_140 = arith.constant 0 : index
    %c0_141 = arith.constant 0 : index
    %304 = vector.load %arg19[%c1_139, %c0_140, %c0_141] : memref<2x1x128xf32, #tpu.memory_space<vmem>>, vector<1x1x128xf32>
    %305 = vector.shape_cast %304 : vector<1x1x128xf32> to vector<1x128xf32>
    %306 = vector.broadcast %305 : vector<1x128xf32> to vector<128x128xf32>
    %307 = arith.addf %303, %306 : vector<128x128xf32>
    %cst_142 = arith.constant 0.000000e+00 : f32
    %308 = vector.broadcast %cst_142 : f32 to vector<128x128xf32>
    %309 = arith.maximumf %307, %308 : vector<128x128xf32>
    %310 = arith.truncf %309 : vector<128x128xf32> to vector<128x128xbf16>
    %c1_143 = arith.constant 1 : index
    %c0_144 = arith.constant 0 : index
    %c0_145 = arith.constant 0 : index
    %311 = vector.load %arg20[%c1_143, %c0_144, %c0_145] : memref<2x128x32xbf16, #tpu.memory_space<vmem>>, vector<1x128x32xbf16>
    %312 = vector.shape_cast %311 : vector<1x128x32xbf16> to vector<128x32xbf16>
    %cst_146 = arith.constant dense<0.000000e+00> : vector<128x32xf32>
    %313 = tpu.matmul %310, %312, %cst_146 {dimension_numbers = #tpu.dot_dimension_numbers<[1], [0], [0], [1], [0, 0, 1, 1], [], []>} : vector<128x128xbf16>, vector<128x32xbf16>, vector<128x32xf32> -> vector<128x32xf32>
    %c1_147 = arith.constant 1 : index
    %c0_148 = arith.constant 0 : index
    %c0_149 = arith.constant 0 : index
    %314 = vector.load %arg21[%c1_147, %c0_148, %c0_149] : memref<2x1x32xf32, #tpu.memory_space<vmem>>, vector<1x1x32xf32>
    %315 = vector.shape_cast %314 : vector<1x1x32xf32> to vector<1x32xf32>
    %316 = vector.broadcast %315 : vector<1x32xf32> to vector<128x32xf32>
    %317 = arith.addf %313, %316 : vector<128x32xf32>
    %318 = arith.addf %299, %317 : vector<128x32xf32>
    %c1_150 = arith.constant 1 : index
    %c0_151 = arith.constant 0 : index
    %c0_152 = arith.constant 0 : index
    %319 = vector.load %arg16[%c1_150, %c0_151, %c0_152] : memref<2x1x32xf32, #tpu.memory_space<vmem>>, vector<1x1x32xf32>
    %320 = vector.shape_cast %319 : vector<1x1x32xf32> to vector<1x32xf32>
    %c1_153 = arith.constant 1 : index
    %c0_154 = arith.constant 0 : index
    %c0_155 = arith.constant 0 : index
    %321 = vector.load %arg17[%c1_153, %c0_154, %c0_155] : memref<2x1x32xf32, #tpu.memory_space<vmem>>, vector<1x1x32xf32>
    %322 = vector.shape_cast %321 : vector<1x1x32xf32> to vector<1x32xf32>
    %cst_156 = arith.constant dense<0.000000e+00> : vector<128xf32>
    %323 = vector.multi_reduction <add>, %318, %cst_156 [1] : vector<128x32xf32> to vector<128xf32>
    %324 = vector.shape_cast %323 : vector<128xf32> to vector<128x1xf32>
    %cst_157 = arith.constant 3.200000e+01 : f32
    %325 = vector.broadcast %cst_157 : f32 to vector<128x1xf32>
    %326 = arith.divf %324, %325 : vector<128x1xf32>
    %327 = vector.broadcast %326 : vector<128x1xf32> to vector<128x32xf32>
    %328 = arith.subf %318, %327 : vector<128x32xf32>
    %329 = arith.mulf %328, %328 : vector<128x32xf32>
    %cst_158 = arith.constant dense<0.000000e+00> : vector<128xf32>
    %330 = vector.multi_reduction <add>, %329, %cst_158 [1] : vector<128x32xf32> to vector<128xf32>
    %331 = vector.shape_cast %330 : vector<128xf32> to vector<128x1xf32>
    %cst_159 = arith.constant 3.200000e+01 : f32
    %332 = vector.broadcast %cst_159 : f32 to vector<128x1xf32>
    %333 = arith.divf %331, %332 : vector<128x1xf32>
    %cst_160 = arith.constant 9.99999974E-6 : f32
    %334 = vector.broadcast %cst_160 : f32 to vector<128x1xf32>
    %335 = arith.addf %333, %334 : vector<128x1xf32>
    %336 = math.rsqrt %335 : vector<128x1xf32>
    %337 = vector.broadcast %336 : vector<128x1xf32> to vector<128x32xf32>
    %338 = arith.mulf %328, %337 : vector<128x32xf32>
    %339 = vector.broadcast %320 : vector<1x32xf32> to vector<128x32xf32>
    %340 = arith.mulf %338, %339 : vector<128x32xf32>
    %341 = vector.broadcast %322 : vector<1x32xf32> to vector<128x32xf32>
    %342 = arith.addf %340, %341 : vector<128x32xf32>
    %c0_161 = arith.constant 0 : index
    %c0_162 = arith.constant 0 : index
    %343 = vector.load %arg24[%c0_161, %c0_162] : memref<2x128xbf16, #tpu.memory_space<vmem>>, vector<2x128xbf16>
    %344 = arith.truncf %342 : vector<128x32xf32> to vector<128x32xbf16>
    %cst_163 = arith.constant dense<0.000000e+00> : vector<2x32xf32>
    %345 = tpu.matmul %343, %344, %cst_163 {dimension_numbers = #tpu.dot_dimension_numbers<[1], [0], [0], [1], [0, 0, 1, 1], [], []>} : vector<2x128xbf16>, vector<128x32xbf16>, vector<2x32xf32> -> vector<2x32xf32>
    %346 = arith.truncf %345 : vector<2x32xf32> to vector<2x32xbf16>
    %c0_164 = arith.constant 0 : index
    %c0_165 = arith.constant 0 : index
    %347 = vector.load %arg22[%c0_164, %c0_165] : memref<32x256xbf16, #tpu.memory_space<vmem>>, vector<32x256xbf16>
    %cst_166 = arith.constant dense<0.000000e+00> : vector<2x256xf32>
    %348 = tpu.matmul %346, %347, %cst_166 {dimension_numbers = #tpu.dot_dimension_numbers<[1], [0], [0], [1], [0, 0, 1, 1], [], []>} : vector<2x32xbf16>, vector<32x256xbf16>, vector<2x256xf32> -> vector<2x256xf32>
    %c0_167 = arith.constant 0 : index
    %c0_168 = arith.constant 0 : index
    %349 = vector.load %arg23[%c0_167, %c0_168] : memref<1x256xf32, #tpu.memory_space<vmem>>, vector<1x256xf32>
    %350 = vector.broadcast %349 : vector<1x256xf32> to vector<2x256xf32>
    %351 = arith.addf %348, %350 : vector<2x256xf32>
    %c0_169 = arith.constant 0 : index
    %c0_170 = arith.constant 0 : index
    %352 = vector.load %arg25[%c0_169, %c0_170] : memref<2x256xf32, #tpu.memory_space<vmem>>, vector<2x256xf32>
    tpu.vector_store %arg25[%c0_169, %c0_170], %351 {strides = array<i32>} : memref<2x256xf32, #tpu.memory_space<vmem>>, vector<2x256xf32>,
    return
  }
  func.func @transform_0(%arg0: i32) -> (i32, i32) {
    %c0_i32 = arith.constant 0 : i32
    %c0_i32_0 = arith.constant 0 : i32
    return %arg0, %c0_i32 : i32, i32
  }
  func.func @transform_1(%arg0: i32) -> (i32, i32) {
    %c0_i32 = arith.constant 0 : i32
    %c0_i32_0 = arith.constant 0 : i32
    %c0_i32_1 = arith.constant 0 : i32
    return %c0_i32, %c0_i32_0 : i32, i32
  }
  func.func @transform_2(%arg0: i32) -> (i32, i32) {
    %c0_i32 = arith.constant 0 : i32
    %c0_i32_0 = arith.constant 0 : i32
    %c0_i32_1 = arith.constant 0 : i32
    return %c0_i32, %c0_i32_0 : i32, i32
  }
  func.func @transform_3(%arg0: i32) -> (i32, i32) {
    %c0_i32 = arith.constant 0 : i32
    %c0_i32_0 = arith.constant 0 : i32
    %c0_i32_1 = arith.constant 0 : i32
    return %c0_i32, %c0_i32_0 : i32, i32
  }
  func.func @transform_4(%arg0: i32) -> (i32, i32, i32) {
    %c0_i32 = arith.constant 0 : i32
    %c0_i32_0 = arith.constant 0 : i32
    %c0_i32_1 = arith.constant 0 : i32
    %c0_i32_2 = arith.constant 0 : i32
    return %c0_i32, %c0_i32_0, %c0_i32_1 : i32, i32, i32
  }
  func.func @transform_5(%arg0: i32) -> (i32, i32, i32) {
    %c0_i32 = arith.constant 0 : i32
    %c0_i32_0 = arith.constant 0 : i32
    %c0_i32_1 = arith.constant 0 : i32
    %c0_i32_2 = arith.constant 0 : i32
    return %c0_i32, %c0_i32_0, %c0_i32_1 : i32, i32, i32
  }
  func.func @transform_6(%arg0: i32) -> (i32, i32, i32) {
    %c0_i32 = arith.constant 0 : i32
    %c0_i32_0 = arith.constant 0 : i32
    %c0_i32_1 = arith.constant 0 : i32
    %c0_i32_2 = arith.constant 0 : i32
    return %c0_i32, %c0_i32_0, %c0_i32_1 : i32, i32, i32
  }
  func.func @transform_7(%arg0: i32) -> (i32, i32, i32) {
    %c0_i32 = arith.constant 0 : i32
    %c0_i32_0 = arith.constant 0 : i32
    %c0_i32_1 = arith.constant 0 : i32
    %c0_i32_2 = arith.constant 0 : i32
    return %c0_i32, %c0_i32_0, %c0_i32_1 : i32, i32, i32
  }
  func.func @transform_8(%arg0: i32) -> (i32, i32, i32) {
    %c0_i32 = arith.constant 0 : i32
    %c0_i32_0 = arith.constant 0 : i32
    %c0_i32_1 = arith.constant 0 : i32
    %c0_i32_2 = arith.constant 0 : i32
    return %c0_i32, %c0_i32_0, %c0_i32_1 : i32, i32, i32
  }
  func.func @transform_9(%arg0: i32) -> (i32, i32, i32) {
    %c0_i32 = arith.constant 0 : i32
    %c0_i32_0 = arith.constant 0 : i32
    %c0_i32_1 = arith.constant 0 : i32
    %c0_i32_2 = arith.constant 0 : i32
    return %c0_i32, %c0_i32_0, %c0_i32_1 : i32, i32, i32
  }
  func.func @transform_10(%arg0: i32) -> (i32, i32, i32) {
    %c0_i32 = arith.constant 0 : i32
    %c0_i32_0 = arith.constant 0 : i32
    %c0_i32_1 = arith.constant 0 : i32
    %c0_i32_2 = arith.constant 0 : i32
    return %c0_i32, %c0_i32_0, %c0_i32_1 : i32, i32, i32
  }
  func.func @transform_11(%arg0: i32) -> (i32, i32, i32) {
    %c0_i32 = arith.constant 0 : i32
    %c0_i32_0 = arith.constant 0 : i32
    %c0_i32_1 = arith.constant 0 : i32
    %c0_i32_2 = arith.constant 0 : i32
    return %c0_i32, %c0_i32_0, %c0_i32_1 : i32, i32, i32
  }
  func.func @transform_12(%arg0: i32) -> (i32, i32, i32) {
    %c0_i32 = arith.constant 0 : i32
    %c0_i32_0 = arith.constant 0 : i32
    %c0_i32_1 = arith.constant 0 : i32
    %c0_i32_2 = arith.constant 0 : i32
    return %c0_i32, %c0_i32_0, %c0_i32_1 : i32, i32, i32
  }
  func.func @transform_13(%arg0: i32) -> (i32, i32, i32) {
    %c0_i32 = arith.constant 0 : i32
    %c0_i32_0 = arith.constant 0 : i32
    %c0_i32_1 = arith.constant 0 : i32
    %c0_i32_2 = arith.constant 0 : i32
    return %c0_i32, %c0_i32_0, %c0_i32_1 : i32, i32, i32
  }
  func.func @transform_14(%arg0: i32) -> (i32, i32, i32) {
    %c0_i32 = arith.constant 0 : i32
    %c0_i32_0 = arith.constant 0 : i32
    %c0_i32_1 = arith.constant 0 : i32
    %c0_i32_2 = arith.constant 0 : i32
    return %c0_i32, %c0_i32_0, %c0_i32_1 : i32, i32, i32
  }
  func.func @transform_15(%arg0: i32) -> (i32, i32, i32) {
    %c0_i32 = arith.constant 0 : i32
    %c0_i32_0 = arith.constant 0 : i32
    %c0_i32_1 = arith.constant 0 : i32
    %c0_i32_2 = arith.constant 0 : i32
    return %c0_i32, %c0_i32_0, %c0_i32_1 : i32, i32, i32
  }
  func.func @transform_16(%arg0: i32) -> (i32, i32, i32) {
    %c0_i32 = arith.constant 0 : i32
    %c0_i32_0 = arith.constant 0 : i32
    %c0_i32_1 = arith.constant 0 : i32
    %c0_i32_2 = arith.constant 0 : i32
    return %c0_i32, %c0_i32_0, %c0_i32_1 : i32, i32, i32
  }
  func.func @transform_17(%arg0: i32) -> (i32, i32, i32) {
    %c0_i32 = arith.constant 0 : i32
    %c0_i32_0 = arith.constant 0 : i32
    %c0_i32_1 = arith.constant 0 : i32
    %c0_i32_2 = arith.constant 0 : i32
    return %c0_i32, %c0_i32_0, %c0_i32_1 : i32, i32, i32
  }
  func.func @transform_18(%arg0: i32) -> (i32, i32, i32) {
    %c0_i32 = arith.constant 0 : i32
    %c0_i32_0 = arith.constant 0 : i32
    %c0_i32_1 = arith.constant 0 : i32
    %c0_i32_2 = arith.constant 0 : i32
    return %c0_i32, %c0_i32_0, %c0_i32_1 : i32, i32, i32
  }
  func.func @transform_19(%arg0: i32) -> (i32, i32, i32) {
    %c0_i32 = arith.constant 0 : i32
    %c0_i32_0 = arith.constant 0 : i32
    %c0_i32_1 = arith.constant 0 : i32
    %c0_i32_2 = arith.constant 0 : i32
    return %c0_i32, %c0_i32_0, %c0_i32_1 : i32, i32, i32
  }
  func.func @transform_20(%arg0: i32) -> (i32, i32, i32) {
    %c0_i32 = arith.constant 0 : i32
    %c0_i32_0 = arith.constant 0 : i32
    %c0_i32_1 = arith.constant 0 : i32
    %c0_i32_2 = arith.constant 0 : i32
    return %c0_i32, %c0_i32_0, %c0_i32_1 : i32, i32, i32
  }
  func.func @transform_21(%arg0: i32) -> (i32, i32) {
    %c0_i32 = arith.constant 0 : i32
    %c0_i32_0 = arith.constant 0 : i32
    %c0_i32_1 = arith.constant 0 : i32
    return %c0_i32, %c0_i32_0 : i32, i32
  }
  func.func @transform_22(%arg0: i32) -> (i32, i32) {
    %c0_i32 = arith.constant 0 : i32
    %c0_i32_0 = arith.constant 0 : i32
    %c0_i32_1 = arith.constant 0 : i32
    return %c0_i32, %c0_i32_0 : i32, i32
  }
  func.func @transform_23(%arg0: i32) -> (i32, i32) {
    %c0_i32 = arith.constant 0 : i32
    %c0_i32_0 = arith.constant 0 : i32
    %c0_i32_1 = arith.constant 0 : i32
    return %c0_i32, %c0_i32_0 : i32, i32
  }
  func.func @transform_24(%arg0: i32) -> (i32, i32) {
    %c0_i32 = arith.constant 0 : i32
    %c0_i32_0 = arith.constant 0 : i32
    return %arg0, %c0_i32 : i32, i32
  }
}

</mosaic_0001>

<llo_original>
// kernel: tpu_custom_call.1
$region0: #{tpu_custom_call.1}
  #allocation0 [shape = 'u32[]', space=smem, size = 0x4, offset = 0x4, fixed_abs, tag = 'smem constant byte address 0x4 - core index']
  #allocation1 [shape = 'u32[72,128]{1,0:T(1,128)}', space=vmem, size = 0x9000, scoped, tag = 'internal scratch']
  %s0 = inlined_call_operand.vmem [shape: bf16[128,13], index: 0, kind: input, shape index: {}]
  %s1 = inlined_call_operand.vmem [shape: f32[128,32], index: 1, kind: input, shape index: {}]
  %s2 = inlined_call_operand.vmem [shape: bf16[13,32], index: 2, kind: input, shape index: {}]
  %s3 = inlined_call_operand.vmem [shape: f32[1,32], index: 3, kind: input, shape index: {}]
  %s4 = inlined_call_operand.vmem [shape: f32[4,1,32], index: 4, kind: input, shape index: {}]
  %s5 = inlined_call_operand.vmem [shape: bf16[2,32,32], index: 5, kind: input, shape index: {}]
  %s6 = inlined_call_operand.vmem [shape: f32[2,1,32], index: 6, kind: input, shape index: {}]
  %s7 = inlined_call_operand.vmem [shape: bf16[2,32,32], index: 7, kind: input, shape index: {}]
  %s8 = inlined_call_operand.vmem [shape: f32[2,1,32], index: 8, kind: input, shape index: {}]
  %s9 = inlined_call_operand.vmem [shape: bf16[2,32,32], index: 9, kind: input, shape index: {}]
  %s10 = inlined_call_operand.vmem [shape: f32[2,1,32], index: 10, kind: input, shape index: {}]
  %s11 = inlined_call_operand.vmem [shape: bf16[2,32,32], index: 11, kind: input, shape index: {}]
  %s12 = inlined_call_operand.vmem [shape: f32[2,1,32], index: 12, kind: input, shape index: {}]
  %s13 = inlined_call_operand.vmem [shape: f32[2,1,32], index: 13, kind: input, shape index: {}]
  %s14 = inlined_call_operand.vmem [shape: f32[2,1,32], index: 14, kind: input, shape index: {}]
  %s15 = inlined_call_operand.vmem [shape: f32[2,1,32], index: 15, kind: input, shape index: {}]
  %s16 = inlined_call_operand.vmem [shape: f32[2,1,32], index: 16, kind: input, shape index: {}]
  %s17 = inlined_call_operand.vmem [shape: bf16[2,32,128], index: 17, kind: input, shape index: {}]
  %s18 = inlined_call_operand.vmem [shape: f32[2,1,128], index: 18, kind: input, shape index: {}]
  %s19 = inlined_call_operand.vmem [shape: bf16[2,128,32], index: 19, kind: input, shape index: {}]
  %s20 = inlined_call_operand.vmem [shape: f32[2,1,32], index: 20, kind: input, shape index: {}]
  %s21 = inlined_call_operand.vmem [shape: bf16[32,256], index: 21, kind: input, shape index: {}]
  %s22 = inlined_call_operand.vmem [shape: f32[1,256], index: 22, kind: input, shape index: {}]
  %s23 = inlined_call_operand.vmem [shape: bf16[2,128], index: 23, kind: input, shape index: {}]
  %s24 = inlined_call_operand.hbm [shape: f32[2,256], index: 24, kind: output, shape index: {}]
  %s25 = sld [smem:[#allocation0]]
  $region106: #{tpu_custom_call.1} parent=0
    _
  %s27 = ssub.s32 1, %s25
  %s28 = scalar_select 0, %s27, %s25
  $region1: #{tpu_custom_call.1} parent=0
    #allocation2 [shape = 'u8[2048]{0}', space=vmem, size = 0x800, scoped, tag = 'output window, operand 0, single buffered']
    #allocation3 [shape = 's32[1]{0}', space=sflag, size = 0x4, scoped, tag = 'scoped memory for tpu_custom_call.1']
    %29 = vsyncpa [#allocation3], 0
    // Predicated region
    $region2: #{tpu_custom_call.1} parent=1 // pred_check
      _
    $region3: #{tpu_custom_call.1} parent=1 // pred_check_branch
      %31 = sbr.rel (0) target = $region5
    $region4: #{tpu_custom_call.1} parent=1 // pred_region
      _
    $region5: #{tpu_custom_call.1} parent=1 // pred_fallthru
      _
    // Predicated region
    $region6: #{tpu_custom_call.1} parent=1 // pred_check
      _
    $region7: #{tpu_custom_call.1} parent=1 // pred_check_branch
      %33 = sbr.rel (0) target = $region9
    $region8: #{tpu_custom_call.1} parent=1 // pred_region
      _
    $region9: #{tpu_custom_call.1} parent=1 // pred_fallthru
      _
    // Predicated region
    $region10: #{tpu_custom_call.1} parent=1 // pred_check
      _
    $region11: #{tpu_custom_call.1} parent=1 // pred_check_branch
      %35 = sbr.rel (0) target = $region13
    $region12: #{tpu_custom_call.1} parent=1 // pred_region
      _
    $region13: #{tpu_custom_call.1} parent=1 // pred_fallthru
      _
    // Predicated region
    $region14: #{tpu_custom_call.1} parent=1 // pred_check
      _
    $region15: #{tpu_custom_call.1} parent=1 // pred_check_branch
      %37 = sbr.rel (0) target = $region17
    $region16: #{tpu_custom_call.1} parent=1 // pred_region
      _
    $region17: #{tpu_custom_call.1} parent=1 // pred_fallthru
      _
    // Predicated region
    $region18: #{tpu_custom_call.1} parent=1 // pred_check
      _
    $region19: #{tpu_custom_call.1} parent=1 // pred_check_branch
      %39 = sbr.rel (0) target = $region21
    $region20: #{tpu_custom_call.1} parent=1 // pred_region
      _
    $region21: #{tpu_custom_call.1} parent=1 // pred_fallthru
      _
    // Predicated region
    $region22: #{tpu_custom_call.1} parent=1 // pred_check
      _
    $region23: #{tpu_custom_call.1} parent=1 // pred_check_branch
      %41 = sbr.rel (0) target = $region25
    $region24: #{tpu_custom_call.1} parent=1 // pred_region
      _
    $region25: #{tpu_custom_call.1} parent=1 // pred_fallthru
      _
    // Predicated region
    $region26: #{tpu_custom_call.1} parent=1 // pred_check
      _
    $region27: #{tpu_custom_call.1} parent=1 // pred_check_branch
      %43 = sbr.rel (0) target = $region29
    $region28: #{tpu_custom_call.1} parent=1 // pred_region
      _
    $region29: #{tpu_custom_call.1} parent=1 // pred_fallthru
      _
    // Predicated region
    $region30: #{tpu_custom_call.1} parent=1 // pred_check
      _
    $region31: #{tpu_custom_call.1} parent=1 // pred_check_branch
      %45 = sbr.rel (0) target = $region33
    $region32: #{tpu_custom_call.1} parent=1 // pred_region
      _
    $region33: #{tpu_custom_call.1} parent=1 // pred_fallthru
      _
    // Predicated region
    $region34: #{tpu_custom_call.1} parent=1 // pred_check
      _
    $region35: #{tpu_custom_call.1} parent=1 // pred_check_branch
      %47 = sbr.rel (0) target = $region37
    $region36: #{tpu_custom_call.1} parent=1 // pred_region
      _
    $region37: #{tpu_custom_call.1} parent=1 // pred_fallthru
      _
    // Predicated region
    $region38: #{tpu_custom_call.1} parent=1 // pred_check
      _
    $region39: #{tpu_custom_call.1} parent=1 // pred_check_branch
      %49 = sbr.rel (0) target = $region41
    $region40: #{tpu_custom_call.1} parent=1 // pred_region
      _
    $region41: #{tpu_custom_call.1} parent=1 // pred_fallthru
      _
    // Predicated region
    $region42: #{tpu_custom_call.1} parent=1 // pred_check
      _
    $region43: #{tpu_custom_call.1} parent=1 // pred_check_branch
      %51 = sbr.rel (0) target = $region45
    $region44: #{tpu_custom_call.1} parent=1 // pred_region
      _
    $region45: #{tpu_custom_call.1} parent=1 // pred_fallthru
      _
    // Predicated region
    $region46: #{tpu_custom_call.1} parent=1 // pred_check
      _
    $region47: #{tpu_custom_call.1} parent=1 // pred_check_branch
      %53 = sbr.rel (0) target = $region49
    $region48: #{tpu_custom_call.1} parent=1 // pred_region
      _
    $region49: #{tpu_custom_call.1} parent=1 // pred_fallthru
      _
    // Predicated region
    $region50: #{tpu_custom_call.1} parent=1 // pred_check
      _
    $region51: #{tpu_custom_call.1} parent=1 // pred_check_branch
      %55 = sbr.rel (0) target = $region53
    $region52: #{tpu_custom_call.1} parent=1 // pred_region
      _
    $region53: #{tpu_custom_call.1} parent=1 // pred_fallthru
      _
    // Predicated region
    $region54: #{tpu_custom_call.1} parent=1 // pred_check
      _
    $region55: #{tpu_custom_call.1} parent=1 // pred_check_branch
      %57 = sbr.rel (0) target = $region57
    $region56: #{tpu_custom_call.1} parent=1 // pred_region
      _
    $region57: #{tpu_custom_call.1} parent=1 // pred_fallthru
      _
    // Predicated region
    $region58: #{tpu_custom_call.1} parent=1 // pred_check
      _
    $region59: #{tpu_custom_call.1} parent=1 // pred_check_branch
      %59 = sbr.rel (0) target = $region61
    $region60: #{tpu_custom_call.1} parent=1 // pred_region
      _
    $region61: #{tpu_custom_call.1} parent=1 // pred_fallthru
      _
    // Predicated region
    $region62: #{tpu_custom_call.1} parent=1 // pred_check
      _
    $region63: #{tpu_custom_call.1} parent=1 // pred_check_branch
      %61 = sbr.rel (0) target = $region65
    $region64: #{tpu_custom_call.1} parent=1 // pred_region
      _
    $region65: #{tpu_custom_call.1} parent=1 // pred_fallthru
      _
    // Predicated region
    $region66: #{tpu_custom_call.1} parent=1 // pred_check
      _
    $region67: #{tpu_custom_call.1} parent=1 // pred_check_branch
      %63 = sbr.rel (0) target = $region69
    $region68: #{tpu_custom_call.1} parent=1 // pred_region
      _
    $region69: #{tpu_custom_call.1} parent=1 // pred_fallthru
      _
    // Predicated region
    $region70: #{tpu_custom_call.1} parent=1 // pred_check
      _
    $region71: #{tpu_custom_call.1} parent=1 // pred_check_branch
      %65 = sbr.rel (0) target = $region73
    $region72: #{tpu_custom_call.1} parent=1 // pred_region
      _
    $region73: #{tpu_custom_call.1} parent=1 // pred_fallthru
      _
    // Predicated region
    $region74: #{tpu_custom_call.1} parent=1 // pred_check
      _
    $region75: #{tpu_custom_call.1} parent=1 // pred_check_branch
      %67 = sbr.rel (0) target = $region77
    $region76: #{tpu_custom_call.1} parent=1 // pred_region
      _
    $region77: #{tpu_custom_call.1} parent=1 // pred_fallthru
      _
    // Predicated region
    $region78: #{tpu_custom_call.1} parent=1 // pred_check
      _
    $region79: #{tpu_custom_call.1} parent=1 // pred_check_branch
      %69 = sbr.rel (0) target = $region81
    $region80: #{tpu_custom_call.1} parent=1 // pred_region
      _
    $region81: #{tpu_custom_call.1} parent=1 // pred_fallthru
      _
    // Predicated region
    $region82: #{tpu_custom_call.1} parent=1 // pred_check
      _
    $region83: #{tpu_custom_call.1} parent=1 // pred_check_branch
      %71 = sbr.rel (0) target = $region85
    $region84: #{tpu_custom_call.1} parent=1 // pred_region
      _
    $region85: #{tpu_custom_call.1} parent=1 // pred_fallthru
      _
    // Predicated region
    $region86: #{tpu_custom_call.1} parent=1 // pred_check
      _
    $region87: #{tpu_custom_call.1} parent=1 // pred_check_branch
      %73 = sbr.rel (0) target = $region89
    $region88: #{tpu_custom_call.1} parent=1 // pred_region
      _
    $region89: #{tpu_custom_call.1} parent=1 // pred_fallthru
      _
    // Predicated region
    $region90: #{tpu_custom_call.1} parent=1 // pred_check
      _
    $region91: #{tpu_custom_call.1} parent=1 // pred_check_branch
      %75 = sbr.rel (0) target = $region93
    $region92: #{tpu_custom_call.1} parent=1 // pred_region
      _
    $region93: #{tpu_custom_call.1} parent=1 // pred_fallthru
      _
    // Predicated region
    $region94: #{tpu_custom_call.1} parent=1 // pred_check
      _
    $region95: #{tpu_custom_call.1} parent=1 // pred_check_branch
      %77 = sbr.rel (0) target = $region97
    $region96: #{tpu_custom_call.1} parent=1 // pred_region
      _
    $region97: #{tpu_custom_call.1} parent=1 // pred_fallthru
      _
    %v79 = vld [vmem:[%s0] sm:$0xf]
    %v80 = vld [vmem:[%s0 + $0x4] sm:$0xf]
    %v81 = vld [vmem:[%s0 + $0x8] sm:$0xf]
    %v82 = vld [vmem:[%s0 + $0xc] sm:$0xf]
    %v83 = vld [vmem:[%s0 + $0x10] sm:$0xf]
    %v84 = vld [vmem:[%s0 + $0x14] sm:$0xf]
    %v85 = vld [vmem:[%s0 + $0x18] sm:$0xf]
    %v86 = vld [vmem:[%s0 + $0x1c] sm:$0xf]
    %v87 = vld [vmem:[%s0 + $0x20] sm:$0xf]
    %v88 = vld [vmem:[%s0 + $0x24] sm:$0xf]
    %v89 = vld [vmem:[%s0 + $0x28] sm:$0xf]
    %v90 = vld [vmem:[%s0 + $0x2c] sm:$0xf]
    %v91 = vld [vmem:[%s0 + $0x30] sm:$0xf]
    %v92 = vld [vmem:[%s0 + $0x34] sm:$0xf]
    %v93 = vld [vmem:[%s0 + $0x38] sm:$0xf]
    %v94 = vld [vmem:[%s0 + $0x3c] sm:$0xf]
    %v95 = vld [vmem:[%s2] sm:$0xf]
    %v96 = vld [vmem:[%s2 + $0x4] sm:$0x7]
    %v97 = vld [vmem:[%s3] sm:$0x1]
    %v99 = vperm.slane %v97, 0
    %v117 = vunpack.c.l.b16 %v79
    %v118 = vunpack.c.l.b16 %v80
    %v119 = vunpack.c.l.b16 %v81
    %v120 = vunpack.c.l.b16 %v82
    %v121 = vunpack.c.l.b16 %v83
    %v122 = vunpack.c.l.b16 %v84
    %v123 = vunpack.c.l.b16 %v85
    %v124 = vunpack.c.l.b16 %v86
    %v125 = vunpack.c.l.b16 %v87
    %v126 = vunpack.c.l.b16 %v88
    %v127 = vunpack.c.l.b16 %v89
    %v128 = vunpack.c.l.b16 %v90
    %v129 = vunpack.c.l.b16 %v91
    %v130 = vunpack.c.l.b16 %v92
    %v131 = vunpack.c.l.b16 %v93
    %v132 = vunpack.c.l.b16 %v94
    %v133 = vpack.c.b16 %v118, %v117
    %v134 = vpack.c.b16 %v120, %v119
    %v135 = vpack.c.b16 %v122, %v121
    %v136 = vpack.c.b16 %v124, %v123
    %v137 = vpack.c.b16 %v126, %v125
    %v138 = vpack.c.b16 %v128, %v127
    %v139 = vpack.c.b16 %v130, %v129
    %v140 = vpack.c.b16 %v132, %v131
    %v143 = vunpack.c.l.b16 %v95
    %v144 = vunpack.c.l.b16 %v96
    %v145 = vpack.c.b16 %v144, %v143
    %vm146 = vcmask 105472
    %v148 = vsel %vm146, %v133, 0
    %v151 = vsel %vm146, %v134, 0
    %v154 = vsel %vm146, %v135, 0
    %v157 = vsel %vm146, %v136, 0
    %v160 = vsel %vm146, %v137, 0
    %v163 = vsel %vm146, %v138, 0
    %v166 = vsel %vm146, %v139, 0
    %v169 = vsel %vm146, %v140, 0
    %vm171 = vcmask 1045504
    %vm172 = vcmask 1046528
    %v173 = vsel %vm171, 4294967295, 65535
    %v174 = vsel %vm172, %v173, 0
    %v176 = vand.u32 %v145, %v174
    %178 = vmatpush.bf16.msra.mxu0 0
    %179 = vmatpush.bf16.msra.mxu0 0
    %180 = vmatpush.bf16.msra.mxu0 0
    %181 = vmatpush.bf16.msra.mxu0 0
    %182 = vmatpush.bf16.msra.mxu0 0
    %183 = vmatpush.bf16.msra.mxu0 0
    %184 = vmatpush.bf16.msra.mxu0 0
    %185 = vmatpush.bf16.msra.mxu0 %v176
    %186 = vmatmul.bf16.gmra.mxu0 %v148
    %v187 = vpop.f32.mrf.mxu0
    %v188 = vadd.f32 %v99, %v187
    %v189 = vpop.f32.mrf.mxu0
    %v190 = vadd.f32 %v99, %v189
    %191 = vmatmul.bf16.gmra.mxu0 %v151
    %v192 = vpop.f32.mrf.mxu0
    %v193 = vadd.f32 %v99, %v192
    %v194 = vpop.f32.mrf.mxu0
    %v195 = vadd.f32 %v99, %v194
    %196 = vmatmul.bf16.gmra.mxu0 %v154
    %v197 = vpop.f32.mrf.mxu0
    %v198 = vadd.f32 %v99, %v197
    %v199 = vpop.f32.mrf.mxu0
    %v200 = vadd.f32 %v99, %v199
    %201 = vmatmul.bf16.gmra.mxu0 %v157
    %v202 = vpop.f32.mrf.mxu0
    %v203 = vadd.f32 %v99, %v202
    %v204 = vpop.f32.mrf.mxu0
    %v205 = vadd.f32 %v99, %v204
    %206 = vmatmul.bf16.gmra.mxu0 %v160
    %v207 = vpop.f32.mrf.mxu0
    %v208 = vadd.f32 %v99, %v207
    %v209 = vpop.f32.mrf.mxu0
    %v210 = vadd.f32 %v99, %v209
    %211 = vmatmul.bf16.gmra.mxu0 %v163
    %v212 = vpop.f32.mrf.mxu0
    %v213 = vadd.f32 %v99, %v212
    %v214 = vpop.f32.mrf.mxu0
    %v215 = vadd.f32 %v99, %v214
    %216 = vmatmul.bf16.gmra.mxu0 %v166
    %v217 = vpop.f32.mrf.mxu0
    %v218 = vadd.f32 %v99, %v217
    %v219 = vpop.f32.mrf.mxu0
    %v220 = vadd.f32 %v99, %v219
    %221 = vmatmul.bf16.gmra.mxu0 %v169
    %v222 = vpop.f32.mrf.mxu0
    %v223 = vadd.f32 %v99, %v222
    %v224 = vpop.f32.mrf.mxu0
    %v225 = vadd.f32 %v99, %v224
    %226 = vdwg.mxu0
    %v227 = vld [vmem:[%s1] sm:$0xff]
    %v228 = vld [vmem:[%s1 + $0x8] sm:$0xff]
    %v229 = vld [vmem:[%s1 + $0x10] sm:$0xff]
    %v230 = vld [vmem:[%s1 + $0x18] sm:$0xff]
    %v231 = vld [vmem:[%s1 + $0x20] sm:$0xff]
    %v232 = vld [vmem:[%s1 + $0x28] sm:$0xff]
    %v233 = vld [vmem:[%s1 + $0x30] sm:$0xff]
    %v234 = vld [vmem:[%s1 + $0x38] sm:$0xff]
    %v235 = vld [vmem:[%s1 + $0x40] sm:$0xff]
    %v236 = vld [vmem:[%s1 + $0x48] sm:$0xff]
    %v237 = vld [vmem:[%s1 + $0x50] sm:$0xff]
    %v238 = vld [vmem:[%s1 + $0x58] sm:$0xff]
    %v239 = vld [vmem:[%s1 + $0x60] sm:$0xff]
    %v240 = vld [vmem:[%s1 + $0x68] sm:$0xff]
    %v241 = vld [vmem:[%s1 + $0x70] sm:$0xff]
    %v242 = vld [vmem:[%s1 + $0x78] sm:$0xff]
    %v243 = vadd.f32 %v188, %v227
    %v244 = vadd.f32 %v190, %v228
    %v245 = vadd.f32 %v193, %v229
    %v246 = vadd.f32 %v195, %v230
    %v247 = vadd.f32 %v198, %v231
    %v248 = vadd.f32 %v200, %v232
    %v249 = vadd.f32 %v203, %v233
    %v250 = vadd.f32 %v205, %v234
    %v251 = vadd.f32 %v208, %v235
    %v252 = vadd.f32 %v210, %v236
    %v253 = vadd.f32 %v213, %v237
    %v254 = vadd.f32 %v215, %v238
    %v255 = vadd.f32 %v218, %v239
    %v256 = vadd.f32 %v220, %v240
    %v257 = vadd.f32 %v223, %v241
    %v258 = vadd.f32 %v225, %v242
    %v259 = vld [vmem:[%s4] sm:$0x1]
    %v260 = vld [vmem:[%s4 + $0x1] sm:$0x1]
    %v261 = vld [vmem:[%s4 + $0x2] sm:$0x1]
    %v262 = vld [vmem:[%s4 + $0x3] sm:$0x1]
    %v263 = vpack.c.bf16 %v244, %v243
    %v264 = vpack.c.bf16 %v246, %v245
    %v265 = vpack.c.bf16 %v248, %v247
    %v266 = vpack.c.bf16 %v250, %v249
    %v267 = vpack.c.bf16 %v252, %v251
    %v268 = vpack.c.bf16 %v254, %v253
    %v269 = vpack.c.bf16 %v256, %v255
    %v270 = vpack.c.bf16 %v258, %v257
    %v271 = vld [vmem:[%s5] sm:$0xf]
    %v272 = vld [vmem:[%s5 + $0x4] sm:$0xf]
    %v273 = vld [vmem:[%s5 + $0x8] sm:$0xf]
    %v274 = vld [vmem:[%s5 + $0xc] sm:$0xf]
    %v275 = vld [vmem:[%s6] sm:$0x1]
    %v277 = vperm.slane %v275, 0
    %v283 = vunpack.c.l.b16 %v271
    %v284 = vunpack.c.l.b16 %v272
    %v285 = vunpack.c.l.b16 %v273
    %v286 = vunpack.c.l.b16 %v274
    %v287 = vpack.c.b16 %v284, %v283
    %v288 = vpack.c.b16 %v286, %v285
    %vm291 = vcmask 261120
    %v293 = vsel %vm291, %v263, 0
    %v296 = vsel %vm291, %v264, 0
    %v299 = vsel %vm291, %v265, 0
    %v302 = vsel %vm291, %v266, 0
    %v305 = vsel %vm291, %v267, 0
    %v308 = vsel %vm291, %v268, 0
    %v311 = vsel %vm291, %v269, 0
    %v314 = vsel %vm291, %v270, 0
    %316 = vmatpush.bf16.msra.mxu0 0
    %317 = vmatpush.bf16.msra.mxu0 0
    %318 = vmatpush.bf16.msra.mxu0 0
    %319 = vmatpush.bf16.msra.mxu0 0
    %320 = vmatpush.bf16.msra.mxu0 0
    %321 = vmatpush.bf16.msra.mxu0 0
    %322 = vmatpush.bf16.msra.mxu0 %v288
    %323 = vmatpush.bf16.msra.mxu0 %v287
    %324 = vmatmul.bf16.gmra.mxu0 %v293
    %v325 = vpop.f32.mrf.mxu0
    %v326 = vadd.f32 %v277, %v325
    %v327 = vpop.f32.mrf.mxu0
    %v328 = vadd.f32 %v277, %v327
    %329 = vmatmul.bf16.gmra.mxu0 %v296
    %v330 = vpop.f32.mrf.mxu0
    %v331 = vadd.f32 %v277, %v330
    %v332 = vpop.f32.mrf.mxu0
    %v333 = vadd.f32 %v277, %v332
    %334 = vmatmul.bf16.gmra.mxu0 %v299
    %v335 = vpop.f32.mrf.mxu0
    %v336 = vadd.f32 %v277, %v335
    %v337 = vpop.f32.mrf.mxu0
    %v338 = vadd.f32 %v277, %v337
    %339 = vmatmul.bf16.gmra.mxu0 %v302
    %v340 = vpop.f32.mrf.mxu0
    %v341 = vadd.f32 %v277, %v340
    %v342 = vpop.f32.mrf.mxu0
    %v343 = vadd.f32 %v277, %v342
    %344 = vmatmul.bf16.gmra.mxu0 %v305
    %v345 = vpop.f32.mrf.mxu0
    %v346 = vadd.f32 %v277, %v345
    %v347 = vpop.f32.mrf.mxu0
    %v348 = vadd.f32 %v277, %v347
    %349 = vmatmul.bf16.gmra.mxu0 %v308
    %v350 = vpop.f32.mrf.mxu0
    %v351 = vadd.f32 %v277, %v350
    %v352 = vpop.f32.mrf.mxu0
    %v353 = vadd.f32 %v277, %v352
    %354 = vmatmul.bf16.gmra.mxu0 %v311
    %v355 = vpop.f32.mrf.mxu0
    %v356 = vadd.f32 %v277, %v355
    %v357 = vpop.f32.mrf.mxu0
    %v358 = vadd.f32 %v277, %v357
    %359 = vmatmul.bf16.gmra.mxu0 %v314
    %v360 = vpop.f32.mrf.mxu0
    %v361 = vadd.f32 %v277, %v360
    %v362 = vpop.f32.mrf.mxu0
    %v363 = vadd.f32 %v277, %v362
    %364 = vdwg.mxu0
    %v365 = vmul.f32 %v326, 0.35355338
    %v366 = vmul.f32 %v328, 0.35355338
    %v367 = vmul.f32 %v331, 0.35355338
    %v368 = vmul.f32 %v333, 0.35355338
    %v369 = vmul.f32 %v336, 0.35355338
    %v370 = vmul.f32 %v338, 0.35355338
    %v371 = vmul.f32 %v341, 0.35355338
    %v372 = vmul.f32 %v343, 0.35355338
    %v373 = vmul.f32 %v346, 0.35355338
    %v374 = vmul.f32 %v348, 0.35355338
    %v375 = vmul.f32 %v351, 0.35355338
    %v376 = vmul.f32 %v353, 0.35355338
    %v377 = vmul.f32 %v356, 0.35355338
    %v378 = vmul.f32 %v358, 0.35355338
    %v379 = vmul.f32 %v361, 0.35355338
    %v380 = vmul.f32 %v363, 0.35355338
    %v381 = vld [vmem:[%s7] sm:$0xf]
    %v382 = vld [vmem:[%s7 + $0x4] sm:$0xf]
    %v383 = vld [vmem:[%s7 + $0x8] sm:$0xf]
    %v384 = vld [vmem:[%s7 + $0xc] sm:$0xf]
    %v385 = vld [vmem:[%s8] sm:$0x1]
    %v387 = vperm.slane %v385, 0
    %v393 = vunpack.c.l.b16 %v381
    %v394 = vunpack.c.l.b16 %v382
    %v395 = vunpack.c.l.b16 %v383
    %v396 = vunpack.c.l.b16 %v384
    %v397 = vpack.c.b16 %v394, %v393
    %v398 = vpack.c.b16 %v396, %v395
    %401 = vmatpush.bf16.msra.mxu0 0
    %402 = vmatpush.bf16.msra.mxu0 0
    %403 = vmatpush.bf16.msra.mxu0 0
    %404 = vmatpush.bf16.msra.mxu0 0
    %405 = vmatpush.bf16.msra.mxu0 0
    %406 = vmatpush.bf16.msra.mxu0 0
    %407 = vmatpush.bf16.msra.mxu0 %v398
    %408 = vmatpush.bf16.msra.mxu0 %v397
    %409 = vmatmul.bf16.gmra.mxu0 %v293
    %v410 = vpop.f32.mrf.mxu0
    %v411 = vadd.f32 %v387, %v410
    %v412 = vpop.f32.mrf.mxu0
    %v413 = vadd.f32 %v387, %v412
    %414 = vmatmul.bf16.gmra.mxu0 %v296
    %v415 = vpop.f32.mrf.mxu0
    %v416 = vadd.f32 %v387, %v415
    %v417 = vpop.f32.mrf.mxu0
    %v418 = vadd.f32 %v387, %v417
    %419 = vmatmul.bf16.gmra.mxu0 %v299
    %v420 = vpop.f32.mrf.mxu0
    %v421 = vadd.f32 %v387, %v420
    %v422 = vpop.f32.mrf.mxu0
    %v423 = vadd.f32 %v387, %v422
    %424 = vmatmul.bf16.gmra.mxu0 %v302
    %v425 = vpop.f32.mrf.mxu0
    %v426 = vadd.f32 %v387, %v425
    %v427 = vpop.f32.mrf.mxu0
    %v428 = vadd.f32 %v387, %v427
    %429 = vmatmul.bf16.gmra.mxu0 %v305
    %v430 = vpop.f32.mrf.mxu0
    %v431 = vadd.f32 %v387, %v430
    %v432 = vpop.f32.mrf.mxu0
    %v433 = vadd.f32 %v387, %v432
    %434 = vmatmul.bf16.gmra.mxu0 %v308
    %v435 = vpop.f32.mrf.mxu0
    %v436 = vadd.f32 %v387, %v435
    %v437 = vpop.f32.mrf.mxu0
    %v438 = vadd.f32 %v387, %v437
    %439 = vmatmul.bf16.gmra.mxu0 %v311
    %v440 = vpop.f32.mrf.mxu0
    %v441 = vadd.f32 %v387, %v440
    %v442 = vpop.f32.mrf.mxu0
    %v443 = vadd.f32 %v387, %v442
    %444 = vmatmul.bf16.gmra.mxu0 %v314
    %v445 = vpop.f32.mrf.mxu0
    %v446 = vadd.f32 %v387, %v445
    %v447 = vpop.f32.mrf.mxu0
    %v448 = vadd.f32 %v387, %v447
    %449 = vdwg.mxu0
    %v450 = vld [vmem:[%s9] sm:$0xf]
    %v451 = vld [vmem:[%s9 + $0x4] sm:$0xf]
    %v452 = vld [vmem:[%s9 + $0x8] sm:$0xf]
    %v453 = vld [vmem:[%s9 + $0xc] sm:$0xf]
    %v454 = vld [vmem:[%s10] sm:$0x1]
    %v456 = vperm.slane %v454, 0
    %v462 = vunpack.c.l.b16 %v450
    %v463 = vunpack.c.l.b16 %v451
    %v464 = vunpack.c.l.b16 %v452
    %v465 = vunpack.c.l.b16 %v453
    %v466 = vpack.c.b16 %v463, %v462
    %v467 = vpack.c.b16 %v465, %v464
    %470 = vmatpush.bf16.msra.mxu0 0
    %471 = vmatpush.bf16.msra.mxu0 0
    %472 = vmatpush.bf16.msra.mxu0 0
    %473 = vmatpush.bf16.msra.mxu0 0
    %474 = vmatpush.bf16.msra.mxu0 0
    %475 = vmatpush.bf16.msra.mxu0 0
    %476 = vmatpush.bf16.msra.mxu0 %v467
    %477 = vmatpush.bf16.msra.mxu0 %v466
    %478 = vmatmul.bf16.gmra.mxu0 %v293
    %v479 = vpop.f32.mrf.mxu0
    %v480 = vadd.f32 %v456, %v479
    %v481 = vpop.f32.mrf.mxu0
    %v482 = vadd.f32 %v456, %v481
    %483 = vmatmul.bf16.gmra.mxu0 %v296
    %v484 = vpop.f32.mrf.mxu0
    %v485 = vadd.f32 %v456, %v484
    %v486 = vpop.f32.mrf.mxu0
    %v487 = vadd.f32 %v456, %v486
    %488 = vmatmul.bf16.gmra.mxu0 %v299
    %v489 = vpop.f32.mrf.mxu0
    %v490 = vadd.f32 %v456, %v489
    %v491 = vpop.f32.mrf.mxu0
    %v492 = vadd.f32 %v456, %v491
    %493 = vmatmul.bf16.gmra.mxu0 %v302
    %v494 = vpop.f32.mrf.mxu0
    %v495 = vadd.f32 %v456, %v494
    %v496 = vpop.f32.mrf.mxu0
    %v497 = vadd.f32 %v456, %v496
    %498 = vmatmul.bf16.gmra.mxu0 %v305
    %v499 = vpop.f32.mrf.mxu0
    %v500 = vadd.f32 %v456, %v499
    %v501 = vpop.f32.mrf.mxu0
    %v502 = vadd.f32 %v456, %v501
    %503 = vmatmul.bf16.gmra.mxu0 %v308
    %v504 = vpop.f32.mrf.mxu0
    %v505 = vadd.f32 %v456, %v504
    %v506 = vpop.f32.mrf.mxu0
    %v507 = vadd.f32 %v456, %v506
    %508 = vmatmul.bf16.gmra.mxu0 %v311
    %v509 = vpop.f32.mrf.mxu0
    %v510 = vadd.f32 %v456, %v509
    %v511 = vpop.f32.mrf.mxu0
    %v512 = vadd.f32 %v456, %v511
    %513 = vmatmul.bf16.gmra.mxu0 %v314
    %v514 = vpop.f32.mrf.mxu0
    %v515 = vadd.f32 %v456, %v514
    %v516 = vpop.f32.mrf.mxu0
    %v517 = vadd.f32 %v456, %v516
    %518 = vdwg.mxu0
    %v523 = vperm.slane %v259, 0
    %v524 = vperm.slane %v260, 0
    %v525 = vperm.slane %v261, 0
    %v526 = vperm.slane %v262, 0
    %v531 = vmul.f32 %v365, %v523
    %v532 = vmul.f32 %v366, %v523
    %v533 = vmul.f32 %v367, %v523
    %v534 = vmul.f32 %v368, %v523
    %v535 = vmul.f32 %v369, %v523
    %v536 = vmul.f32 %v370, %v523
    %v537 = vmul.f32 %v371, %v523
    %v538 = vmul.f32 %v372, %v523
    %v539 = vmul.f32 %v365, %v524
    %v540 = vmul.f32 %v366, %v524
    %v541 = vmul.f32 %v367, %v524
    %v542 = vmul.f32 %v368, %v524
    %v543 = vmul.f32 %v369, %v524
    %v544 = vmul.f32 %v370, %v524
    %v545 = vmul.f32 %v371, %v524
    %v546 = vmul.f32 %v372, %v524
    %v547 = vmul.f32 %v365, %v525
    %v548 = vmul.f32 %v366, %v525
    %v549 = vmul.f32 %v367, %v525
    %v550 = vmul.f32 %v368, %v525
    %v551 = vmul.f32 %v369, %v525
    %v552 = vmul.f32 %v370, %v525
    %v553 = vmul.f32 %v371, %v525
    %v554 = vmul.f32 %v372, %v525
    %v555 = vmul.f32 %v365, %v526
    %v556 = vmul.f32 %v366, %v526
    %v557 = vmul.f32 %v367, %v526
    %v558 = vmul.f32 %v368, %v526
    %v559 = vmul.f32 %v369, %v526
    %v560 = vmul.f32 %v370, %v526
    %v561 = vmul.f32 %v371, %v526
    %v562 = vmul.f32 %v372, %v526
    %v563 = vpack.c.bf16 %v531, %v531
    %v564 = vpack.c.bf16 %v532, %v532
    %v565 = vpack.c.bf16 %v533, %v533
    %v566 = vpack.c.bf16 %v534, %v534
    %v567 = vpack.c.bf16 %v535, %v535
    %v568 = vpack.c.bf16 %v536, %v536
    %v569 = vpack.c.bf16 %v537, %v537
    %v570 = vpack.c.bf16 %v538, %v538
    %v571 = vpack.c.bf16 %v539, %v539
    %v572 = vpack.c.bf16 %v540, %v540
    %v573 = vpack.c.bf16 %v541, %v541
    %v574 = vpack.c.bf16 %v542, %v542
    %v575 = vpack.c.bf16 %v543, %v543
    %v576 = vpack.c.bf16 %v544, %v544
    %v577 = vpack.c.bf16 %v545, %v545
    %v578 = vpack.c.bf16 %v546, %v546
    %v579 = vpack.c.bf16 %v547, %v547
    %v580 = vpack.c.bf16 %v548, %v548
    %v581 = vpack.c.bf16 %v549, %v549
    %v582 = vpack.c.bf16 %v550, %v550
    %v583 = vpack.c.bf16 %v551, %v551
    %v584 = vpack.c.bf16 %v552, %v552
    %v585 = vpack.c.bf16 %v553, %v553
    %v586 = vpack.c.bf16 %v554, %v554
    %v587 = vpack.c.bf16 %v555, %v555
    %v588 = vpack.c.bf16 %v556, %v556
    %v589 = vpack.c.bf16 %v557, %v557
    %v590 = vpack.c.bf16 %v558, %v558
    %v591 = vpack.c.bf16 %v559, %v559
    %v592 = vpack.c.bf16 %v560, %v560
    %v593 = vpack.c.bf16 %v561, %v561
    %v594 = vpack.c.bf16 %v562, %v562
    %v595 = vpack.c.bf16 %v411, %v411
    %v596 = vpack.c.bf16 %v413, %v413
    %v597 = vpack.c.bf16 %v416, %v416
    %v598 = vpack.c.bf16 %v418, %v418
    %v599 = vpack.c.bf16 %v421, %v421
    %v600 = vpack.c.bf16 %v423, %v423
    %v601 = vpack.c.bf16 %v426, %v426
    %v602 = vpack.c.bf16 %v428, %v428
    %v603 = vpack.c.bf16 %v480, %v480
    %v604 = vpack.c.bf16 %v482, %v482
    %v605 = vpack.c.bf16 %v485, %v485
    %v606 = vpack.c.bf16 %v487, %v487
    %v607 = vpack.c.bf16 %v490, %v490
    %v608 = vpack.c.bf16 %v492, %v492
    %v609 = vpack.c.bf16 %v495, %v495
    %v610 = vpack.c.bf16 %v497, %v497
    %v619 = vunpack.c.l.b16 %v563
    %v620 = vunpack.c.l.b16 %v564
    %v621 = vunpack.c.l.b16 %v565
    %v622 = vunpack.c.l.b16 %v566
    %v623 = vunpack.c.l.b16 %v567
    %v624 = vunpack.c.l.b16 %v568
    %v625 = vunpack.c.l.b16 %v569
    %v626 = vunpack.c.l.b16 %v570
    %v627 = vpack.c.b16 %v620, %v619
    %v628 = vpack.c.b16 %v622, %v621
    %v629 = vpack.c.b16 %v624, %v623
    %v630 = vpack.c.b16 %v626, %v625
    %v639 = vunpack.c.l.b16 %v595
    %v640 = vunpack.c.l.b16 %v596
    %v641 = vunpack.c.l.b16 %v597
    %v642 = vunpack.c.l.b16 %v598
    %v643 = vunpack.c.l.b16 %v599
    %v644 = vunpack.c.l.b16 %v600
    %v645 = vunpack.c.l.b16 %v601
    %v646 = vunpack.c.l.b16 %v602
    %v647 = vpack.c.b16 %v640, %v639
    %v648 = vpack.c.b16 %v642, %v641
    %v649 = vpack.c.b16 %v644, %v643
    %v650 = vpack.c.b16 %v646, %v645
    %v652 = vsel %vm291, %v627, 0
    %v655 = vsel %vm291, %v628, 0
    %v658 = vsel %vm291, %v629, 0
    %v661 = vsel %vm291, %v630, 0
    %v664 = vsel %vm291, %v647, 0
    %v667 = vsel %vm291, %v648, 0
    %v670 = vsel %vm291, %v649, 0
    %v673 = vsel %vm291, %v650, 0
    %675 = vmatpush.bf16.xpose.msra.mxu0 0
    %676 = vmatpush.bf16.xpose.msra.mxu0 0
    %677 = vmatpush.bf16.xpose.msra.mxu0 0
    %678 = vmatpush.bf16.xpose.msra.mxu0 0
    %679 = vmatpush.bf16.xpose.msra.mxu0 %v673
    %680 = vmatpush.bf16.xpose.msra.mxu0 %v670
    %681 = vmatpush.bf16.xpose.msra.mxu0 %v667
    %682 = vmatpush.bf16.xpose.msra.mxu0 %v664
    %683 = vmatmul.bf16.gmra.mxu0 %v652
    %v684 = vpop.f32.mrf.mxu0
    %v685 = vadd.f32 0.0, %v684
    %v686 = vpop.f32.mrf.mxu0
    %v687 = vadd.f32 0.0, %v686
    %688 = vmatmul.bf16.gmra.mxu0 %v655
    %v689 = vpop.f32.mrf.mxu0
    %v690 = vadd.f32 0.0, %v689
    %v691 = vpop.f32.mrf.mxu0
    %v692 = vadd.f32 0.0, %v691
    %693 = vmatmul.bf16.gmra.mxu0 %v658
    %v694 = vpop.f32.mrf.mxu0
    %v695 = vadd.f32 0.0, %v694
    %v696 = vpop.f32.mrf.mxu0
    %v697 = vadd.f32 0.0, %v696
    %698 = vmatmul.bf16.gmra.mxu0 %v661
    %v699 = vpop.f32.mrf.mxu0
    %v700 = vadd.f32 0.0, %v699
    %v701 = vpop.f32.mrf.mxu0
    %v702 = vadd.f32 0.0, %v701
    %703 = vdwg.mxu0
    %v712 = vunpack.c.l.b16 %v571
    %v713 = vunpack.c.l.b16 %v572
    %v714 = vunpack.c.l.b16 %v573
    %v715 = vunpack.c.l.b16 %v574
    %v716 = vunpack.c.l.b16 %v575
    %v717 = vunpack.c.l.b16 %v576
    %v718 = vunpack.c.l.b16 %v577
    %v719 = vunpack.c.l.b16 %v578
    %v720 = vpack.c.b16 %v713, %v712
    %v721 = vpack.c.b16 %v715, %v714
    %v722 = vpack.c.b16 %v717, %v716
    %v723 = vpack.c.b16 %v719, %v718
    %v725 = vsel %vm291, %v720, 0
    %v728 = vsel %vm291, %v721, 0
    %v731 = vsel %vm291, %v722, 0
    %v734 = vsel %vm291, %v723, 0
    %736 = vmatpush.bf16.xpose.msra.mxu0 0
    %737 = vmatpush.bf16.xpose.msra.mxu0 0
    %738 = vmatpush.bf16.xpose.msra.mxu0 0
    %739 = vmatpush.bf16.xpose.msra.mxu0 0
    %740 = vmatpush.bf16.xpose.msra.mxu0 %v673
    %741 = vmatpush.bf16.xpose.msra.mxu0 %v670
    %742 = vmatpush.bf16.xpose.msra.mxu0 %v667
    %743 = vmatpush.bf16.xpose.msra.mxu0 %v664
    %744 = vmatmul.bf16.gmra.mxu0 %v725
    %v745 = vpop.f32.mrf.mxu0
    %v746 = vadd.f32 0.0, %v745
    %v747 = vpop.f32.mrf.mxu0
    %v748 = vadd.f32 0.0, %v747
    %749 = vmatmul.bf16.gmra.mxu0 %v728
    %v750 = vpop.f32.mrf.mxu0
    %v751 = vadd.f32 0.0, %v750
    %v752 = vpop.f32.mrf.mxu0
    %v753 = vadd.f32 0.0, %v752
    %754 = vmatmul.bf16.gmra.mxu0 %v731
    %v755 = vpop.f32.mrf.mxu0
    %v756 = vadd.f32 0.0, %v755
    %v757 = vpop.f32.mrf.mxu0
    %v758 = vadd.f32 0.0, %v757
    %759 = vmatmul.bf16.gmra.mxu0 %v734
    %v760 = vpop.f32.mrf.mxu0
    %v761 = vadd.f32 0.0, %v760
    %v762 = vpop.f32.mrf.mxu0
    %v763 = vadd.f32 0.0, %v762
    %764 = vdwg.mxu0
    %v773 = vunpack.c.l.b16 %v579
    %v774 = vunpack.c.l.b16 %v580
    %v775 = vunpack.c.l.b16 %v581
    %v776 = vunpack.c.l.b16 %v582
    %v777 = vunpack.c.l.b16 %v583
    %v778 = vunpack.c.l.b16 %v584
    %v779 = vunpack.c.l.b16 %v585
    %v780 = vunpack.c.l.b16 %v586
    %v781 = vpack.c.b16 %v774, %v773
    %v782 = vpack.c.b16 %v776, %v775
    %v783 = vpack.c.b16 %v778, %v777
    %v784 = vpack.c.b16 %v780, %v779
    %v786 = vsel %vm291, %v781, 0
    %v789 = vsel %vm291, %v782, 0
    %v792 = vsel %vm291, %v783, 0
    %v795 = vsel %vm291, %v784, 0
    %797 = vmatpush.bf16.xpose.msra.mxu0 0
    %798 = vmatpush.bf16.xpose.msra.mxu0 0
    %799 = vmatpush.bf16.xpose.msra.mxu0 0
    %800 = vmatpush.bf16.xpose.msra.mxu0 0
    %801 = vmatpush.bf16.xpose.msra.mxu0 %v673
    %802 = vmatpush.bf16.xpose.msra.mxu0 %v670
    %803 = vmatpush.bf16.xpose.msra.mxu0 %v667
    %804 = vmatpush.bf16.xpose.msra.mxu0 %v664
    %805 = vmatmul.bf16.gmra.mxu0 %v786
    %v806 = vpop.f32.mrf.mxu0
    %v807 = vadd.f32 0.0, %v806
    %v808 = vpop.f32.mrf.mxu0
    %v809 = vadd.f32 0.0, %v808
    %810 = vmatmul.bf16.gmra.mxu0 %v789
    %v811 = vpop.f32.mrf.mxu0
    %v812 = vadd.f32 0.0, %v811
    %v813 = vpop.f32.mrf.mxu0
    %v814 = vadd.f32 0.0, %v813
    %815 = vmatmul.bf16.gmra.mxu0 %v792
    %v816 = vpop.f32.mrf.mxu0
    %v817 = vadd.f32 0.0, %v816
    %v818 = vpop.f32.mrf.mxu0
    %v819 = vadd.f32 0.0, %v818
    %820 = vmatmul.bf16.gmra.mxu0 %v795
    %v821 = vpop.f32.mrf.mxu0
    %v822 = vadd.f32 0.0, %v821
    %v823 = vpop.f32.mrf.mxu0
    %v824 = vadd.f32 0.0, %v823
    %825 = vdwg.mxu0
    %v834 = vunpack.c.l.b16 %v587
    %v835 = vunpack.c.l.b16 %v588
    %v836 = vunpack.c.l.b16 %v589
    %v837 = vunpack.c.l.b16 %v590
    %v838 = vunpack.c.l.b16 %v591
    %v839 = vunpack.c.l.b16 %v592
    %v840 = vunpack.c.l.b16 %v593
    %v841 = vunpack.c.l.b16 %v594
    %v842 = vpack.c.b16 %v835, %v834
    %v843 = vpack.c.b16 %v837, %v836
    %v844 = vpack.c.b16 %v839, %v838
    %v845 = vpack.c.b16 %v841, %v840
    %v847 = vsel %vm291, %v842, 0
    %v850 = vsel %vm291, %v843, 0
    %v853 = vsel %vm291, %v844, 0
    %v856 = vsel %vm291, %v845, 0
    %858 = vmatpush.bf16.xpose.msra.mxu0 0
    %859 = vmatpush.bf16.xpose.msra.mxu0 0
    %860 = vmatpush.bf16.xpose.msra.mxu0 0
    %861 = vmatpush.bf16.xpose.msra.mxu0 0
    %862 = vmatpush.bf16.xpose.msra.mxu0 %v673
    %863 = vmatpush.bf16.xpose.msra.mxu0 %v670
    %864 = vmatpush.bf16.xpose.msra.mxu0 %v667
    %865 = vmatpush.bf16.xpose.msra.mxu0 %v664
    %866 = vmatmul.bf16.gmra.mxu0 %v847
    %v867 = vpop.f32.mrf.mxu0
    %v868 = vadd.f32 0.0, %v867
    %v869 = vpop.f32.mrf.mxu0
    %v870 = vadd.f32 0.0, %v869
    %871 = vmatmul.bf16.gmra.mxu0 %v850
    %v872 = vpop.f32.mrf.mxu0
    %v873 = vadd.f32 0.0, %v872
    %v874 = vpop.f32.mrf.mxu0
    %v875 = vadd.f32 0.0, %v874
    %876 = vmatmul.bf16.gmra.mxu0 %v853
    %v877 = vpop.f32.mrf.mxu0
    %v878 = vadd.f32 0.0, %v877
    %v879 = vpop.f32.mrf.mxu0
    %v880 = vadd.f32 0.0, %v879
    %881 = vmatmul.bf16.gmra.mxu0 %v856
    %v882 = vpop.f32.mrf.mxu0
    %v883 = vadd.f32 0.0, %v882
    %v884 = vpop.f32.mrf.mxu0
    %v885 = vadd.f32 0.0, %v884
    %886 = vdwg.mxu0
    %vm887 = vcmask 523264
    %v888 = vsel %vm887, %v685, -inf
    %889 = vmax.xlane.f32.xlu0 %v888
    %v890 = vpop.xlane.xlu0 %889
    %v891 = vsel %vm887, %v687, -inf
    %892 = vmax.xlane.f32.xlu0 %v891
    %v893 = vpop.xlane.xlu0 %892
    %v894 = vsel %vm887, %v690, -inf
    %895 = vmax.xlane.f32.xlu0 %v894
    %v896 = vpop.xlane.xlu0 %895
    %v897 = vsel %vm887, %v692, -inf
    %898 = vmax.xlane.f32.xlu0 %v897
    %v899 = vpop.xlane.xlu0 %898
    %v900 = vsel %vm887, %v695, -inf
    %901 = vmax.xlane.f32.xlu0 %v900
    %v902 = vpop.xlane.xlu0 %901
    %v903 = vsel %vm887, %v697, -inf
    %904 = vmax.xlane.f32.xlu0 %v903
    %v905 = vpop.xlane.xlu0 %904
    %v906 = vsel %vm887, %v700, -inf
    %907 = vmax.xlane.f32.xlu0 %v906
    %v908 = vpop.xlane.xlu0 %907
    %v909 = vsel %vm887, %v702, -inf
    %910 = vmax.xlane.f32.xlu0 %v909
    %v911 = vpop.xlane.xlu0 %910
    %v912 = vsel %vm887, %v746, -inf
    %913 = vmax.xlane.f32.xlu0 %v912
    %v914 = vpop.xlane.xlu0 %913
    %v915 = vsel %vm887, %v748, -inf
    %916 = vmax.xlane.f32.xlu0 %v915
    %v917 = vpop.xlane.xlu0 %916
    %v918 = vsel %vm887, %v751, -inf
    %919 = vmax.xlane.f32.xlu0 %v918
    %v920 = vpop.xlane.xlu0 %919
    %v921 = vsel %vm887, %v753, -inf
    %922 = vmax.xlane.f32.xlu0 %v921
    %v923 = vpop.xlane.xlu0 %922
    %v924 = vsel %vm887, %v756, -inf
    %925 = vmax.xlane.f32.xlu0 %v924
    %v926 = vpop.xlane.xlu0 %925
    %v927 = vsel %vm887, %v758, -inf
    %928 = vmax.xlane.f32.xlu0 %v927
    %v929 = vpop.xlane.xlu0 %928
    %v930 = vsel %vm887, %v761, -inf
    %931 = vmax.xlane.f32.xlu0 %v930
    %v932 = vpop.xlane.xlu0 %931
    %v933 = vsel %vm887, %v763, -inf
    %934 = vmax.xlane.f32.xlu0 %v933
    %v935 = vpop.xlane.xlu0 %934
    %v936 = vsel %vm887, %v807, -inf
    %937 = vmax.xlane.f32.xlu0 %v936
    %v938 = vpop.xlane.xlu0 %937
    %v939 = vsel %vm887, %v809, -inf
    %940 = vmax.xlane.f32.xlu0 %v939
    %v941 = vpop.xlane.xlu0 %940
    %v942 = vsel %vm887, %v812, -inf
    %943 = vmax.xlane.f32.xlu0 %v942
    %v944 = vpop.xlane.xlu0 %943
    %v945 = vsel %vm887, %v814, -inf
    %946 = vmax.xlane.f32.xlu0 %v945
    %v947 = vpop.xlane.xlu0 %946
    %v948 = vsel %vm887, %v817, -inf
    %949 = vmax.xlane.f32.xlu0 %v948
    %v950 = vpop.xlane.xlu0 %949
    %v951 = vsel %vm887, %v819, -inf
    %952 = vmax.xlane.f32.xlu0 %v951
    %v953 = vpop.xlane.xlu0 %952
    %v954 = vsel %vm887, %v822, -inf
    %955 = vmax.xlane.f32.xlu0 %v954
    %v956 = vpop.xlane.xlu0 %955
    %v957 = vsel %vm887, %v824, -inf
    %958 = vmax.xlane.f32.xlu0 %v957
    %v959 = vpop.xlane.xlu0 %958
    %v960 = vsel %vm887, %v868, -inf
    %961 = vmax.xlane.f32.xlu0 %v960
    %v962 = vpop.xlane.xlu0 %961
    %v963 = vsel %vm887, %v870, -inf
    %964 = vmax.xlane.f32.xlu0 %v963
    %v965 = vpop.xlane.xlu0 %964
    %v966 = vsel %vm887, %v873, -inf
    %967 = vmax.xlane.f32.xlu0 %v966
    %v968 = vpop.xlane.xlu0 %967
    %v969 = vsel %vm887, %v875, -inf
    %970 = vmax.xlane.f32.xlu0 %v969
    %v971 = vpop.xlane.xlu0 %970
    %v972 = vsel %vm887, %v878, -inf
    %973 = vmax.xlane.f32.xlu0 %v972
    %v974 = vpop.xlane.xlu0 %973
    %v975 = vsel %vm887, %v880, -inf
    %976 = vmax.xlane.f32.xlu0 %v975
    %v977 = vpop.xlane.xlu0 %976
    %v978 = vsel %vm887, %v883, -inf
    %979 = vmax.xlane.f32.xlu0 %v978
    %v980 = vpop.xlane.xlu0 %979
    %v981 = vsel %vm887, %v885, -inf
    %982 = vmax.xlane.f32.xlu0 %v981
    %v983 = vpop.xlane.xlu0 %982
    %v984 = vsub.f32 %v685, %v890
    %v985 = vsub.f32 %v687, %v893
    %v986 = vsub.f32 %v690, %v896
    %v987 = vsub.f32 %v692, %v899
    %v988 = vsub.f32 %v695, %v902
    %v989 = vsub.f32 %v697, %v905
    %v990 = vsub.f32 %v700, %v908
    %v991 = vsub.f32 %v702, %v911
    %v992 = vsub.f32 %v746, %v914
    %v993 = vsub.f32 %v748, %v917
    %v994 = vsub.f32 %v751, %v920
    %v995 = vsub.f32 %v753, %v923
    %v996 = vsub.f32 %v756, %v926
    %v997 = vsub.f32 %v758, %v929
    %v998 = vsub.f32 %v761, %v932
    %v999 = vsub.f32 %v763, %v935
    %v1000 = vsub.f32 %v807, %v938
    %v1001 = vsub.f32 %v809, %v941
    %v1002 = vsub.f32 %v812, %v944
    %v1003 = vsub.f32 %v814, %v947
    %v1004 = vsub.f32 %v817, %v950
    %v1005 = vsub.f32 %v819, %v953
    %v1006 = vsub.f32 %v822, %v956
    %v1007 = vsub.f32 %v824, %v959
    %v1008 = vsub.f32 %v868, %v962
    %v1009 = vsub.f32 %v870, %v965
    %v1010 = vsub.f32 %v873, %v968
    %v1011 = vsub.f32 %v875, %v971
    %v1012 = vsub.f32 %v878, %v974
    %v1013 = vsub.f32 %v880, %v977
    %v1014 = vsub.f32 %v883, %v980
    %v1015 = vsub.f32 %v885, %v983
    %v1016 = vmul.f32 %v984, 1.442695
    %v1017 = vpow.pop %v1016
    %v1018 = vmul.f32 %v985, 1.442695
    %v1019 = vpow.pop %v1018
    %v1020 = vmul.f32 %v986, 1.442695
    %v1021 = vpow.pop %v1020
    %v1022 = vmul.f32 %v987, 1.442695
    %v1023 = vpow.pop %v1022
    %v1024 = vmul.f32 %v988, 1.442695
    %v1025 = vpow.pop %v1024
    %v1026 = vmul.f32 %v989, 1.442695
    %v1027 = vpow.pop %v1026
    %v1028 = vmul.f32 %v990, 1.442695
    %v1029 = vpow.pop %v1028
    %v1030 = vmul.f32 %v991, 1.442695
    %v1031 = vpow.pop %v1030
    %v1032 = vmul.f32 %v992, 1.442695
    %v1033 = vpow.pop %v1032
    %v1034 = vmul.f32 %v993, 1.442695
    %v1035 = vpow.pop %v1034
    %v1036 = vmul.f32 %v994, 1.442695
    %v1037 = vpow.pop %v1036
    %v1038 = vmul.f32 %v995, 1.442695
    %v1039 = vpow.pop %v1038
    %v1040 = vmul.f32 %v996, 1.442695
    %v1041 = vpow.pop %v1040
    %v1042 = vmul.f32 %v997, 1.442695
    %v1043 = vpow.pop %v1042
    %v1044 = vmul.f32 %v998, 1.442695
    %v1045 = vpow.pop %v1044
    %v1046 = vmul.f32 %v999, 1.442695
    %v1047 = vpow.pop %v1046
    %v1048 = vmul.f32 %v1000, 1.442695
    %v1049 = vpow.pop %v1048
    %v1050 = vmul.f32 %v1001, 1.442695
    %v1051 = vpow.pop %v1050
    %v1052 = vmul.f32 %v1002, 1.442695
    %v1053 = vpow.pop %v1052
    %v1054 = vmul.f32 %v1003, 1.442695
    %v1055 = vpow.pop %v1054
    %v1056 = vmul.f32 %v1004, 1.442695
    %v1057 = vpow.pop %v1056
    %v1058 = vmul.f32 %v1005, 1.442695
    %v1059 = vpow.pop %v1058
    %v1060 = vmul.f32 %v1006, 1.442695
    %v1061 = vpow.pop %v1060
    %v1062 = vmul.f32 %v1007, 1.442695
    %v1063 = vpow.pop %v1062
    %v1064 = vmul.f32 %v1008, 1.442695
    %v1065 = vpow.pop %v1064
    %v1066 = vmul.f32 %v1009, 1.442695
    %v1067 = vpow.pop %v1066
    %v1068 = vmul.f32 %v1010, 1.442695
    %v1069 = vpow.pop %v1068
    %v1070 = vmul.f32 %v1011, 1.442695
    %v1071 = vpow.pop %v1070
    %v1072 = vmul.f32 %v1012, 1.442695
    %v1073 = vpow.pop %v1072
    %v1074 = vmul.f32 %v1013, 1.442695
    %v1075 = vpow.pop %v1074
    %v1076 = vmul.f32 %v1014, 1.442695
    %v1077 = vpow.pop %v1076
    %v1078 = vmul.f32 %v1015, 1.442695
    %v1079 = vpow.pop %v1078
    %v1080 = vsel %vm887, %v1017, 0.0
    %1081 = vadd.xlane.f32.xlu0 %v1080
    %v1082 = vpop.xlane.xlu0 %1081
    %v1083 = vsel %vm887, %v1019, 0.0
    %1084 = vadd.xlane.f32.xlu0 %v1083
    %v1085 = vpop.xlane.xlu0 %1084
    %v1086 = vsel %vm887, %v1021, 0.0
    %1087 = vadd.xlane.f32.xlu0 %v1086
    %v1088 = vpop.xlane.xlu0 %1087
    %v1089 = vsel %vm887, %v1023, 0.0
    %1090 = vadd.xlane.f32.xlu0 %v1089
    %v1091 = vpop.xlane.xlu0 %1090
    %v1092 = vsel %vm887, %v1025, 0.0
    %1093 = vadd.xlane.f32.xlu0 %v1092
    %v1094 = vpop.xlane.xlu0 %1093
    %v1095 = vsel %vm887, %v1027, 0.0
    %1096 = vadd.xlane.f32.xlu0 %v1095
    %v1097 = vpop.xlane.xlu0 %1096
    %v1098 = vsel %vm887, %v1029, 0.0
    %1099 = vadd.xlane.f32.xlu0 %v1098
    %v1100 = vpop.xlane.xlu0 %1099
    %v1101 = vsel %vm887, %v1031, 0.0
    %1102 = vadd.xlane.f32.xlu0 %v1101
    %v1103 = vpop.xlane.xlu0 %1102
    %v1104 = vsel %vm887, %v1033, 0.0
    %1105 = vadd.xlane.f32.xlu0 %v1104
    %v1106 = vpop.xlane.xlu0 %1105
    %v1107 = vsel %vm887, %v1035, 0.0
    %1108 = vadd.xlane.f32.xlu0 %v1107
    %v1109 = vpop.xlane.xlu0 %1108
    %v1110 = vsel %vm887, %v1037, 0.0
    %1111 = vadd.xlane.f32.xlu0 %v1110
    %v1112 = vpop.xlane.xlu0 %1111
    %v1113 = vsel %vm887, %v1039, 0.0
    %1114 = vadd.xlane.f32.xlu0 %v1113
    %v1115 = vpop.xlane.xlu0 %1114
    %v1116 = vsel %vm887, %v1041, 0.0
    %1117 = vadd.xlane.f32.xlu0 %v1116
    %v1118 = vpop.xlane.xlu0 %1117
    %v1119 = vsel %vm887, %v1043, 0.0
    %1120 = vadd.xlane.f32.xlu0 %v1119
    %v1121 = vpop.xlane.xlu0 %1120
    %v1122 = vsel %vm887, %v1045, 0.0
    %1123 = vadd.xlane.f32.xlu0 %v1122
    %v1124 = vpop.xlane.xlu0 %1123
    %v1125 = vsel %vm887, %v1047, 0.0
    %1126 = vadd.xlane.f32.xlu0 %v1125
    %v1127 = vpop.xlane.xlu0 %1126
    %v1128 = vsel %vm887, %v1049, 0.0
    %1129 = vadd.xlane.f32.xlu0 %v1128
    %v1130 = vpop.xlane.xlu0 %1129
    %v1131 = vsel %vm887, %v1051, 0.0
    %1132 = vadd.xlane.f32.xlu0 %v1131
    %v1133 = vpop.xlane.xlu0 %1132
    %v1134 = vsel %vm887, %v1053, 0.0
    %1135 = vadd.xlane.f32.xlu0 %v1134
    %v1136 = vpop.xlane.xlu0 %1135
    %v1137 = vsel %vm887, %v1055, 0.0
    %1138 = vadd.xlane.f32.xlu0 %v1137
    %v1139 = vpop.xlane.xlu0 %1138
    %v1140 = vsel %vm887, %v1057, 0.0
    %1141 = vadd.xlane.f32.xlu0 %v1140
    %v1142 = vpop.xlane.xlu0 %1141
    %v1143 = vsel %vm887, %v1059, 0.0
    %1144 = vadd.xlane.f32.xlu0 %v1143
    %v1145 = vpop.xlane.xlu0 %1144
    %v1146 = vsel %vm887, %v1061, 0.0
    %1147 = vadd.xlane.f32.xlu0 %v1146
    %v1148 = vpop.xlane.xlu0 %1147
    %v1149 = vsel %vm887, %v1063, 0.0
    %1150 = vadd.xlane.f32.xlu0 %v1149
    %v1151 = vpop.xlane.xlu0 %1150
    %v1152 = vsel %vm887, %v1065, 0.0
    %1153 = vadd.xlane.f32.xlu0 %v1152
    %v1154 = vpop.xlane.xlu0 %1153
    %v1155 = vsel %vm887, %v1067, 0.0
    %1156 = vadd.xlane.f32.xlu0 %v1155
    %v1157 = vpop.xlane.xlu0 %1156
    %v1158 = vsel %vm887, %v1069, 0.0
    %1159 = vadd.xlane.f32.xlu0 %v1158
    %v1160 = vpop.xlane.xlu0 %1159
    %v1161 = vsel %vm887, %v1071, 0.0
    %1162 = vadd.xlane.f32.xlu0 %v1161
    %v1163 = vpop.xlane.xlu0 %1162
    %v1164 = vsel %vm887, %v1073, 0.0
    %1165 = vadd.xlane.f32.xlu0 %v1164
    %v1166 = vpop.xlane.xlu0 %1165
    %v1167 = vsel %vm887, %v1075, 0.0
    %1168 = vadd.xlane.f32.xlu0 %v1167
    %v1169 = vpop.xlane.xlu0 %1168
    %v1170 = vsel %vm887, %v1077, 0.0
    %1171 = vadd.xlane.f32.xlu0 %v1170
    %v1172 = vpop.xlane.xlu0 %1171
    %v1173 = vsel %vm887, %v1079, 0.0
    %1174 = vadd.xlane.f32.xlu0 %v1173
    %v1175 = vpop.xlane.xlu0 %1174
    %v1176 = vrcp.pop %v1082
    %v1177 = vrcp.pop %v1085
    %v1178 = vrcp.pop %v1088
    %v1179 = vrcp.pop %v1091
    %v1180 = vrcp.pop %v1094
    %v1181 = vrcp.pop %v1097
    %v1182 = vrcp.pop %v1100
    %v1183 = vrcp.pop %v1103
    %v1184 = vrcp.pop %v1106
    %v1185 = vrcp.pop %v1109
    %v1186 = vrcp.pop %v1112
    %v1187 = vrcp.pop %v1115
    %v1188 = vrcp.pop %v1118
    %v1189 = vrcp.pop %v1121
    %v1190 = vrcp.pop %v1124
    %v1191 = vrcp.pop %v1127
    %v1192 = vrcp.pop %v1130
    %v1193 = vrcp.pop %v1133
    %v1194 = vrcp.pop %v1136
    %v1195 = vrcp.pop %v1139
    %v1196 = vrcp.pop %v1142
    %v1197 = vrcp.pop %v1145
    %v1198 = vrcp.pop %v1148
    %v1199 = vrcp.pop %v1151
    %v1200 = vrcp.pop %v1154
    %v1201 = vrcp.pop %v1157
    %v1202 = vrcp.pop %v1160
    %v1203 = vrcp.pop %v1163
    %v1204 = vrcp.pop %v1166
    %v1205 = vrcp.pop %v1169
    %v1206 = vrcp.pop %v1172
    %v1207 = vrcp.pop %v1175
    %v1208 = vmul.f32 %v1017, %v1176
    %v1209 = vmul.f32 %v1019, %v1177
    %v1210 = vmul.f32 %v1021, %v1178
    %v1211 = vmul.f32 %v1023, %v1179
    %v1212 = vmul.f32 %v1025, %v1180
    %v1213 = vmul.f32 %v1027, %v1181
    %v1214 = vmul.f32 %v1029, %v1182
    %v1215 = vmul.f32 %v1031, %v1183
    %v1216 = vmul.f32 %v1033, %v1184
    %v1217 = vmul.f32 %v1035, %v1185
    %v1218 = vmul.f32 %v1037, %v1186
    %v1219 = vmul.f32 %v1039, %v1187
    %v1220 = vmul.f32 %v1041, %v1188
    %v1221 = vmul.f32 %v1043, %v1189
    %v1222 = vmul.f32 %v1045, %v1190
    %v1223 = vmul.f32 %v1047, %v1191
    %v1224 = vmul.f32 %v1049, %v1192
    %v1225 = vmul.f32 %v1051, %v1193
    %v1226 = vmul.f32 %v1053, %v1194
    %v1227 = vmul.f32 %v1055, %v1195
    %v1228 = vmul.f32 %v1057, %v1196
    %v1229 = vmul.f32 %v1059, %v1197
    %v1230 = vmul.f32 %v1061, %v1198
    %v1231 = vmul.f32 %v1063, %v1199
    %v1232 = vmul.f32 %v1065, %v1200
    %v1233 = vmul.f32 %v1067, %v1201
    %v1234 = vmul.f32 %v1069, %v1202
    %v1235 = vmul.f32 %v1071, %v1203
    %v1236 = vmul.f32 %v1073, %v1204
    %v1237 = vmul.f32 %v1075, %v1205
    %v1238 = vmul.f32 %v1077, %v1206
    %v1239 = vmul.f32 %v1079, %v1207
    %v1240 = vpack.c.bf16 %v1208, %v1208
    %v1241 = vpack.c.bf16 %v1209, %v1209
    %v1242 = vpack.c.bf16 %v1210, %v1210
    %v1243 = vpack.c.bf16 %v1211, %v1211
    %v1244 = vpack.c.bf16 %v1212, %v1212
    %v1245 = vpack.c.bf16 %v1213, %v1213
    %v1246 = vpack.c.bf16 %v1214, %v1214
    %v1247 = vpack.c.bf16 %v1215, %v1215
    %v1248 = vpack.c.bf16 %v1216, %v1216
    %v1249 = vpack.c.bf16 %v1217, %v1217
    %v1250 = vpack.c.bf16 %v1218, %v1218
    %v1251 = vpack.c.bf16 %v1219, %v1219
    %v1252 = vpack.c.bf16 %v1220, %v1220
    %v1253 = vpack.c.bf16 %v1221, %v1221
    %v1254 = vpack.c.bf16 %v1222, %v1222
    %v1255 = vpack.c.bf16 %v1223, %v1223
    %v1256 = vpack.c.bf16 %v1224, %v1224
    %v1257 = vpack.c.bf16 %v1225, %v1225
    %v1258 = vpack.c.bf16 %v1226, %v1226
    %v1259 = vpack.c.bf16 %v1227, %v1227
    %v1260 = vpack.c.bf16 %v1228, %v1228
    %v1261 = vpack.c.bf16 %v1229, %v1229
    %v1262 = vpack.c.bf16 %v1230, %v1230
    %v1263 = vpack.c.bf16 %v1231, %v1231
    %v1264 = vpack.c.bf16 %v1232, %v1232
    %v1265 = vpack.c.bf16 %v1233, %v1233
    %v1266 = vpack.c.bf16 %v1234, %v1234
    %v1267 = vpack.c.bf16 %v1235, %v1235
    %v1268 = vpack.c.bf16 %v1236, %v1236
    %v1269 = vpack.c.bf16 %v1237, %v1237
    %v1270 = vpack.c.bf16 %v1238, %v1238
    %v1271 = vpack.c.bf16 %v1239, %v1239
    %v1280 = vunpack.c.l.b16 %v1240
    %v1281 = vunpack.c.l.b16 %v1241
    %v1282 = vunpack.c.l.b16 %v1242
    %v1283 = vunpack.c.l.b16 %v1243
    %v1284 = vunpack.c.l.b16 %v1244
    %v1285 = vunpack.c.l.b16 %v1245
    %v1286 = vunpack.c.l.b16 %v1246
    %v1287 = vunpack.c.l.b16 %v1247
    %v1288 = vpack.c.b16 %v1281, %v1280
    %v1289 = vpack.c.b16 %v1283, %v1282
    %v1290 = vpack.c.b16 %v1285, %v1284
    %v1291 = vpack.c.b16 %v1287, %v1286
    %v1300 = vunpack.c.l.b16 %v603
    %v1301 = vunpack.c.l.b16 %v604
    %v1302 = vunpack.c.l.b16 %v605
    %v1303 = vunpack.c.l.b16 %v606
    %v1304 = vunpack.c.l.b16 %v607
    %v1305 = vunpack.c.l.b16 %v608
    %v1306 = vunpack.c.l.b16 %v609
    %v1307 = vunpack.c.l.b16 %v610
    %v1308 = vpack.c.b16 %v1301, %v1300
    %v1309 = vpack.c.b16 %v1303, %v1302
    %v1310 = vpack.c.b16 %v1305, %v1304
    %v1311 = vpack.c.b16 %v1307, %v1306
    %v1317 = vsel %vm887, %v1288, 0
    %v1320 = vsel %vm887, %v1289, 0
    %v1323 = vsel %vm887, %v1290, 0
    %v1326 = vsel %vm887, %v1291, 0
    %1328 = vmatpush.bf16.msra.mxu0 0
    %1329 = vmatpush.bf16.msra.mxu0 0
    %1330 = vmatpush.bf16.msra.mxu0 0
    %1331 = vmatpush.bf16.msra.mxu0 0
    %1332 = vmatpush.bf16.msra.mxu0 %v1311
    %1333 = vmatpush.bf16.msra.mxu0 %v1310
    %1334 = vmatpush.bf16.msra.mxu0 %v1309
    %1335 = vmatpush.bf16.msra.mxu0 %v1308
    %1336 = vmatmul.bf16.gmra.mxu0 %v1317
    %v1337 = vpop.f32.mrf.mxu0
    %v1338 = vadd.f32 0.0, %v1337
    %v1339 = vpop.f32.mrf.mxu0
    %v1340 = vadd.f32 0.0, %v1339
    %1341 = vmatmul.bf16.gmra.mxu0 %v1320
    %v1342 = vpop.f32.mrf.mxu0
    %v1343 = vadd.f32 0.0, %v1342
    %v1344 = vpop.f32.mrf.mxu0
    %v1345 = vadd.f32 0.0, %v1344
    %1346 = vmatmul.bf16.gmra.mxu0 %v1323
    %v1347 = vpop.f32.mrf.mxu0
    %v1348 = vadd.f32 0.0, %v1347
    %v1349 = vpop.f32.mrf.mxu0
    %v1350 = vadd.f32 0.0, %v1349
    %1351 = vmatmul.bf16.gmra.mxu0 %v1326
    %v1352 = vpop.f32.mrf.mxu0
    %v1353 = vadd.f32 0.0, %v1352
    %v1354 = vpop.f32.mrf.mxu0
    %v1355 = vadd.f32 0.0, %v1354
    %1356 = vdwg.mxu0
    %v1365 = vunpack.c.l.b16 %v1248
    %v1366 = vunpack.c.l.b16 %v1249
    %v1367 = vunpack.c.l.b16 %v1250
    %v1368 = vunpack.c.l.b16 %v1251
    %v1369 = vunpack.c.l.b16 %v1252
    %v1370 = vunpack.c.l.b16 %v1253
    %v1371 = vunpack.c.l.b16 %v1254
    %v1372 = vunpack.c.l.b16 %v1255
    %v1373 = vpack.c.b16 %v1366, %v1365
    %v1374 = vpack.c.b16 %v1368, %v1367
    %v1375 = vpack.c.b16 %v1370, %v1369
    %v1376 = vpack.c.b16 %v1372, %v1371
    %v1378 = vsel %vm887, %v1373, 0
    %v1381 = vsel %vm887, %v1374, 0
    %v1384 = vsel %vm887, %v1375, 0
    %v1387 = vsel %vm887, %v1376, 0
    %1389 = vmatpush.bf16.msra.mxu0 0
    %1390 = vmatpush.bf16.msra.mxu0 0
    %1391 = vmatpush.bf16.msra.mxu0 0
    %1392 = vmatpush.bf16.msra.mxu0 0
    %1393 = vmatpush.bf16.msra.mxu0 %v1311
    %1394 = vmatpush.bf16.msra.mxu0 %v1310
    %1395 = vmatpush.bf16.msra.mxu0 %v1309
    %1396 = vmatpush.bf16.msra.mxu0 %v1308
    %1397 = vmatmul.bf16.gmra.mxu0 %v1378
    %v1398 = vpop.f32.mrf.mxu0
    %v1399 = vadd.f32 0.0, %v1398
    %v1400 = vpop.f32.mrf.mxu0
    %v1401 = vadd.f32 0.0, %v1400
    %1402 = vmatmul.bf16.gmra.mxu0 %v1381
    %v1403 = vpop.f32.mrf.mxu0
    %v1404 = vadd.f32 0.0, %v1403
    %v1405 = vpop.f32.mrf.mxu0
    %v1406 = vadd.f32 0.0, %v1405
    %1407 = vmatmul.bf16.gmra.mxu0 %v1384
    %v1408 = vpop.f32.mrf.mxu0
    %v1409 = vadd.f32 0.0, %v1408
    %v1410 = vpop.f32.mrf.mxu0
    %v1411 = vadd.f32 0.0, %v1410
    %1412 = vmatmul.bf16.gmra.mxu0 %v1387
    %v1413 = vpop.f32.mrf.mxu0
    %v1414 = vadd.f32 0.0, %v1413
    %v1415 = vpop.f32.mrf.mxu0
    %v1416 = vadd.f32 0.0, %v1415
    %1417 = vdwg.mxu0
    %v1426 = vunpack.c.l.b16 %v1256
    %v1427 = vunpack.c.l.b16 %v1257
    %v1428 = vunpack.c.l.b16 %v1258
    %v1429 = vunpack.c.l.b16 %v1259
    %v1430 = vunpack.c.l.b16 %v1260
    %v1431 = vunpack.c.l.b16 %v1261
    %v1432 = vunpack.c.l.b16 %v1262
    %v1433 = vunpack.c.l.b16 %v1263
    %v1434 = vpack.c.b16 %v1427, %v1426
    %v1435 = vpack.c.b16 %v1429, %v1428
    %v1436 = vpack.c.b16 %v1431, %v1430
    %v1437 = vpack.c.b16 %v1433, %v1432
    %v1439 = vsel %vm887, %v1434, 0
    %v1442 = vsel %vm887, %v1435, 0
    %v1445 = vsel %vm887, %v1436, 0
    %v1448 = vsel %vm887, %v1437, 0
    %1450 = vmatpush.bf16.msra.mxu0 0
    %1451 = vmatpush.bf16.msra.mxu0 0
    %1452 = vmatpush.bf16.msra.mxu0 0
    %1453 = vmatpush.bf16.msra.mxu0 0
    %1454 = vmatpush.bf16.msra.mxu0 %v1311
    %1455 = vmatpush.bf16.msra.mxu0 %v1310
    %1456 = vmatpush.bf16.msra.mxu0 %v1309
    %1457 = vmatpush.bf16.msra.mxu0 %v1308
    %1458 = vmatmul.bf16.gmra.mxu0 %v1439
    %v1459 = vpop.f32.mrf.mxu0
    %v1460 = vadd.f32 0.0, %v1459
    %v1461 = vpop.f32.mrf.mxu0
    %v1462 = vadd.f32 0.0, %v1461
    %1463 = vmatmul.bf16.gmra.mxu0 %v1442
    %v1464 = vpop.f32.mrf.mxu0
    %v1465 = vadd.f32 0.0, %v1464
    %v1466 = vpop.f32.mrf.mxu0
    %v1467 = vadd.f32 0.0, %v1466
    %1468 = vmatmul.bf16.gmra.mxu0 %v1445
    %v1469 = vpop.f32.mrf.mxu0
    %v1470 = vadd.f32 0.0, %v1469
    %v1471 = vpop.f32.mrf.mxu0
    %v1472 = vadd.f32 0.0, %v1471
    %1473 = vmatmul.bf16.gmra.mxu0 %v1448
    %v1474 = vpop.f32.mrf.mxu0
    %v1475 = vadd.f32 0.0, %v1474
    %v1476 = vpop.f32.mrf.mxu0
    %v1477 = vadd.f32 0.0, %v1476
    %1478 = vdwg.mxu0
    %v1487 = vunpack.c.l.b16 %v1264
    %v1488 = vunpack.c.l.b16 %v1265
    %v1489 = vunpack.c.l.b16 %v1266
    %v1490 = vunpack.c.l.b16 %v1267
    %v1491 = vunpack.c.l.b16 %v1268
    %v1492 = vunpack.c.l.b16 %v1269
    %v1493 = vunpack.c.l.b16 %v1270
    %v1494 = vunpack.c.l.b16 %v1271
    %v1495 = vpack.c.b16 %v1488, %v1487
    %v1496 = vpack.c.b16 %v1490, %v1489
    %v1497 = vpack.c.b16 %v1492, %v1491
    %v1498 = vpack.c.b16 %v1494, %v1493
    %v1500 = vsel %vm887, %v1495, 0
    %v1503 = vsel %vm887, %v1496, 0
    %v1506 = vsel %vm887, %v1497, 0
    %v1509 = vsel %vm887, %v1498, 0
    %1511 = vmatpush.bf16.msra.mxu0 0
    %1512 = vmatpush.bf16.msra.mxu0 0
    %1513 = vmatpush.bf16.msra.mxu0 0
    %1514 = vmatpush.bf16.msra.mxu0 0
    %1515 = vmatpush.bf16.msra.mxu0 %v1311
    %1516 = vmatpush.bf16.msra.mxu0 %v1310
    %1517 = vmatpush.bf16.msra.mxu0 %v1309
    %1518 = vmatpush.bf16.msra.mxu0 %v1308
    %1519 = vmatmul.bf16.gmra.mxu0 %v1500
    %v1520 = vpop.f32.mrf.mxu0
    %v1521 = vadd.f32 0.0, %v1520
    %v1522 = vpop.f32.mrf.mxu0
    %v1523 = vadd.f32 0.0, %v1522
    %1524 = vmatmul.bf16.gmra.mxu0 %v1503
    %v1525 = vpop.f32.mrf.mxu0
    %v1526 = vadd.f32 0.0, %v1525
    %v1527 = vpop.f32.mrf.mxu0
    %v1528 = vadd.f32 0.0, %v1527
    %1529 = vmatmul.bf16.gmra.mxu0 %v1506
    %v1530 = vpop.f32.mrf.mxu0
    %v1531 = vadd.f32 0.0, %v1530
    %v1532 = vpop.f32.mrf.mxu0
    %v1533 = vadd.f32 0.0, %v1532
    %1534 = vmatmul.bf16.gmra.mxu0 %v1509
    %v1535 = vpop.f32.mrf.mxu0
    %v1536 = vadd.f32 0.0, %v1535
    %v1537 = vpop.f32.mrf.mxu0
    %v1538 = vadd.f32 0.0, %v1537
    %1539 = vdwg.mxu0
    %v1540 = vmul.f32 %v1338, %v523
    %v1541 = vmul.f32 %v1340, %v523
    %v1542 = vmul.f32 %v1343, %v523
    %v1543 = vmul.f32 %v1345, %v523
    %v1544 = vmul.f32 %v1348, %v523
    %v1545 = vmul.f32 %v1350, %v523
    %v1546 = vmul.f32 %v1353, %v523
    %v1547 = vmul.f32 %v1355, %v523
    %v1548 = vmul.f32 %v1399, %v524
    %v1549 = vmul.f32 %v1401, %v524
    %v1550 = vmul.f32 %v1404, %v524
    %v1551 = vmul.f32 %v1406, %v524
    %v1552 = vmul.f32 %v1409, %v524
    %v1553 = vmul.f32 %v1411, %v524
    %v1554 = vmul.f32 %v1414, %v524
    %v1555 = vmul.f32 %v1416, %v524
    %v1556 = vmul.f32 %v1460, %v525
    %v1557 = vmul.f32 %v1462, %v525
    %v1558 = vmul.f32 %v1465, %v525
    %v1559 = vmul.f32 %v1467, %v525
    %v1560 = vmul.f32 %v1470, %v525
    %v1561 = vmul.f32 %v1472, %v525
    %v1562 = vmul.f32 %v1475, %v525
    %v1563 = vmul.f32 %v1477, %v525
    %v1564 = vmul.f32 %v1521, %v526
    %v1565 = vmul.f32 %v1523, %v526
    %v1566 = vmul.f32 %v1526, %v526
    %v1567 = vmul.f32 %v1528, %v526
    %v1568 = vmul.f32 %v1531, %v526
    %v1569 = vmul.f32 %v1533, %v526
    %v1570 = vmul.f32 %v1536, %v526
    %v1571 = vmul.f32 %v1538, %v526
    %v1572 = vsel %vm291, %v1540, 0.0
    %v1573 = vsel %vm291, %v1548, 0.0
    %v1574 = vadd.f32 %v1572, %v1573
    %v1575 = vsel %vm291, %v1556, 0.0
    %v1576 = vadd.f32 %v1574, %v1575
    %v1577 = vsel %vm291, %v1564, 0.0
    %v1578 = vadd.f32 %v1576, %v1577
    %v1579 = vsel %vm291, %v1541, 0.0
    %v1580 = vsel %vm291, %v1549, 0.0
    %v1581 = vadd.f32 %v1579, %v1580
    %v1582 = vsel %vm291, %v1557, 0.0
    %v1583 = vadd.f32 %v1581, %v1582
    %v1584 = vsel %vm291, %v1565, 0.0
    %v1585 = vadd.f32 %v1583, %v1584
    %v1586 = vsel %vm291, %v1542, 0.0
    %v1587 = vsel %vm291, %v1550, 0.0
    %v1588 = vadd.f32 %v1586, %v1587
    %v1589 = vsel %vm291, %v1558, 0.0
    %v1590 = vadd.f32 %v1588, %v1589
    %v1591 = vsel %vm291, %v1566, 0.0
    %v1592 = vadd.f32 %v1590, %v1591
    %v1593 = vsel %vm291, %v1543, 0.0
    %v1594 = vsel %vm291, %v1551, 0.0
    %v1595 = vadd.f32 %v1593, %v1594
    %v1596 = vsel %vm291, %v1559, 0.0
    %v1597 = vadd.f32 %v1595, %v1596
    %v1598 = vsel %vm291, %v1567, 0.0
    %v1599 = vadd.f32 %v1597, %v1598
    %v1600 = vsel %vm291, %v1544, 0.0
    %v1601 = vsel %vm291, %v1552, 0.0
    %v1602 = vadd.f32 %v1600, %v1601
    %v1603 = vsel %vm291, %v1560, 0.0
    %v1604 = vadd.f32 %v1602, %v1603
    %v1605 = vsel %vm291, %v1568, 0.0
    %v1606 = vadd.f32 %v1604, %v1605
    %v1607 = vsel %vm291, %v1545, 0.0
    %v1608 = vsel %vm291, %v1553, 0.0
    %v1609 = vadd.f32 %v1607, %v1608
    %v1610 = vsel %vm291, %v1561, 0.0
    %v1611 = vadd.f32 %v1609, %v1610
    %v1612 = vsel %vm291, %v1569, 0.0
    %v1613 = vadd.f32 %v1611, %v1612
    %v1614 = vsel %vm291, %v1546, 0.0
    %v1615 = vsel %vm291, %v1554, 0.0
    %v1616 = vadd.f32 %v1614, %v1615
    %v1617 = vsel %vm291, %v1562, 0.0
    %v1618 = vadd.f32 %v1616, %v1617
    %v1619 = vsel %vm291, %v1570, 0.0
    %v1620 = vadd.f32 %v1618, %v1619
    %v1621 = vsel %vm291, %v1547, 0.0
    %v1622 = vsel %vm291, %v1555, 0.0
    %v1623 = vadd.f32 %v1621, %v1622
    %v1624 = vsel %vm291, %v1563, 0.0
    %v1625 = vadd.f32 %v1623, %v1624
    %v1626 = vsel %vm291, %v1571, 0.0
    %v1627 = vadd.f32 %v1625, %v1626
    %v1628 = vmul.f32 %v373, %v523
    %v1629 = vmul.f32 %v374, %v523
    %v1630 = vmul.f32 %v375, %v523
    %v1631 = vmul.f32 %v376, %v523
    %v1632 = vmul.f32 %v377, %v523
    %v1633 = vmul.f32 %v378, %v523
    %v1634 = vmul.f32 %v379, %v523
    %v1635 = vmul.f32 %v380, %v523
    %v1636 = vmul.f32 %v373, %v524
    %v1637 = vmul.f32 %v374, %v524
    %v1638 = vmul.f32 %v375, %v524
    %v1639 = vmul.f32 %v376, %v524
    %v1640 = vmul.f32 %v377, %v524
    %v1641 = vmul.f32 %v378, %v524
    %v1642 = vmul.f32 %v379, %v524
    %v1643 = vmul.f32 %v380, %v524
    %v1644 = vmul.f32 %v373, %v525
    %v1645 = vmul.f32 %v374, %v525
    %v1646 = vmul.f32 %v375, %v525
    %v1647 = vmul.f32 %v376, %v525
    %v1648 = vmul.f32 %v377, %v525
    %v1649 = vmul.f32 %v378, %v525
    %v1650 = vmul.f32 %v379, %v525
    %v1651 = vmul.f32 %v380, %v525
    %v1652 = vmul.f32 %v373, %v526
    %v1653 = vmul.f32 %v374, %v526
    %v1654 = vmul.f32 %v375, %v526
    %v1655 = vmul.f32 %v376, %v526
    %v1656 = vmul.f32 %v377, %v526
    %v1657 = vmul.f32 %v378, %v526
    %v1658 = vmul.f32 %v379, %v526
    %v1659 = vmul.f32 %v380, %v526
    %v1660 = vpack.c.bf16 %v1628, %v1628
    %v1661 = vpack.c.bf16 %v1629, %v1629
    %v1662 = vpack.c.bf16 %v1630, %v1630
    %v1663 = vpack.c.bf16 %v1631, %v1631
    %v1664 = vpack.c.bf16 %v1632, %v1632
    %v1665 = vpack.c.bf16 %v1633, %v1633
    %v1666 = vpack.c.bf16 %v1634, %v1634
    %v1667 = vpack.c.bf16 %v1635, %v1635
    %v1668 = vpack.c.bf16 %v1636, %v1636
    %v1669 = vpack.c.bf16 %v1637, %v1637
    %v1670 = vpack.c.bf16 %v1638, %v1638
    %v1671 = vpack.c.bf16 %v1639, %v1639
    %v1672 = vpack.c.bf16 %v1640, %v1640
    %v1673 = vpack.c.bf16 %v1641, %v1641
    %v1674 = vpack.c.bf16 %v1642, %v1642
    %v1675 = vpack.c.bf16 %v1643, %v1643
    %v1676 = vpack.c.bf16 %v1644, %v1644
    %v1677 = vpack.c.bf16 %v1645, %v1645
    %v1678 = vpack.c.bf16 %v1646, %v1646
    %v1679 = vpack.c.bf16 %v1647, %v1647
    %v1680 = vpack.c.bf16 %v1648, %v1648
    %v1681 = vpack.c.bf16 %v1649, %v1649
    %v1682 = vpack.c.bf16 %v1650, %v1650
    %v1683 = vpack.c.bf16 %v1651, %v1651
    %v1684 = vpack.c.bf16 %v1652, %v1652
    %v1685 = vpack.c.bf16 %v1653, %v1653
    %v1686 = vpack.c.bf16 %v1654, %v1654
    %v1687 = vpack.c.bf16 %v1655, %v1655
    %v1688 = vpack.c.bf16 %v1656, %v1656
    %v1689 = vpack.c.bf16 %v1657, %v1657
    %v1690 = vpack.c.bf16 %v1658, %v1658
    %v1691 = vpack.c.bf16 %v1659, %v1659
    %v1692 = vpack.c.bf16 %v431, %v431
    %v1693 = vpack.c.bf16 %v433, %v433
    %v1694 = vpack.c.bf16 %v436, %v436
    %v1695 = vpack.c.bf16 %v438, %v438
    %v1696 = vpack.c.bf16 %v441, %v441
    %v1697 = vpack.c.bf16 %v443, %v443
    %v1698 = vpack.c.bf16 %v446, %v446
    %v1699 = vpack.c.bf16 %v448, %v448
    %v1700 = vpack.c.bf16 %v500, %v500
    %v1701 = vpack.c.bf16 %v502, %v502
    %v1702 = vpack.c.bf16 %v505, %v505
    %v1703 = vpack.c.bf16 %v507, %v507
    %v1704 = vpack.c.bf16 %v510, %v510
    %v1705 = vpack.c.bf16 %v512, %v512
    %v1706 = vpack.c.bf16 %v515, %v515
    %v1707 = vpack.c.bf16 %v517, %v517
    %v1716 = vunpack.c.l.b16 %v1660
    %v1717 = vunpack.c.l.b16 %v1661
    %v1718 = vunpack.c.l.b16 %v1662
    %v1719 = vunpack.c.l.b16 %v1663
    %v1720 = vunpack.c.l.b16 %v1664
    %v1721 = vunpack.c.l.b16 %v1665
    %v1722 = vunpack.c.l.b16 %v1666
    %v1723 = vunpack.c.l.b16 %v1667
    %v1724 = vpack.c.b16 %v1717, %v1716
    %v1725 = vpack.c.b16 %v1719, %v1718
    %v1726 = vpack.c.b16 %v1721, %v1720
    %v1727 = vpack.c.b16 %v1723, %v1722
    %v1736 = vunpack.c.l.b16 %v1692
    %v1737 = vunpack.c.l.b16 %v1693
    %v1738 = vunpack.c.l.b16 %v1694
    %v1739 = vunpack.c.l.b16 %v1695
    %v1740 = vunpack.c.l.b16 %v1696
    %v1741 = vunpack.c.l.b16 %v1697
    %v1742 = vunpack.c.l.b16 %v1698
    %v1743 = vunpack.c.l.b16 %v1699
    %v1744 = vpack.c.b16 %v1737, %v1736
    %v1745 = vpack.c.b16 %v1739, %v1738
    %v1746 = vpack.c.b16 %v1741, %v1740
    %v1747 = vpack.c.b16 %v1743, %v1742
    %v1749 = vsel %vm291, %v1724, 0
    %v1752 = vsel %vm291, %v1725, 0
    %v1755 = vsel %vm291, %v1726, 0
    %v1758 = vsel %vm291, %v1727, 0
    %v1761 = vsel %vm291, %v1744, 0
    %v1764 = vsel %vm291, %v1745, 0
    %v1767 = vsel %vm291, %v1746, 0
    %v1770 = vsel %vm291, %v1747, 0
    %1772 = vmatpush.bf16.xpose.msra.mxu0 0
    %1773 = vmatpush.bf16.xpose.msra.mxu0 0
    %1774 = vmatpush.bf16.xpose.msra.mxu0 0
    %1775 = vmatpush.bf16.xpose.msra.mxu0 0
    %1776 = vmatpush.bf16.xpose.msra.mxu0 %v1770
    %1777 = vmatpush.bf16.xpose.msra.mxu0 %v1767
    %1778 = vmatpush.bf16.xpose.msra.mxu0 %v1764
    %1779 = vmatpush.bf16.xpose.msra.mxu0 %v1761
    %1780 = vmatmul.bf16.gmra.mxu0 %v1749
    %v1781 = vpop.f32.mrf.mxu0
    %v1782 = vadd.f32 0.0, %v1781
    %v1783 = vpop.f32.mrf.mxu0
    %v1784 = vadd.f32 0.0, %v1783
    %1785 = vmatmul.bf16.gmra.mxu0 %v1752
    %v1786 = vpop.f32.mrf.mxu0
    %v1787 = vadd.f32 0.0, %v1786
    %v1788 = vpop.f32.mrf.mxu0
    %v1789 = vadd.f32 0.0, %v1788
    %1790 = vmatmul.bf16.gmra.mxu0 %v1755
    %v1791 = vpop.f32.mrf.mxu0
    %v1792 = vadd.f32 0.0, %v1791
    %v1793 = vpop.f32.mrf.mxu0
    %v1794 = vadd.f32 0.0, %v1793
    %1795 = vmatmul.bf16.gmra.mxu0 %v1758
    %v1796 = vpop.f32.mrf.mxu0
    %v1797 = vadd.f32 0.0, %v1796
    %v1798 = vpop.f32.mrf.mxu0
    %v1799 = vadd.f32 0.0, %v1798
    %1800 = vdwg.mxu0
    %v1809 = vunpack.c.l.b16 %v1668
    %v1810 = vunpack.c.l.b16 %v1669
    %v1811 = vunpack.c.l.b16 %v1670
    %v1812 = vunpack.c.l.b16 %v1671
    %v1813 = vunpack.c.l.b16 %v1672
    %v1814 = vunpack.c.l.b16 %v1673
    %v1815 = vunpack.c.l.b16 %v1674
    %v1816 = vunpack.c.l.b16 %v1675
    %v1817 = vpack.c.b16 %v1810, %v1809
    %v1818 = vpack.c.b16 %v1812, %v1811
    %v1819 = vpack.c.b16 %v1814, %v1813
    %v1820 = vpack.c.b16 %v1816, %v1815
    %v1822 = vsel %vm291, %v1817, 0
    %v1825 = vsel %vm291, %v1818, 0
    %v1828 = vsel %vm291, %v1819, 0
    %v1831 = vsel %vm291, %v1820, 0
    %1833 = vmatpush.bf16.xpose.msra.mxu0 0
    %1834 = vmatpush.bf16.xpose.msra.mxu0 0
    %1835 = vmatpush.bf16.xpose.msra.mxu0 0
    %1836 = vmatpush.bf16.xpose.msra.mxu0 0
    %1837 = vmatpush.bf16.xpose.msra.mxu0 %v1770
    %1838 = vmatpush.bf16.xpose.msra.mxu0 %v1767
    %1839 = vmatpush.bf16.xpose.msra.mxu0 %v1764
    %1840 = vmatpush.bf16.xpose.msra.mxu0 %v1761
    %1841 = vmatmul.bf16.gmra.mxu0 %v1822
    %v1842 = vpop.f32.mrf.mxu0
    %v1843 = vadd.f32 0.0, %v1842
    %v1844 = vpop.f32.mrf.mxu0
    %v1845 = vadd.f32 0.0, %v1844
    %1846 = vmatmul.bf16.gmra.mxu0 %v1825
    %v1847 = vpop.f32.mrf.mxu0
    %v1848 = vadd.f32 0.0, %v1847
    %v1849 = vpop.f32.mrf.mxu0
    %v1850 = vadd.f32 0.0, %v1849
    %1851 = vmatmul.bf16.gmra.mxu0 %v1828
    %v1852 = vpop.f32.mrf.mxu0
    %v1853 = vadd.f32 0.0, %v1852
    %v1854 = vpop.f32.mrf.mxu0
    %v1855 = vadd.f32 0.0, %v1854
    %1856 = vmatmul.bf16.gmra.mxu0 %v1831
    %v1857 = vpop.f32.mrf.mxu0
    %v1858 = vadd.f32 0.0, %v1857
    %v1859 = vpop.f32.mrf.mxu0
    %v1860 = vadd.f32 0.0, %v1859
    %1861 = vdwg.mxu0
    %v1870 = vunpack.c.l.b16 %v1676
    %v1871 = vunpack.c.l.b16 %v1677
    %v1872 = vunpack.c.l.b16 %v1678
    %v1873 = vunpack.c.l.b16 %v1679
    %v1874 = vunpack.c.l.b16 %v1680
    %v1875 = vunpack.c.l.b16 %v1681
    %v1876 = vunpack.c.l.b16 %v1682
    %v1877 = vunpack.c.l.b16 %v1683
    %v1878 = vpack.c.b16 %v1871, %v1870
    %v1879 = vpack.c.b16 %v1873, %v1872
    %v1880 = vpack.c.b16 %v1875, %v1874
    %v1881 = vpack.c.b16 %v1877, %v1876
    %v1883 = vsel %vm291, %v1878, 0
    %v1886 = vsel %vm291, %v1879, 0
    %v1889 = vsel %vm291, %v1880, 0
    %v1892 = vsel %vm291, %v1881, 0
    %1894 = vmatpush.bf16.xpose.msra.mxu0 0
    %1895 = vmatpush.bf16.xpose.msra.mxu0 0
    %1896 = vmatpush.bf16.xpose.msra.mxu0 0
    %1897 = vmatpush.bf16.xpose.msra.mxu0 0
    %1898 = vmatpush.bf16.xpose.msra.mxu0 %v1770
    %1899 = vmatpush.bf16.xpose.msra.mxu0 %v1767
    %1900 = vmatpush.bf16.xpose.msra.mxu0 %v1764
    %1901 = vmatpush.bf16.xpose.msra.mxu0 %v1761
    %1902 = vmatmul.bf16.gmra.mxu0 %v1883
    %v1903 = vpop.f32.mrf.mxu0
    %v1904 = vadd.f32 0.0, %v1903
    %v1905 = vpop.f32.mrf.mxu0
    %v1906 = vadd.f32 0.0, %v1905
    %1907 = vmatmul.bf16.gmra.mxu0 %v1886
    %v1908 = vpop.f32.mrf.mxu0
    %v1909 = vadd.f32 0.0, %v1908
    %v1910 = vpop.f32.mrf.mxu0
    %v1911 = vadd.f32 0.0, %v1910
    %1912 = vmatmul.bf16.gmra.mxu0 %v1889
    %v1913 = vpop.f32.mrf.mxu0
    %v1914 = vadd.f32 0.0, %v1913
    %v1915 = vpop.f32.mrf.mxu0
    %v1916 = vadd.f32 0.0, %v1915
    %1917 = vmatmul.bf16.gmra.mxu0 %v1892
    %v1918 = vpop.f32.mrf.mxu0
    %v1919 = vadd.f32 0.0, %v1918
    %v1920 = vpop.f32.mrf.mxu0
    %v1921 = vadd.f32 0.0, %v1920
    %1922 = vdwg.mxu0
    %v1931 = vunpack.c.l.b16 %v1684
    %v1932 = vunpack.c.l.b16 %v1685
    %v1933 = vunpack.c.l.b16 %v1686
    %v1934 = vunpack.c.l.b16 %v1687
    %v1935 = vunpack.c.l.b16 %v1688
    %v1936 = vunpack.c.l.b16 %v1689
    %v1937 = vunpack.c.l.b16 %v1690
    %v1938 = vunpack.c.l.b16 %v1691
    %v1939 = vpack.c.b16 %v1932, %v1931
    %v1940 = vpack.c.b16 %v1934, %v1933
    %v1941 = vpack.c.b16 %v1936, %v1935
    %v1942 = vpack.c.b16 %v1938, %v1937
    %v1944 = vsel %vm291, %v1939, 0
    %v1947 = vsel %vm291, %v1940, 0
    %v1950 = vsel %vm291, %v1941, 0
    %v1953 = vsel %vm291, %v1942, 0
    %1955 = vmatpush.bf16.xpose.msra.mxu0 0
    %1956 = vmatpush.bf16.xpose.msra.mxu0 0
    %1957 = vmatpush.bf16.xpose.msra.mxu0 0
    %1958 = vmatpush.bf16.xpose.msra.mxu0 0
    %1959 = vmatpush.bf16.xpose.msra.mxu0 %v1770
    %1960 = vmatpush.bf16.xpose.msra.mxu0 %v1767
    %1961 = vmatpush.bf16.xpose.msra.mxu0 %v1764
    %1962 = vmatpush.bf16.xpose.msra.mxu0 %v1761
    %1963 = vmatmul.bf16.gmra.mxu0 %v1944
    %v1964 = vpop.f32.mrf.mxu0
    %v1965 = vadd.f32 0.0, %v1964
    %v1966 = vpop.f32.mrf.mxu0
    %v1967 = vadd.f32 0.0, %v1966
    %1968 = vmatmul.bf16.gmra.mxu0 %v1947
    %v1969 = vpop.f32.mrf.mxu0
    %v1970 = vadd.f32 0.0, %v1969
    %v1971 = vpop.f32.mrf.mxu0
    %v1972 = vadd.f32 0.0, %v1971
    %1973 = vmatmul.bf16.gmra.mxu0 %v1950
    %v1974 = vpop.f32.mrf.mxu0
    %v1975 = vadd.f32 0.0, %v1974
    %v1976 = vpop.f32.mrf.mxu0
    %v1977 = vadd.f32 0.0, %v1976
    %1978 = vmatmul.bf16.gmra.mxu0 %v1953
    %v1979 = vpop.f32.mrf.mxu0
    %v1980 = vadd.f32 0.0, %v1979
    %v1981 = vpop.f32.mrf.mxu0
    %v1982 = vadd.f32 0.0, %v1981
    %1983 = vdwg.mxu0
    %v1984 = vsel %vm887, %v1782, -inf
    %1985 = vmax.xlane.f32.xlu0 %v1984
    %v1986 = vpop.xlane.xlu0 %1985
    %v1987 = vsel %vm887, %v1784, -inf
    %1988 = vmax.xlane.f32.xlu0 %v1987
    %v1989 = vpop.xlane.xlu0 %1988
    %v1990 = vsel %vm887, %v1787, -inf
    %1991 = vmax.xlane.f32.xlu0 %v1990
    %v1992 = vpop.xlane.xlu0 %1991
    %v1993 = vsel %vm887, %v1789, -inf
    %1994 = vmax.xlane.f32.xlu0 %v1993
    %v1995 = vpop.xlane.xlu0 %1994
    %v1996 = vsel %vm887, %v1792, -inf
    %1997 = vmax.xlane.f32.xlu0 %v1996
    %v1998 = vpop.xlane.xlu0 %1997
    %v1999 = vsel %vm887, %v1794, -inf
    %2000 = vmax.xlane.f32.xlu0 %v1999
    %v2001 = vpop.xlane.xlu0 %2000
    %v2002 = vsel %vm887, %v1797, -inf
    %2003 = vmax.xlane.f32.xlu0 %v2002
    %v2004 = vpop.xlane.xlu0 %2003
    %v2005 = vsel %vm887, %v1799, -inf
    %2006 = vmax.xlane.f32.xlu0 %v2005
    %v2007 = vpop.xlane.xlu0 %2006
    %v2008 = vsel %vm887, %v1843, -inf
    %2009 = vmax.xlane.f32.xlu0 %v2008
    %v2010 = vpop.xlane.xlu0 %2009
    %v2011 = vsel %vm887, %v1845, -inf
    %2012 = vmax.xlane.f32.xlu0 %v2011
    %v2013 = vpop.xlane.xlu0 %2012
    %v2014 = vsel %vm887, %v1848, -inf
    %2015 = vmax.xlane.f32.xlu0 %v2014
    %v2016 = vpop.xlane.xlu0 %2015
    %v2017 = vsel %vm887, %v1850, -inf
    %2018 = vmax.xlane.f32.xlu0 %v2017
    %v2019 = vpop.xlane.xlu0 %2018
    %v2020 = vsel %vm887, %v1853, -inf
    %2021 = vmax.xlane.f32.xlu0 %v2020
    %v2022 = vpop.xlane.xlu0 %2021
    %v2023 = vsel %vm887, %v1855, -inf
    %2024 = vmax.xlane.f32.xlu0 %v2023
    %v2025 = vpop.xlane.xlu0 %2024
    %v2026 = vsel %vm887, %v1858, -inf
    %2027 = vmax.xlane.f32.xlu0 %v2026
    %v2028 = vpop.xlane.xlu0 %2027
    %v2029 = vsel %vm887, %v1860, -inf
    %2030 = vmax.xlane.f32.xlu0 %v2029
    %v2031 = vpop.xlane.xlu0 %2030
    %v2032 = vsel %vm887, %v1904, -inf
    %2033 = vmax.xlane.f32.xlu0 %v2032
    %v2034 = vpop.xlane.xlu0 %2033
    %v2035 = vsel %vm887, %v1906, -inf
    %2036 = vmax.xlane.f32.xlu0 %v2035
    %v2037 = vpop.xlane.xlu0 %2036
    %v2038 = vsel %vm887, %v1909, -inf
    %2039 = vmax.xlane.f32.xlu0 %v2038
    %v2040 = vpop.xlane.xlu0 %2039
    %v2041 = vsel %vm887, %v1911, -inf
    %2042 = vmax.xlane.f32.xlu0 %v2041
    %v2043 = vpop.xlane.xlu0 %2042
    %v2044 = vsel %vm887, %v1914, -inf
    %2045 = vmax.xlane.f32.xlu0 %v2044
    %v2046 = vpop.xlane.xlu0 %2045
    %v2047 = vsel %vm887, %v1916, -inf
    %2048 = vmax.xlane.f32.xlu0 %v2047
    %v2049 = vpop.xlane.xlu0 %2048
    %v2050 = vsel %vm887, %v1919, -inf
    %2051 = vmax.xlane.f32.xlu0 %v2050
    %v2052 = vpop.xlane.xlu0 %2051
    %v2053 = vsel %vm887, %v1921, -inf
    %2054 = vmax.xlane.f32.xlu0 %v2053
    %v2055 = vpop.xlane.xlu0 %2054
    %v2056 = vsel %vm887, %v1965, -inf
    %2057 = vmax.xlane.f32.xlu0 %v2056
    %v2058 = vpop.xlane.xlu0 %2057
    %v2059 = vsel %vm887, %v1967, -inf
    %2060 = vmax.xlane.f32.xlu0 %v2059
    %v2061 = vpop.xlane.xlu0 %2060
    %v2062 = vsel %vm887, %v1970, -inf
    %2063 = vmax.xlane.f32.xlu0 %v2062
    %v2064 = vpop.xlane.xlu0 %2063
    %v2065 = vsel %vm887, %v1972, -inf
    %2066 = vmax.xlane.f32.xlu0 %v2065
    %v2067 = vpop.xlane.xlu0 %2066
    %v2068 = vsel %vm887, %v1975, -inf
    %2069 = vmax.xlane.f32.xlu0 %v2068
    %v2070 = vpop.xlane.xlu0 %2069
    %v2071 = vsel %vm887, %v1977, -inf
    %2072 = vmax.xlane.f32.xlu0 %v2071
    %v2073 = vpop.xlane.xlu0 %2072
    %v2074 = vsel %vm887, %v1980, -inf
    %2075 = vmax.xlane.f32.xlu0 %v2074
    %v2076 = vpop.xlane.xlu0 %2075
    %v2077 = vsel %vm887, %v1982, -inf
    %2078 = vmax.xlane.f32.xlu0 %v2077
    %v2079 = vpop.xlane.xlu0 %2078
    %v2080 = vsub.f32 %v1782, %v1986
    %v2081 = vsub.f32 %v1784, %v1989
    %v2082 = vsub.f32 %v1787, %v1992
    %v2083 = vsub.f32 %v1789, %v1995
    %v2084 = vsub.f32 %v1792, %v1998
    %v2085 = vsub.f32 %v1794, %v2001
    %v2086 = vsub.f32 %v1797, %v2004
    %v2087 = vsub.f32 %v1799, %v2007
    %v2088 = vsub.f32 %v1843, %v2010
    %v2089 = vsub.f32 %v1845, %v2013
    %v2090 = vsub.f32 %v1848, %v2016
    %v2091 = vsub.f32 %v1850, %v2019
    %v2092 = vsub.f32 %v1853, %v2022
    %v2093 = vsub.f32 %v1855, %v2025
    %v2094 = vsub.f32 %v1858, %v2028
    %v2095 = vsub.f32 %v1860, %v2031
    %v2096 = vsub.f32 %v1904, %v2034
    %v2097 = vsub.f32 %v1906, %v2037
    %v2098 = vsub.f32 %v1909, %v2040
    %v2099 = vsub.f32 %v1911, %v2043
    %v2100 = vsub.f32 %v1914, %v2046
    %v2101 = vsub.f32 %v1916, %v2049
    %v2102 = vsub.f32 %v1919, %v2052
    %v2103 = vsub.f32 %v1921, %v2055
    %v2104 = vsub.f32 %v1965, %v2058
    %v2105 = vsub.f32 %v1967, %v2061
    %v2106 = vsub.f32 %v1970, %v2064
    %v2107 = vsub.f32 %v1972, %v2067
    %v2108 = vsub.f32 %v1975, %v2070
    %v2109 = vsub.f32 %v1977, %v2073
    %v2110 = vsub.f32 %v1980, %v2076
    %v2111 = vsub.f32 %v1982, %v2079
    %v2112 = vmul.f32 %v2080, 1.442695
    %v2113 = vpow.pop %v2112
    %v2114 = vmul.f32 %v2081, 1.442695
    %v2115 = vpow.pop %v2114
    %v2116 = vmul.f32 %v2082, 1.442695
    %v2117 = vpow.pop %v2116
    %v2118 = vmul.f32 %v2083, 1.442695
    %v2119 = vpow.pop %v2118
    %v2120 = vmul.f32 %v2084, 1.442695
    %v2121 = vpow.pop %v2120
    %v2122 = vmul.f32 %v2085, 1.442695
    %v2123 = vpow.pop %v2122
    %v2124 = vmul.f32 %v2086, 1.442695
    %v2125 = vpow.pop %v2124
    %v2126 = vmul.f32 %v2087, 1.442695
    %v2127 = vpow.pop %v2126
    %v2128 = vmul.f32 %v2088, 1.442695
    %v2129 = vpow.pop %v2128
    %v2130 = vmul.f32 %v2089, 1.442695
    %v2131 = vpow.pop %v2130
    %v2132 = vmul.f32 %v2090, 1.442695
    %v2133 = vpow.pop %v2132
    %v2134 = vmul.f32 %v2091, 1.442695
    %v2135 = vpow.pop %v2134
    %v2136 = vmul.f32 %v2092, 1.442695
    %v2137 = vpow.pop %v2136
    %v2138 = vmul.f32 %v2093, 1.442695
    %v2139 = vpow.pop %v2138
    %v2140 = vmul.f32 %v2094, 1.442695
    %v2141 = vpow.pop %v2140
    %v2142 = vmul.f32 %v2095, 1.442695
    %v2143 = vpow.pop %v2142
    %v2144 = vmul.f32 %v2096, 1.442695
    %v2145 = vpow.pop %v2144
    %v2146 = vmul.f32 %v2097, 1.442695
    %v2147 = vpow.pop %v2146
    %v2148 = vmul.f32 %v2098, 1.442695
    %v2149 = vpow.pop %v2148
    %v2150 = vmul.f32 %v2099, 1.442695
    %v2151 = vpow.pop %v2150
    %v2152 = vmul.f32 %v2100, 1.442695
    %v2153 = vpow.pop %v2152
    %v2154 = vmul.f32 %v2101, 1.442695
    %v2155 = vpow.pop %v2154
    %v2156 = vmul.f32 %v2102, 1.442695
    %v2157 = vpow.pop %v2156
    %v2158 = vmul.f32 %v2103, 1.442695
    %v2159 = vpow.pop %v2158
    %v2160 = vmul.f32 %v2104, 1.442695
    %v2161 = vpow.pop %v2160
    %v2162 = vmul.f32 %v2105, 1.442695
    %v2163 = vpow.pop %v2162
    %v2164 = vmul.f32 %v2106, 1.442695
    %v2165 = vpow.pop %v2164
    %v2166 = vmul.f32 %v2107, 1.442695
    %v2167 = vpow.pop %v2166
    %v2168 = vmul.f32 %v2108, 1.442695
    %v2169 = vpow.pop %v2168
    %v2170 = vmul.f32 %v2109, 1.442695
    %v2171 = vpow.pop %v2170
    %v2172 = vmul.f32 %v2110, 1.442695
    %v2173 = vpow.pop %v2172
    %v2174 = vmul.f32 %v2111, 1.442695
    %v2175 = vpow.pop %v2174
    %v2176 = vsel %vm887, %v2113, 0.0
    %2177 = vadd.xlane.f32.xlu0 %v2176
    %v2178 = vpop.xlane.xlu0 %2177
    %v2179 = vsel %vm887, %v2115, 0.0
    %2180 = vadd.xlane.f32.xlu0 %v2179
    %v2181 = vpop.xlane.xlu0 %2180
    %v2182 = vsel %vm887, %v2117, 0.0
    %2183 = vadd.xlane.f32.xlu0 %v2182
    %v2184 = vpop.xlane.xlu0 %2183
    %v2185 = vsel %vm887, %v2119, 0.0
    %2186 = vadd.xlane.f32.xlu0 %v2185
    %v2187 = vpop.xlane.xlu0 %2186
    %v2188 = vsel %vm887, %v2121, 0.0
    %2189 = vadd.xlane.f32.xlu0 %v2188
    %v2190 = vpop.xlane.xlu0 %2189
    %v2191 = vsel %vm887, %v2123, 0.0
    %2192 = vadd.xlane.f32.xlu0 %v2191
    %v2193 = vpop.xlane.xlu0 %2192
    %v2194 = vsel %vm887, %v2125, 0.0
    %2195 = vadd.xlane.f32.xlu0 %v2194
    %v2196 = vpop.xlane.xlu0 %2195
    %v2197 = vsel %vm887, %v2127, 0.0
    %2198 = vadd.xlane.f32.xlu0 %v2197
    %v2199 = vpop.xlane.xlu0 %2198
    %v2200 = vsel %vm887, %v2129, 0.0
    %2201 = vadd.xlane.f32.xlu0 %v2200
    %v2202 = vpop.xlane.xlu0 %2201
    %v2203 = vsel %vm887, %v2131, 0.0
    %2204 = vadd.xlane.f32.xlu0 %v2203
    %v2205 = vpop.xlane.xlu0 %2204
    %v2206 = vsel %vm887, %v2133, 0.0
    %2207 = vadd.xlane.f32.xlu0 %v2206
    %v2208 = vpop.xlane.xlu0 %2207
    %v2209 = vsel %vm887, %v2135, 0.0
    %2210 = vadd.xlane.f32.xlu0 %v2209
    %v2211 = vpop.xlane.xlu0 %2210
    %v2212 = vsel %vm887, %v2137, 0.0
    %2213 = vadd.xlane.f32.xlu0 %v2212
    %v2214 = vpop.xlane.xlu0 %2213
    %v2215 = vsel %vm887, %v2139, 0.0
    %2216 = vadd.xlane.f32.xlu0 %v2215
    %v2217 = vpop.xlane.xlu0 %2216
    %v2218 = vsel %vm887, %v2141, 0.0
    %2219 = vadd.xlane.f32.xlu0 %v2218
    %v2220 = vpop.xlane.xlu0 %2219
    %v2221 = vsel %vm887, %v2143, 0.0
    %2222 = vadd.xlane.f32.xlu0 %v2221
    %v2223 = vpop.xlane.xlu0 %2222
    %v2224 = vsel %vm887, %v2145, 0.0
    %2225 = vadd.xlane.f32.xlu0 %v2224
    %v2226 = vpop.xlane.xlu0 %2225
    %v2227 = vsel %vm887, %v2147, 0.0
    %2228 = vadd.xlane.f32.xlu0 %v2227
    %v2229 = vpop.xlane.xlu0 %2228
    %v2230 = vsel %vm887, %v2149, 0.0
    %2231 = vadd.xlane.f32.xlu0 %v2230
    %v2232 = vpop.xlane.xlu0 %2231
    %v2233 = vsel %vm887, %v2151, 0.0
    %2234 = vadd.xlane.f32.xlu0 %v2233
    %v2235 = vpop.xlane.xlu0 %2234
    %v2236 = vsel %vm887, %v2153, 0.0
    %2237 = vadd.xlane.f32.xlu0 %v2236
    %v2238 = vpop.xlane.xlu0 %2237
    %v2239 = vsel %vm887, %v2155, 0.0
    %2240 = vadd.xlane.f32.xlu0 %v2239
    %v2241 = vpop.xlane.xlu0 %2240
    %v2242 = vsel %vm887, %v2157, 0.0
    %2243 = vadd.xlane.f32.xlu0 %v2242
    %v2244 = vpop.xlane.xlu0 %2243
    %v2245 = vsel %vm887, %v2159, 0.0
    %2246 = vadd.xlane.f32.xlu0 %v2245
    %v2247 = vpop.xlane.xlu0 %2246
    %v2248 = vsel %vm887, %v2161, 0.0
    %2249 = vadd.xlane.f32.xlu0 %v2248
    %v2250 = vpop.xlane.xlu0 %2249
    %v2251 = vsel %vm887, %v2163, 0.0
    %2252 = vadd.xlane.f32.xlu0 %v2251
    %v2253 = vpop.xlane.xlu0 %2252
    %v2254 = vsel %vm887, %v2165, 0.0
    %2255 = vadd.xlane.f32.xlu0 %v2254
    %v2256 = vpop.xlane.xlu0 %2255
    %v2257 = vsel %vm887, %v2167, 0.0
    %2258 = vadd.xlane.f32.xlu0 %v2257
    %v2259 = vpop.xlane.xlu0 %2258
    %v2260 = vsel %vm887, %v2169, 0.0
    %2261 = vadd.xlane.f32.xlu0 %v2260
    %v2262 = vpop.xlane.xlu0 %2261
    %v2263 = vsel %vm887, %v2171, 0.0
    %2264 = vadd.xlane.f32.xlu0 %v2263
    %v2265 = vpop.xlane.xlu0 %2264
    %v2266 = vsel %vm887, %v2173, 0.0
    %2267 = vadd.xlane.f32.xlu0 %v2266
    %v2268 = vpop.xlane.xlu0 %2267
    %v2269 = vsel %vm887, %v2175, 0.0
    %2270 = vadd.xlane.f32.xlu0 %v2269
    %v2271 = vpop.xlane.xlu0 %2270
    %v2272 = vrcp.pop %v2178
    %v2273 = vrcp.pop %v2181
    %v2274 = vrcp.pop %v2184
    %v2275 = vrcp.pop %v2187
    %v2276 = vrcp.pop %v2190
    %v2277 = vrcp.pop %v2193
    %v2278 = vrcp.pop %v2196
    %v2279 = vrcp.pop %v2199
    %v2280 = vrcp.pop %v2202
    %v2281 = vrcp.pop %v2205
    %v2282 = vrcp.pop %v2208
    %v2283 = vrcp.pop %v2211
    %v2284 = vrcp.pop %v2214
    %v2285 = vrcp.pop %v2217
    %v2286 = vrcp.pop %v2220
    %v2287 = vrcp.pop %v2223
    %v2288 = vrcp.pop %v2226
    %v2289 = vrcp.pop %v2229
    %v2290 = vrcp.pop %v2232
    %v2291 = vrcp.pop %v2235
    %v2292 = vrcp.pop %v2238
    %v2293 = vrcp.pop %v2241
    %v2294 = vrcp.pop %v2244
    %v2295 = vrcp.pop %v2247
    %v2296 = vrcp.pop %v2250
    %v2297 = vrcp.pop %v2253
    %v2298 = vrcp.pop %v2256
    %v2299 = vrcp.pop %v2259
    %v2300 = vrcp.pop %v2262
    %v2301 = vrcp.pop %v2265
    %v2302 = vrcp.pop %v2268
    %v2303 = vrcp.pop %v2271
    %v2304 = vmul.f32 %v2113, %v2272
    %v2305 = vmul.f32 %v2115, %v2273
    %v2306 = vmul.f32 %v2117, %v2274
    %v2307 = vmul.f32 %v2119, %v2275
    %v2308 = vmul.f32 %v2121, %v2276
    %v2309 = vmul.f32 %v2123, %v2277
    %v2310 = vmul.f32 %v2125, %v2278
    %v2311 = vmul.f32 %v2127, %v2279
    %v2312 = vmul.f32 %v2129, %v2280
    %v2313 = vmul.f32 %v2131, %v2281
    %v2314 = vmul.f32 %v2133, %v2282
    %v2315 = vmul.f32 %v2135, %v2283
    %v2316 = vmul.f32 %v2137, %v2284
    %v2317 = vmul.f32 %v2139, %v2285
    %v2318 = vmul.f32 %v2141, %v2286
    %v2319 = vmul.f32 %v2143, %v2287
    %v2320 = vmul.f32 %v2145, %v2288
    %v2321 = vmul.f32 %v2147, %v2289
    %v2322 = vmul.f32 %v2149, %v2290
    %v2323 = vmul.f32 %v2151, %v2291
    %v2324 = vmul.f32 %v2153, %v2292
    %v2325 = vmul.f32 %v2155, %v2293
    %v2326 = vmul.f32 %v2157, %v2294
    %v2327 = vmul.f32 %v2159, %v2295
    %v2328 = vmul.f32 %v2161, %v2296
    %v2329 = vmul.f32 %v2163, %v2297
    %v2330 = vmul.f32 %v2165, %v2298
    %v2331 = vmul.f32 %v2167, %v2299
    %v2332 = vmul.f32 %v2169, %v2300
    %v2333 = vmul.f32 %v2171, %v2301
    %v2334 = vmul.f32 %v2173, %v2302
    %v2335 = vmul.f32 %v2175, %v2303
    %v2336 = vpack.c.bf16 %v2304, %v2304
    %v2337 = vpack.c.bf16 %v2305, %v2305
    %v2338 = vpack.c.bf16 %v2306, %v2306
    %v2339 = vpack.c.bf16 %v2307, %v2307
    %v2340 = vpack.c.bf16 %v2308, %v2308
    %v2341 = vpack.c.bf16 %v2309, %v2309
    %v2342 = vpack.c.bf16 %v2310, %v2310
    %v2343 = vpack.c.bf16 %v2311, %v2311
    %v2344 = vpack.c.bf16 %v2312, %v2312
    %v2345 = vpack.c.bf16 %v2313, %v2313
    %v2346 = vpack.c.bf16 %v2314, %v2314
    %v2347 = vpack.c.bf16 %v2315, %v2315
    %v2348 = vpack.c.bf16 %v2316, %v2316
    %v2349 = vpack.c.bf16 %v2317, %v2317
    %v2350 = vpack.c.bf16 %v2318, %v2318
    %v2351 = vpack.c.bf16 %v2319, %v2319
    %v2352 = vpack.c.bf16 %v2320, %v2320
    %v2353 = vpack.c.bf16 %v2321, %v2321
    %v2354 = vpack.c.bf16 %v2322, %v2322
    %v2355 = vpack.c.bf16 %v2323, %v2323
    %v2356 = vpack.c.bf16 %v2324, %v2324
    %v2357 = vpack.c.bf16 %v2325, %v2325
    %v2358 = vpack.c.bf16 %v2326, %v2326
    %v2359 = vpack.c.bf16 %v2327, %v2327
    %v2360 = vpack.c.bf16 %v2328, %v2328
    %v2361 = vpack.c.bf16 %v2329, %v2329
    %v2362 = vpack.c.bf16 %v2330, %v2330
    %v2363 = vpack.c.bf16 %v2331, %v2331
    %v2364 = vpack.c.bf16 %v2332, %v2332
    %v2365 = vpack.c.bf16 %v2333, %v2333
    %v2366 = vpack.c.bf16 %v2334, %v2334
    %v2367 = vpack.c.bf16 %v2335, %v2335
    %v2376 = vunpack.c.l.b16 %v2336
    %v2377 = vunpack.c.l.b16 %v2337
    %v2378 = vunpack.c.l.b16 %v2338
    %v2379 = vunpack.c.l.b16 %v2339
    %v2380 = vunpack.c.l.b16 %v2340
    %v2381 = vunpack.c.l.b16 %v2341
    %v2382 = vunpack.c.l.b16 %v2342
    %v2383 = vunpack.c.l.b16 %v2343
    %v2384 = vpack.c.b16 %v2377, %v2376
    %v2385 = vpack.c.b16 %v2379, %v2378
    %v2386 = vpack.c.b16 %v2381, %v2380
    %v2387 = vpack.c.b16 %v2383, %v2382
    %v2396 = vunpack.c.l.b16 %v1700
    %v2397 = vunpack.c.l.b16 %v1701
    %v2398 = vunpack.c.l.b16 %v1702
    %v2399 = vunpack.c.l.b16 %v1703
    %v2400 = vunpack.c.l.b16 %v1704
    %v2401 = vunpack.c.l.b16 %v1705
    %v2402 = vunpack.c.l.b16 %v1706
    %v2403 = vunpack.c.l.b16 %v1707
    %v2404 = vpack.c.b16 %v2397, %v2396
    %v2405 = vpack.c.b16 %v2399, %v2398
    %v2406 = vpack.c.b16 %v2401, %v2400
    %v2407 = vpack.c.b16 %v2403, %v2402
    %v2413 = vsel %vm887, %v2384, 0
    %v2416 = vsel %vm887, %v2385, 0
    %v2419 = vsel %vm887, %v2386, 0
    %v2422 = vsel %vm887, %v2387, 0
    %2424 = vmatpush.bf16.msra.mxu0 0
    %2425 = vmatpush.bf16.msra.mxu0 0
    %2426 = vmatpush.bf16.msra.mxu0 0
    %2427 = vmatpush.bf16.msra.mxu0 0
    %2428 = vmatpush.bf16.msra.mxu0 %v2407
    %2429 = vmatpush.bf16.msra.mxu0 %v2406
    %2430 = vmatpush.bf16.msra.mxu0 %v2405
    %2431 = vmatpush.bf16.msra.mxu0 %v2404
    %2432 = vmatmul.bf16.gmra.mxu0 %v2413
    %v2433 = vpop.f32.mrf.mxu0
    %v2434 = vadd.f32 0.0, %v2433
    %v2435 = vpop.f32.mrf.mxu0
    %v2436 = vadd.f32 0.0, %v2435
    %2437 = vmatmul.bf16.gmra.mxu0 %v2416
    %v2438 = vpop.f32.mrf.mxu0
    %v2439 = vadd.f32 0.0, %v2438
    %v2440 = vpop.f32.mrf.mxu0
    %v2441 = vadd.f32 0.0, %v2440
    %2442 = vmatmul.bf16.gmra.mxu0 %v2419
    %v2443 = vpop.f32.mrf.mxu0
    %v2444 = vadd.f32 0.0, %v2443
    %v2445 = vpop.f32.mrf.mxu0
    %v2446 = vadd.f32 0.0, %v2445
    %2447 = vmatmul.bf16.gmra.mxu0 %v2422
    %v2448 = vpop.f32.mrf.mxu0
    %v2449 = vadd.f32 0.0, %v2448
    %v2450 = vpop.f32.mrf.mxu0
    %v2451 = vadd.f32 0.0, %v2450
    %2452 = vdwg.mxu0
    %v2461 = vunpack.c.l.b16 %v2344
    %v2462 = vunpack.c.l.b16 %v2345
    %v2463 = vunpack.c.l.b16 %v2346
    %v2464 = vunpack.c.l.b16 %v2347
    %v2465 = vunpack.c.l.b16 %v2348
    %v2466 = vunpack.c.l.b16 %v2349
    %v2467 = vunpack.c.l.b16 %v2350
    %v2468 = vunpack.c.l.b16 %v2351
    %v2469 = vpack.c.b16 %v2462, %v2461
    %v2470 = vpack.c.b16 %v2464, %v2463
    %v2471 = vpack.c.b16 %v2466, %v2465
    %v2472 = vpack.c.b16 %v2468, %v2467
    %v2474 = vsel %vm887, %v2469, 0
    %v2477 = vsel %vm887, %v2470, 0
    %v2480 = vsel %vm887, %v2471, 0
    %v2483 = vsel %vm887, %v2472, 0
    %2485 = vmatpush.bf16.msra.mxu0 0
    %2486 = vmatpush.bf16.msra.mxu0 0
    %2487 = vmatpush.bf16.msra.mxu0 0
    %2488 = vmatpush.bf16.msra.mxu0 0
    %2489 = vmatpush.bf16.msra.mxu0 %v2407
    %2490 = vmatpush.bf16.msra.mxu0 %v2406
    %2491 = vmatpush.bf16.msra.mxu0 %v2405
    %2492 = vmatpush.bf16.msra.mxu0 %v2404
    %2493 = vmatmul.bf16.gmra.mxu0 %v2474
    %v2494 = vpop.f32.mrf.mxu0
    %v2495 = vadd.f32 0.0, %v2494
    %v2496 = vpop.f32.mrf.mxu0
    %v2497 = vadd.f32 0.0, %v2496
    %2498 = vmatmul.bf16.gmra.mxu0 %v2477
    %v2499 = vpop.f32.mrf.mxu0
    %v2500 = vadd.f32 0.0, %v2499
    %v2501 = vpop.f32.mrf.mxu0
    %v2502 = vadd.f32 0.0, %v2501
    %2503 = vmatmul.bf16.gmra.mxu0 %v2480
    %v2504 = vpop.f32.mrf.mxu0
    %v2505 = vadd.f32 0.0, %v2504
    %v2506 = vpop.f32.mrf.mxu0
    %v2507 = vadd.f32 0.0, %v2506
    %2508 = vmatmul.bf16.gmra.mxu0 %v2483
    %v2509 = vpop.f32.mrf.mxu0
    %v2510 = vadd.f32 0.0, %v2509
    %v2511 = vpop.f32.mrf.mxu0
    %v2512 = vadd.f32 0.0, %v2511
    %2513 = vdwg.mxu0
    %v2522 = vunpack.c.l.b16 %v2352
    %v2523 = vunpack.c.l.b16 %v2353
    %v2524 = vunpack.c.l.b16 %v2354
    %v2525 = vunpack.c.l.b16 %v2355
    %v2526 = vunpack.c.l.b16 %v2356
    %v2527 = vunpack.c.l.b16 %v2357
    %v2528 = vunpack.c.l.b16 %v2358
    %v2529 = vunpack.c.l.b16 %v2359
    %v2530 = vpack.c.b16 %v2523, %v2522
    %v2531 = vpack.c.b16 %v2525, %v2524
    %v2532 = vpack.c.b16 %v2527, %v2526
    %v2533 = vpack.c.b16 %v2529, %v2528
    %v2535 = vsel %vm887, %v2530, 0
    %v2538 = vsel %vm887, %v2531, 0
    %v2541 = vsel %vm887, %v2532, 0
    %v2544 = vsel %vm887, %v2533, 0
    %2546 = vmatpush.bf16.msra.mxu0 0
    %2547 = vmatpush.bf16.msra.mxu0 0
    %2548 = vmatpush.bf16.msra.mxu0 0
    %2549 = vmatpush.bf16.msra.mxu0 0
    %2550 = vmatpush.bf16.msra.mxu0 %v2407
    %2551 = vmatpush.bf16.msra.mxu0 %v2406
    %2552 = vmatpush.bf16.msra.mxu0 %v2405
    %2553 = vmatpush.bf16.msra.mxu0 %v2404
    %2554 = vmatmul.bf16.gmra.mxu0 %v2535
    %v2555 = vpop.f32.mrf.mxu0
    %v2556 = vadd.f32 0.0, %v2555
    %v2557 = vpop.f32.mrf.mxu0
    %v2558 = vadd.f32 0.0, %v2557
    %2559 = vmatmul.bf16.gmra.mxu0 %v2538
    %v2560 = vpop.f32.mrf.mxu0
    %v2561 = vadd.f32 0.0, %v2560
    %v2562 = vpop.f32.mrf.mxu0
    %v2563 = vadd.f32 0.0, %v2562
    %2564 = vmatmul.bf16.gmra.mxu0 %v2541
    %v2565 = vpop.f32.mrf.mxu0
    %v2566 = vadd.f32 0.0, %v2565
    %v2567 = vpop.f32.mrf.mxu0
    %v2568 = vadd.f32 0.0, %v2567
    %2569 = vmatmul.bf16.gmra.mxu0 %v2544
    %v2570 = vpop.f32.mrf.mxu0
    %v2571 = vadd.f32 0.0, %v2570
    %v2572 = vpop.f32.mrf.mxu0
    %v2573 = vadd.f32 0.0, %v2572
    %2574 = vdwg.mxu0
    %v2583 = vunpack.c.l.b16 %v2360
    %v2584 = vunpack.c.l.b16 %v2361
    %v2585 = vunpack.c.l.b16 %v2362
    %v2586 = vunpack.c.l.b16 %v2363
    %v2587 = vunpack.c.l.b16 %v2364
    %v2588 = vunpack.c.l.b16 %v2365
    %v2589 = vunpack.c.l.b16 %v2366
    %v2590 = vunpack.c.l.b16 %v2367
    %v2591 = vpack.c.b16 %v2584, %v2583
    %v2592 = vpack.c.b16 %v2586, %v2585
    %v2593 = vpack.c.b16 %v2588, %v2587
    %v2594 = vpack.c.b16 %v2590, %v2589
    %v2596 = vsel %vm887, %v2591, 0
    %v2599 = vsel %vm887, %v2592, 0
    %v2602 = vsel %vm887, %v2593, 0
    %v2605 = vsel %vm887, %v2594, 0
    %2607 = vmatpush.bf16.msra.mxu0 0
    %2608 = vmatpush.bf16.msra.mxu0 0
    %2609 = vmatpush.bf16.msra.mxu0 0
    %2610 = vmatpush.bf16.msra.mxu0 0
    %2611 = vmatpush.bf16.msra.mxu0 %v2407
    %2612 = vmatpush.bf16.msra.mxu0 %v2406
    %2613 = vmatpush.bf16.msra.mxu0 %v2405
    %2614 = vmatpush.bf16.msra.mxu0 %v2404
    %2615 = vmatmul.bf16.gmra.mxu0 %v2596
    %v2616 = vpop.f32.mrf.mxu0
    %v2617 = vadd.f32 0.0, %v2616
    %v2618 = vpop.f32.mrf.mxu0
    %v2619 = vadd.f32 0.0, %v2618
    %2620 = vmatmul.bf16.gmra.mxu0 %v2599
    %v2621 = vpop.f32.mrf.mxu0
    %v2622 = vadd.f32 0.0, %v2621
    %v2623 = vpop.f32.mrf.mxu0
    %v2624 = vadd.f32 0.0, %v2623
    %2625 = vmatmul.bf16.gmra.mxu0 %v2602
    %v2626 = vpop.f32.mrf.mxu0
    %v2627 = vadd.f32 0.0, %v2626
    %v2628 = vpop.f32.mrf.mxu0
    %v2629 = vadd.f32 0.0, %v2628
    %2630 = vmatmul.bf16.gmra.mxu0 %v2605
    %v2631 = vpop.f32.mrf.mxu0
    %v2632 = vadd.f32 0.0, %v2631
    %v2633 = vpop.f32.mrf.mxu0
    %v2634 = vadd.f32 0.0, %v2633
    %2635 = vdwg.mxu0
    %v2636 = vmul.f32 %v2434, %v523
    %v2637 = vmul.f32 %v2436, %v523
    %v2638 = vmul.f32 %v2439, %v523
    %v2639 = vmul.f32 %v2441, %v523
    %v2640 = vmul.f32 %v2444, %v523
    %v2641 = vmul.f32 %v2446, %v523
    %v2642 = vmul.f32 %v2449, %v523
    %v2643 = vmul.f32 %v2451, %v523
    %v2644 = vmul.f32 %v2495, %v524
    %v2645 = vmul.f32 %v2497, %v524
    %v2646 = vmul.f32 %v2500, %v524
    %v2647 = vmul.f32 %v2502, %v524
    %v2648 = vmul.f32 %v2505, %v524
    %v2649 = vmul.f32 %v2507, %v524
    %v2650 = vmul.f32 %v2510, %v524
    %v2651 = vmul.f32 %v2512, %v524
    %v2652 = vmul.f32 %v2556, %v525
    %v2653 = vmul.f32 %v2558, %v525
    %v2654 = vmul.f32 %v2561, %v525
    %v2655 = vmul.f32 %v2563, %v525
    %v2656 = vmul.f32 %v2566, %v525
    %v2657 = vmul.f32 %v2568, %v525
    %v2658 = vmul.f32 %v2571, %v525
    %v2659 = vmul.f32 %v2573, %v525
    %v2660 = vmul.f32 %v2617, %v526
    %v2661 = vmul.f32 %v2619, %v526
    %v2662 = vmul.f32 %v2622, %v526
    %v2663 = vmul.f32 %v2624, %v526
    %v2664 = vmul.f32 %v2627, %v526
    %v2665 = vmul.f32 %v2629, %v526
    %v2666 = vmul.f32 %v2632, %v526
    %v2667 = vmul.f32 %v2634, %v526
    %v2668 = vsel %vm291, %v2636, 0.0
    %v2669 = vsel %vm291, %v2644, 0.0
    %v2670 = vadd.f32 %v2668, %v2669
    %v2671 = vsel %vm291, %v2652, 0.0
    %v2672 = vadd.f32 %v2670, %v2671
    %v2673 = vsel %vm291, %v2660, 0.0
    %v2674 = vadd.f32 %v2672, %v2673
    %v2675 = vsel %vm291, %v2637, 0.0
    %v2676 = vsel %vm291, %v2645, 0.0
    %v2677 = vadd.f32 %v2675, %v2676
    %v2678 = vsel %vm291, %v2653, 0.0
    %v2679 = vadd.f32 %v2677, %v2678
    %v2680 = vsel %vm291, %v2661, 0.0
    %v2681 = vadd.f32 %v2679, %v2680
    %v2682 = vsel %vm291, %v2638, 0.0
    %v2683 = vsel %vm291, %v2646, 0.0
    %v2684 = vadd.f32 %v2682, %v2683
    %v2685 = vsel %vm291, %v2654, 0.0
    %v2686 = vadd.f32 %v2684, %v2685
    %v2687 = vsel %vm291, %v2662, 0.0
    %v2688 = vadd.f32 %v2686, %v2687
    %v2689 = vsel %vm291, %v2639, 0.0
    %v2690 = vsel %vm291, %v2647, 0.0
    %v2691 = vadd.f32 %v2689, %v2690
    %v2692 = vsel %vm291, %v2655, 0.0
    %v2693 = vadd.f32 %v2691, %v2692
    %v2694 = vsel %vm291, %v2663, 0.0
    %v2695 = vadd.f32 %v2693, %v2694
    %v2696 = vsel %vm291, %v2640, 0.0
    %v2697 = vsel %vm291, %v2648, 0.0
    %v2698 = vadd.f32 %v2696, %v2697
    %v2699 = vsel %vm291, %v2656, 0.0
    %v2700 = vadd.f32 %v2698, %v2699
    %v2701 = vsel %vm291, %v2664, 0.0
    %v2702 = vadd.f32 %v2700, %v2701
    %v2703 = vsel %vm291, %v2641, 0.0
    %v2704 = vsel %vm291, %v2649, 0.0
    %v2705 = vadd.f32 %v2703, %v2704
    %v2706 = vsel %vm291, %v2657, 0.0
    %v2707 = vadd.f32 %v2705, %v2706
    %v2708 = vsel %vm291, %v2665, 0.0
    %v2709 = vadd.f32 %v2707, %v2708
    %v2710 = vsel %vm291, %v2642, 0.0
    %v2711 = vsel %vm291, %v2650, 0.0
    %v2712 = vadd.f32 %v2710, %v2711
    %v2713 = vsel %vm291, %v2658, 0.0
    %v2714 = vadd.f32 %v2712, %v2713
    %v2715 = vsel %vm291, %v2666, 0.0
    %v2716 = vadd.f32 %v2714, %v2715
    %v2717 = vsel %vm291, %v2643, 0.0
    %v2718 = vsel %vm291, %v2651, 0.0
    %v2719 = vadd.f32 %v2717, %v2718
    %v2720 = vsel %vm291, %v2659, 0.0
    %v2721 = vadd.f32 %v2719, %v2720
    %v2722 = vsel %vm291, %v2667, 0.0
    %v2723 = vadd.f32 %v2721, %v2722
    %v2724 = vpack.c.bf16 %v1585, %v1578
    %v2725 = vpack.c.bf16 %v1599, %v1592
    %v2726 = vpack.c.bf16 %v1613, %v1606
    %v2727 = vpack.c.bf16 %v1627, %v1620
    %v2728 = vpack.c.bf16 %v2681, %v2674
    %v2729 = vpack.c.bf16 %v2695, %v2688
    %v2730 = vpack.c.bf16 %v2709, %v2702
    %v2731 = vpack.c.bf16 %v2723, %v2716
    %v2732 = vld [vmem:[%s11] sm:$0xf]
    %v2733 = vld [vmem:[%s11 + $0x4] sm:$0xf]
    %v2734 = vld [vmem:[%s11 + $0x8] sm:$0xf]
    %v2735 = vld [vmem:[%s11 + $0xc] sm:$0xf]
    %v2736 = vld [vmem:[%s12] sm:$0x1]
    %v2738 = vperm.slane %v2736, 0
    %v2744 = vunpack.c.l.b16 %v2732
    %v2745 = vunpack.c.l.b16 %v2733
    %v2746 = vunpack.c.l.b16 %v2734
    %v2747 = vunpack.c.l.b16 %v2735
    %v2748 = vpack.c.b16 %v2745, %v2744
    %v2749 = vpack.c.b16 %v2747, %v2746
    %v2753 = vsel %vm291, %v2724, 0
    %v2756 = vsel %vm291, %v2725, 0
    %v2759 = vsel %vm291, %v2726, 0
    %v2762 = vsel %vm291, %v2727, 0
    %v2765 = vsel %vm291, %v2728, 0
    %v2768 = vsel %vm291, %v2729, 0
    %v2771 = vsel %vm291, %v2730, 0
    %v2774 = vsel %vm291, %v2731, 0
    %2776 = vmatpush.bf16.msra.mxu0 0
    %2777 = vmatpush.bf16.msra.mxu0 0
    %2778 = vmatpush.bf16.msra.mxu0 0
    %2779 = vmatpush.bf16.msra.mxu0 0
    %2780 = vmatpush.bf16.msra.mxu0 0
    %2781 = vmatpush.bf16.msra.mxu0 0
    %2782 = vmatpush.bf16.msra.mxu0 %v2749
    %2783 = vmatpush.bf16.msra.mxu0 %v2748
    %2784 = vmatmul.bf16.gmra.mxu0 %v2753
    %v2785 = vpop.f32.mrf.mxu0
    %v2786 = vadd.f32 %v2738, %v2785
    %v2787 = vpop.f32.mrf.mxu0
    %v2788 = vadd.f32 %v2738, %v2787
    %2789 = vmatmul.bf16.gmra.mxu0 %v2756
    %v2790 = vpop.f32.mrf.mxu0
    %v2791 = vadd.f32 %v2738, %v2790
    %v2792 = vpop.f32.mrf.mxu0
    %v2793 = vadd.f32 %v2738, %v2792
    %2794 = vmatmul.bf16.gmra.mxu0 %v2759
    %v2795 = vpop.f32.mrf.mxu0
    %v2796 = vadd.f32 %v2738, %v2795
    %v2797 = vpop.f32.mrf.mxu0
    %v2798 = vadd.f32 %v2738, %v2797
    %2799 = vmatmul.bf16.gmra.mxu0 %v2762
    %v2800 = vpop.f32.mrf.mxu0
    %v2801 = vadd.f32 %v2738, %v2800
    %v2802 = vpop.f32.mrf.mxu0
    %v2803 = vadd.f32 %v2738, %v2802
    %2804 = vmatmul.bf16.gmra.mxu0 %v2765
    %v2805 = vpop.f32.mrf.mxu0
    %v2806 = vadd.f32 %v2738, %v2805
    %v2807 = vpop.f32.mrf.mxu0
    %v2808 = vadd.f32 %v2738, %v2807
    %2809 = vmatmul.bf16.gmra.mxu0 %v2768
    %v2810 = vpop.f32.mrf.mxu0
    %v2811 = vadd.f32 %v2738, %v2810
    %v2812 = vpop.f32.mrf.mxu0
    %v2813 = vadd.f32 %v2738, %v2812
    %2814 = vmatmul.bf16.gmra.mxu0 %v2771
    %v2815 = vpop.f32.mrf.mxu0
    %v2816 = vadd.f32 %v2738, %v2815
    %v2817 = vpop.f32.mrf.mxu0
    %v2818 = vadd.f32 %v2738, %v2817
    %2819 = vmatmul.bf16.gmra.mxu0 %v2774
    %v2820 = vpop.f32.mrf.mxu0
    %v2821 = vadd.f32 %v2738, %v2820
    %v2822 = vpop.f32.mrf.mxu0
    %v2823 = vadd.f32 %v2738, %v2822
    %2824 = vdwg.mxu0
    %v2825 = vadd.f32 %v243, %v2786
    %v2826 = vadd.f32 %v244, %v2788
    %v2827 = vadd.f32 %v245, %v2791
    %v2828 = vadd.f32 %v246, %v2793
    %v2829 = vadd.f32 %v247, %v2796
    %v2830 = vadd.f32 %v248, %v2798
    %v2831 = vadd.f32 %v249, %v2801
    %v2832 = vadd.f32 %v250, %v2803
    %v2833 = vadd.f32 %v251, %v2806
    %v2834 = vadd.f32 %v252, %v2808
    %v2835 = vadd.f32 %v253, %v2811
    %v2836 = vadd.f32 %v254, %v2813
    %v2837 = vadd.f32 %v255, %v2816
    %v2838 = vadd.f32 %v256, %v2818
    %v2839 = vadd.f32 %v257, %v2821
    %v2840 = vadd.f32 %v258, %v2823
    %v2841 = vld [vmem:[%s13] sm:$0x1]
    %v2842 = vld [vmem:[%s14] sm:$0x1]
    %v2843 = vsel %vm291, %v2825, 0.0
    %2844 = vadd.xlane.f32.xlu0 %v2843
    %v2845 = vpop.xlane.xlu0 %2844
    %v2846 = vsel %vm291, %v2826, 0.0
    %2847 = vadd.xlane.f32.xlu0 %v2846
    %v2848 = vpop.xlane.xlu0 %2847
    %v2849 = vsel %vm291, %v2827, 0.0
    %2850 = vadd.xlane.f32.xlu0 %v2849
    %v2851 = vpop.xlane.xlu0 %2850
    %v2852 = vsel %vm291, %v2828, 0.0
    %2853 = vadd.xlane.f32.xlu0 %v2852
    %v2854 = vpop.xlane.xlu0 %2853
    %v2855 = vsel %vm291, %v2829, 0.0
    %2856 = vadd.xlane.f32.xlu0 %v2855
    %v2857 = vpop.xlane.xlu0 %2856
    %v2858 = vsel %vm291, %v2830, 0.0
    %2859 = vadd.xlane.f32.xlu0 %v2858
    %v2860 = vpop.xlane.xlu0 %2859
    %v2861 = vsel %vm291, %v2831, 0.0
    %2862 = vadd.xlane.f32.xlu0 %v2861
    %v2863 = vpop.xlane.xlu0 %2862
    %v2864 = vsel %vm291, %v2832, 0.0
    %2865 = vadd.xlane.f32.xlu0 %v2864
    %v2866 = vpop.xlane.xlu0 %2865
    %v2867 = vsel %vm291, %v2833, 0.0
    %2868 = vadd.xlane.f32.xlu0 %v2867
    %v2869 = vpop.xlane.xlu0 %2868
    %v2870 = vsel %vm291, %v2834, 0.0
    %2871 = vadd.xlane.f32.xlu0 %v2870
    %v2872 = vpop.xlane.xlu0 %2871
    %v2873 = vsel %vm291, %v2835, 0.0
    %2874 = vadd.xlane.f32.xlu0 %v2873
    %v2875 = vpop.xlane.xlu0 %2874
    %v2876 = vsel %vm291, %v2836, 0.0
    %2877 = vadd.xlane.f32.xlu0 %v2876
    %v2878 = vpop.xlane.xlu0 %2877
    %v2879 = vsel %vm291, %v2837, 0.0
    %2880 = vadd.xlane.f32.xlu0 %v2879
    %v2881 = vpop.xlane.xlu0 %2880
    %v2882 = vsel %vm291, %v2838, 0.0
    %2883 = vadd.xlane.f32.xlu0 %v2882
    %v2884 = vpop.xlane.xlu0 %2883
    %v2885 = vsel %vm291, %v2839, 0.0
    %2886 = vadd.xlane.f32.xlu0 %v2885
    %v2887 = vpop.xlane.xlu0 %2886
    %v2888 = vsel %vm291, %v2840, 0.0
    %2889 = vadd.xlane.f32.xlu0 %v2888
    %v2890 = vpop.xlane.xlu0 %2889
    %v2891 = vrcp.pop 32.0
    %v2892 = vmul.f32 32.0, %v2891
    %v2893 = vsub.f32 1.0, %v2892
    %v2894 = vmul.f32 %v2891, %v2893
    %v2895 = vadd.f32 %v2891, %v2894
    %vm2896 = vweird.f32 %v2891
    %v2897 = vsel %vm2896, %v2891, %v2895
    %v2898 = vmul.f32 %v2845, %v2897
    %v2899 = vmul.f32 %v2848, %v2897
    %v2900 = vmul.f32 %v2851, %v2897
    %v2901 = vmul.f32 %v2854, %v2897
    %v2902 = vmul.f32 %v2857, %v2897
    %v2903 = vmul.f32 %v2860, %v2897
    %v2904 = vmul.f32 %v2863, %v2897
    %v2905 = vmul.f32 %v2866, %v2897
    %v2906 = vmul.f32 %v2869, %v2897
    %v2907 = vmul.f32 %v2872, %v2897
    %v2908 = vmul.f32 %v2875, %v2897
    %v2909 = vmul.f32 %v2878, %v2897
    %v2910 = vmul.f32 %v2881, %v2897
    %v2911 = vmul.f32 %v2884, %v2897
    %v2912 = vmul.f32 %v2887, %v2897
    %v2913 = vmul.f32 %v2890, %v2897
    %v2914 = vsub.f32 %v2825, %v2898
    %v2915 = vsub.f32 %v2826, %v2899
    %v2916 = vsub.f32 %v2827, %v2900
    %v2917 = vsub.f32 %v2828, %v2901
    %v2918 = vsub.f32 %v2829, %v2902
    %v2919 = vsub.f32 %v2830, %v2903
    %v2920 = vsub.f32 %v2831, %v2904
    %v2921 = vsub.f32 %v2832, %v2905
    %v2922 = vsub.f32 %v2833, %v2906
    %v2923 = vsub.f32 %v2834, %v2907
    %v2924 = vsub.f32 %v2835, %v2908
    %v2925 = vsub.f32 %v2836, %v2909
    %v2926 = vsub.f32 %v2837, %v2910
    %v2927 = vsub.f32 %v2838, %v2911
    %v2928 = vsub.f32 %v2839, %v2912
    %v2929 = vsub.f32 %v2840, %v2913
    %v2930 = vmul.f32 %v2914, %v2914
    %v2931 = vmul.f32 %v2915, %v2915
    %v2932 = vmul.f32 %v2916, %v2916
    %v2933 = vmul.f32 %v2917, %v2917
    %v2934 = vmul.f32 %v2918, %v2918
    %v2935 = vmul.f32 %v2919, %v2919
    %v2936 = vmul.f32 %v2920, %v2920
    %v2937 = vmul.f32 %v2921, %v2921
    %v2938 = vmul.f32 %v2922, %v2922
    %v2939 = vmul.f32 %v2923, %v2923
    %v2940 = vmul.f32 %v2924, %v2924
    %v2941 = vmul.f32 %v2925, %v2925
    %v2942 = vmul.f32 %v2926, %v2926
    %v2943 = vmul.f32 %v2927, %v2927
    %v2944 = vmul.f32 %v2928, %v2928
    %v2945 = vmul.f32 %v2929, %v2929
    %v2946 = vsel %vm291, %v2930, 0.0
    %2947 = vadd.xlane.f32.xlu0 %v2946
    %v2948 = vpop.xlane.xlu0 %2947
    %v2949 = vsel %vm291, %v2931, 0.0
    %2950 = vadd.xlane.f32.xlu0 %v2949
    %v2951 = vpop.xlane.xlu0 %2950
    %v2952 = vsel %vm291, %v2932, 0.0
    %2953 = vadd.xlane.f32.xlu0 %v2952
    %v2954 = vpop.xlane.xlu0 %2953
    %v2955 = vsel %vm291, %v2933, 0.0
    %2956 = vadd.xlane.f32.xlu0 %v2955
    %v2957 = vpop.xlane.xlu0 %2956
    %v2958 = vsel %vm291, %v2934, 0.0
    %2959 = vadd.xlane.f32.xlu0 %v2958
    %v2960 = vpop.xlane.xlu0 %2959
    %v2961 = vsel %vm291, %v2935, 0.0
    %2962 = vadd.xlane.f32.xlu0 %v2961
    %v2963 = vpop.xlane.xlu0 %2962
    %v2964 = vsel %vm291, %v2936, 0.0
    %2965 = vadd.xlane.f32.xlu0 %v2964
    %v2966 = vpop.xlane.xlu0 %2965
    %v2967 = vsel %vm291, %v2937, 0.0
    %2968 = vadd.xlane.f32.xlu0 %v2967
    %v2969 = vpop.xlane.xlu0 %2968
    %v2970 = vsel %vm291, %v2938, 0.0
    %2971 = vadd.xlane.f32.xlu0 %v2970
    %v2972 = vpop.xlane.xlu0 %2971
    %v2973 = vsel %vm291, %v2939, 0.0
    %2974 = vadd.xlane.f32.xlu0 %v2973
    %v2975 = vpop.xlane.xlu0 %2974
    %v2976 = vsel %vm291, %v2940, 0.0
    %2977 = vadd.xlane.f32.xlu0 %v2976
    %v2978 = vpop.xlane.xlu0 %2977
    %v2979 = vsel %vm291, %v2941, 0.0
    %2980 = vadd.xlane.f32.xlu0 %v2979
    %v2981 = vpop.xlane.xlu0 %2980
    %v2982 = vsel %vm291, %v2942, 0.0
    %2983 = vadd.xlane.f32.xlu0 %v2982
    %v2984 = vpop.xlane.xlu0 %2983
    %v2985 = vsel %vm291, %v2943, 0.0
    %2986 = vadd.xlane.f32.xlu0 %v2985
    %v2987 = vpop.xlane.xlu0 %2986
    %v2988 = vsel %vm291, %v2944, 0.0
    %2989 = vadd.xlane.f32.xlu0 %v2988
    %v2990 = vpop.xlane.xlu0 %2989
    %v2991 = vsel %vm291, %v2945, 0.0
    %2992 = vadd.xlane.f32.xlu0 %v2991
    %v2993 = vpop.xlane.xlu0 %2992
    %v2994 = vmul.f32 %v2948, %v2897
    %v2995 = vmul.f32 %v2951, %v2897
    %v2996 = vmul.f32 %v2954, %v2897
    %v2997 = vmul.f32 %v2957, %v2897
    %v2998 = vmul.f32 %v2960, %v2897
    %v2999 = vmul.f32 %v2963, %v2897
    %v3000 = vmul.f32 %v2966, %v2897
    %v3001 = vmul.f32 %v2969, %v2897
    %v3002 = vmul.f32 %v2972, %v2897
    %v3003 = vmul.f32 %v2975, %v2897
    %v3004 = vmul.f32 %v2978, %v2897
    %v3005 = vmul.f32 %v2981, %v2897
    %v3006 = vmul.f32 %v2984, %v2897
    %v3007 = vmul.f32 %v2987, %v2897
    %v3008 = vmul.f32 %v2990, %v2897
    %v3009 = vmul.f32 %v2993, %v2897
    %v3010 = vadd.f32 %v2994, 1e-05
    %v3011 = vadd.f32 %v2995, 1e-05
    %v3012 = vadd.f32 %v2996, 1e-05
    %v3013 = vadd.f32 %v2997, 1e-05
    %v3014 = vadd.f32 %v2998, 1e-05
    %v3015 = vadd.f32 %v2999, 1e-05
    %v3016 = vadd.f32 %v3000, 1e-05
    %v3017 = vadd.f32 %v3001, 1e-05
    %v3018 = vadd.f32 %v3002, 1e-05
    %v3019 = vadd.f32 %v3003, 1e-05
    %v3020 = vadd.f32 %v3004, 1e-05
    %v3021 = vadd.f32 %v3005, 1e-05
    %v3022 = vadd.f32 %v3006, 1e-05
    %v3023 = vadd.f32 %v3007, 1e-05
    %v3024 = vadd.f32 %v3008, 1e-05
    %v3025 = vadd.f32 %v3009, 1e-05
    %v3026 = vrsqrt.pop %v3010
    %v3027 = vmul.f32 %v3026, %v3010
    %v3028 = vmul.f32 %v3027, %v3026
    %v3029 = vmul.f32 0.5, %v3028
    %v3030 = vsub.f32 1.5, %v3029
    %v3031 = vmul.f32 %v3026, %v3030
    %vm3032 = vweird.f32 %v3010
    %vm3033 = vweird.f32 %v3026
    %vm3034 = vmor %vm3032, %vm3033
    %v3035 = vsel %vm3034, %v3026, %v3031
    %v3036 = vrsqrt.pop %v3011
    %v3037 = vmul.f32 %v3036, %v3011
    %v3038 = vmul.f32 %v3037, %v3036
    %v3039 = vmul.f32 0.5, %v3038
    %v3040 = vsub.f32 1.5, %v3039
    %v3041 = vmul.f32 %v3036, %v3040
    %vm3042 = vweird.f32 %v3011
    %vm3043 = vweird.f32 %v3036
    %vm3044 = vmor %vm3042, %vm3043
    %v3045 = vsel %vm3044, %v3036, %v3041
    %v3046 = vrsqrt.pop %v3012
    %v3047 = vmul.f32 %v3046, %v3012
    %v3048 = vmul.f32 %v3047, %v3046
    %v3049 = vmul.f32 0.5, %v3048
    %v3050 = vsub.f32 1.5, %v3049
    %v3051 = vmul.f32 %v3046, %v3050
    %vm3052 = vweird.f32 %v3012
    %vm3053 = vweird.f32 %v3046
    %vm3054 = vmor %vm3052, %vm3053
    %v3055 = vsel %vm3054, %v3046, %v3051
    %v3056 = vrsqrt.pop %v3013
    %v3057 = vmul.f32 %v3056, %v3013
    %v3058 = vmul.f32 %v3057, %v3056
    %v3059 = vmul.f32 0.5, %v3058
    %v3060 = vsub.f32 1.5, %v3059
    %v3061 = vmul.f32 %v3056, %v3060
    %vm3062 = vweird.f32 %v3013
    %vm3063 = vweird.f32 %v3056
    %vm3064 = vmor %vm3062, %vm3063
    %v3065 = vsel %vm3064, %v3056, %v3061
    %v3066 = vrsqrt.pop %v3014
    %v3067 = vmul.f32 %v3066, %v3014
    %v3068 = vmul.f32 %v3067, %v3066
    %v3069 = vmul.f32 0.5, %v3068
    %v3070 = vsub.f32 1.5, %v3069
    %v3071 = vmul.f32 %v3066, %v3070
    %vm3072 = vweird.f32 %v3014
    %vm3073 = vweird.f32 %v3066
    %vm3074 = vmor %vm3072, %vm3073
    %v3075 = vsel %vm3074, %v3066, %v3071
    %v3076 = vrsqrt.pop %v3015
    %v3077 = vmul.f32 %v3076, %v3015
    %v3078 = vmul.f32 %v3077, %v3076
    %v3079 = vmul.f32 0.5, %v3078
    %v3080 = vsub.f32 1.5, %v3079
    %v3081 = vmul.f32 %v3076, %v3080
    %vm3082 = vweird.f32 %v3015
    %vm3083 = vweird.f32 %v3076
    %vm3084 = vmor %vm3082, %vm3083
    %v3085 = vsel %vm3084, %v3076, %v3081
    %v3086 = vrsqrt.pop %v3016
    %v3087 = vmul.f32 %v3086, %v3016
    %v3088 = vmul.f32 %v3087, %v3086
    %v3089 = vmul.f32 0.5, %v3088
    %v3090 = vsub.f32 1.5, %v3089
    %v3091 = vmul.f32 %v3086, %v3090
    %vm3092 = vweird.f32 %v3016
    %vm3093 = vweird.f32 %v3086
    %vm3094 = vmor %vm3092, %vm3093
    %v3095 = vsel %vm3094, %v3086, %v3091
    %v3096 = vrsqrt.pop %v3017
    %v3097 = vmul.f32 %v3096, %v3017
    %v3098 = vmul.f32 %v3097, %v3096
    %v3099 = vmul.f32 0.5, %v3098
    %v3100 = vsub.f32 1.5, %v3099
    %v3101 = vmul.f32 %v3096, %v3100
    %vm3102 = vweird.f32 %v3017
    %vm3103 = vweird.f32 %v3096
    %vm3104 = vmor %vm3102, %vm3103
    %v3105 = vsel %vm3104, %v3096, %v3101
    %v3106 = vrsqrt.pop %v3018
    %v3107 = vmul.f32 %v3106, %v3018
    %v3108 = vmul.f32 %v3107, %v3106
    %v3109 = vmul.f32 0.5, %v3108
    %v3110 = vsub.f32 1.5, %v3109
    %v3111 = vmul.f32 %v3106, %v3110
    %vm3112 = vweird.f32 %v3018
    %vm3113 = vweird.f32 %v3106
    %vm3114 = vmor %vm3112, %vm3113
    %v3115 = vsel %vm3114, %v3106, %v3111
    %v3116 = vrsqrt.pop %v3019
    %v3117 = vmul.f32 %v3116, %v3019
    %v3118 = vmul.f32 %v3117, %v3116
    %v3119 = vmul.f32 0.5, %v3118
    %v3120 = vsub.f32 1.5, %v3119
    %v3121 = vmul.f32 %v3116, %v3120
    %vm3122 = vweird.f32 %v3019
    %vm3123 = vweird.f32 %v3116
    %vm3124 = vmor %vm3122, %vm3123
    %v3125 = vsel %vm3124, %v3116, %v3121
    %v3126 = vrsqrt.pop %v3020
    %v3127 = vmul.f32 %v3126, %v3020
    %v3128 = vmul.f32 %v3127, %v3126
    %v3129 = vmul.f32 0.5, %v3128
    %v3130 = vsub.f32 1.5, %v3129
    %v3131 = vmul.f32 %v3126, %v3130
    %vm3132 = vweird.f32 %v3020
    %vm3133 = vweird.f32 %v3126
    %vm3134 = vmor %vm3132, %vm3133
    %v3135 = vsel %vm3134, %v3126, %v3131
    %v3136 = vrsqrt.pop %v3021
    %v3137 = vmul.f32 %v3136, %v3021
    %v3138 = vmul.f32 %v3137, %v3136
    %v3139 = vmul.f32 0.5, %v3138
    %v3140 = vsub.f32 1.5, %v3139
    %v3141 = vmul.f32 %v3136, %v3140
    %vm3142 = vweird.f32 %v3021
    %vm3143 = vweird.f32 %v3136
    %vm3144 = vmor %vm3142, %vm3143
    %v3145 = vsel %vm3144, %v3136, %v3141
    %v3146 = vrsqrt.pop %v3022
    %v3147 = vmul.f32 %v3146, %v3022
    %v3148 = vmul.f32 %v3147, %v3146
    %v3149 = vmul.f32 0.5, %v3148
    %v3150 = vsub.f32 1.5, %v3149
    %v3151 = vmul.f32 %v3146, %v3150
    %vm3152 = vweird.f32 %v3022
    %vm3153 = vweird.f32 %v3146
    %vm3154 = vmor %vm3152, %vm3153
    %v3155 = vsel %vm3154, %v3146, %v3151
    %v3156 = vrsqrt.pop %v3023
    %v3157 = vmul.f32 %v3156, %v3023
    %v3158 = vmul.f32 %v3157, %v3156
    %v3159 = vmul.f32 0.5, %v3158
    %v3160 = vsub.f32 1.5, %v3159
    %v3161 = vmul.f32 %v3156, %v3160
    %vm3162 = vweird.f32 %v3023
    %vm3163 = vweird.f32 %v3156
    %vm3164 = vmor %vm3162, %vm3163
    %v3165 = vsel %vm3164, %v3156, %v3161
    %v3166 = vrsqrt.pop %v3024
    %v3167 = vmul.f32 %v3166, %v3024
    %v3168 = vmul.f32 %v3167, %v3166
    %v3169 = vmul.f32 0.5, %v3168
    %v3170 = vsub.f32 1.5, %v3169
    %v3171 = vmul.f32 %v3166, %v3170
    %vm3172 = vweird.f32 %v3024
    %vm3173 = vweird.f32 %v3166
    %vm3174 = vmor %vm3172, %vm3173
    %v3175 = vsel %vm3174, %v3166, %v3171
    %v3176 = vrsqrt.pop %v3025
    %v3177 = vmul.f32 %v3176, %v3025
    %v3178 = vmul.f32 %v3177, %v3176
    %v3179 = vmul.f32 0.5, %v3178
    %v3180 = vsub.f32 1.5, %v3179
    %v3181 = vmul.f32 %v3176, %v3180
    %vm3182 = vweird.f32 %v3025
    %vm3183 = vweird.f32 %v3176
    %vm3184 = vmor %vm3182, %vm3183
    %v3185 = vsel %vm3184, %v3176, %v3181
    %v3186 = vmul.f32 %v2914, %v3035
    %v3187 = vmul.f32 %v2915, %v3045
    %v3188 = vmul.f32 %v2916, %v3055
    %v3189 = vmul.f32 %v2917, %v3065
    %v3190 = vmul.f32 %v2918, %v3075
    %v3191 = vmul.f32 %v2919, %v3085
    %v3192 = vmul.f32 %v2920, %v3095
    %v3193 = vmul.f32 %v2921, %v3105
    %v3194 = vmul.f32 %v2922, %v3115
    %v3195 = vmul.f32 %v2923, %v3125
    %v3196 = vmul.f32 %v2924, %v3135
    %v3197 = vmul.f32 %v2925, %v3145
    %v3198 = vmul.f32 %v2926, %v3155
    %v3199 = vmul.f32 %v2927, %v3165
    %v3200 = vmul.f32 %v2928, %v3175
    %v3201 = vmul.f32 %v2929, %v3185
    %v3203 = vperm.slane %v2841, 0
    %v3205 = vmul.f32 %v3186, %v3203
    %v3206 = vmul.f32 %v3187, %v3203
    %v3207 = vmul.f32 %v3188, %v3203
    %v3208 = vmul.f32 %v3189, %v3203
    %v3209 = vmul.f32 %v3190, %v3203
    %v3210 = vmul.f32 %v3191, %v3203
    %v3211 = vmul.f32 %v3192, %v3203
    %v3212 = vmul.f32 %v3193, %v3203
    %v3213 = vmul.f32 %v3194, %v3203
    %v3214 = vmul.f32 %v3195, %v3203
    %v3215 = vmul.f32 %v3196, %v3203
    %v3216 = vmul.f32 %v3197, %v3203
    %v3217 = vmul.f32 %v3198, %v3203
    %v3218 = vmul.f32 %v3199, %v3203
    %v3219 = vmul.f32 %v3200, %v3203
    %v3220 = vmul.f32 %v3201, %v3203
    %v3222 = vperm.slane %v2842, 0
    %v3224 = vadd.f32 %v3205, %v3222
    %v3225 = vadd.f32 %v3206, %v3222
    %v3226 = vadd.f32 %v3207, %v3222
    %v3227 = vadd.f32 %v3208, %v3222
    %v3228 = vadd.f32 %v3209, %v3222
    %v3229 = vadd.f32 %v3210, %v3222
    %v3230 = vadd.f32 %v3211, %v3222
    %v3231 = vadd.f32 %v3212, %v3222
    %v3232 = vadd.f32 %v3213, %v3222
    %v3233 = vadd.f32 %v3214, %v3222
    %v3234 = vadd.f32 %v3215, %v3222
    %v3235 = vadd.f32 %v3216, %v3222
    %v3236 = vadd.f32 %v3217, %v3222
    %v3237 = vadd.f32 %v3218, %v3222
    %v3238 = vadd.f32 %v3219, %v3222
    %v3239 = vadd.f32 %v3220, %v3222
    %v3240 = vpack.c.bf16 %v3225, %v3224
    %v3241 = vpack.c.bf16 %v3227, %v3226
    %v3242 = vpack.c.bf16 %v3229, %v3228
    %v3243 = vpack.c.bf16 %v3231, %v3230
    %v3244 = vpack.c.bf16 %v3233, %v3232
    %v3245 = vpack.c.bf16 %v3235, %v3234
    %v3246 = vpack.c.bf16 %v3237, %v3236
    %v3247 = vpack.c.bf16 %v3239, %v3238
    %v3248 = vld [vmem:[%s17] sm:$0xf]
    %v3249 = vld [vmem:[%s17 + $0x4] sm:$0xf]
    %v3250 = vld [vmem:[%s17 + $0x8] sm:$0xf]
    %v3251 = vld [vmem:[%s17 + $0xc] sm:$0xf]
    %v3252 = vld [vmem:[%s18] sm:$0x1]
    %v3254 = vperm.slane %v3252, 0
    %v3260 = vunpack.c.l.b16 %v3248
    %v3261 = vunpack.c.l.b16 %v3249
    %v3262 = vunpack.c.l.b16 %v3250
    %v3263 = vunpack.c.l.b16 %v3251
    %v3264 = vpack.c.b16 %v3261, %v3260
    %v3265 = vpack.c.b16 %v3263, %v3262
    %v3269 = vsel %vm291, %v3240, 0
    %v3272 = vsel %vm291, %v3241, 0
    %v3275 = vsel %vm291, %v3242, 0
    %v3278 = vsel %vm291, %v3243, 0
    %v3281 = vsel %vm291, %v3244, 0
    %v3284 = vsel %vm291, %v3245, 0
    %v3287 = vsel %vm291, %v3246, 0
    %v3290 = vsel %vm291, %v3247, 0
    %3292 = vmatpush.bf16.msra.mxu0 0
    %3293 = vmatpush.bf16.msra.mxu0 0
    %3294 = vmatpush.bf16.msra.mxu0 0
    %3295 = vmatpush.bf16.msra.mxu0 0
    %3296 = vmatpush.bf16.msra.mxu0 0
    %3297 = vmatpush.bf16.msra.mxu0 0
    %3298 = vmatpush.bf16.msra.mxu0 %v3265
    %3299 = vmatpush.bf16.msra.mxu0 %v3264
    %3300 = vmatmul.bf16.gmra.mxu0 %v3269
    %v3301 = vpop.f32.mrf.mxu0
    %v3302 = vadd.f32 %v3254, %v3301
    %v3303 = vpop.f32.mrf.mxu0
    %v3304 = vadd.f32 %v3254, %v3303
    %3305 = vmatmul.bf16.gmra.mxu0 %v3272
    %v3306 = vpop.f32.mrf.mxu0
    %v3307 = vadd.f32 %v3254, %v3306
    %v3308 = vpop.f32.mrf.mxu0
    %v3309 = vadd.f32 %v3254, %v3308
    %3310 = vmatmul.bf16.gmra.mxu0 %v3275
    %v3311 = vpop.f32.mrf.mxu0
    %v3312 = vadd.f32 %v3254, %v3311
    %v3313 = vpop.f32.mrf.mxu0
    %v3314 = vadd.f32 %v3254, %v3313
    %3315 = vmatmul.bf16.gmra.mxu0 %v3278
    %v3316 = vpop.f32.mrf.mxu0
    %v3317 = vadd.f32 %v3254, %v3316
    %v3318 = vpop.f32.mrf.mxu0
    %v3319 = vadd.f32 %v3254, %v3318
    %3320 = vmatmul.bf16.gmra.mxu0 %v3281
    %v3321 = vpop.f32.mrf.mxu0
    %v3322 = vadd.f32 %v3254, %v3321
    %v3323 = vpop.f32.mrf.mxu0
    %v3324 = vadd.f32 %v3254, %v3323
    %3325 = vmatmul.bf16.gmra.mxu0 %v3284
    %v3326 = vpop.f32.mrf.mxu0
    %v3327 = vadd.f32 %v3254, %v3326
    %v3328 = vpop.f32.mrf.mxu0
    %v3329 = vadd.f32 %v3254, %v3328
    %3330 = vmatmul.bf16.gmra.mxu0 %v3287
    %v3331 = vpop.f32.mrf.mxu0
    %v3332 = vadd.f32 %v3254, %v3331
    %v3333 = vpop.f32.mrf.mxu0
    %v3334 = vadd.f32 %v3254, %v3333
    %3335 = vmatmul.bf16.gmra.mxu0 %v3290
    %v3336 = vpop.f32.mrf.mxu0
    %v3337 = vadd.f32 %v3254, %v3336
    %v3338 = vpop.f32.mrf.mxu0
    %v3339 = vadd.f32 %v3254, %v3338
    %3340 = vdwg.mxu0
    %v3341 = vmax.f32 %v3302, 0.0
    %v3342 = vmax.f32 %v3304, 0.0
    %v3343 = vmax.f32 %v3307, 0.0
    %v3344 = vmax.f32 %v3309, 0.0
    %v3345 = vmax.f32 %v3312, 0.0
    %v3346 = vmax.f32 %v3314, 0.0
    %v3347 = vmax.f32 %v3317, 0.0
    %v3348 = vmax.f32 %v3319, 0.0
    %v3349 = vmax.f32 %v3322, 0.0
    %v3350 = vmax.f32 %v3324, 0.0
    %v3351 = vmax.f32 %v3327, 0.0
    %v3352 = vmax.f32 %v3329, 0.0
    %v3353 = vmax.f32 %v3332, 0.0
    %v3354 = vmax.f32 %v3334, 0.0
    %v3355 = vmax.f32 %v3337, 0.0
    %v3356 = vmax.f32 %v3339, 0.0
    %v3357 = vpack.c.bf16 %v3342, %v3341
    %v3358 = vpack.c.bf16 %v3344, %v3343
    %v3359 = vpack.c.bf16 %v3346, %v3345
    %v3360 = vpack.c.bf16 %v3348, %v3347
    %v3361 = vpack.c.bf16 %v3350, %v3349
    %v3362 = vpack.c.bf16 %v3352, %v3351
    %v3363 = vpack.c.bf16 %v3354, %v3353
    %v3364 = vpack.c.bf16 %v3356, %v3355
    %v3365 = vld [vmem:[%s19] sm:$0xf]
    %v3366 = vld [vmem:[%s19 + $0x4] sm:$0xf]
    %v3367 = vld [vmem:[%s19 + $0x8] sm:$0xf]
    %v3368 = vld [vmem:[%s19 + $0xc] sm:$0xf]
    %v3369 = vld [vmem:[%s19 + $0x10] sm:$0xf]
    %v3370 = vld [vmem:[%s19 + $0x14] sm:$0xf]
    %v3371 = vld [vmem:[%s19 + $0x18] sm:$0xf]
    %v3372 = vld [vmem:[%s19 + $0x1c] sm:$0xf]
    %v3373 = vld [vmem:[%s19 + $0x20] sm:$0xf]
    %v3374 = vld [vmem:[%s19 + $0x24] sm:$0xf]
    %v3375 = vld [vmem:[%s19 + $0x28] sm:$0xf]
    %v3376 = vld [vmem:[%s19 + $0x2c] sm:$0xf]
    %v3377 = vld [vmem:[%s19 + $0x30] sm:$0xf]
    %v3378 = vld [vmem:[%s19 + $0x34] sm:$0xf]
    %v3379 = vld [vmem:[%s19 + $0x38] sm:$0xf]
    %v3380 = vld [vmem:[%s19 + $0x3c] sm:$0xf]
    %v3381 = vld [vmem:[%s20] sm:$0x1]
    %v3383 = vperm.slane %v3381, 0
    %v3401 = vunpack.c.l.b16 %v3365
    %v3402 = vunpack.c.l.b16 %v3366
    %v3403 = vunpack.c.l.b16 %v3367
    %v3404 = vunpack.c.l.b16 %v3368
    %v3405 = vunpack.c.l.b16 %v3369
    %v3406 = vunpack.c.l.b16 %v3370
    %v3407 = vunpack.c.l.b16 %v3371
    %v3408 = vunpack.c.l.b16 %v3372
    %v3409 = vunpack.c.l.b16 %v3373
    %v3410 = vunpack.c.l.b16 %v3374
    %v3411 = vunpack.c.l.b16 %v3375
    %v3412 = vunpack.c.l.b16 %v3376
    %v3413 = vunpack.c.l.b16 %v3377
    %v3414 = vunpack.c.l.b16 %v3378
    %v3415 = vunpack.c.l.b16 %v3379
    %v3416 = vunpack.c.l.b16 %v3380
    %v3417 = vpack.c.b16 %v3402, %v3401
    %v3418 = vpack.c.b16 %v3404, %v3403
    %v3419 = vpack.c.b16 %v3406, %v3405
    %v3420 = vpack.c.b16 %v3408, %v3407
    %v3421 = vpack.c.b16 %v3410, %v3409
    %v3422 = vpack.c.b16 %v3412, %v3411
    %v3423 = vpack.c.b16 %v3414, %v3413
    %v3424 = vpack.c.b16 %v3416, %v3415
    %3433 = vmatpush.bf16.msra.mxu0 %v3424
    %3434 = vmatpush.bf16.msra.mxu0 %v3423
    %3435 = vmatpush.bf16.msra.mxu0 %v3422
    %3436 = vmatpush.bf16.msra.mxu0 %v3421
    %3437 = vmatpush.bf16.msra.mxu0 %v3420
    %3438 = vmatpush.bf16.msra.mxu0 %v3419
    %3439 = vmatpush.bf16.msra.mxu0 %v3418
    %3440 = vmatpush.bf16.msra.mxu0 %v3417
    %3441 = vmatmul.bf16.gmra.mxu0 %v3357
    %v3442 = vpop.f32.mrf.mxu0
    %v3443 = vadd.f32 %v3383, %v3442
    %v3444 = vpop.f32.mrf.mxu0
    %v3445 = vadd.f32 %v3383, %v3444
    %3446 = vmatmul.bf16.gmra.mxu0 %v3358
    %v3447 = vpop.f32.mrf.mxu0
    %v3448 = vadd.f32 %v3383, %v3447
    %v3449 = vpop.f32.mrf.mxu0
    %v3450 = vadd.f32 %v3383, %v3449
    %3451 = vmatmul.bf16.gmra.mxu0 %v3359
    %v3452 = vpop.f32.mrf.mxu0
    %v3453 = vadd.f32 %v3383, %v3452
    %v3454 = vpop.f32.mrf.mxu0
    %v3455 = vadd.f32 %v3383, %v3454
    %3456 = vmatmul.bf16.gmra.mxu0 %v3360
    %v3457 = vpop.f32.mrf.mxu0
    %v3458 = vadd.f32 %v3383, %v3457
    %v3459 = vpop.f32.mrf.mxu0
    %v3460 = vadd.f32 %v3383, %v3459
    %3461 = vmatmul.bf16.gmra.mxu0 %v3361
    %v3462 = vpop.f32.mrf.mxu0
    %v3463 = vadd.f32 %v3383, %v3462
    %v3464 = vpop.f32.mrf.mxu0
    %v3465 = vadd.f32 %v3383, %v3464
    %3466 = vmatmul.bf16.gmra.mxu0 %v3362
    %v3467 = vpop.f32.mrf.mxu0
    %v3468 = vadd.f32 %v3383, %v3467
    %v3469 = vpop.f32.mrf.mxu0
    %v3470 = vadd.f32 %v3383, %v3469
    %3471 = vmatmul.bf16.gmra.mxu0 %v3363
    %v3472 = vpop.f32.mrf.mxu0
    %v3473 = vadd.f32 %v3383, %v3472
    %v3474 = vpop.f32.mrf.mxu0
    %v3475 = vadd.f32 %v3383, %v3474
    %3476 = vmatmul.bf16.gmra.mxu0 %v3364
    %v3477 = vpop.f32.mrf.mxu0
    %v3478 = vadd.f32 %v3383, %v3477
    %v3479 = vpop.f32.mrf.mxu0
    %v3480 = vadd.f32 %v3383, %v3479
    %3481 = vdwg.mxu0
    %v3482 = vadd.f32 %v3224, %v3443
    %v3483 = vadd.f32 %v3225, %v3445
    %v3484 = vadd.f32 %v3226, %v3448
    %v3485 = vadd.f32 %v3227, %v3450
    %v3486 = vadd.f32 %v3228, %v3453
    %v3487 = vadd.f32 %v3229, %v3455
    %v3488 = vadd.f32 %v3230, %v3458
    %v3489 = vadd.f32 %v3231, %v3460
    %v3490 = vadd.f32 %v3232, %v3463
    %v3491 = vadd.f32 %v3233, %v3465
    %v3492 = vadd.f32 %v3234, %v3468
    %v3493 = vadd.f32 %v3235, %v3470
    %v3494 = vadd.f32 %v3236, %v3473
    %v3495 = vadd.f32 %v3237, %v3475
    %v3496 = vadd.f32 %v3238, %v3478
    %v3497 = vadd.f32 %v3239, %v3480
    %v3498 = vld [vmem:[%s15] sm:$0x1]
    %v3499 = vld [vmem:[%s16] sm:$0x1]
    %v3500 = vsel %vm291, %v3482, 0.0
    %3501 = vadd.xlane.f32.xlu0 %v3500
    %v3502 = vpop.xlane.xlu0 %3501
    %v3503 = vsel %vm291, %v3483, 0.0
    %3504 = vadd.xlane.f32.xlu0 %v3503
    %v3505 = vpop.xlane.xlu0 %3504
    %v3506 = vsel %vm291, %v3484, 0.0
    %3507 = vadd.xlane.f32.xlu0 %v3506
    %v3508 = vpop.xlane.xlu0 %3507
    %v3509 = vsel %vm291, %v3485, 0.0
    %3510 = vadd.xlane.f32.xlu0 %v3509
    %v3511 = vpop.xlane.xlu0 %3510
    %v3512 = vsel %vm291, %v3486, 0.0
    %3513 = vadd.xlane.f32.xlu0 %v3512
    %v3514 = vpop.xlane.xlu0 %3513
    %v3515 = vsel %vm291, %v3487, 0.0
    %3516 = vadd.xlane.f32.xlu0 %v3515
    %v3517 = vpop.xlane.xlu0 %3516
    %v3518 = vsel %vm291, %v3488, 0.0
    %3519 = vadd.xlane.f32.xlu0 %v3518
    %v3520 = vpop.xlane.xlu0 %3519
    %v3521 = vsel %vm291, %v3489, 0.0
    %3522 = vadd.xlane.f32.xlu0 %v3521
    %v3523 = vpop.xlane.xlu0 %3522
    %v3524 = vsel %vm291, %v3490, 0.0
    %3525 = vadd.xlane.f32.xlu0 %v3524
    %v3526 = vpop.xlane.xlu0 %3525
    %v3527 = vsel %vm291, %v3491, 0.0
    %3528 = vadd.xlane.f32.xlu0 %v3527
    %v3529 = vpop.xlane.xlu0 %3528
    %v3530 = vsel %vm291, %v3492, 0.0
    %3531 = vadd.xlane.f32.xlu0 %v3530
    %v3532 = vpop.xlane.xlu0 %3531
    %v3533 = vsel %vm291, %v3493, 0.0
    %3534 = vadd.xlane.f32.xlu0 %v3533
    %v3535 = vpop.xlane.xlu0 %3534
    %v3536 = vsel %vm291, %v3494, 0.0
    %3537 = vadd.xlane.f32.xlu0 %v3536
    %v3538 = vpop.xlane.xlu0 %3537
    %v3539 = vsel %vm291, %v3495, 0.0
    %3540 = vadd.xlane.f32.xlu0 %v3539
    %v3541 = vpop.xlane.xlu0 %3540
    %v3542 = vsel %vm291, %v3496, 0.0
    %3543 = vadd.xlane.f32.xlu0 %v3542
    %v3544 = vpop.xlane.xlu0 %3543
    %v3545 = vsel %vm291, %v3497, 0.0
    %3546 = vadd.xlane.f32.xlu0 %v3545
    %v3547 = vpop.xlane.xlu0 %3546
    %v3548 = vmul.f32 %v3502, %v2897
    %v3549 = vmul.f32 %v3505, %v2897
    %v3550 = vmul.f32 %v3508, %v2897
    %v3551 = vmul.f32 %v3511, %v2897
    %v3552 = vmul.f32 %v3514, %v2897
    %v3553 = vmul.f32 %v3517, %v2897
    %v3554 = vmul.f32 %v3520, %v2897
    %v3555 = vmul.f32 %v3523, %v2897
    %v3556 = vmul.f32 %v3526, %v2897
    %v3557 = vmul.f32 %v3529, %v2897
    %v3558 = vmul.f32 %v3532, %v2897
    %v3559 = vmul.f32 %v3535, %v2897
    %v3560 = vmul.f32 %v3538, %v2897
    %v3561 = vmul.f32 %v3541, %v2897
    %v3562 = vmul.f32 %v3544, %v2897
    %v3563 = vmul.f32 %v3547, %v2897
    %v3564 = vsub.f32 %v3482, %v3548
    %v3565 = vsub.f32 %v3483, %v3549
    %v3566 = vsub.f32 %v3484, %v3550
    %v3567 = vsub.f32 %v3485, %v3551
    %v3568 = vsub.f32 %v3486, %v3552
    %v3569 = vsub.f32 %v3487, %v3553
    %v3570 = vsub.f32 %v3488, %v3554
    %v3571 = vsub.f32 %v3489, %v3555
    %v3572 = vsub.f32 %v3490, %v3556
    %v3573 = vsub.f32 %v3491, %v3557
    %v3574 = vsub.f32 %v3492, %v3558
    %v3575 = vsub.f32 %v3493, %v3559
    %v3576 = vsub.f32 %v3494, %v3560
    %v3577 = vsub.f32 %v3495, %v3561
    %v3578 = vsub.f32 %v3496, %v3562
    %v3579 = vsub.f32 %v3497, %v3563
    %v3580 = vmul.f32 %v3564, %v3564
    %v3581 = vmul.f32 %v3565, %v3565
    %v3582 = vmul.f32 %v3566, %v3566
    %v3583 = vmul.f32 %v3567, %v3567
    %v3584 = vmul.f32 %v3568, %v3568
    %v3585 = vmul.f32 %v3569, %v3569
    %v3586 = vmul.f32 %v3570, %v3570
    %v3587 = vmul.f32 %v3571, %v3571
    %v3588 = vmul.f32 %v3572, %v3572
    %v3589 = vmul.f32 %v3573, %v3573
    %v3590 = vmul.f32 %v3574, %v3574
    %v3591 = vmul.f32 %v3575, %v3575
    %v3592 = vmul.f32 %v3576, %v3576
    %v3593 = vmul.f32 %v3577, %v3577
    %v3594 = vmul.f32 %v3578, %v3578
    %v3595 = vmul.f32 %v3579, %v3579
    %v3596 = vsel %vm291, %v3580, 0.0
    %3597 = vadd.xlane.f32.xlu0 %v3596
    %v3598 = vpop.xlane.xlu0 %3597
    %v3599 = vsel %vm291, %v3581, 0.0
    %3600 = vadd.xlane.f32.xlu0 %v3599
    %v3601 = vpop.xlane.xlu0 %3600
    %v3602 = vsel %vm291, %v3582, 0.0
    %3603 = vadd.xlane.f32.xlu0 %v3602
    %v3604 = vpop.xlane.xlu0 %3603
    %v3605 = vsel %vm291, %v3583, 0.0
    %3606 = vadd.xlane.f32.xlu0 %v3605
    %v3607 = vpop.xlane.xlu0 %3606
    %v3608 = vsel %vm291, %v3584, 0.0
    %3609 = vadd.xlane.f32.xlu0 %v3608
    %v3610 = vpop.xlane.xlu0 %3609
    %v3611 = vsel %vm291, %v3585, 0.0
    %3612 = vadd.xlane.f32.xlu0 %v3611
    %v3613 = vpop.xlane.xlu0 %3612
    %v3614 = vsel %vm291, %v3586, 0.0
    %3615 = vadd.xlane.f32.xlu0 %v3614
    %v3616 = vpop.xlane.xlu0 %3615
    %v3617 = vsel %vm291, %v3587, 0.0
    %3618 = vadd.xlane.f32.xlu0 %v3617
    %v3619 = vpop.xlane.xlu0 %3618
    %v3620 = vsel %vm291, %v3588, 0.0
    %3621 = vadd.xlane.f32.xlu0 %v3620
    %v3622 = vpop.xlane.xlu0 %3621
    %v3623 = vsel %vm291, %v3589, 0.0
    %3624 = vadd.xlane.f32.xlu0 %v3623
    %v3625 = vpop.xlane.xlu0 %3624
    %v3626 = vsel %vm291, %v3590, 0.0
    %3627 = vadd.xlane.f32.xlu0 %v3626
    %v3628 = vpop.xlane.xlu0 %3627
    %v3629 = vsel %vm291, %v3591, 0.0
    %3630 = vadd.xlane.f32.xlu0 %v3629
    %v3631 = vpop.xlane.xlu0 %3630
    %v3632 = vsel %vm291, %v3592, 0.0
    %3633 = vadd.xlane.f32.xlu0 %v3632
    %v3634 = vpop.xlane.xlu0 %3633
    %v3635 = vsel %vm291, %v3593, 0.0
    %3636 = vadd.xlane.f32.xlu0 %v3635
    %v3637 = vpop.xlane.xlu0 %3636
    %v3638 = vsel %vm291, %v3594, 0.0
    %3639 = vadd.xlane.f32.xlu0 %v3638
    %v3640 = vpop.xlane.xlu0 %3639
    %v3641 = vsel %vm291, %v3595, 0.0
    %3642 = vadd.xlane.f32.xlu0 %v3641
    %v3643 = vpop.xlane.xlu0 %3642
    %v3644 = vmul.f32 %v3598, %v2897
    %v3645 = vmul.f32 %v3601, %v2897
    %v3646 = vmul.f32 %v3604, %v2897
    %v3647 = vmul.f32 %v3607, %v2897
    %v3648 = vmul.f32 %v3610, %v2897
    %v3649 = vmul.f32 %v3613, %v2897
    %v3650 = vmul.f32 %v3616, %v2897
    %v3651 = vmul.f32 %v3619, %v2897
    %v3652 = vmul.f32 %v3622, %v2897
    %v3653 = vmul.f32 %v3625, %v2897
    %v3654 = vmul.f32 %v3628, %v2897
    %v3655 = vmul.f32 %v3631, %v2897
    %v3656 = vmul.f32 %v3634, %v2897
    %v3657 = vmul.f32 %v3637, %v2897
    %v3658 = vmul.f32 %v3640, %v2897
    %v3659 = vmul.f32 %v3643, %v2897
    %v3660 = vadd.f32 %v3644, 1e-05
    %v3661 = vadd.f32 %v3645, 1e-05
    %v3662 = vadd.f32 %v3646, 1e-05
    %v3663 = vadd.f32 %v3647, 1e-05
    %v3664 = vadd.f32 %v3648, 1e-05
    %v3665 = vadd.f32 %v3649, 1e-05
    %v3666 = vadd.f32 %v3650, 1e-05
    %v3667 = vadd.f32 %v3651, 1e-05
    %v3668 = vadd.f32 %v3652, 1e-05
    %v3669 = vadd.f32 %v3653, 1e-05
    %v3670 = vadd.f32 %v3654, 1e-05
    %v3671 = vadd.f32 %v3655, 1e-05
    %v3672 = vadd.f32 %v3656, 1e-05
    %v3673 = vadd.f32 %v3657, 1e-05
    %v3674 = vadd.f32 %v3658, 1e-05
    %v3675 = vadd.f32 %v3659, 1e-05
    %v3676 = vrsqrt.pop %v3660
    %v3677 = vmul.f32 %v3676, %v3660
    %v3678 = vmul.f32 %v3677, %v3676
    %v3679 = vmul.f32 0.5, %v3678
    %v3680 = vsub.f32 1.5, %v3679
    %v3681 = vmul.f32 %v3676, %v3680
    %vm3682 = vweird.f32 %v3660
    %vm3683 = vweird.f32 %v3676
    %vm3684 = vmor %vm3682, %vm3683
    %v3685 = vsel %vm3684, %v3676, %v3681
    %v3686 = vrsqrt.pop %v3661
    %v3687 = vmul.f32 %v3686, %v3661
    %v3688 = vmul.f32 %v3687, %v3686
    %v3689 = vmul.f32 0.5, %v3688
    %v3690 = vsub.f32 1.5, %v3689
    %v3691 = vmul.f32 %v3686, %v3690
    %vm3692 = vweird.f32 %v3661
    %vm3693 = vweird.f32 %v3686
    %vm3694 = vmor %vm3692, %vm3693
    %v3695 = vsel %vm3694, %v3686, %v3691
    %v3696 = vrsqrt.pop %v3662
    %v3697 = vmul.f32 %v3696, %v3662
    %v3698 = vmul.f32 %v3697, %v3696
    %v3699 = vmul.f32 0.5, %v3698
    %v3700 = vsub.f32 1.5, %v3699
    %v3701 = vmul.f32 %v3696, %v3700
    %vm3702 = vweird.f32 %v3662
    %vm3703 = vweird.f32 %v3696
    %vm3704 = vmor %vm3702, %vm3703
    %v3705 = vsel %vm3704, %v3696, %v3701
    %v3706 = vrsqrt.pop %v3663
    %v3707 = vmul.f32 %v3706, %v3663
    %v3708 = vmul.f32 %v3707, %v3706
    %v3709 = vmul.f32 0.5, %v3708
    %v3710 = vsub.f32 1.5, %v3709
    %v3711 = vmul.f32 %v3706, %v3710
    %vm3712 = vweird.f32 %v3663
    %vm3713 = vweird.f32 %v3706
    %vm3714 = vmor %vm3712, %vm3713
    %v3715 = vsel %vm3714, %v3706, %v3711
    %v3716 = vrsqrt.pop %v3664
    %v3717 = vmul.f32 %v3716, %v3664
    %v3718 = vmul.f32 %v3717, %v3716
    %v3719 = vmul.f32 0.5, %v3718
    %v3720 = vsub.f32 1.5, %v3719
    %v3721 = vmul.f32 %v3716, %v3720
    %vm3722 = vweird.f32 %v3664
    %vm3723 = vweird.f32 %v3716
    %vm3724 = vmor %vm3722, %vm3723
    %v3725 = vsel %vm3724, %v3716, %v3721
    %v3726 = vrsqrt.pop %v3665
    %v3727 = vmul.f32 %v3726, %v3665
    %v3728 = vmul.f32 %v3727, %v3726
    %v3729 = vmul.f32 0.5, %v3728
    %v3730 = vsub.f32 1.5, %v3729
    %v3731 = vmul.f32 %v3726, %v3730
    %vm3732 = vweird.f32 %v3665
    %vm3733 = vweird.f32 %v3726
    %vm3734 = vmor %vm3732, %vm3733
    %v3735 = vsel %vm3734, %v3726, %v3731
    %v3736 = vrsqrt.pop %v3666
    %v3737 = vmul.f32 %v3736, %v3666
    %v3738 = vmul.f32 %v3737, %v3736
    %v3739 = vmul.f32 0.5, %v3738
    %v3740 = vsub.f32 1.5, %v3739
    %v3741 = vmul.f32 %v3736, %v3740
    %vm3742 = vweird.f32 %v3666
    %vm3743 = vweird.f32 %v3736
    %vm3744 = vmor %vm3742, %vm3743
    %v3745 = vsel %vm3744, %v3736, %v3741
    %v3746 = vrsqrt.pop %v3667
    %v3747 = vmul.f32 %v3746, %v3667
    %v3748 = vmul.f32 %v3747, %v3746
    %v3749 = vmul.f32 0.5, %v3748
    %v3750 = vsub.f32 1.5, %v3749
    %v3751 = vmul.f32 %v3746, %v3750
    %vm3752 = vweird.f32 %v3667
    %vm3753 = vweird.f32 %v3746
    %vm3754 = vmor %vm3752, %vm3753
    %v3755 = vsel %vm3754, %v3746, %v3751
    %v3756 = vrsqrt.pop %v3668
    %v3757 = vmul.f32 %v3756, %v3668
    %v3758 = vmul.f32 %v3757, %v3756
    %v3759 = vmul.f32 0.5, %v3758
    %v3760 = vsub.f32 1.5, %v3759
    %v3761 = vmul.f32 %v3756, %v3760
    %vm3762 = vweird.f32 %v3668
    %vm3763 = vweird.f32 %v3756
    %vm3764 = vmor %vm3762, %vm3763
    %v3765 = vsel %vm3764, %v3756, %v3761
    %v3766 = vrsqrt.pop %v3669
    %v3767 = vmul.f32 %v3766, %v3669
    %v3768 = vmul.f32 %v3767, %v3766
    %v3769 = vmul.f32 0.5, %v3768
    %v3770 = vsub.f32 1.5, %v3769
    %v3771 = vmul.f32 %v3766, %v3770
    %vm3772 = vweird.f32 %v3669
    %vm3773 = vweird.f32 %v3766
    %vm3774 = vmor %vm3772, %vm3773
    %v3775 = vsel %vm3774, %v3766, %v3771
    %v3776 = vrsqrt.pop %v3670
    %v3777 = vmul.f32 %v3776, %v3670
    %v3778 = vmul.f32 %v3777, %v3776
    %v3779 = vmul.f32 0.5, %v3778
    %v3780 = vsub.f32 1.5, %v3779
    %v3781 = vmul.f32 %v3776, %v3780
    %vm3782 = vweird.f32 %v3670
    %vm3783 = vweird.f32 %v3776
    %vm3784 = vmor %vm3782, %vm3783
    %v3785 = vsel %vm3784, %v3776, %v3781
    %v3786 = vrsqrt.pop %v3671
    %v3787 = vmul.f32 %v3786, %v3671
    %v3788 = vmul.f32 %v3787, %v3786
    %v3789 = vmul.f32 0.5, %v3788
    %v3790 = vsub.f32 1.5, %v3789
    %v3791 = vmul.f32 %v3786, %v3790
    %vm3792 = vweird.f32 %v3671
    %vm3793 = vweird.f32 %v3786
    %vm3794 = vmor %vm3792, %vm3793
    %v3795 = vsel %vm3794, %v3786, %v3791
    %v3796 = vrsqrt.pop %v3672
    %v3797 = vmul.f32 %v3796, %v3672
    %v3798 = vmul.f32 %v3797, %v3796
    %v3799 = vmul.f32 0.5, %v3798
    %v3800 = vsub.f32 1.5, %v3799
    %v3801 = vmul.f32 %v3796, %v3800
    %vm3802 = vweird.f32 %v3672
    %vm3803 = vweird.f32 %v3796
    %vm3804 = vmor %vm3802, %vm3803
    %v3805 = vsel %vm3804, %v3796, %v3801
    %v3806 = vrsqrt.pop %v3673
    %v3807 = vmul.f32 %v3806, %v3673
    %v3808 = vmul.f32 %v3807, %v3806
    %v3809 = vmul.f32 0.5, %v3808
    %v3810 = vsub.f32 1.5, %v3809
    %v3811 = vmul.f32 %v3806, %v3810
    %vm3812 = vweird.f32 %v3673
    %vm3813 = vweird.f32 %v3806
    %vm3814 = vmor %vm3812, %vm3813
    %v3815 = vsel %vm3814, %v3806, %v3811
    %v3816 = vrsqrt.pop %v3674
    %v3817 = vmul.f32 %v3816, %v3674
    %v3818 = vmul.f32 %v3817, %v3816
    %v3819 = vmul.f32 0.5, %v3818
    %v3820 = vsub.f32 1.5, %v3819
    %v3821 = vmul.f32 %v3816, %v3820
    %vm3822 = vweird.f32 %v3674
    %vm3823 = vweird.f32 %v3816
    %vm3824 = vmor %vm3822, %vm3823
    %v3825 = vsel %vm3824, %v3816, %v3821
    %v3826 = vrsqrt.pop %v3675
    %v3827 = vmul.f32 %v3826, %v3675
    %v3828 = vmul.f32 %v3827, %v3826
    %v3829 = vmul.f32 0.5, %v3828
    %v3830 = vsub.f32 1.5, %v3829
    %v3831 = vmul.f32 %v3826, %v3830
    %vm3832 = vweird.f32 %v3675
    %vm3833 = vweird.f32 %v3826
    %vm3834 = vmor %vm3832, %vm3833
    %v3835 = vsel %vm3834, %v3826, %v3831
    %v3836 = vmul.f32 %v3564, %v3685
    %v3837 = vmul.f32 %v3565, %v3695
    %v3838 = vmul.f32 %v3566, %v3705
    %v3839 = vmul.f32 %v3567, %v3715
    %v3840 = vmul.f32 %v3568, %v3725
    %v3841 = vmul.f32 %v3569, %v3735
    %v3842 = vmul.f32 %v3570, %v3745
    %v3843 = vmul.f32 %v3571, %v3755
    %v3844 = vmul.f32 %v3572, %v3765
    %v3845 = vmul.f32 %v3573, %v3775
    %v3846 = vmul.f32 %v3574, %v3785
    %v3847 = vmul.f32 %v3575, %v3795
    %v3848 = vmul.f32 %v3576, %v3805
    %v3849 = vmul.f32 %v3577, %v3815
    %v3850 = vmul.f32 %v3578, %v3825
    %v3851 = vmul.f32 %v3579, %v3835
    %v3853 = vperm.slane %v3498, 0
    %v3855 = vmul.f32 %v3836, %v3853
    %v3856 = vmul.f32 %v3837, %v3853
    %v3857 = vmul.f32 %v3838, %v3853
    %v3858 = vmul.f32 %v3839, %v3853
    %v3859 = vmul.f32 %v3840, %v3853
    %v3860 = vmul.f32 %v3841, %v3853
    %v3861 = vmul.f32 %v3842, %v3853
    %v3862 = vmul.f32 %v3843, %v3853
    %v3863 = vmul.f32 %v3844, %v3853
    %v3864 = vmul.f32 %v3845, %v3853
    %v3865 = vmul.f32 %v3846, %v3853
    %v3866 = vmul.f32 %v3847, %v3853
    %v3867 = vmul.f32 %v3848, %v3853
    %v3868 = vmul.f32 %v3849, %v3853
    %v3869 = vmul.f32 %v3850, %v3853
    %v3870 = vmul.f32 %v3851, %v3853
    %v3872 = vperm.slane %v3499, 0
    %v3874 = vadd.f32 %v3855, %v3872
    %v3875 = vadd.f32 %v3856, %v3872
    %v3876 = vadd.f32 %v3857, %v3872
    %v3877 = vadd.f32 %v3858, %v3872
    %v3878 = vadd.f32 %v3859, %v3872
    %v3879 = vadd.f32 %v3860, %v3872
    %v3880 = vadd.f32 %v3861, %v3872
    %v3881 = vadd.f32 %v3862, %v3872
    %v3882 = vadd.f32 %v3863, %v3872
    %v3883 = vadd.f32 %v3864, %v3872
    %v3884 = vadd.f32 %v3865, %v3872
    %v3885 = vadd.f32 %v3866, %v3872
    %v3886 = vadd.f32 %v3867, %v3872
    %v3887 = vadd.f32 %v3868, %v3872
    %v3888 = vadd.f32 %v3869, %v3872
    %v3889 = vadd.f32 %v3870, %v3872
    %v3890 = vpack.c.bf16 %v3875, %v3874
    %v3891 = vpack.c.bf16 %v3877, %v3876
    %v3892 = vpack.c.bf16 %v3879, %v3878
    %v3893 = vpack.c.bf16 %v3881, %v3880
    %v3894 = vpack.c.bf16 %v3883, %v3882
    %v3895 = vpack.c.bf16 %v3885, %v3884
    %v3896 = vpack.c.bf16 %v3887, %v3886
    %v3897 = vpack.c.bf16 %v3889, %v3888
    %s3898 = scalar_lea.vmem %s5, 16
    %v3899 = vld [vmem:[%s3898] sm:$0xf]
    %v3900 = vld [vmem:[%s3898 + $0x4] sm:$0xf]
    %v3901 = vld [vmem:[%s3898 + $0x8] sm:$0xf]
    %v3902 = vld [vmem:[%s3898 + $0xc] sm:$0xf]
    %s3903 = scalar_lea.vmem %s6, 1
    %v3904 = vld [vmem:[%s3903] sm:$0x1]
    %v3906 = vperm.slane %v3904, 0
    %v3912 = vunpack.c.l.b16 %v3899
    %v3913 = vunpack.c.l.b16 %v3900
    %v3914 = vunpack.c.l.b16 %v3901
    %v3915 = vunpack.c.l.b16 %v3902
    %v3916 = vpack.c.b16 %v3913, %v3912
    %v3917 = vpack.c.b16 %v3915, %v3914
    %v3921 = vsel %vm291, %v3890, 0
    %v3924 = vsel %vm291, %v3891, 0
    %v3927 = vsel %vm291, %v3892, 0
    %v3930 = vsel %vm291, %v3893, 0
    %v3933 = vsel %vm291, %v3894, 0
    %v3936 = vsel %vm291, %v3895, 0
    %v3939 = vsel %vm291, %v3896, 0
    %v3942 = vsel %vm291, %v3897, 0
    %3944 = vmatpush.bf16.msra.mxu0 0
    %3945 = vmatpush.bf16.msra.mxu0 0
    %3946 = vmatpush.bf16.msra.mxu0 0
    %3947 = vmatpush.bf16.msra.mxu0 0
    %3948 = vmatpush.bf16.msra.mxu0 0
    %3949 = vmatpush.bf16.msra.mxu0 0
    %3950 = vmatpush.bf16.msra.mxu0 %v3917
    %3951 = vmatpush.bf16.msra.mxu0 %v3916
    %3952 = vmatmul.bf16.gmra.mxu0 %v3921
    %v3953 = vpop.f32.mrf.mxu0
    %v3954 = vadd.f32 %v3906, %v3953
    %v3955 = vpop.f32.mrf.mxu0
    %v3956 = vadd.f32 %v3906, %v3955
    %3957 = vmatmul.bf16.gmra.mxu0 %v3924
    %v3958 = vpop.f32.mrf.mxu0
    %v3959 = vadd.f32 %v3906, %v3958
    %v3960 = vpop.f32.mrf.mxu0
    %v3961 = vadd.f32 %v3906, %v3960
    %3962 = vmatmul.bf16.gmra.mxu0 %v3927
    %v3963 = vpop.f32.mrf.mxu0
    %v3964 = vadd.f32 %v3906, %v3963
    %v3965 = vpop.f32.mrf.mxu0
    %v3966 = vadd.f32 %v3906, %v3965
    %3967 = vmatmul.bf16.gmra.mxu0 %v3930
    %v3968 = vpop.f32.mrf.mxu0
    %v3969 = vadd.f32 %v3906, %v3968
    %v3970 = vpop.f32.mrf.mxu0
    %v3971 = vadd.f32 %v3906, %v3970
    %3972 = vmatmul.bf16.gmra.mxu0 %v3933
    %v3973 = vpop.f32.mrf.mxu0
    %v3974 = vadd.f32 %v3906, %v3973
    %v3975 = vpop.f32.mrf.mxu0
    %v3976 = vadd.f32 %v3906, %v3975
    %3977 = vmatmul.bf16.gmra.mxu0 %v3936
    %v3978 = vpop.f32.mrf.mxu0
    %v3979 = vadd.f32 %v3906, %v3978
    %v3980 = vpop.f32.mrf.mxu0
    %v3981 = vadd.f32 %v3906, %v3980
    %3982 = vmatmul.bf16.gmra.mxu0 %v3939
    %v3983 = vpop.f32.mrf.mxu0
    %v3984 = vadd.f32 %v3906, %v3983
    %v3985 = vpop.f32.mrf.mxu0
    %v3986 = vadd.f32 %v3906, %v3985
    %3987 = vmatmul.bf16.gmra.mxu0 %v3942
    %v3988 = vpop.f32.mrf.mxu0
    %v3989 = vadd.f32 %v3906, %v3988
    %v3990 = vpop.f32.mrf.mxu0
    %v3991 = vadd.f32 %v3906, %v3990
    %3992 = vdwg.mxu0
    %v3993 = vmul.f32 %v3954, 0.35355338
    %v3994 = vmul.f32 %v3956, 0.35355338
    %v3995 = vmul.f32 %v3959, 0.35355338
    %v3996 = vmul.f32 %v3961, 0.35355338
    %v3997 = vmul.f32 %v3964, 0.35355338
    %v3998 = vmul.f32 %v3966, 0.35355338
    %v3999 = vmul.f32 %v3969, 0.35355338
    %v4000 = vmul.f32 %v3971, 0.35355338
    %v4001 = vmul.f32 %v3974, 0.35355338
    %v4002 = vmul.f32 %v3976, 0.35355338
    %v4003 = vmul.f32 %v3979, 0.35355338
    %v4004 = vmul.f32 %v3981, 0.35355338
    %v4005 = vmul.f32 %v3984, 0.35355338
    %v4006 = vmul.f32 %v3986, 0.35355338
    %v4007 = vmul.f32 %v3989, 0.35355338
    %v4008 = vmul.f32 %v3991, 0.35355338
    %s4009 = scalar_lea.vmem %s7, 16
    %v4010 = vld [vmem:[%s4009] sm:$0xf]
    %v4011 = vld [vmem:[%s4009 + $0x4] sm:$0xf]
    %v4012 = vld [vmem:[%s4009 + $0x8] sm:$0xf]
    %v4013 = vld [vmem:[%s4009 + $0xc] sm:$0xf]
    %s4014 = scalar_lea.vmem %s8, 1
    %v4015 = vld [vmem:[%s4014] sm:$0x1]
    %v4017 = vperm.slane %v4015, 0
    %v4023 = vunpack.c.l.b16 %v4010
    %v4024 = vunpack.c.l.b16 %v4011
    %v4025 = vunpack.c.l.b16 %v4012
    %v4026 = vunpack.c.l.b16 %v4013
    %v4027 = vpack.c.b16 %v4024, %v4023
    %v4028 = vpack.c.b16 %v4026, %v4025
    %4031 = vmatpush.bf16.msra.mxu0 0
    %4032 = vmatpush.bf16.msra.mxu0 0
    %4033 = vmatpush.bf16.msra.mxu0 0
    %4034 = vmatpush.bf16.msra.mxu0 0
    %4035 = vmatpush.bf16.msra.mxu0 0
    %4036 = vmatpush.bf16.msra.mxu0 0
    %4037 = vmatpush.bf16.msra.mxu0 %v4028
    %4038 = vmatpush.bf16.msra.mxu0 %v4027
    %4039 = vmatmul.bf16.gmra.mxu0 %v3921
    %v4040 = vpop.f32.mrf.mxu0
    %v4041 = vadd.f32 %v4017, %v4040
    %v4042 = vpop.f32.mrf.mxu0
    %v4043 = vadd.f32 %v4017, %v4042
    %4044 = vmatmul.bf16.gmra.mxu0 %v3924
    %v4045 = vpop.f32.mrf.mxu0
    %v4046 = vadd.f32 %v4017, %v4045
    %v4047 = vpop.f32.mrf.mxu0
    %v4048 = vadd.f32 %v4017, %v4047
    %4049 = vmatmul.bf16.gmra.mxu0 %v3927
    %v4050 = vpop.f32.mrf.mxu0
    %v4051 = vadd.f32 %v4017, %v4050
    %v4052 = vpop.f32.mrf.mxu0
    %v4053 = vadd.f32 %v4017, %v4052
    %4054 = vmatmul.bf16.gmra.mxu0 %v3930
    %v4055 = vpop.f32.mrf.mxu0
    %v4056 = vadd.f32 %v4017, %v4055
    %v4057 = vpop.f32.mrf.mxu0
    %v4058 = vadd.f32 %v4017, %v4057
    %4059 = vmatmul.bf16.gmra.mxu0 %v3933
    %v4060 = vpop.f32.mrf.mxu0
    %v4061 = vadd.f32 %v4017, %v4060
    %v4062 = vpop.f32.mrf.mxu0
    %v4063 = vadd.f32 %v4017, %v4062
    %4064 = vmatmul.bf16.gmra.mxu0 %v3936
    %v4065 = vpop.f32.mrf.mxu0
    %v4066 = vadd.f32 %v4017, %v4065
    %v4067 = vpop.f32.mrf.mxu0
    %v4068 = vadd.f32 %v4017, %v4067
    %4069 = vmatmul.bf16.gmra.mxu0 %v3939
    %v4070 = vpop.f32.mrf.mxu0
    %v4071 = vadd.f32 %v4017, %v4070
    %v4072 = vpop.f32.mrf.mxu0
    %v4073 = vadd.f32 %v4017, %v4072
    %4074 = vmatmul.bf16.gmra.mxu0 %v3942
    %v4075 = vpop.f32.mrf.mxu0
    %v4076 = vadd.f32 %v4017, %v4075
    %v4077 = vpop.f32.mrf.mxu0
    %v4078 = vadd.f32 %v4017, %v4077
    %4079 = vdwg.mxu0
    %s4080 = scalar_lea.vmem %s9, 16
    %v4081 = vld [vmem:[%s4080] sm:$0xf]
    %v4082 = vld [vmem:[%s4080 + $0x4] sm:$0xf]
    %v4083 = vld [vmem:[%s4080 + $0x8] sm:$0xf]
    %v4084 = vld [vmem:[%s4080 + $0xc] sm:$0xf]
    %s4085 = scalar_lea.vmem %s10, 1
    %v4086 = vld [vmem:[%s4085] sm:$0x1]
    %v4088 = vperm.slane %v4086, 0
    %v4094 = vunpack.c.l.b16 %v4081
    %v4095 = vunpack.c.l.b16 %v4082
    %v4096 = vunpack.c.l.b16 %v4083
    %v4097 = vunpack.c.l.b16 %v4084
    %v4098 = vpack.c.b16 %v4095, %v4094
    %v4099 = vpack.c.b16 %v4097, %v4096
    %4102 = vmatpush.bf16.msra.mxu0 0
    %4103 = vmatpush.bf16.msra.mxu0 0
    %4104 = vmatpush.bf16.msra.mxu0 0
    %4105 = vmatpush.bf16.msra.mxu0 0
    %4106 = vmatpush.bf16.msra.mxu0 0
    %4107 = vmatpush.bf16.msra.mxu0 0
    %4108 = vmatpush.bf16.msra.mxu0 %v4099
    %4109 = vmatpush.bf16.msra.mxu0 %v4098
    %4110 = vmatmul.bf16.gmra.mxu0 %v3921
    %v4111 = vpop.f32.mrf.mxu0
    %v4112 = vadd.f32 %v4088, %v4111
    %v4113 = vpop.f32.mrf.mxu0
    %v4114 = vadd.f32 %v4088, %v4113
    %4115 = vmatmul.bf16.gmra.mxu0 %v3924
    %v4116 = vpop.f32.mrf.mxu0
    %v4117 = vadd.f32 %v4088, %v4116
    %v4118 = vpop.f32.mrf.mxu0
    %v4119 = vadd.f32 %v4088, %v4118
    %4120 = vmatmul.bf16.gmra.mxu0 %v3927
    %v4121 = vpop.f32.mrf.mxu0
    %v4122 = vadd.f32 %v4088, %v4121
    %v4123 = vpop.f32.mrf.mxu0
    %v4124 = vadd.f32 %v4088, %v4123
    %4125 = vmatmul.bf16.gmra.mxu0 %v3930
    %v4126 = vpop.f32.mrf.mxu0
    %v4127 = vadd.f32 %v4088, %v4126
    %v4128 = vpop.f32.mrf.mxu0
    %v4129 = vadd.f32 %v4088, %v4128
    %4130 = vmatmul.bf16.gmra.mxu0 %v3933
    %v4131 = vpop.f32.mrf.mxu0
    %v4132 = vadd.f32 %v4088, %v4131
    %v4133 = vpop.f32.mrf.mxu0
    %v4134 = vadd.f32 %v4088, %v4133
    %4135 = vmatmul.bf16.gmra.mxu0 %v3936
    %v4136 = vpop.f32.mrf.mxu0
    %v4137 = vadd.f32 %v4088, %v4136
    %v4138 = vpop.f32.mrf.mxu0
    %v4139 = vadd.f32 %v4088, %v4138
    %4140 = vmatmul.bf16.gmra.mxu0 %v3939
    %v4141 = vpop.f32.mrf.mxu0
    %v4142 = vadd.f32 %v4088, %v4141
    %v4143 = vpop.f32.mrf.mxu0
    %v4144 = vadd.f32 %v4088, %v4143
    %4145 = vmatmul.bf16.gmra.mxu0 %v3942
    %v4146 = vpop.f32.mrf.mxu0
    %v4147 = vadd.f32 %v4088, %v4146
    %v4148 = vpop.f32.mrf.mxu0
    %v4149 = vadd.f32 %v4088, %v4148
    %4150 = vdwg.mxu0
    %v4151 = vmul.f32 %v3993, %v523
    %v4152 = vmul.f32 %v3994, %v523
    %v4153 = vmul.f32 %v3995, %v523
    %v4154 = vmul.f32 %v3996, %v523
    %v4155 = vmul.f32 %v3997, %v523
    %v4156 = vmul.f32 %v3998, %v523
    %v4157 = vmul.f32 %v3999, %v523
    %v4158 = vmul.f32 %v4000, %v523
    %v4159 = vmul.f32 %v3993, %v524
    %v4160 = vmul.f32 %v3994, %v524
    %v4161 = vmul.f32 %v3995, %v524
    %v4162 = vmul.f32 %v3996, %v524
    %v4163 = vmul.f32 %v3997, %v524
    %v4164 = vmul.f32 %v3998, %v524
    %v4165 = vmul.f32 %v3999, %v524
    %v4166 = vmul.f32 %v4000, %v524
    %v4167 = vmul.f32 %v3993, %v525
    %v4168 = vmul.f32 %v3994, %v525
    %v4169 = vmul.f32 %v3995, %v525
    %v4170 = vmul.f32 %v3996, %v525
    %v4171 = vmul.f32 %v3997, %v525
    %v4172 = vmul.f32 %v3998, %v525
    %v4173 = vmul.f32 %v3999, %v525
    %v4174 = vmul.f32 %v4000, %v525
    %v4175 = vmul.f32 %v3993, %v526
    %v4176 = vmul.f32 %v3994, %v526
    %v4177 = vmul.f32 %v3995, %v526
    %v4178 = vmul.f32 %v3996, %v526
    %v4179 = vmul.f32 %v3997, %v526
    %v4180 = vmul.f32 %v3998, %v526
    %v4181 = vmul.f32 %v3999, %v526
    %v4182 = vmul.f32 %v4000, %v526
    %v4183 = vpack.c.bf16 %v4151, %v4151
    %v4184 = vpack.c.bf16 %v4152, %v4152
    %v4185 = vpack.c.bf16 %v4153, %v4153
    %v4186 = vpack.c.bf16 %v4154, %v4154
    %v4187 = vpack.c.bf16 %v4155, %v4155
    %v4188 = vpack.c.bf16 %v4156, %v4156
    %v4189 = vpack.c.bf16 %v4157, %v4157
    %v4190 = vpack.c.bf16 %v4158, %v4158
    %v4191 = vpack.c.bf16 %v4159, %v4159
    %v4192 = vpack.c.bf16 %v4160, %v4160
    %v4193 = vpack.c.bf16 %v4161, %v4161
    %v4194 = vpack.c.bf16 %v4162, %v4162
    %v4195 = vpack.c.bf16 %v4163, %v4163
    %v4196 = vpack.c.bf16 %v4164, %v4164
    %v4197 = vpack.c.bf16 %v4165, %v4165
    %v4198 = vpack.c.bf16 %v4166, %v4166
    %v4199 = vpack.c.bf16 %v4167, %v4167
    %v4200 = vpack.c.bf16 %v4168, %v4168
    %v4201 = vpack.c.bf16 %v4169, %v4169
    %v4202 = vpack.c.bf16 %v4170, %v4170
    %v4203 = vpack.c.bf16 %v4171, %v4171
    %v4204 = vpack.c.bf16 %v4172, %v4172
    %v4205 = vpack.c.bf16 %v4173, %v4173
    %v4206 = vpack.c.bf16 %v4174, %v4174
    %v4207 = vpack.c.bf16 %v4175, %v4175
    %v4208 = vpack.c.bf16 %v4176, %v4176
    %v4209 = vpack.c.bf16 %v4177, %v4177
    %v4210 = vpack.c.bf16 %v4178, %v4178
    %v4211 = vpack.c.bf16 %v4179, %v4179
    %v4212 = vpack.c.bf16 %v4180, %v4180
    %v4213 = vpack.c.bf16 %v4181, %v4181
    %v4214 = vpack.c.bf16 %v4182, %v4182
    %v4215 = vpack.c.bf16 %v4041, %v4041
    %v4216 = vpack.c.bf16 %v4043, %v4043
    %v4217 = vpack.c.bf16 %v4046, %v4046
    %v4218 = vpack.c.bf16 %v4048, %v4048
    %v4219 = vpack.c.bf16 %v4051, %v4051
    %v4220 = vpack.c.bf16 %v4053, %v4053
    %v4221 = vpack.c.bf16 %v4056, %v4056
    %v4222 = vpack.c.bf16 %v4058, %v4058
    %v4223 = vpack.c.bf16 %v4112, %v4112
    %v4224 = vpack.c.bf16 %v4114, %v4114
    %v4225 = vpack.c.bf16 %v4117, %v4117
    %v4226 = vpack.c.bf16 %v4119, %v4119
    %v4227 = vpack.c.bf16 %v4122, %v4122
    %v4228 = vpack.c.bf16 %v4124, %v4124
    %v4229 = vpack.c.bf16 %v4127, %v4127
    %v4230 = vpack.c.bf16 %v4129, %v4129
    %v4239 = vunpack.c.l.b16 %v4183
    %v4240 = vunpack.c.l.b16 %v4184
    %v4241 = vunpack.c.l.b16 %v4185
    %v4242 = vunpack.c.l.b16 %v4186
    %v4243 = vunpack.c.l.b16 %v4187
    %v4244 = vunpack.c.l.b16 %v4188
    %v4245 = vunpack.c.l.b16 %v4189
    %v4246 = vunpack.c.l.b16 %v4190
    %v4247 = vpack.c.b16 %v4240, %v4239
    %v4248 = vpack.c.b16 %v4242, %v4241
    %v4249 = vpack.c.b16 %v4244, %v4243
    %v4250 = vpack.c.b16 %v4246, %v4245
    %v4259 = vunpack.c.l.b16 %v4215
    %v4260 = vunpack.c.l.b16 %v4216
    %v4261 = vunpack.c.l.b16 %v4217
    %v4262 = vunpack.c.l.b16 %v4218
    %v4263 = vunpack.c.l.b16 %v4219
    %v4264 = vunpack.c.l.b16 %v4220
    %v4265 = vunpack.c.l.b16 %v4221
    %v4266 = vunpack.c.l.b16 %v4222
    %v4267 = vpack.c.b16 %v4260, %v4259
    %v4268 = vpack.c.b16 %v4262, %v4261
    %v4269 = vpack.c.b16 %v4264, %v4263
    %v4270 = vpack.c.b16 %v4266, %v4265
    %v4272 = vsel %vm291, %v4247, 0
    %v4275 = vsel %vm291, %v4248, 0
    %v4278 = vsel %vm291, %v4249, 0
    %v4281 = vsel %vm291, %v4250, 0
    %v4284 = vsel %vm291, %v4267, 0
    %v4287 = vsel %vm291, %v4268, 0
    %v4290 = vsel %vm291, %v4269, 0
    %v4293 = vsel %vm291, %v4270, 0
    %4295 = vmatpush.bf16.xpose.msra.mxu0 0
    %4296 = vmatpush.bf16.xpose.msra.mxu0 0
    %4297 = vmatpush.bf16.xpose.msra.mxu0 0
    %4298 = vmatpush.bf16.xpose.msra.mxu0 0
    %4299 = vmatpush.bf16.xpose.msra.mxu0 %v4293
    %4300 = vmatpush.bf16.xpose.msra.mxu0 %v4290
    %4301 = vmatpush.bf16.xpose.msra.mxu0 %v4287
    %4302 = vmatpush.bf16.xpose.msra.mxu0 %v4284
    %4303 = vmatmul.bf16.gmra.mxu0 %v4272
    %v4304 = vpop.f32.mrf.mxu0
    %v4305 = vadd.f32 0.0, %v4304
    %v4306 = vpop.f32.mrf.mxu0
    %v4307 = vadd.f32 0.0, %v4306
    %4308 = vmatmul.bf16.gmra.mxu0 %v4275
    %v4309 = vpop.f32.mrf.mxu0
    %v4310 = vadd.f32 0.0, %v4309
    %v4311 = vpop.f32.mrf.mxu0
    %v4312 = vadd.f32 0.0, %v4311
    %4313 = vmatmul.bf16.gmra.mxu0 %v4278
    %v4314 = vpop.f32.mrf.mxu0
    %v4315 = vadd.f32 0.0, %v4314
    %v4316 = vpop.f32.mrf.mxu0
    %v4317 = vadd.f32 0.0, %v4316
    %4318 = vmatmul.bf16.gmra.mxu0 %v4281
    %v4319 = vpop.f32.mrf.mxu0
    %v4320 = vadd.f32 0.0, %v4319
    %v4321 = vpop.f32.mrf.mxu0
    %v4322 = vadd.f32 0.0, %v4321
    %4323 = vdwg.mxu0
    %v4332 = vunpack.c.l.b16 %v4191
    %v4333 = vunpack.c.l.b16 %v4192
    %v4334 = vunpack.c.l.b16 %v4193
    %v4335 = vunpack.c.l.b16 %v4194
    %v4336 = vunpack.c.l.b16 %v4195
    %v4337 = vunpack.c.l.b16 %v4196
    %v4338 = vunpack.c.l.b16 %v4197
    %v4339 = vunpack.c.l.b16 %v4198
    %v4340 = vpack.c.b16 %v4333, %v4332
    %v4341 = vpack.c.b16 %v4335, %v4334
    %v4342 = vpack.c.b16 %v4337, %v4336
    %v4343 = vpack.c.b16 %v4339, %v4338
    %v4345 = vsel %vm291, %v4340, 0
    %v4348 = vsel %vm291, %v4341, 0
    %v4351 = vsel %vm291, %v4342, 0
    %v4354 = vsel %vm291, %v4343, 0
    %4356 = vmatpush.bf16.xpose.msra.mxu0 0
    %4357 = vmatpush.bf16.xpose.msra.mxu0 0
    %4358 = vmatpush.bf16.xpose.msra.mxu0 0
    %4359 = vmatpush.bf16.xpose.msra.mxu0 0
    %4360 = vmatpush.bf16.xpose.msra.mxu0 %v4293
    %4361 = vmatpush.bf16.xpose.msra.mxu0 %v4290
    %4362 = vmatpush.bf16.xpose.msra.mxu0 %v4287
    %4363 = vmatpush.bf16.xpose.msra.mxu0 %v4284
    %4364 = vmatmul.bf16.gmra.mxu0 %v4345
    %v4365 = vpop.f32.mrf.mxu0
    %v4366 = vadd.f32 0.0, %v4365
    %v4367 = vpop.f32.mrf.mxu0
    %v4368 = vadd.f32 0.0, %v4367
    %4369 = vmatmul.bf16.gmra.mxu0 %v4348
    %v4370 = vpop.f32.mrf.mxu0
    %v4371 = vadd.f32 0.0, %v4370
    %v4372 = vpop.f32.mrf.mxu0
    %v4373 = vadd.f32 0.0, %v4372
    %4374 = vmatmul.bf16.gmra.mxu0 %v4351
    %v4375 = vpop.f32.mrf.mxu0
    %v4376 = vadd.f32 0.0, %v4375
    %v4377 = vpop.f32.mrf.mxu0
    %v4378 = vadd.f32 0.0, %v4377
    %4379 = vmatmul.bf16.gmra.mxu0 %v4354
    %v4380 = vpop.f32.mrf.mxu0
    %v4381 = vadd.f32 0.0, %v4380
    %v4382 = vpop.f32.mrf.mxu0
    %v4383 = vadd.f32 0.0, %v4382
    %4384 = vdwg.mxu0
    %v4393 = vunpack.c.l.b16 %v4199
    %v4394 = vunpack.c.l.b16 %v4200
    %v4395 = vunpack.c.l.b16 %v4201
    %v4396 = vunpack.c.l.b16 %v4202
    %v4397 = vunpack.c.l.b16 %v4203
    %v4398 = vunpack.c.l.b16 %v4204
    %v4399 = vunpack.c.l.b16 %v4205
    %v4400 = vunpack.c.l.b16 %v4206
    %v4401 = vpack.c.b16 %v4394, %v4393
    %v4402 = vpack.c.b16 %v4396, %v4395
    %v4403 = vpack.c.b16 %v4398, %v4397
    %v4404 = vpack.c.b16 %v4400, %v4399
    %v4406 = vsel %vm291, %v4401, 0
    %v4409 = vsel %vm291, %v4402, 0
    %v4412 = vsel %vm291, %v4403, 0
    %v4415 = vsel %vm291, %v4404, 0
    %4417 = vmatpush.bf16.xpose.msra.mxu0 0
    %4418 = vmatpush.bf16.xpose.msra.mxu0 0
    %4419 = vmatpush.bf16.xpose.msra.mxu0 0
    %4420 = vmatpush.bf16.xpose.msra.mxu0 0
    %4421 = vmatpush.bf16.xpose.msra.mxu0 %v4293
    %4422 = vmatpush.bf16.xpose.msra.mxu0 %v4290
    %4423 = vmatpush.bf16.xpose.msra.mxu0 %v4287
    %4424 = vmatpush.bf16.xpose.msra.mxu0 %v4284
    %4425 = vmatmul.bf16.gmra.mxu0 %v4406
    %v4426 = vpop.f32.mrf.mxu0
    %v4427 = vadd.f32 0.0, %v4426
    %v4428 = vpop.f32.mrf.mxu0
    %v4429 = vadd.f32 0.0, %v4428
    %4430 = vmatmul.bf16.gmra.mxu0 %v4409
    %v4431 = vpop.f32.mrf.mxu0
    %v4432 = vadd.f32 0.0, %v4431
    %v4433 = vpop.f32.mrf.mxu0
    %v4434 = vadd.f32 0.0, %v4433
    %4435 = vmatmul.bf16.gmra.mxu0 %v4412
    %v4436 = vpop.f32.mrf.mxu0
    %v4437 = vadd.f32 0.0, %v4436
    %v4438 = vpop.f32.mrf.mxu0
    %v4439 = vadd.f32 0.0, %v4438
    %4440 = vmatmul.bf16.gmra.mxu0 %v4415
    %v4441 = vpop.f32.mrf.mxu0
    %v4442 = vadd.f32 0.0, %v4441
    %v4443 = vpop.f32.mrf.mxu0
    %v4444 = vadd.f32 0.0, %v4443
    %4445 = vdwg.mxu0
    %v4454 = vunpack.c.l.b16 %v4207
    %v4455 = vunpack.c.l.b16 %v4208
    %v4456 = vunpack.c.l.b16 %v4209
    %v4457 = vunpack.c.l.b16 %v4210
    %v4458 = vunpack.c.l.b16 %v4211
    %v4459 = vunpack.c.l.b16 %v4212
    %v4460 = vunpack.c.l.b16 %v4213
    %v4461 = vunpack.c.l.b16 %v4214
    %v4462 = vpack.c.b16 %v4455, %v4454
    %v4463 = vpack.c.b16 %v4457, %v4456
    %v4464 = vpack.c.b16 %v4459, %v4458
    %v4465 = vpack.c.b16 %v4461, %v4460
    %v4467 = vsel %vm291, %v4462, 0
    %v4470 = vsel %vm291, %v4463, 0
    %v4473 = vsel %vm291, %v4464, 0
    %v4476 = vsel %vm291, %v4465, 0
    %4478 = vmatpush.bf16.xpose.msra.mxu0 0
    %4479 = vmatpush.bf16.xpose.msra.mxu0 0
    %4480 = vmatpush.bf16.xpose.msra.mxu0 0
    %4481 = vmatpush.bf16.xpose.msra.mxu0 0
    %4482 = vmatpush.bf16.xpose.msra.mxu0 %v4293
    %4483 = vmatpush.bf16.xpose.msra.mxu0 %v4290
    %4484 = vmatpush.bf16.xpose.msra.mxu0 %v4287
    %4485 = vmatpush.bf16.xpose.msra.mxu0 %v4284
    %4486 = vmatmul.bf16.gmra.mxu0 %v4467
    %v4487 = vpop.f32.mrf.mxu0
    %v4488 = vadd.f32 0.0, %v4487
    %v4489 = vpop.f32.mrf.mxu0
    %v4490 = vadd.f32 0.0, %v4489
    %4491 = vmatmul.bf16.gmra.mxu0 %v4470
    %v4492 = vpop.f32.mrf.mxu0
    %v4493 = vadd.f32 0.0, %v4492
    %v4494 = vpop.f32.mrf.mxu0
    %v4495 = vadd.f32 0.0, %v4494
    %4496 = vmatmul.bf16.gmra.mxu0 %v4473
    %v4497 = vpop.f32.mrf.mxu0
    %v4498 = vadd.f32 0.0, %v4497
    %v4499 = vpop.f32.mrf.mxu0
    %v4500 = vadd.f32 0.0, %v4499
    %4501 = vmatmul.bf16.gmra.mxu0 %v4476
    %v4502 = vpop.f32.mrf.mxu0
    %v4503 = vadd.f32 0.0, %v4502
    %v4504 = vpop.f32.mrf.mxu0
    %v4505 = vadd.f32 0.0, %v4504
    %4506 = vdwg.mxu0
    %v4507 = vsel %vm887, %v4305, -inf
    %4508 = vmax.xlane.f32.xlu0 %v4507
    %v4509 = vpop.xlane.xlu0 %4508
    %v4510 = vsel %vm887, %v4307, -inf
    %4511 = vmax.xlane.f32.xlu0 %v4510
    %v4512 = vpop.xlane.xlu0 %4511
    %v4513 = vsel %vm887, %v4310, -inf
    %4514 = vmax.xlane.f32.xlu0 %v4513
    %v4515 = vpop.xlane.xlu0 %4514
    %v4516 = vsel %vm887, %v4312, -inf
    %4517 = vmax.xlane.f32.xlu0 %v4516
    %v4518 = vpop.xlane.xlu0 %4517
    %v4519 = vsel %vm887, %v4315, -inf
    %4520 = vmax.xlane.f32.xlu0 %v4519
    %v4521 = vpop.xlane.xlu0 %4520
    %v4522 = vsel %vm887, %v4317, -inf
    %4523 = vmax.xlane.f32.xlu0 %v4522
    %v4524 = vpop.xlane.xlu0 %4523
    %v4525 = vsel %vm887, %v4320, -inf
    %4526 = vmax.xlane.f32.xlu0 %v4525
    %v4527 = vpop.xlane.xlu0 %4526
    %v4528 = vsel %vm887, %v4322, -inf
    %4529 = vmax.xlane.f32.xlu0 %v4528
    %v4530 = vpop.xlane.xlu0 %4529
    %v4531 = vsel %vm887, %v4366, -inf
    %4532 = vmax.xlane.f32.xlu0 %v4531
    %v4533 = vpop.xlane.xlu0 %4532
    %v4534 = vsel %vm887, %v4368, -inf
    %4535 = vmax.xlane.f32.xlu0 %v4534
    %v4536 = vpop.xlane.xlu0 %4535
    %v4537 = vsel %vm887, %v4371, -inf
    %4538 = vmax.xlane.f32.xlu0 %v4537
    %v4539 = vpop.xlane.xlu0 %4538
    %v4540 = vsel %vm887, %v4373, -inf
    %4541 = vmax.xlane.f32.xlu0 %v4540
    %v4542 = vpop.xlane.xlu0 %4541
    %v4543 = vsel %vm887, %v4376, -inf
    %4544 = vmax.xlane.f32.xlu0 %v4543
    %v4545 = vpop.xlane.xlu0 %4544
    %v4546 = vsel %vm887, %v4378, -inf
    %4547 = vmax.xlane.f32.xlu0 %v4546
    %v4548 = vpop.xlane.xlu0 %4547
    %v4549 = vsel %vm887, %v4381, -inf
    %4550 = vmax.xlane.f32.xlu0 %v4549
    %v4551 = vpop.xlane.xlu0 %4550
    %v4552 = vsel %vm887, %v4383, -inf
    %4553 = vmax.xlane.f32.xlu0 %v4552
    %v4554 = vpop.xlane.xlu0 %4553
    %v4555 = vsel %vm887, %v4427, -inf
    %4556 = vmax.xlane.f32.xlu0 %v4555
    %v4557 = vpop.xlane.xlu0 %4556
    %v4558 = vsel %vm887, %v4429, -inf
    %4559 = vmax.xlane.f32.xlu0 %v4558
    %v4560 = vpop.xlane.xlu0 %4559
    %v4561 = vsel %vm887, %v4432, -inf
    %4562 = vmax.xlane.f32.xlu0 %v4561
    %v4563 = vpop.xlane.xlu0 %4562
    %v4564 = vsel %vm887, %v4434, -inf
    %4565 = vmax.xlane.f32.xlu0 %v4564
    %v4566 = vpop.xlane.xlu0 %4565
    %v4567 = vsel %vm887, %v4437, -inf
    %4568 = vmax.xlane.f32.xlu0 %v4567
    %v4569 = vpop.xlane.xlu0 %4568
    %v4570 = vsel %vm887, %v4439, -inf
    %4571 = vmax.xlane.f32.xlu0 %v4570
    %v4572 = vpop.xlane.xlu0 %4571
    %v4573 = vsel %vm887, %v4442, -inf
    %4574 = vmax.xlane.f32.xlu0 %v4573
    %v4575 = vpop.xlane.xlu0 %4574
    %v4576 = vsel %vm887, %v4444, -inf
    %4577 = vmax.xlane.f32.xlu0 %v4576
    %v4578 = vpop.xlane.xlu0 %4577
    %v4579 = vsel %vm887, %v4488, -inf
    %4580 = vmax.xlane.f32.xlu0 %v4579
    %v4581 = vpop.xlane.xlu0 %4580
    %v4582 = vsel %vm887, %v4490, -inf
    %4583 = vmax.xlane.f32.xlu0 %v4582
    %v4584 = vpop.xlane.xlu0 %4583
    %v4585 = vsel %vm887, %v4493, -inf
    %4586 = vmax.xlane.f32.xlu0 %v4585
    %v4587 = vpop.xlane.xlu0 %4586
    %v4588 = vsel %vm887, %v4495, -inf
    %4589 = vmax.xlane.f32.xlu0 %v4588
    %v4590 = vpop.xlane.xlu0 %4589
    %v4591 = vsel %vm887, %v4498, -inf
    %4592 = vmax.xlane.f32.xlu0 %v4591
    %v4593 = vpop.xlane.xlu0 %4592
    %v4594 = vsel %vm887, %v4500, -inf
    %4595 = vmax.xlane.f32.xlu0 %v4594
    %v4596 = vpop.xlane.xlu0 %4595
    %v4597 = vsel %vm887, %v4503, -inf
    %4598 = vmax.xlane.f32.xlu0 %v4597
    %v4599 = vpop.xlane.xlu0 %4598
    %v4600 = vsel %vm887, %v4505, -inf
    %4601 = vmax.xlane.f32.xlu0 %v4600
    %v4602 = vpop.xlane.xlu0 %4601
    %v4603 = vsub.f32 %v4305, %v4509
    %v4604 = vsub.f32 %v4307, %v4512
    %v4605 = vsub.f32 %v4310, %v4515
    %v4606 = vsub.f32 %v4312, %v4518
    %v4607 = vsub.f32 %v4315, %v4521
    %v4608 = vsub.f32 %v4317, %v4524
    %v4609 = vsub.f32 %v4320, %v4527
    %v4610 = vsub.f32 %v4322, %v4530
    %v4611 = vsub.f32 %v4366, %v4533
    %v4612 = vsub.f32 %v4368, %v4536
    %v4613 = vsub.f32 %v4371, %v4539
    %v4614 = vsub.f32 %v4373, %v4542
    %v4615 = vsub.f32 %v4376, %v4545
    %v4616 = vsub.f32 %v4378, %v4548
    %v4617 = vsub.f32 %v4381, %v4551
    %v4618 = vsub.f32 %v4383, %v4554
    %v4619 = vsub.f32 %v4427, %v4557
    %v4620 = vsub.f32 %v4429, %v4560
    %v4621 = vsub.f32 %v4432, %v4563
    %v4622 = vsub.f32 %v4434, %v4566
    %v4623 = vsub.f32 %v4437, %v4569
    %v4624 = vsub.f32 %v4439, %v4572
    %v4625 = vsub.f32 %v4442, %v4575
    %v4626 = vsub.f32 %v4444, %v4578
    %v4627 = vsub.f32 %v4488, %v4581
    %v4628 = vsub.f32 %v4490, %v4584
    %v4629 = vsub.f32 %v4493, %v4587
    %v4630 = vsub.f32 %v4495, %v4590
    %v4631 = vsub.f32 %v4498, %v4593
    %v4632 = vsub.f32 %v4500, %v4596
    %v4633 = vsub.f32 %v4503, %v4599
    %v4634 = vsub.f32 %v4505, %v4602
    %v4635 = vmul.f32 %v4603, 1.442695
    %v4636 = vpow.pop %v4635
    %v4637 = vmul.f32 %v4604, 1.442695
    %v4638 = vpow.pop %v4637
    %v4639 = vmul.f32 %v4605, 1.442695
    %v4640 = vpow.pop %v4639
    %v4641 = vmul.f32 %v4606, 1.442695
    %v4642 = vpow.pop %v4641
    %v4643 = vmul.f32 %v4607, 1.442695
    %v4644 = vpow.pop %v4643
    %v4645 = vmul.f32 %v4608, 1.442695
    %v4646 = vpow.pop %v4645
    %v4647 = vmul.f32 %v4609, 1.442695
    %v4648 = vpow.pop %v4647
    %v4649 = vmul.f32 %v4610, 1.442695
    %v4650 = vpow.pop %v4649
    %v4651 = vmul.f32 %v4611, 1.442695
    %v4652 = vpow.pop %v4651
    %v4653 = vmul.f32 %v4612, 1.442695
    %v4654 = vpow.pop %v4653
    %v4655 = vmul.f32 %v4613, 1.442695
    %v4656 = vpow.pop %v4655
    %v4657 = vmul.f32 %v4614, 1.442695
    %v4658 = vpow.pop %v4657
    %v4659 = vmul.f32 %v4615, 1.442695
    %v4660 = vpow.pop %v4659
    %v4661 = vmul.f32 %v4616, 1.442695
    %v4662 = vpow.pop %v4661
    %v4663 = vmul.f32 %v4617, 1.442695
    %v4664 = vpow.pop %v4663
    %v4665 = vmul.f32 %v4618, 1.442695
    %v4666 = vpow.pop %v4665
    %v4667 = vmul.f32 %v4619, 1.442695
    %v4668 = vpow.pop %v4667
    %v4669 = vmul.f32 %v4620, 1.442695
    %v4670 = vpow.pop %v4669
    %v4671 = vmul.f32 %v4621, 1.442695
    %v4672 = vpow.pop %v4671
    %v4673 = vmul.f32 %v4622, 1.442695
    %v4674 = vpow.pop %v4673
    %v4675 = vmul.f32 %v4623, 1.442695
    %v4676 = vpow.pop %v4675
    %v4677 = vmul.f32 %v4624, 1.442695
    %v4678 = vpow.pop %v4677
    %v4679 = vmul.f32 %v4625, 1.442695
    %v4680 = vpow.pop %v4679
    %v4681 = vmul.f32 %v4626, 1.442695
    %v4682 = vpow.pop %v4681
    %v4683 = vmul.f32 %v4627, 1.442695
    %v4684 = vpow.pop %v4683
    %v4685 = vmul.f32 %v4628, 1.442695
    %v4686 = vpow.pop %v4685
    %v4687 = vmul.f32 %v4629, 1.442695
    %v4688 = vpow.pop %v4687
    %v4689 = vmul.f32 %v4630, 1.442695
    %v4690 = vpow.pop %v4689
    %v4691 = vmul.f32 %v4631, 1.442695
    %v4692 = vpow.pop %v4691
    %v4693 = vmul.f32 %v4632, 1.442695
    %v4694 = vpow.pop %v4693
    %v4695 = vmul.f32 %v4633, 1.442695
    %v4696 = vpow.pop %v4695
    %v4697 = vmul.f32 %v4634, 1.442695
    %v4698 = vpow.pop %v4697
    %v4699 = vsel %vm887, %v4636, 0.0
    %4700 = vadd.xlane.f32.xlu0 %v4699
    %v4701 = vpop.xlane.xlu0 %4700
    %v4702 = vsel %vm887, %v4638, 0.0
    %4703 = vadd.xlane.f32.xlu0 %v4702
    %v4704 = vpop.xlane.xlu0 %4703
    %v4705 = vsel %vm887, %v4640, 0.0
    %4706 = vadd.xlane.f32.xlu0 %v4705
    %v4707 = vpop.xlane.xlu0 %4706
    %v4708 = vsel %vm887, %v4642, 0.0
    %4709 = vadd.xlane.f32.xlu0 %v4708
    %v4710 = vpop.xlane.xlu0 %4709
    %v4711 = vsel %vm887, %v4644, 0.0
    %4712 = vadd.xlane.f32.xlu0 %v4711
    %v4713 = vpop.xlane.xlu0 %4712
    %v4714 = vsel %vm887, %v4646, 0.0
    %4715 = vadd.xlane.f32.xlu0 %v4714
    %v4716 = vpop.xlane.xlu0 %4715
    %v4717 = vsel %vm887, %v4648, 0.0
    %4718 = vadd.xlane.f32.xlu0 %v4717
    %v4719 = vpop.xlane.xlu0 %4718
    %v4720 = vsel %vm887, %v4650, 0.0
    %4721 = vadd.xlane.f32.xlu0 %v4720
    %v4722 = vpop.xlane.xlu0 %4721
    %v4723 = vsel %vm887, %v4652, 0.0
    %4724 = vadd.xlane.f32.xlu0 %v4723
    %v4725 = vpop.xlane.xlu0 %4724
    %v4726 = vsel %vm887, %v4654, 0.0
    %4727 = vadd.xlane.f32.xlu0 %v4726
    %v4728 = vpop.xlane.xlu0 %4727
    %v4729 = vsel %vm887, %v4656, 0.0
    %4730 = vadd.xlane.f32.xlu0 %v4729
    %v4731 = vpop.xlane.xlu0 %4730
    %v4732 = vsel %vm887, %v4658, 0.0
    %4733 = vadd.xlane.f32.xlu0 %v4732
    %v4734 = vpop.xlane.xlu0 %4733
    %v4735 = vsel %vm887, %v4660, 0.0
    %4736 = vadd.xlane.f32.xlu0 %v4735
    %v4737 = vpop.xlane.xlu0 %4736
    %v4738 = vsel %vm887, %v4662, 0.0
    %4739 = vadd.xlane.f32.xlu0 %v4738
    %v4740 = vpop.xlane.xlu0 %4739
    %v4741 = vsel %vm887, %v4664, 0.0
    %4742 = vadd.xlane.f32.xlu0 %v4741
    %v4743 = vpop.xlane.xlu0 %4742
    %v4744 = vsel %vm887, %v4666, 0.0
    %4745 = vadd.xlane.f32.xlu0 %v4744
    %v4746 = vpop.xlane.xlu0 %4745
    %v4747 = vsel %vm887, %v4668, 0.0
    %4748 = vadd.xlane.f32.xlu0 %v4747
    %v4749 = vpop.xlane.xlu0 %4748
    %v4750 = vsel %vm887, %v4670, 0.0
    %4751 = vadd.xlane.f32.xlu0 %v4750
    %v4752 = vpop.xlane.xlu0 %4751
    %v4753 = vsel %vm887, %v4672, 0.0
    %4754 = vadd.xlane.f32.xlu0 %v4753
    %v4755 = vpop.xlane.xlu0 %4754
    %v4756 = vsel %vm887, %v4674, 0.0
    %4757 = vadd.xlane.f32.xlu0 %v4756
    %v4758 = vpop.xlane.xlu0 %4757
    %v4759 = vsel %vm887, %v4676, 0.0
    %4760 = vadd.xlane.f32.xlu0 %v4759
    %v4761 = vpop.xlane.xlu0 %4760
    %v4762 = vsel %vm887, %v4678, 0.0
    %4763 = vadd.xlane.f32.xlu0 %v4762
    %v4764 = vpop.xlane.xlu0 %4763
    %v4765 = vsel %vm887, %v4680, 0.0
    %4766 = vadd.xlane.f32.xlu0 %v4765
    %v4767 = vpop.xlane.xlu0 %4766
    %v4768 = vsel %vm887, %v4682, 0.0
    %4769 = vadd.xlane.f32.xlu0 %v4768
    %v4770 = vpop.xlane.xlu0 %4769
    %v4771 = vsel %vm887, %v4684, 0.0
    %4772 = vadd.xlane.f32.xlu0 %v4771
    %v4773 = vpop.xlane.xlu0 %4772
    %v4774 = vsel %vm887, %v4686, 0.0
    %4775 = vadd.xlane.f32.xlu0 %v4774
    %v4776 = vpop.xlane.xlu0 %4775
    %v4777 = vsel %vm887, %v4688, 0.0
    %4778 = vadd.xlane.f32.xlu0 %v4777
    %v4779 = vpop.xlane.xlu0 %4778
    %v4780 = vsel %vm887, %v4690, 0.0
    %4781 = vadd.xlane.f32.xlu0 %v4780
    %v4782 = vpop.xlane.xlu0 %4781
    %v4783 = vsel %vm887, %v4692, 0.0
    %4784 = vadd.xlane.f32.xlu0 %v4783
    %v4785 = vpop.xlane.xlu0 %4784
    %v4786 = vsel %vm887, %v4694, 0.0
    %4787 = vadd.xlane.f32.xlu0 %v4786
    %v4788 = vpop.xlane.xlu0 %4787
    %v4789 = vsel %vm887, %v4696, 0.0
    %4790 = vadd.xlane.f32.xlu0 %v4789
    %v4791 = vpop.xlane.xlu0 %4790
    %v4792 = vsel %vm887, %v4698, 0.0
    %4793 = vadd.xlane.f32.xlu0 %v4792
    %v4794 = vpop.xlane.xlu0 %4793
    %v4795 = vrcp.pop %v4701
    %v4796 = vrcp.pop %v4704
    %v4797 = vrcp.pop %v4707
    %v4798 = vrcp.pop %v4710
    %v4799 = vrcp.pop %v4713
    %v4800 = vrcp.pop %v4716
    %v4801 = vrcp.pop %v4719
    %v4802 = vrcp.pop %v4722
    %v4803 = vrcp.pop %v4725
    %v4804 = vrcp.pop %v4728
    %v4805 = vrcp.pop %v4731
    %v4806 = vrcp.pop %v4734
    %v4807 = vrcp.pop %v4737
    %v4808 = vrcp.pop %v4740
    %v4809 = vrcp.pop %v4743
    %v4810 = vrcp.pop %v4746
    %v4811 = vrcp.pop %v4749
    %v4812 = vrcp.pop %v4752
    %v4813 = vrcp.pop %v4755
    %v4814 = vrcp.pop %v4758
    %v4815 = vrcp.pop %v4761
    %v4816 = vrcp.pop %v4764
    %v4817 = vrcp.pop %v4767
    %v4818 = vrcp.pop %v4770
    %v4819 = vrcp.pop %v4773
    %v4820 = vrcp.pop %v4776
    %v4821 = vrcp.pop %v4779
    %v4822 = vrcp.pop %v4782
    %v4823 = vrcp.pop %v4785
    %v4824 = vrcp.pop %v4788
    %v4825 = vrcp.pop %v4791
    %v4826 = vrcp.pop %v4794
    %v4827 = vmul.f32 %v4636, %v4795
    %v4828 = vmul.f32 %v4638, %v4796
    %v4829 = vmul.f32 %v4640, %v4797
    %v4830 = vmul.f32 %v4642, %v4798
    %v4831 = vmul.f32 %v4644, %v4799
    %v4832 = vmul.f32 %v4646, %v4800
    %v4833 = vmul.f32 %v4648, %v4801
    %v4834 = vmul.f32 %v4650, %v4802
    %v4835 = vmul.f32 %v4652, %v4803
    %v4836 = vmul.f32 %v4654, %v4804
    %v4837 = vmul.f32 %v4656, %v4805
    %v4838 = vmul.f32 %v4658, %v4806
    %v4839 = vmul.f32 %v4660, %v4807
    %v4840 = vmul.f32 %v4662, %v4808
    %v4841 = vmul.f32 %v4664, %v4809
    %v4842 = vmul.f32 %v4666, %v4810
    %v4843 = vmul.f32 %v4668, %v4811
    %v4844 = vmul.f32 %v4670, %v4812
    %v4845 = vmul.f32 %v4672, %v4813
    %v4846 = vmul.f32 %v4674, %v4814
    %v4847 = vmul.f32 %v4676, %v4815
    %v4848 = vmul.f32 %v4678, %v4816
    %v4849 = vmul.f32 %v4680, %v4817
    %v4850 = vmul.f32 %v4682, %v4818
    %v4851 = vmul.f32 %v4684, %v4819
    %v4852 = vmul.f32 %v4686, %v4820
    %v4853 = vmul.f32 %v4688, %v4821
    %v4854 = vmul.f32 %v4690, %v4822
    %v4855 = vmul.f32 %v4692, %v4823
    %v4856 = vmul.f32 %v4694, %v4824
    %v4857 = vmul.f32 %v4696, %v4825
    %v4858 = vmul.f32 %v4698, %v4826
    %v4859 = vpack.c.bf16 %v4827, %v4827
    %v4860 = vpack.c.bf16 %v4828, %v4828
    %v4861 = vpack.c.bf16 %v4829, %v4829
    %v4862 = vpack.c.bf16 %v4830, %v4830
    %v4863 = vpack.c.bf16 %v4831, %v4831
    %v4864 = vpack.c.bf16 %v4832, %v4832
    %v4865 = vpack.c.bf16 %v4833, %v4833
    %v4866 = vpack.c.bf16 %v4834, %v4834
    %v4867 = vpack.c.bf16 %v4835, %v4835
    %v4868 = vpack.c.bf16 %v4836, %v4836
    %v4869 = vpack.c.bf16 %v4837, %v4837
    %v4870 = vpack.c.bf16 %v4838, %v4838
    %v4871 = vpack.c.bf16 %v4839, %v4839
    %v4872 = vpack.c.bf16 %v4840, %v4840
    %v4873 = vpack.c.bf16 %v4841, %v4841
    %v4874 = vpack.c.bf16 %v4842, %v4842
    %v4875 = vpack.c.bf16 %v4843, %v4843
    %v4876 = vpack.c.bf16 %v4844, %v4844
    %v4877 = vpack.c.bf16 %v4845, %v4845
    %v4878 = vpack.c.bf16 %v4846, %v4846
    %v4879 = vpack.c.bf16 %v4847, %v4847
    %v4880 = vpack.c.bf16 %v4848, %v4848
    %v4881 = vpack.c.bf16 %v4849, %v4849
    %v4882 = vpack.c.bf16 %v4850, %v4850
    %v4883 = vpack.c.bf16 %v4851, %v4851
    %v4884 = vpack.c.bf16 %v4852, %v4852
    %v4885 = vpack.c.bf16 %v4853, %v4853
    %v4886 = vpack.c.bf16 %v4854, %v4854
    %v4887 = vpack.c.bf16 %v4855, %v4855
    %v4888 = vpack.c.bf16 %v4856, %v4856
    %v4889 = vpack.c.bf16 %v4857, %v4857
    %v4890 = vpack.c.bf16 %v4858, %v4858
    %v4899 = vunpack.c.l.b16 %v4859
    %v4900 = vunpack.c.l.b16 %v4860
    %v4901 = vunpack.c.l.b16 %v4861
    %v4902 = vunpack.c.l.b16 %v4862
    %v4903 = vunpack.c.l.b16 %v4863
    %v4904 = vunpack.c.l.b16 %v4864
    %v4905 = vunpack.c.l.b16 %v4865
    %v4906 = vunpack.c.l.b16 %v4866
    %v4907 = vpack.c.b16 %v4900, %v4899
    %v4908 = vpack.c.b16 %v4902, %v4901
    %v4909 = vpack.c.b16 %v4904, %v4903
    %v4910 = vpack.c.b16 %v4906, %v4905
    %v4919 = vunpack.c.l.b16 %v4223
    %v4920 = vunpack.c.l.b16 %v4224
    %v4921 = vunpack.c.l.b16 %v4225
    %v4922 = vunpack.c.l.b16 %v4226
    %v4923 = vunpack.c.l.b16 %v4227
    %v4924 = vunpack.c.l.b16 %v4228
    %v4925 = vunpack.c.l.b16 %v4229
    %v4926 = vunpack.c.l.b16 %v4230
    %v4927 = vpack.c.b16 %v4920, %v4919
    %v4928 = vpack.c.b16 %v4922, %v4921
    %v4929 = vpack.c.b16 %v4924, %v4923
    %v4930 = vpack.c.b16 %v4926, %v4925
    %v4936 = vsel %vm887, %v4907, 0
    %v4939 = vsel %vm887, %v4908, 0
    %v4942 = vsel %vm887, %v4909, 0
    %v4945 = vsel %vm887, %v4910, 0
    %4947 = vmatpush.bf16.msra.mxu0 0
    %4948 = vmatpush.bf16.msra.mxu0 0
    %4949 = vmatpush.bf16.msra.mxu0 0
    %4950 = vmatpush.bf16.msra.mxu0 0
    %4951 = vmatpush.bf16.msra.mxu0 %v4930
    %4952 = vmatpush.bf16.msra.mxu0 %v4929
    %4953 = vmatpush.bf16.msra.mxu0 %v4928
    %4954 = vmatpush.bf16.msra.mxu0 %v4927
    %4955 = vmatmul.bf16.gmra.mxu0 %v4936
    %v4956 = vpop.f32.mrf.mxu0
    %v4957 = vadd.f32 0.0, %v4956
    %v4958 = vpop.f32.mrf.mxu0
    %v4959 = vadd.f32 0.0, %v4958
    %4960 = vmatmul.bf16.gmra.mxu0 %v4939
    %v4961 = vpop.f32.mrf.mxu0
    %v4962 = vadd.f32 0.0, %v4961
    %v4963 = vpop.f32.mrf.mxu0
    %v4964 = vadd.f32 0.0, %v4963
    %4965 = vmatmul.bf16.gmra.mxu0 %v4942
    %v4966 = vpop.f32.mrf.mxu0
    %v4967 = vadd.f32 0.0, %v4966
    %v4968 = vpop.f32.mrf.mxu0
    %v4969 = vadd.f32 0.0, %v4968
    %4970 = vmatmul.bf16.gmra.mxu0 %v4945
    %v4971 = vpop.f32.mrf.mxu0
    %v4972 = vadd.f32 0.0, %v4971
    %v4973 = vpop.f32.mrf.mxu0
    %v4974 = vadd.f32 0.0, %v4973
    %4975 = vdwg.mxu0
    %v4984 = vunpack.c.l.b16 %v4867
    %v4985 = vunpack.c.l.b16 %v4868
    %v4986 = vunpack.c.l.b16 %v4869
    %v4987 = vunpack.c.l.b16 %v4870
    %v4988 = vunpack.c.l.b16 %v4871
    %v4989 = vunpack.c.l.b16 %v4872
    %v4990 = vunpack.c.l.b16 %v4873
    %v4991 = vunpack.c.l.b16 %v4874
    %v4992 = vpack.c.b16 %v4985, %v4984
    %v4993 = vpack.c.b16 %v4987, %v4986
    %v4994 = vpack.c.b16 %v4989, %v4988
    %v4995 = vpack.c.b16 %v4991, %v4990
    %v4997 = vsel %vm887, %v4992, 0
    %v5000 = vsel %vm887, %v4993, 0
    %v5003 = vsel %vm887, %v4994, 0
    %v5006 = vsel %vm887, %v4995, 0
    %5008 = vmatpush.bf16.msra.mxu0 0
    %5009 = vmatpush.bf16.msra.mxu0 0
    %5010 = vmatpush.bf16.msra.mxu0 0
    %5011 = vmatpush.bf16.msra.mxu0 0
    %5012 = vmatpush.bf16.msra.mxu0 %v4930
    %5013 = vmatpush.bf16.msra.mxu0 %v4929
    %5014 = vmatpush.bf16.msra.mxu0 %v4928
    %5015 = vmatpush.bf16.msra.mxu0 %v4927
    %5016 = vmatmul.bf16.gmra.mxu0 %v4997
    %v5017 = vpop.f32.mrf.mxu0
    %v5018 = vadd.f32 0.0, %v5017
    %v5019 = vpop.f32.mrf.mxu0
    %v5020 = vadd.f32 0.0, %v5019
    %5021 = vmatmul.bf16.gmra.mxu0 %v5000
    %v5022 = vpop.f32.mrf.mxu0
    %v5023 = vadd.f32 0.0, %v5022
    %v5024 = vpop.f32.mrf.mxu0
    %v5025 = vadd.f32 0.0, %v5024
    %5026 = vmatmul.bf16.gmra.mxu0 %v5003
    %v5027 = vpop.f32.mrf.mxu0
    %v5028 = vadd.f32 0.0, %v5027
    %v5029 = vpop.f32.mrf.mxu0
    %v5030 = vadd.f32 0.0, %v5029
    %5031 = vmatmul.bf16.gmra.mxu0 %v5006
    %v5032 = vpop.f32.mrf.mxu0
    %v5033 = vadd.f32 0.0, %v5032
    %v5034 = vpop.f32.mrf.mxu0
    %v5035 = vadd.f32 0.0, %v5034
    %5036 = vdwg.mxu0
    %v5045 = vunpack.c.l.b16 %v4875
    %v5046 = vunpack.c.l.b16 %v4876
    %v5047 = vunpack.c.l.b16 %v4877
    %v5048 = vunpack.c.l.b16 %v4878
    %v5049 = vunpack.c.l.b16 %v4879
    %v5050 = vunpack.c.l.b16 %v4880
    %v5051 = vunpack.c.l.b16 %v4881
    %v5052 = vunpack.c.l.b16 %v4882
    %v5053 = vpack.c.b16 %v5046, %v5045
    %v5054 = vpack.c.b16 %v5048, %v5047
    %v5055 = vpack.c.b16 %v5050, %v5049
    %v5056 = vpack.c.b16 %v5052, %v5051
    %v5058 = vsel %vm887, %v5053, 0
    %v5061 = vsel %vm887, %v5054, 0
    %v5064 = vsel %vm887, %v5055, 0
    %v5067 = vsel %vm887, %v5056, 0
    %5069 = vmatpush.bf16.msra.mxu0 0
    %5070 = vmatpush.bf16.msra.mxu0 0
    %5071 = vmatpush.bf16.msra.mxu0 0
    %5072 = vmatpush.bf16.msra.mxu0 0
    %5073 = vmatpush.bf16.msra.mxu0 %v4930
    %5074 = vmatpush.bf16.msra.mxu0 %v4929
    %5075 = vmatpush.bf16.msra.mxu0 %v4928
    %5076 = vmatpush.bf16.msra.mxu0 %v4927
    %5077 = vmatmul.bf16.gmra.mxu0 %v5058
    %v5078 = vpop.f32.mrf.mxu0
    %v5079 = vadd.f32 0.0, %v5078
    %v5080 = vpop.f32.mrf.mxu0
    %v5081 = vadd.f32 0.0, %v5080
    %5082 = vmatmul.bf16.gmra.mxu0 %v5061
    %v5083 = vpop.f32.mrf.mxu0
    %v5084 = vadd.f32 0.0, %v5083
    %v5085 = vpop.f32.mrf.mxu0
    %v5086 = vadd.f32 0.0, %v5085
    %5087 = vmatmul.bf16.gmra.mxu0 %v5064
    %v5088 = vpop.f32.mrf.mxu0
    %v5089 = vadd.f32 0.0, %v5088
    %v5090 = vpop.f32.mrf.mxu0
    %v5091 = vadd.f32 0.0, %v5090
    %5092 = vmatmul.bf16.gmra.mxu0 %v5067
    %v5093 = vpop.f32.mrf.mxu0
    %v5094 = vadd.f32 0.0, %v5093
    %v5095 = vpop.f32.mrf.mxu0
    %v5096 = vadd.f32 0.0, %v5095
    %5097 = vdwg.mxu0
    %v5106 = vunpack.c.l.b16 %v4883
    %v5107 = vunpack.c.l.b16 %v4884
    %v5108 = vunpack.c.l.b16 %v4885
    %v5109 = vunpack.c.l.b16 %v4886
    %v5110 = vunpack.c.l.b16 %v4887
    %v5111 = vunpack.c.l.b16 %v4888
    %v5112 = vunpack.c.l.b16 %v4889
    %v5113 = vunpack.c.l.b16 %v4890
    %v5114 = vpack.c.b16 %v5107, %v5106
    %v5115 = vpack.c.b16 %v5109, %v5108
    %v5116 = vpack.c.b16 %v5111, %v5110
    %v5117 = vpack.c.b16 %v5113, %v5112
    %v5119 = vsel %vm887, %v5114, 0
    %v5122 = vsel %vm887, %v5115, 0
    %v5125 = vsel %vm887, %v5116, 0
    %v5128 = vsel %vm887, %v5117, 0
    %5130 = vmatpush.bf16.msra.mxu0 0
    %5131 = vmatpush.bf16.msra.mxu0 0
    %5132 = vmatpush.bf16.msra.mxu0 0
    %5133 = vmatpush.bf16.msra.mxu0 0
    %5134 = vmatpush.bf16.msra.mxu0 %v4930
    %5135 = vmatpush.bf16.msra.mxu0 %v4929
    %5136 = vmatpush.bf16.msra.mxu0 %v4928
    %5137 = vmatpush.bf16.msra.mxu0 %v4927
    %5138 = vmatmul.bf16.gmra.mxu0 %v5119
    %v5139 = vpop.f32.mrf.mxu0
    %v5140 = vadd.f32 0.0, %v5139
    %v5141 = vpop.f32.mrf.mxu0
    %v5142 = vadd.f32 0.0, %v5141
    %5143 = vmatmul.bf16.gmra.mxu0 %v5122
    %v5144 = vpop.f32.mrf.mxu0
    %v5145 = vadd.f32 0.0, %v5144
    %v5146 = vpop.f32.mrf.mxu0
    %v5147 = vadd.f32 0.0, %v5146
    %5148 = vmatmul.bf16.gmra.mxu0 %v5125
    %v5149 = vpop.f32.mrf.mxu0
    %v5150 = vadd.f32 0.0, %v5149
    %v5151 = vpop.f32.mrf.mxu0
    %v5152 = vadd.f32 0.0, %v5151
    %5153 = vmatmul.bf16.gmra.mxu0 %v5128
    %v5154 = vpop.f32.mrf.mxu0
    %v5155 = vadd.f32 0.0, %v5154
    %v5156 = vpop.f32.mrf.mxu0
    %v5157 = vadd.f32 0.0, %v5156
    %5158 = vdwg.mxu0
    %v5159 = vmul.f32 %v4957, %v523
    %v5160 = vmul.f32 %v4959, %v523
    %v5161 = vmul.f32 %v4962, %v523
    %v5162 = vmul.f32 %v4964, %v523
    %v5163 = vmul.f32 %v4967, %v523
    %v5164 = vmul.f32 %v4969, %v523
    %v5165 = vmul.f32 %v4972, %v523
    %v5166 = vmul.f32 %v4974, %v523
    %v5167 = vmul.f32 %v5018, %v524
    %v5168 = vmul.f32 %v5020, %v524
    %v5169 = vmul.f32 %v5023, %v524
    %v5170 = vmul.f32 %v5025, %v524
    %v5171 = vmul.f32 %v5028, %v524
    %v5172 = vmul.f32 %v5030, %v524
    %v5173 = vmul.f32 %v5033, %v524
    %v5174 = vmul.f32 %v5035, %v524
    %v5175 = vmul.f32 %v5079, %v525
    %v5176 = vmul.f32 %v5081, %v525
    %v5177 = vmul.f32 %v5084, %v525
    %v5178 = vmul.f32 %v5086, %v525
    %v5179 = vmul.f32 %v5089, %v525
    %v5180 = vmul.f32 %v5091, %v525
    %v5181 = vmul.f32 %v5094, %v525
    %v5182 = vmul.f32 %v5096, %v525
    %v5183 = vmul.f32 %v5140, %v526
    %v5184 = vmul.f32 %v5142, %v526
    %v5185 = vmul.f32 %v5145, %v526
    %v5186 = vmul.f32 %v5147, %v526
    %v5187 = vmul.f32 %v5150, %v526
    %v5188 = vmul.f32 %v5152, %v526
    %v5189 = vmul.f32 %v5155, %v526
    %v5190 = vmul.f32 %v5157, %v526
    %v5191 = vsel %vm291, %v5159, 0.0
    %v5192 = vsel %vm291, %v5167, 0.0
    %v5193 = vadd.f32 %v5191, %v5192
    %v5194 = vsel %vm291, %v5175, 0.0
    %v5195 = vadd.f32 %v5193, %v5194
    %v5196 = vsel %vm291, %v5183, 0.0
    %v5197 = vadd.f32 %v5195, %v5196
    %v5198 = vsel %vm291, %v5160, 0.0
    %v5199 = vsel %vm291, %v5168, 0.0
    %v5200 = vadd.f32 %v5198, %v5199
    %v5201 = vsel %vm291, %v5176, 0.0
    %v5202 = vadd.f32 %v5200, %v5201
    %v5203 = vsel %vm291, %v5184, 0.0
    %v5204 = vadd.f32 %v5202, %v5203
    %v5205 = vsel %vm291, %v5161, 0.0
    %v5206 = vsel %vm291, %v5169, 0.0
    %v5207 = vadd.f32 %v5205, %v5206
    %v5208 = vsel %vm291, %v5177, 0.0
    %v5209 = vadd.f32 %v5207, %v5208
    %v5210 = vsel %vm291, %v5185, 0.0
    %v5211 = vadd.f32 %v5209, %v5210
    %v5212 = vsel %vm291, %v5162, 0.0
    %v5213 = vsel %vm291, %v5170, 0.0
    %v5214 = vadd.f32 %v5212, %v5213
    %v5215 = vsel %vm291, %v5178, 0.0
    %v5216 = vadd.f32 %v5214, %v5215
    %v5217 = vsel %vm291, %v5186, 0.0
    %v5218 = vadd.f32 %v5216, %v5217
    %v5219 = vsel %vm291, %v5163, 0.0
    %v5220 = vsel %vm291, %v5171, 0.0
    %v5221 = vadd.f32 %v5219, %v5220
    %v5222 = vsel %vm291, %v5179, 0.0
    %v5223 = vadd.f32 %v5221, %v5222
    %v5224 = vsel %vm291, %v5187, 0.0
    %v5225 = vadd.f32 %v5223, %v5224
    %v5226 = vsel %vm291, %v5164, 0.0
    %v5227 = vsel %vm291, %v5172, 0.0
    %v5228 = vadd.f32 %v5226, %v5227
    %v5229 = vsel %vm291, %v5180, 0.0
    %v5230 = vadd.f32 %v5228, %v5229
    %v5231 = vsel %vm291, %v5188, 0.0
    %v5232 = vadd.f32 %v5230, %v5231
    %v5233 = vsel %vm291, %v5165, 0.0
    %v5234 = vsel %vm291, %v5173, 0.0
    %v5235 = vadd.f32 %v5233, %v5234
    %v5236 = vsel %vm291, %v5181, 0.0
    %v5237 = vadd.f32 %v5235, %v5236
    %v5238 = vsel %vm291, %v5189, 0.0
    %v5239 = vadd.f32 %v5237, %v5238
    %v5240 = vsel %vm291, %v5166, 0.0
    %v5241 = vsel %vm291, %v5174, 0.0
    %v5242 = vadd.f32 %v5240, %v5241
    %v5243 = vsel %vm291, %v5182, 0.0
    %v5244 = vadd.f32 %v5242, %v5243
    %v5245 = vsel %vm291, %v5190, 0.0
    %v5246 = vadd.f32 %v5244, %v5245
    %v5247 = vmul.f32 %v4001, %v523
    %v5248 = vmul.f32 %v4002, %v523
    %v5249 = vmul.f32 %v4003, %v523
    %v5250 = vmul.f32 %v4004, %v523
    %v5251 = vmul.f32 %v4005, %v523
    %v5252 = vmul.f32 %v4006, %v523
    %v5253 = vmul.f32 %v4007, %v523
    %v5254 = vmul.f32 %v4008, %v523
    %v5255 = vmul.f32 %v4001, %v524
    %v5256 = vmul.f32 %v4002, %v524
    %v5257 = vmul.f32 %v4003, %v524
    %v5258 = vmul.f32 %v4004, %v524
    %v5259 = vmul.f32 %v4005, %v524
    %v5260 = vmul.f32 %v4006, %v524
    %v5261 = vmul.f32 %v4007, %v524
    %v5262 = vmul.f32 %v4008, %v524
    %v5263 = vmul.f32 %v4001, %v525
    %v5264 = vmul.f32 %v4002, %v525
    %v5265 = vmul.f32 %v4003, %v525
    %v5266 = vmul.f32 %v4004, %v525
    %v5267 = vmul.f32 %v4005, %v525
    %v5268 = vmul.f32 %v4006, %v525
    %v5269 = vmul.f32 %v4007, %v525
    %v5270 = vmul.f32 %v4008, %v525
    %v5271 = vmul.f32 %v4001, %v526
    %v5272 = vmul.f32 %v4002, %v526
    %v5273 = vmul.f32 %v4003, %v526
    %v5274 = vmul.f32 %v4004, %v526
    %v5275 = vmul.f32 %v4005, %v526
    %v5276 = vmul.f32 %v4006, %v526
    %v5277 = vmul.f32 %v4007, %v526
    %v5278 = vmul.f32 %v4008, %v526
    %v5279 = vpack.c.bf16 %v5247, %v5247
    %v5280 = vpack.c.bf16 %v5248, %v5248
    %v5281 = vpack.c.bf16 %v5249, %v5249
    %v5282 = vpack.c.bf16 %v5250, %v5250
    %v5283 = vpack.c.bf16 %v5251, %v5251
    %v5284 = vpack.c.bf16 %v5252, %v5252
    %v5285 = vpack.c.bf16 %v5253, %v5253
    %v5286 = vpack.c.bf16 %v5254, %v5254
    %v5287 = vpack.c.bf16 %v5255, %v5255
    %v5288 = vpack.c.bf16 %v5256, %v5256
    %v5289 = vpack.c.bf16 %v5257, %v5257
    %v5290 = vpack.c.bf16 %v5258, %v5258
    %v5291 = vpack.c.bf16 %v5259, %v5259
    %v5292 = vpack.c.bf16 %v5260, %v5260
    %v5293 = vpack.c.bf16 %v5261, %v5261
    %v5294 = vpack.c.bf16 %v5262, %v5262
    %v5295 = vpack.c.bf16 %v5263, %v5263
    %v5296 = vpack.c.bf16 %v5264, %v5264
    %v5297 = vpack.c.bf16 %v5265, %v5265
    %v5298 = vpack.c.bf16 %v5266, %v5266
    %v5299 = vpack.c.bf16 %v5267, %v5267
    %v5300 = vpack.c.bf16 %v5268, %v5268
    %v5301 = vpack.c.bf16 %v5269, %v5269
    %v5302 = vpack.c.bf16 %v5270, %v5270
    %v5303 = vpack.c.bf16 %v5271, %v5271
    %v5304 = vpack.c.bf16 %v5272, %v5272
    %v5305 = vpack.c.bf16 %v5273, %v5273
    %v5306 = vpack.c.bf16 %v5274, %v5274
    %v5307 = vpack.c.bf16 %v5275, %v5275
    %v5308 = vpack.c.bf16 %v5276, %v5276
    %v5309 = vpack.c.bf16 %v5277, %v5277
    %v5310 = vpack.c.bf16 %v5278, %v5278
    %v5311 = vpack.c.bf16 %v4061, %v4061
    %v5312 = vpack.c.bf16 %v4063, %v4063
    %v5313 = vpack.c.bf16 %v4066, %v4066
    %v5314 = vpack.c.bf16 %v4068, %v4068
    %v5315 = vpack.c.bf16 %v4071, %v4071
    %v5316 = vpack.c.bf16 %v4073, %v4073
    %v5317 = vpack.c.bf16 %v4076, %v4076
    %v5318 = vpack.c.bf16 %v4078, %v4078
    %v5319 = vpack.c.bf16 %v4132, %v4132
    %v5320 = vpack.c.bf16 %v4134, %v4134
    %v5321 = vpack.c.bf16 %v4137, %v4137
    %v5322 = vpack.c.bf16 %v4139, %v4139
    %v5323 = vpack.c.bf16 %v4142, %v4142
    %v5324 = vpack.c.bf16 %v4144, %v4144
    %v5325 = vpack.c.bf16 %v4147, %v4147
    %v5326 = vpack.c.bf16 %v4149, %v4149
    %v5335 = vunpack.c.l.b16 %v5279
    %v5336 = vunpack.c.l.b16 %v5280
    %v5337 = vunpack.c.l.b16 %v5281
    %v5338 = vunpack.c.l.b16 %v5282
    %v5339 = vunpack.c.l.b16 %v5283
    %v5340 = vunpack.c.l.b16 %v5284
    %v5341 = vunpack.c.l.b16 %v5285
    %v5342 = vunpack.c.l.b16 %v5286
    %v5343 = vpack.c.b16 %v5336, %v5335
    %v5344 = vpack.c.b16 %v5338, %v5337
    %v5345 = vpack.c.b16 %v5340, %v5339
    %v5346 = vpack.c.b16 %v5342, %v5341
    %v5355 = vunpack.c.l.b16 %v5311
    %v5356 = vunpack.c.l.b16 %v5312
    %v5357 = vunpack.c.l.b16 %v5313
    %v5358 = vunpack.c.l.b16 %v5314
    %v5359 = vunpack.c.l.b16 %v5315
    %v5360 = vunpack.c.l.b16 %v5316
    %v5361 = vunpack.c.l.b16 %v5317
    %v5362 = vunpack.c.l.b16 %v5318
    %v5363 = vpack.c.b16 %v5356, %v5355
    %v5364 = vpack.c.b16 %v5358, %v5357
    %v5365 = vpack.c.b16 %v5360, %v5359
    %v5366 = vpack.c.b16 %v5362, %v5361
    %v5368 = vsel %vm291, %v5343, 0
    %v5371 = vsel %vm291, %v5344, 0
    %v5374 = vsel %vm291, %v5345, 0
    %v5377 = vsel %vm291, %v5346, 0
    %v5380 = vsel %vm291, %v5363, 0
    %v5383 = vsel %vm291, %v5364, 0
    %v5386 = vsel %vm291, %v5365, 0
    %v5389 = vsel %vm291, %v5366, 0
    %5391 = vmatpush.bf16.xpose.msra.mxu0 0
    %5392 = vmatpush.bf16.xpose.msra.mxu0 0
    %5393 = vmatpush.bf16.xpose.msra.mxu0 0
    %5394 = vmatpush.bf16.xpose.msra.mxu0 0
    %5395 = vmatpush.bf16.xpose.msra.mxu0 %v5389
    %5396 = vmatpush.bf16.xpose.msra.mxu0 %v5386
    %5397 = vmatpush.bf16.xpose.msra.mxu0 %v5383
    %5398 = vmatpush.bf16.xpose.msra.mxu0 %v5380
    %5399 = vmatmul.bf16.gmra.mxu0 %v5368
    %v5400 = vpop.f32.mrf.mxu0
    %v5401 = vadd.f32 0.0, %v5400
    %v5402 = vpop.f32.mrf.mxu0
    %v5403 = vadd.f32 0.0, %v5402
    %5404 = vmatmul.bf16.gmra.mxu0 %v5371
    %v5405 = vpop.f32.mrf.mxu0
    %v5406 = vadd.f32 0.0, %v5405
    %v5407 = vpop.f32.mrf.mxu0
    %v5408 = vadd.f32 0.0, %v5407
    %5409 = vmatmul.bf16.gmra.mxu0 %v5374
    %v5410 = vpop.f32.mrf.mxu0
    %v5411 = vadd.f32 0.0, %v5410
    %v5412 = vpop.f32.mrf.mxu0
    %v5413 = vadd.f32 0.0, %v5412
    %5414 = vmatmul.bf16.gmra.mxu0 %v5377
    %v5415 = vpop.f32.mrf.mxu0
    %v5416 = vadd.f32 0.0, %v5415
    %v5417 = vpop.f32.mrf.mxu0
    %v5418 = vadd.f32 0.0, %v5417
    %5419 = vdwg.mxu0
    %v5428 = vunpack.c.l.b16 %v5287
    %v5429 = vunpack.c.l.b16 %v5288
    %v5430 = vunpack.c.l.b16 %v5289
    %v5431 = vunpack.c.l.b16 %v5290
    %v5432 = vunpack.c.l.b16 %v5291
    %v5433 = vunpack.c.l.b16 %v5292
    %v5434 = vunpack.c.l.b16 %v5293
    %v5435 = vunpack.c.l.b16 %v5294
    %v5436 = vpack.c.b16 %v5429, %v5428
    %v5437 = vpack.c.b16 %v5431, %v5430
    %v5438 = vpack.c.b16 %v5433, %v5432
    %v5439 = vpack.c.b16 %v5435, %v5434
    %v5441 = vsel %vm291, %v5436, 0
    %v5444 = vsel %vm291, %v5437, 0
    %v5447 = vsel %vm291, %v5438, 0
    %v5450 = vsel %vm291, %v5439, 0
    %5452 = vmatpush.bf16.xpose.msra.mxu0 0
    %5453 = vmatpush.bf16.xpose.msra.mxu0 0
    %5454 = vmatpush.bf16.xpose.msra.mxu0 0
    %5455 = vmatpush.bf16.xpose.msra.mxu0 0
    %5456 = vmatpush.bf16.xpose.msra.mxu0 %v5389
    %5457 = vmatpush.bf16.xpose.msra.mxu0 %v5386
    %5458 = vmatpush.bf16.xpose.msra.mxu0 %v5383
    %5459 = vmatpush.bf16.xpose.msra.mxu0 %v5380
    %5460 = vmatmul.bf16.gmra.mxu0 %v5441
    %v5461 = vpop.f32.mrf.mxu0
    %v5462 = vadd.f32 0.0, %v5461
    %v5463 = vpop.f32.mrf.mxu0
    %v5464 = vadd.f32 0.0, %v5463
    %5465 = vmatmul.bf16.gmra.mxu0 %v5444
    %v5466 = vpop.f32.mrf.mxu0
    %v5467 = vadd.f32 0.0, %v5466
    %v5468 = vpop.f32.mrf.mxu0
    %v5469 = vadd.f32 0.0, %v5468
    %5470 = vmatmul.bf16.gmra.mxu0 %v5447
    %v5471 = vpop.f32.mrf.mxu0
    %v5472 = vadd.f32 0.0, %v5471
    %v5473 = vpop.f32.mrf.mxu0
    %v5474 = vadd.f32 0.0, %v5473
    %5475 = vmatmul.bf16.gmra.mxu0 %v5450
    %v5476 = vpop.f32.mrf.mxu0
    %v5477 = vadd.f32 0.0, %v5476
    %v5478 = vpop.f32.mrf.mxu0
    %v5479 = vadd.f32 0.0, %v5478
    %5480 = vdwg.mxu0
    %v5489 = vunpack.c.l.b16 %v5295
    %v5490 = vunpack.c.l.b16 %v5296
    %v5491 = vunpack.c.l.b16 %v5297
    %v5492 = vunpack.c.l.b16 %v5298
    %v5493 = vunpack.c.l.b16 %v5299
    %v5494 = vunpack.c.l.b16 %v5300
    %v5495 = vunpack.c.l.b16 %v5301
    %v5496 = vunpack.c.l.b16 %v5302
    %v5497 = vpack.c.b16 %v5490, %v5489
    %v5498 = vpack.c.b16 %v5492, %v5491
    %v5499 = vpack.c.b16 %v5494, %v5493
    %v5500 = vpack.c.b16 %v5496, %v5495
    %v5502 = vsel %vm291, %v5497, 0
    %v5505 = vsel %vm291, %v5498, 0
    %v5508 = vsel %vm291, %v5499, 0
    %v5511 = vsel %vm291, %v5500, 0
    %5513 = vmatpush.bf16.xpose.msra.mxu0 0
    %5514 = vmatpush.bf16.xpose.msra.mxu0 0
    %5515 = vmatpush.bf16.xpose.msra.mxu0 0
    %5516 = vmatpush.bf16.xpose.msra.mxu0 0
    %5517 = vmatpush.bf16.xpose.msra.mxu0 %v5389
    %5518 = vmatpush.bf16.xpose.msra.mxu0 %v5386
    %5519 = vmatpush.bf16.xpose.msra.mxu0 %v5383
    %5520 = vmatpush.bf16.xpose.msra.mxu0 %v5380
    %5521 = vmatmul.bf16.gmra.mxu0 %v5502
    %v5522 = vpop.f32.mrf.mxu0
    %v5523 = vadd.f32 0.0, %v5522
    %v5524 = vpop.f32.mrf.mxu0
    %v5525 = vadd.f32 0.0, %v5524
    %5526 = vmatmul.bf16.gmra.mxu0 %v5505
    %v5527 = vpop.f32.mrf.mxu0
    %v5528 = vadd.f32 0.0, %v5527
    %v5529 = vpop.f32.mrf.mxu0
    %v5530 = vadd.f32 0.0, %v5529
    %5531 = vmatmul.bf16.gmra.mxu0 %v5508
    %v5532 = vpop.f32.mrf.mxu0
    %v5533 = vadd.f32 0.0, %v5532
    %v5534 = vpop.f32.mrf.mxu0
    %v5535 = vadd.f32 0.0, %v5534
    %5536 = vmatmul.bf16.gmra.mxu0 %v5511
    %v5537 = vpop.f32.mrf.mxu0
    %v5538 = vadd.f32 0.0, %v5537
    %v5539 = vpop.f32.mrf.mxu0
    %v5540 = vadd.f32 0.0, %v5539
    %5541 = vdwg.mxu0
    %v5550 = vunpack.c.l.b16 %v5303
    %v5551 = vunpack.c.l.b16 %v5304
    %v5552 = vunpack.c.l.b16 %v5305
    %v5553 = vunpack.c.l.b16 %v5306
    %v5554 = vunpack.c.l.b16 %v5307
    %v5555 = vunpack.c.l.b16 %v5308
    %v5556 = vunpack.c.l.b16 %v5309
    %v5557 = vunpack.c.l.b16 %v5310
    %v5558 = vpack.c.b16 %v5551, %v5550
    %v5559 = vpack.c.b16 %v5553, %v5552
    %v5560 = vpack.c.b16 %v5555, %v5554
    %v5561 = vpack.c.b16 %v5557, %v5556
    %v5563 = vsel %vm291, %v5558, 0
    %v5566 = vsel %vm291, %v5559, 0
    %v5569 = vsel %vm291, %v5560, 0
    %v5572 = vsel %vm291, %v5561, 0
    %5574 = vmatpush.bf16.xpose.msra.mxu0 0
    %5575 = vmatpush.bf16.xpose.msra.mxu0 0
    %5576 = vmatpush.bf16.xpose.msra.mxu0 0
    %5577 = vmatpush.bf16.xpose.msra.mxu0 0
    %5578 = vmatpush.bf16.xpose.msra.mxu0 %v5389
    %5579 = vmatpush.bf16.xpose.msra.mxu0 %v5386
    %5580 = vmatpush.bf16.xpose.msra.mxu0 %v5383
    %5581 = vmatpush.bf16.xpose.msra.mxu0 %v5380
    %5582 = vmatmul.bf16.gmra.mxu0 %v5563
    %v5583 = vpop.f32.mrf.mxu0
    %v5584 = vadd.f32 0.0, %v5583
    %v5585 = vpop.f32.mrf.mxu0
    %v5586 = vadd.f32 0.0, %v5585
    %5587 = vmatmul.bf16.gmra.mxu0 %v5566
    %v5588 = vpop.f32.mrf.mxu0
    %v5589 = vadd.f32 0.0, %v5588
    %v5590 = vpop.f32.mrf.mxu0
    %v5591 = vadd.f32 0.0, %v5590
    %5592 = vmatmul.bf16.gmra.mxu0 %v5569
    %v5593 = vpop.f32.mrf.mxu0
    %v5594 = vadd.f32 0.0, %v5593
    %v5595 = vpop.f32.mrf.mxu0
    %v5596 = vadd.f32 0.0, %v5595
    %5597 = vmatmul.bf16.gmra.mxu0 %v5572
    %v5598 = vpop.f32.mrf.mxu0
    %v5599 = vadd.f32 0.0, %v5598
    %v5600 = vpop.f32.mrf.mxu0
    %v5601 = vadd.f32 0.0, %v5600
    %5602 = vdwg.mxu0
    %v5603 = vsel %vm887, %v5401, -inf
    %5604 = vmax.xlane.f32.xlu0 %v5603
    %v5605 = vpop.xlane.xlu0 %5604
    %v5606 = vsel %vm887, %v5403, -inf
    %5607 = vmax.xlane.f32.xlu0 %v5606
    %v5608 = vpop.xlane.xlu0 %5607
    %v5609 = vsel %vm887, %v5406, -inf
    %5610 = vmax.xlane.f32.xlu0 %v5609
    %v5611 = vpop.xlane.xlu0 %5610
    %v5612 = vsel %vm887, %v5408, -inf
    %5613 = vmax.xlane.f32.xlu0 %v5612
    %v5614 = vpop.xlane.xlu0 %5613
    %v5615 = vsel %vm887, %v5411, -inf
    %5616 = vmax.xlane.f32.xlu0 %v5615
    %v5617 = vpop.xlane.xlu0 %5616
    %v5618 = vsel %vm887, %v5413, -inf
    %5619 = vmax.xlane.f32.xlu0 %v5618
    %v5620 = vpop.xlane.xlu0 %5619
    %v5621 = vsel %vm887, %v5416, -inf
    %5622 = vmax.xlane.f32.xlu0 %v5621
    %v5623 = vpop.xlane.xlu0 %5622
    %v5624 = vsel %vm887, %v5418, -inf
    %5625 = vmax.xlane.f32.xlu0 %v5624
    %v5626 = vpop.xlane.xlu0 %5625
    %v5627 = vsel %vm887, %v5462, -inf
    %5628 = vmax.xlane.f32.xlu0 %v5627
    %v5629 = vpop.xlane.xlu0 %5628
    %v5630 = vsel %vm887, %v5464, -inf
    %5631 = vmax.xlane.f32.xlu0 %v5630
    %v5632 = vpop.xlane.xlu0 %5631
    %v5633 = vsel %vm887, %v5467, -inf
    %5634 = vmax.xlane.f32.xlu0 %v5633
    %v5635 = vpop.xlane.xlu0 %5634
    %v5636 = vsel %vm887, %v5469, -inf
    %5637 = vmax.xlane.f32.xlu0 %v5636
    %v5638 = vpop.xlane.xlu0 %5637
    %v5639 = vsel %vm887, %v5472, -inf
    %5640 = vmax.xlane.f32.xlu0 %v5639
    %v5641 = vpop.xlane.xlu0 %5640
    %v5642 = vsel %vm887, %v5474, -inf
    %5643 = vmax.xlane.f32.xlu0 %v5642
    %v5644 = vpop.xlane.xlu0 %5643
    %v5645 = vsel %vm887, %v5477, -inf
    %5646 = vmax.xlane.f32.xlu0 %v5645
    %v5647 = vpop.xlane.xlu0 %5646
    %v5648 = vsel %vm887, %v5479, -inf
    %5649 = vmax.xlane.f32.xlu0 %v5648
    %v5650 = vpop.xlane.xlu0 %5649
    %v5651 = vsel %vm887, %v5523, -inf
    %5652 = vmax.xlane.f32.xlu0 %v5651
    %v5653 = vpop.xlane.xlu0 %5652
    %v5654 = vsel %vm887, %v5525, -inf
    %5655 = vmax.xlane.f32.xlu0 %v5654
    %v5656 = vpop.xlane.xlu0 %5655
    %v5657 = vsel %vm887, %v5528, -inf
    %5658 = vmax.xlane.f32.xlu0 %v5657
    %v5659 = vpop.xlane.xlu0 %5658
    %v5660 = vsel %vm887, %v5530, -inf
    %5661 = vmax.xlane.f32.xlu0 %v5660
    %v5662 = vpop.xlane.xlu0 %5661
    %v5663 = vsel %vm887, %v5533, -inf
    %5664 = vmax.xlane.f32.xlu0 %v5663
    %v5665 = vpop.xlane.xlu0 %5664
    %v5666 = vsel %vm887, %v5535, -inf
    %5667 = vmax.xlane.f32.xlu0 %v5666
    %v5668 = vpop.xlane.xlu0 %5667
    %v5669 = vsel %vm887, %v5538, -inf
    %5670 = vmax.xlane.f32.xlu0 %v5669
    %v5671 = vpop.xlane.xlu0 %5670
    %v5672 = vsel %vm887, %v5540, -inf
    %5673 = vmax.xlane.f32.xlu0 %v5672
    %v5674 = vpop.xlane.xlu0 %5673
    %v5675 = vsel %vm887, %v5584, -inf
    %5676 = vmax.xlane.f32.xlu0 %v5675
    %v5677 = vpop.xlane.xlu0 %5676
    %v5678 = vsel %vm887, %v5586, -inf
    %5679 = vmax.xlane.f32.xlu0 %v5678
    %v5680 = vpop.xlane.xlu0 %5679
    %v5681 = vsel %vm887, %v5589, -inf
    %5682 = vmax.xlane.f32.xlu0 %v5681
    %v5683 = vpop.xlane.xlu0 %5682
    %v5684 = vsel %vm887, %v5591, -inf
    %5685 = vmax.xlane.f32.xlu0 %v5684
    %v5686 = vpop.xlane.xlu0 %5685
    %v5687 = vsel %vm887, %v5594, -inf
    %5688 = vmax.xlane.f32.xlu0 %v5687
    %v5689 = vpop.xlane.xlu0 %5688
    %v5690 = vsel %vm887, %v5596, -inf
    %5691 = vmax.xlane.f32.xlu0 %v5690
    %v5692 = vpop.xlane.xlu0 %5691
    %v5693 = vsel %vm887, %v5599, -inf
    %5694 = vmax.xlane.f32.xlu0 %v5693
    %v5695 = vpop.xlane.xlu0 %5694
    %v5696 = vsel %vm887, %v5601, -inf
    %5697 = vmax.xlane.f32.xlu0 %v5696
    %v5698 = vpop.xlane.xlu0 %5697
    %v5699 = vsub.f32 %v5401, %v5605
    %v5700 = vsub.f32 %v5403, %v5608
    %v5701 = vsub.f32 %v5406, %v5611
    %v5702 = vsub.f32 %v5408, %v5614
    %v5703 = vsub.f32 %v5411, %v5617
    %v5704 = vsub.f32 %v5413, %v5620
    %v5705 = vsub.f32 %v5416, %v5623
    %v5706 = vsub.f32 %v5418, %v5626
    %v5707 = vsub.f32 %v5462, %v5629
    %v5708 = vsub.f32 %v5464, %v5632
    %v5709 = vsub.f32 %v5467, %v5635
    %v5710 = vsub.f32 %v5469, %v5638
    %v5711 = vsub.f32 %v5472, %v5641
    %v5712 = vsub.f32 %v5474, %v5644
    %v5713 = vsub.f32 %v5477, %v5647
    %v5714 = vsub.f32 %v5479, %v5650
    %v5715 = vsub.f32 %v5523, %v5653
    %v5716 = vsub.f32 %v5525, %v5656
    %v5717 = vsub.f32 %v5528, %v5659
    %v5718 = vsub.f32 %v5530, %v5662
    %v5719 = vsub.f32 %v5533, %v5665
    %v5720 = vsub.f32 %v5535, %v5668
    %v5721 = vsub.f32 %v5538, %v5671
    %v5722 = vsub.f32 %v5540, %v5674
    %v5723 = vsub.f32 %v5584, %v5677
    %v5724 = vsub.f32 %v5586, %v5680
    %v5725 = vsub.f32 %v5589, %v5683
    %v5726 = vsub.f32 %v5591, %v5686
    %v5727 = vsub.f32 %v5594, %v5689
    %v5728 = vsub.f32 %v5596, %v5692
    %v5729 = vsub.f32 %v5599, %v5695
    %v5730 = vsub.f32 %v5601, %v5698
    %v5731 = vmul.f32 %v5699, 1.442695
    %v5732 = vpow.pop %v5731
    %v5733 = vmul.f32 %v5700, 1.442695
    %v5734 = vpow.pop %v5733
    %v5735 = vmul.f32 %v5701, 1.442695
    %v5736 = vpow.pop %v5735
    %v5737 = vmul.f32 %v5702, 1.442695
    %v5738 = vpow.pop %v5737
    %v5739 = vmul.f32 %v5703, 1.442695
    %v5740 = vpow.pop %v5739
    %v5741 = vmul.f32 %v5704, 1.442695
    %v5742 = vpow.pop %v5741
    %v5743 = vmul.f32 %v5705, 1.442695
    %v5744 = vpow.pop %v5743
    %v5745 = vmul.f32 %v5706, 1.442695
    %v5746 = vpow.pop %v5745
    %v5747 = vmul.f32 %v5707, 1.442695
    %v5748 = vpow.pop %v5747
    %v5749 = vmul.f32 %v5708, 1.442695
    %v5750 = vpow.pop %v5749
    %v5751 = vmul.f32 %v5709, 1.442695
    %v5752 = vpow.pop %v5751
    %v5753 = vmul.f32 %v5710, 1.442695
    %v5754 = vpow.pop %v5753
    %v5755 = vmul.f32 %v5711, 1.442695
    %v5756 = vpow.pop %v5755
    %v5757 = vmul.f32 %v5712, 1.442695
    %v5758 = vpow.pop %v5757
    %v5759 = vmul.f32 %v5713, 1.442695
    %v5760 = vpow.pop %v5759
    %v5761 = vmul.f32 %v5714, 1.442695
    %v5762 = vpow.pop %v5761
    %v5763 = vmul.f32 %v5715, 1.442695
    %v5764 = vpow.pop %v5763
    %v5765 = vmul.f32 %v5716, 1.442695
    %v5766 = vpow.pop %v5765
    %v5767 = vmul.f32 %v5717, 1.442695
    %v5768 = vpow.pop %v5767
    %v5769 = vmul.f32 %v5718, 1.442695
    %v5770 = vpow.pop %v5769
    %v5771 = vmul.f32 %v5719, 1.442695
    %v5772 = vpow.pop %v5771
    %v5773 = vmul.f32 %v5720, 1.442695
    %v5774 = vpow.pop %v5773
    %v5775 = vmul.f32 %v5721, 1.442695
    %v5776 = vpow.pop %v5775
    %v5777 = vmul.f32 %v5722, 1.442695
    %v5778 = vpow.pop %v5777
    %v5779 = vmul.f32 %v5723, 1.442695
    %v5780 = vpow.pop %v5779
    %v5781 = vmul.f32 %v5724, 1.442695
    %v5782 = vpow.pop %v5781
    %v5783 = vmul.f32 %v5725, 1.442695
    %v5784 = vpow.pop %v5783
    %v5785 = vmul.f32 %v5726, 1.442695
    %v5786 = vpow.pop %v5785
    %v5787 = vmul.f32 %v5727, 1.442695
    %v5788 = vpow.pop %v5787
    %v5789 = vmul.f32 %v5728, 1.442695
    %v5790 = vpow.pop %v5789
    %v5791 = vmul.f32 %v5729, 1.442695
    %v5792 = vpow.pop %v5791
    %v5793 = vmul.f32 %v5730, 1.442695
    %v5794 = vpow.pop %v5793
    %v5795 = vsel %vm887, %v5732, 0.0
    %5796 = vadd.xlane.f32.xlu0 %v5795
    %v5797 = vpop.xlane.xlu0 %5796
    %v5798 = vsel %vm887, %v5734, 0.0
    %5799 = vadd.xlane.f32.xlu0 %v5798
    %v5800 = vpop.xlane.xlu0 %5799
    %v5801 = vsel %vm887, %v5736, 0.0
    %5802 = vadd.xlane.f32.xlu0 %v5801
    %v5803 = vpop.xlane.xlu0 %5802
    %v5804 = vsel %vm887, %v5738, 0.0
    %5805 = vadd.xlane.f32.xlu0 %v5804
    %v5806 = vpop.xlane.xlu0 %5805
    %v5807 = vsel %vm887, %v5740, 0.0
    %5808 = vadd.xlane.f32.xlu0 %v5807
    %v5809 = vpop.xlane.xlu0 %5808
    %v5810 = vsel %vm887, %v5742, 0.0
    %5811 = vadd.xlane.f32.xlu0 %v5810
    %v5812 = vpop.xlane.xlu0 %5811
    %v5813 = vsel %vm887, %v5744, 0.0
    %5814 = vadd.xlane.f32.xlu0 %v5813
    %v5815 = vpop.xlane.xlu0 %5814
    %v5816 = vsel %vm887, %v5746, 0.0
    %5817 = vadd.xlane.f32.xlu0 %v5816
    %v5818 = vpop.xlane.xlu0 %5817
    %v5819 = vsel %vm887, %v5748, 0.0
    %5820 = vadd.xlane.f32.xlu0 %v5819
    %v5821 = vpop.xlane.xlu0 %5820
    %v5822 = vsel %vm887, %v5750, 0.0
    %5823 = vadd.xlane.f32.xlu0 %v5822
    %v5824 = vpop.xlane.xlu0 %5823
    %v5825 = vsel %vm887, %v5752, 0.0
    %5826 = vadd.xlane.f32.xlu0 %v5825
    %v5827 = vpop.xlane.xlu0 %5826
    %v5828 = vsel %vm887, %v5754, 0.0
    %5829 = vadd.xlane.f32.xlu0 %v5828
    %v5830 = vpop.xlane.xlu0 %5829
    %v5831 = vsel %vm887, %v5756, 0.0
    %5832 = vadd.xlane.f32.xlu0 %v5831
    %v5833 = vpop.xlane.xlu0 %5832
    %v5834 = vsel %vm887, %v5758, 0.0
    %5835 = vadd.xlane.f32.xlu0 %v5834
    %v5836 = vpop.xlane.xlu0 %5835
    %v5837 = vsel %vm887, %v5760, 0.0
    %5838 = vadd.xlane.f32.xlu0 %v5837
    %v5839 = vpop.xlane.xlu0 %5838
    %v5840 = vsel %vm887, %v5762, 0.0
    %5841 = vadd.xlane.f32.xlu0 %v5840
    %v5842 = vpop.xlane.xlu0 %5841
    %v5843 = vsel %vm887, %v5764, 0.0
    %5844 = vadd.xlane.f32.xlu0 %v5843
    %v5845 = vpop.xlane.xlu0 %5844
    %v5846 = vsel %vm887, %v5766, 0.0
    %5847 = vadd.xlane.f32.xlu0 %v5846
    %v5848 = vpop.xlane.xlu0 %5847
    %v5849 = vsel %vm887, %v5768, 0.0
    %5850 = vadd.xlane.f32.xlu0 %v5849
    %v5851 = vpop.xlane.xlu0 %5850
    %v5852 = vsel %vm887, %v5770, 0.0
    %5853 = vadd.xlane.f32.xlu0 %v5852
    %v5854 = vpop.xlane.xlu0 %5853
    %v5855 = vsel %vm887, %v5772, 0.0
    %5856 = vadd.xlane.f32.xlu0 %v5855
    %v5857 = vpop.xlane.xlu0 %5856
    %v5858 = vsel %vm887, %v5774, 0.0
    %5859 = vadd.xlane.f32.xlu0 %v5858
    %v5860 = vpop.xlane.xlu0 %5859
    %v5861 = vsel %vm887, %v5776, 0.0
    %5862 = vadd.xlane.f32.xlu0 %v5861
    %v5863 = vpop.xlane.xlu0 %5862
    %v5864 = vsel %vm887, %v5778, 0.0
    %5865 = vadd.xlane.f32.xlu0 %v5864
    %v5866 = vpop.xlane.xlu0 %5865
    %v5867 = vsel %vm887, %v5780, 0.0
    %5868 = vadd.xlane.f32.xlu0 %v5867
    %v5869 = vpop.xlane.xlu0 %5868
    %v5870 = vsel %vm887, %v5782, 0.0
    %5871 = vadd.xlane.f32.xlu0 %v5870
    %v5872 = vpop.xlane.xlu0 %5871
    %v5873 = vsel %vm887, %v5784, 0.0
    %5874 = vadd.xlane.f32.xlu0 %v5873
    %v5875 = vpop.xlane.xlu0 %5874
    %v5876 = vsel %vm887, %v5786, 0.0
    %5877 = vadd.xlane.f32.xlu0 %v5876
    %v5878 = vpop.xlane.xlu0 %5877
    %v5879 = vsel %vm887, %v5788, 0.0
    %5880 = vadd.xlane.f32.xlu0 %v5879
    %v5881 = vpop.xlane.xlu0 %5880
    %v5882 = vsel %vm887, %v5790, 0.0
    %5883 = vadd.xlane.f32.xlu0 %v5882
    %v5884 = vpop.xlane.xlu0 %5883
    %v5885 = vsel %vm887, %v5792, 0.0
    %5886 = vadd.xlane.f32.xlu0 %v5885
    %v5887 = vpop.xlane.xlu0 %5886
    %v5888 = vsel %vm887, %v5794, 0.0
    %5889 = vadd.xlane.f32.xlu0 %v5888
    %v5890 = vpop.xlane.xlu0 %5889
    %v5891 = vrcp.pop %v5797
    %v5892 = vrcp.pop %v5800
    %v5893 = vrcp.pop %v5803
    %v5894 = vrcp.pop %v5806
    %v5895 = vrcp.pop %v5809
    %v5896 = vrcp.pop %v5812
    %v5897 = vrcp.pop %v5815
    %v5898 = vrcp.pop %v5818
    %v5899 = vrcp.pop %v5821
    %v5900 = vrcp.pop %v5824
    %v5901 = vrcp.pop %v5827
    %v5902 = vrcp.pop %v5830
    %v5903 = vrcp.pop %v5833
    %v5904 = vrcp.pop %v5836
    %v5905 = vrcp.pop %v5839
    %v5906 = vrcp.pop %v5842
    %v5907 = vrcp.pop %v5845
    %v5908 = vrcp.pop %v5848
    %v5909 = vrcp.pop %v5851
    %v5910 = vrcp.pop %v5854
    %v5911 = vrcp.pop %v5857
    %v5912 = vrcp.pop %v5860
    %v5913 = vrcp.pop %v5863
    %v5914 = vrcp.pop %v5866
    %v5915 = vrcp.pop %v5869
    %v5916 = vrcp.pop %v5872
    %v5917 = vrcp.pop %v5875
    %v5918 = vrcp.pop %v5878
    %v5919 = vrcp.pop %v5881
    %v5920 = vrcp.pop %v5884
    %v5921 = vrcp.pop %v5887
    %v5922 = vrcp.pop %v5890
    %v5923 = vmul.f32 %v5732, %v5891
    %v5924 = vmul.f32 %v5734, %v5892
    %v5925 = vmul.f32 %v5736, %v5893
    %v5926 = vmul.f32 %v5738, %v5894
    %v5927 = vmul.f32 %v5740, %v5895
    %v5928 = vmul.f32 %v5742, %v5896
    %v5929 = vmul.f32 %v5744, %v5897
    %v5930 = vmul.f32 %v5746, %v5898
    %v5931 = vmul.f32 %v5748, %v5899
    %v5932 = vmul.f32 %v5750, %v5900
    %v5933 = vmul.f32 %v5752, %v5901
    %v5934 = vmul.f32 %v5754, %v5902
    %v5935 = vmul.f32 %v5756, %v5903
    %v5936 = vmul.f32 %v5758, %v5904
    %v5937 = vmul.f32 %v5760, %v5905
    %v5938 = vmul.f32 %v5762, %v5906
    %v5939 = vmul.f32 %v5764, %v5907
    %v5940 = vmul.f32 %v5766, %v5908
    %v5941 = vmul.f32 %v5768, %v5909
    %v5942 = vmul.f32 %v5770, %v5910
    %v5943 = vmul.f32 %v5772, %v5911
    %v5944 = vmul.f32 %v5774, %v5912
    %v5945 = vmul.f32 %v5776, %v5913
    %v5946 = vmul.f32 %v5778, %v5914
    %v5947 = vmul.f32 %v5780, %v5915
    %v5948 = vmul.f32 %v5782, %v5916
    %v5949 = vmul.f32 %v5784, %v5917
    %v5950 = vmul.f32 %v5786, %v5918
    %v5951 = vmul.f32 %v5788, %v5919
    %v5952 = vmul.f32 %v5790, %v5920
    %v5953 = vmul.f32 %v5792, %v5921
    %v5954 = vmul.f32 %v5794, %v5922
    %v5955 = vpack.c.bf16 %v5923, %v5923
    %v5956 = vpack.c.bf16 %v5924, %v5924
    %v5957 = vpack.c.bf16 %v5925, %v5925
    %v5958 = vpack.c.bf16 %v5926, %v5926
    %v5959 = vpack.c.bf16 %v5927, %v5927
    %v5960 = vpack.c.bf16 %v5928, %v5928
    %v5961 = vpack.c.bf16 %v5929, %v5929
    %v5962 = vpack.c.bf16 %v5930, %v5930
    %v5963 = vpack.c.bf16 %v5931, %v5931
    %v5964 = vpack.c.bf16 %v5932, %v5932
    %v5965 = vpack.c.bf16 %v5933, %v5933
    %v5966 = vpack.c.bf16 %v5934, %v5934
    %v5967 = vpack.c.bf16 %v5935, %v5935
    %v5968 = vpack.c.bf16 %v5936, %v5936
    %v5969 = vpack.c.bf16 %v5937, %v5937
    %v5970 = vpack.c.bf16 %v5938, %v5938
    %v5971 = vpack.c.bf16 %v5939, %v5939
    %v5972 = vpack.c.bf16 %v5940, %v5940
    %v5973 = vpack.c.bf16 %v5941, %v5941
    %v5974 = vpack.c.bf16 %v5942, %v5942
    %v5975 = vpack.c.bf16 %v5943, %v5943
    %v5976 = vpack.c.bf16 %v5944, %v5944
    %v5977 = vpack.c.bf16 %v5945, %v5945
    %v5978 = vpack.c.bf16 %v5946, %v5946
    %v5979 = vpack.c.bf16 %v5947, %v5947
    %v5980 = vpack.c.bf16 %v5948, %v5948
    %v5981 = vpack.c.bf16 %v5949, %v5949
    %v5982 = vpack.c.bf16 %v5950, %v5950
    %v5983 = vpack.c.bf16 %v5951, %v5951
    %v5984 = vpack.c.bf16 %v5952, %v5952
    %v5985 = vpack.c.bf16 %v5953, %v5953
    %v5986 = vpack.c.bf16 %v5954, %v5954
    %v5995 = vunpack.c.l.b16 %v5955
    %v5996 = vunpack.c.l.b16 %v5956
    %v5997 = vunpack.c.l.b16 %v5957
    %v5998 = vunpack.c.l.b16 %v5958
    %v5999 = vunpack.c.l.b16 %v5959
    %v6000 = vunpack.c.l.b16 %v5960
    %v6001 = vunpack.c.l.b16 %v5961
    %v6002 = vunpack.c.l.b16 %v5962
    %v6003 = vpack.c.b16 %v5996, %v5995
    %v6004 = vpack.c.b16 %v5998, %v5997
    %v6005 = vpack.c.b16 %v6000, %v5999
    %v6006 = vpack.c.b16 %v6002, %v6001
    %v6015 = vunpack.c.l.b16 %v5319
    %v6016 = vunpack.c.l.b16 %v5320
    %v6017 = vunpack.c.l.b16 %v5321
    %v6018 = vunpack.c.l.b16 %v5322
    %v6019 = vunpack.c.l.b16 %v5323
    %v6020 = vunpack.c.l.b16 %v5324
    %v6021 = vunpack.c.l.b16 %v5325
    %v6022 = vunpack.c.l.b16 %v5326
    %v6023 = vpack.c.b16 %v6016, %v6015
    %v6024 = vpack.c.b16 %v6018, %v6017
    %v6025 = vpack.c.b16 %v6020, %v6019
    %v6026 = vpack.c.b16 %v6022, %v6021
    %v6032 = vsel %vm887, %v6003, 0
    %v6035 = vsel %vm887, %v6004, 0
    %v6038 = vsel %vm887, %v6005, 0
    %v6041 = vsel %vm887, %v6006, 0
    %6043 = vmatpush.bf16.msra.mxu0 0
    %6044 = vmatpush.bf16.msra.mxu0 0
    %6045 = vmatpush.bf16.msra.mxu0 0
    %6046 = vmatpush.bf16.msra.mxu0 0
    %6047 = vmatpush.bf16.msra.mxu0 %v6026
    %6048 = vmatpush.bf16.msra.mxu0 %v6025
    %6049 = vmatpush.bf16.msra.mxu0 %v6024
    %6050 = vmatpush.bf16.msra.mxu0 %v6023
    %6051 = vmatmul.bf16.gmra.mxu0 %v6032
    %v6052 = vpop.f32.mrf.mxu0
    %v6053 = vadd.f32 0.0, %v6052
    %v6054 = vpop.f32.mrf.mxu0
    %v6055 = vadd.f32 0.0, %v6054
    %6056 = vmatmul.bf16.gmra.mxu0 %v6035
    %v6057 = vpop.f32.mrf.mxu0
    %v6058 = vadd.f32 0.0, %v6057
    %v6059 = vpop.f32.mrf.mxu0
    %v6060 = vadd.f32 0.0, %v6059
    %6061 = vmatmul.bf16.gmra.mxu0 %v6038
    %v6062 = vpop.f32.mrf.mxu0
    %v6063 = vadd.f32 0.0, %v6062
    %v6064 = vpop.f32.mrf.mxu0
    %v6065 = vadd.f32 0.0, %v6064
    %6066 = vmatmul.bf16.gmra.mxu0 %v6041
    %v6067 = vpop.f32.mrf.mxu0
    %v6068 = vadd.f32 0.0, %v6067
    %v6069 = vpop.f32.mrf.mxu0
    %v6070 = vadd.f32 0.0, %v6069
    %6071 = vdwg.mxu0
    %v6080 = vunpack.c.l.b16 %v5963
    %v6081 = vunpack.c.l.b16 %v5964
    %v6082 = vunpack.c.l.b16 %v5965
    %v6083 = vunpack.c.l.b16 %v5966
    %v6084 = vunpack.c.l.b16 %v5967
    %v6085 = vunpack.c.l.b16 %v5968
    %v6086 = vunpack.c.l.b16 %v5969
    %v6087 = vunpack.c.l.b16 %v5970
    %v6088 = vpack.c.b16 %v6081, %v6080
    %v6089 = vpack.c.b16 %v6083, %v6082
    %v6090 = vpack.c.b16 %v6085, %v6084
    %v6091 = vpack.c.b16 %v6087, %v6086
    %v6093 = vsel %vm887, %v6088, 0
    %v6096 = vsel %vm887, %v6089, 0
    %v6099 = vsel %vm887, %v6090, 0
    %v6102 = vsel %vm887, %v6091, 0
    %6104 = vmatpush.bf16.msra.mxu0 0
    %6105 = vmatpush.bf16.msra.mxu0 0
    %6106 = vmatpush.bf16.msra.mxu0 0
    %6107 = vmatpush.bf16.msra.mxu0 0
    %6108 = vmatpush.bf16.msra.mxu0 %v6026
    %6109 = vmatpush.bf16.msra.mxu0 %v6025
    %6110 = vmatpush.bf16.msra.mxu0 %v6024
    %6111 = vmatpush.bf16.msra.mxu0 %v6023
    %6112 = vmatmul.bf16.gmra.mxu0 %v6093
    %v6113 = vpop.f32.mrf.mxu0
    %v6114 = vadd.f32 0.0, %v6113
    %v6115 = vpop.f32.mrf.mxu0
    %v6116 = vadd.f32 0.0, %v6115
    %6117 = vmatmul.bf16.gmra.mxu0 %v6096
    %v6118 = vpop.f32.mrf.mxu0
    %v6119 = vadd.f32 0.0, %v6118
    %v6120 = vpop.f32.mrf.mxu0
    %v6121 = vadd.f32 0.0, %v6120
    %6122 = vmatmul.bf16.gmra.mxu0 %v6099
    %v6123 = vpop.f32.mrf.mxu0
    %v6124 = vadd.f32 0.0, %v6123
    %v6125 = vpop.f32.mrf.mxu0
    %v6126 = vadd.f32 0.0, %v6125
    %6127 = vmatmul.bf16.gmra.mxu0 %v6102
    %v6128 = vpop.f32.mrf.mxu0
    %v6129 = vadd.f32 0.0, %v6128
    %v6130 = vpop.f32.mrf.mxu0
    %v6131 = vadd.f32 0.0, %v6130
    %6132 = vdwg.mxu0
    %v6141 = vunpack.c.l.b16 %v5971
    %v6142 = vunpack.c.l.b16 %v5972
    %v6143 = vunpack.c.l.b16 %v5973
    %v6144 = vunpack.c.l.b16 %v5974
    %v6145 = vunpack.c.l.b16 %v5975
    %v6146 = vunpack.c.l.b16 %v5976
    %v6147 = vunpack.c.l.b16 %v5977
    %v6148 = vunpack.c.l.b16 %v5978
    %v6149 = vpack.c.b16 %v6142, %v6141
    %v6150 = vpack.c.b16 %v6144, %v6143
    %v6151 = vpack.c.b16 %v6146, %v6145
    %v6152 = vpack.c.b16 %v6148, %v6147
    %v6154 = vsel %vm887, %v6149, 0
    %v6157 = vsel %vm887, %v6150, 0
    %v6160 = vsel %vm887, %v6151, 0
    %v6163 = vsel %vm887, %v6152, 0
    %6165 = vmatpush.bf16.msra.mxu0 0
    %6166 = vmatpush.bf16.msra.mxu0 0
    %6167 = vmatpush.bf16.msra.mxu0 0
    %6168 = vmatpush.bf16.msra.mxu0 0
    %6169 = vmatpush.bf16.msra.mxu0 %v6026
    %6170 = vmatpush.bf16.msra.mxu0 %v6025
    %6171 = vmatpush.bf16.msra.mxu0 %v6024
    %6172 = vmatpush.bf16.msra.mxu0 %v6023
    %6173 = vmatmul.bf16.gmra.mxu0 %v6154
    %v6174 = vpop.f32.mrf.mxu0
    %v6175 = vadd.f32 0.0, %v6174
    %v6176 = vpop.f32.mrf.mxu0
    %v6177 = vadd.f32 0.0, %v6176
    %6178 = vmatmul.bf16.gmra.mxu0 %v6157
    %v6179 = vpop.f32.mrf.mxu0
    %v6180 = vadd.f32 0.0, %v6179
    %v6181 = vpop.f32.mrf.mxu0
    %v6182 = vadd.f32 0.0, %v6181
    %6183 = vmatmul.bf16.gmra.mxu0 %v6160
    %v6184 = vpop.f32.mrf.mxu0
    %v6185 = vadd.f32 0.0, %v6184
    %v6186 = vpop.f32.mrf.mxu0
    %v6187 = vadd.f32 0.0, %v6186
    %6188 = vmatmul.bf16.gmra.mxu0 %v6163
    %v6189 = vpop.f32.mrf.mxu0
    %v6190 = vadd.f32 0.0, %v6189
    %v6191 = vpop.f32.mrf.mxu0
    %v6192 = vadd.f32 0.0, %v6191
    %6193 = vdwg.mxu0
    %v6202 = vunpack.c.l.b16 %v5979
    %v6203 = vunpack.c.l.b16 %v5980
    %v6204 = vunpack.c.l.b16 %v5981
    %v6205 = vunpack.c.l.b16 %v5982
    %v6206 = vunpack.c.l.b16 %v5983
    %v6207 = vunpack.c.l.b16 %v5984
    %v6208 = vunpack.c.l.b16 %v5985
    %v6209 = vunpack.c.l.b16 %v5986
    %v6210 = vpack.c.b16 %v6203, %v6202
    %v6211 = vpack.c.b16 %v6205, %v6204
    %v6212 = vpack.c.b16 %v6207, %v6206
    %v6213 = vpack.c.b16 %v6209, %v6208
    %v6215 = vsel %vm887, %v6210, 0
    %v6218 = vsel %vm887, %v6211, 0
    %v6221 = vsel %vm887, %v6212, 0
    %v6224 = vsel %vm887, %v6213, 0
    %6226 = vmatpush.bf16.msra.mxu0 0
    %6227 = vmatpush.bf16.msra.mxu0 0
    %6228 = vmatpush.bf16.msra.mxu0 0
    %6229 = vmatpush.bf16.msra.mxu0 0
    %6230 = vmatpush.bf16.msra.mxu0 %v6026
    %6231 = vmatpush.bf16.msra.mxu0 %v6025
    %6232 = vmatpush.bf16.msra.mxu0 %v6024
    %6233 = vmatpush.bf16.msra.mxu0 %v6023
    %6234 = vmatmul.bf16.gmra.mxu0 %v6215
    %v6235 = vpop.f32.mrf.mxu0
    %v6236 = vadd.f32 0.0, %v6235
    %v6237 = vpop.f32.mrf.mxu0
    %v6238 = vadd.f32 0.0, %v6237
    %6239 = vmatmul.bf16.gmra.mxu0 %v6218
    %v6240 = vpop.f32.mrf.mxu0
    %v6241 = vadd.f32 0.0, %v6240
    %v6242 = vpop.f32.mrf.mxu0
    %v6243 = vadd.f32 0.0, %v6242
    %6244 = vmatmul.bf16.gmra.mxu0 %v6221
    %v6245 = vpop.f32.mrf.mxu0
    %v6246 = vadd.f32 0.0, %v6245
    %v6247 = vpop.f32.mrf.mxu0
    %v6248 = vadd.f32 0.0, %v6247
    %6249 = vmatmul.bf16.gmra.mxu0 %v6224
    %v6250 = vpop.f32.mrf.mxu0
    %v6251 = vadd.f32 0.0, %v6250
    %v6252 = vpop.f32.mrf.mxu0
    %v6253 = vadd.f32 0.0, %v6252
    %6254 = vdwg.mxu0
    %v6255 = vmul.f32 %v6053, %v523
    %v6256 = vmul.f32 %v6055, %v523
    %v6257 = vmul.f32 %v6058, %v523
    %v6258 = vmul.f32 %v6060, %v523
    %v6259 = vmul.f32 %v6063, %v523
    %v6260 = vmul.f32 %v6065, %v523
    %v6261 = vmul.f32 %v6068, %v523
    %v6262 = vmul.f32 %v6070, %v523
    %v6263 = vmul.f32 %v6114, %v524
    %v6264 = vmul.f32 %v6116, %v524
    %v6265 = vmul.f32 %v6119, %v524
    %v6266 = vmul.f32 %v6121, %v524
    %v6267 = vmul.f32 %v6124, %v524
    %v6268 = vmul.f32 %v6126, %v524
    %v6269 = vmul.f32 %v6129, %v524
    %v6270 = vmul.f32 %v6131, %v524
    %v6271 = vmul.f32 %v6175, %v525
    %v6272 = vmul.f32 %v6177, %v525
    %v6273 = vmul.f32 %v6180, %v525
    %v6274 = vmul.f32 %v6182, %v525
    %v6275 = vmul.f32 %v6185, %v525
    %v6276 = vmul.f32 %v6187, %v525
    %v6277 = vmul.f32 %v6190, %v525
    %v6278 = vmul.f32 %v6192, %v525
    %v6279 = vmul.f32 %v6236, %v526
    %v6280 = vmul.f32 %v6238, %v526
    %v6281 = vmul.f32 %v6241, %v526
    %v6282 = vmul.f32 %v6243, %v526
    %v6283 = vmul.f32 %v6246, %v526
    %v6284 = vmul.f32 %v6248, %v526
    %v6285 = vmul.f32 %v6251, %v526
    %v6286 = vmul.f32 %v6253, %v526
    %v6287 = vsel %vm291, %v6255, 0.0
    %v6288 = vsel %vm291, %v6263, 0.0
    %v6289 = vadd.f32 %v6287, %v6288
    %v6290 = vsel %vm291, %v6271, 0.0
    %v6291 = vadd.f32 %v6289, %v6290
    %v6292 = vsel %vm291, %v6279, 0.0
    %v6293 = vadd.f32 %v6291, %v6292
    %v6294 = vsel %vm291, %v6256, 0.0
    %v6295 = vsel %vm291, %v6264, 0.0
    %v6296 = vadd.f32 %v6294, %v6295
    %v6297 = vsel %vm291, %v6272, 0.0
    %v6298 = vadd.f32 %v6296, %v6297
    %v6299 = vsel %vm291, %v6280, 0.0
    %v6300 = vadd.f32 %v6298, %v6299
    %v6301 = vsel %vm291, %v6257, 0.0
    %v6302 = vsel %vm291, %v6265, 0.0
    %v6303 = vadd.f32 %v6301, %v6302
    %v6304 = vsel %vm291, %v6273, 0.0
    %v6305 = vadd.f32 %v6303, %v6304
    %v6306 = vsel %vm291, %v6281, 0.0
    %v6307 = vadd.f32 %v6305, %v6306
    %v6308 = vsel %vm291, %v6258, 0.0
    %v6309 = vsel %vm291, %v6266, 0.0
    %v6310 = vadd.f32 %v6308, %v6309
    %v6311 = vsel %vm291, %v6274, 0.0
    %v6312 = vadd.f32 %v6310, %v6311
    %v6313 = vsel %vm291, %v6282, 0.0
    %v6314 = vadd.f32 %v6312, %v6313
    %v6315 = vsel %vm291, %v6259, 0.0
    %v6316 = vsel %vm291, %v6267, 0.0
    %v6317 = vadd.f32 %v6315, %v6316
    %v6318 = vsel %vm291, %v6275, 0.0
    %v6319 = vadd.f32 %v6317, %v6318
    %v6320 = vsel %vm291, %v6283, 0.0
    %v6321 = vadd.f32 %v6319, %v6320
    %v6322 = vsel %vm291, %v6260, 0.0
    %v6323 = vsel %vm291, %v6268, 0.0
    %v6324 = vadd.f32 %v6322, %v6323
    %v6325 = vsel %vm291, %v6276, 0.0
    %v6326 = vadd.f32 %v6324, %v6325
    %v6327 = vsel %vm291, %v6284, 0.0
    %v6328 = vadd.f32 %v6326, %v6327
    %v6329 = vsel %vm291, %v6261, 0.0
    %v6330 = vsel %vm291, %v6269, 0.0
    %v6331 = vadd.f32 %v6329, %v6330
    %v6332 = vsel %vm291, %v6277, 0.0
    %v6333 = vadd.f32 %v6331, %v6332
    %v6334 = vsel %vm291, %v6285, 0.0
    %v6335 = vadd.f32 %v6333, %v6334
    %v6336 = vsel %vm291, %v6262, 0.0
    %v6337 = vsel %vm291, %v6270, 0.0
    %v6338 = vadd.f32 %v6336, %v6337
    %v6339 = vsel %vm291, %v6278, 0.0
    %v6340 = vadd.f32 %v6338, %v6339
    %v6341 = vsel %vm291, %v6286, 0.0
    %v6342 = vadd.f32 %v6340, %v6341
    %v6343 = vpack.c.bf16 %v5204, %v5197
    %v6344 = vpack.c.bf16 %v5218, %v5211
    %v6345 = vpack.c.bf16 %v5232, %v5225
    %v6346 = vpack.c.bf16 %v5246, %v5239
    %v6347 = vpack.c.bf16 %v6300, %v6293
    %v6348 = vpack.c.bf16 %v6314, %v6307
    %v6349 = vpack.c.bf16 %v6328, %v6321
    %v6350 = vpack.c.bf16 %v6342, %v6335
    %s6351 = scalar_lea.vmem %s11, 16
    %v6352 = vld [vmem:[%s6351] sm:$0xf]
    %v6353 = vld [vmem:[%s6351 + $0x4] sm:$0xf]
    %v6354 = vld [vmem:[%s6351 + $0x8] sm:$0xf]
    %v6355 = vld [vmem:[%s6351 + $0xc] sm:$0xf]
    %s6356 = scalar_lea.vmem %s12, 1
    %v6357 = vld [vmem:[%s6356] sm:$0x1]
    %v6359 = vperm.slane %v6357, 0
    %v6365 = vunpack.c.l.b16 %v6352
    %v6366 = vunpack.c.l.b16 %v6353
    %v6367 = vunpack.c.l.b16 %v6354
    %v6368 = vunpack.c.l.b16 %v6355
    %v6369 = vpack.c.b16 %v6366, %v6365
    %v6370 = vpack.c.b16 %v6368, %v6367
    %v6374 = vsel %vm291, %v6343, 0
    %v6377 = vsel %vm291, %v6344, 0
    %v6380 = vsel %vm291, %v6345, 0
    %v6383 = vsel %vm291, %v6346, 0
    %v6386 = vsel %vm291, %v6347, 0
    %v6389 = vsel %vm291, %v6348, 0
    %v6392 = vsel %vm291, %v6349, 0
    %v6395 = vsel %vm291, %v6350, 0
    %6397 = vmatpush.bf16.msra.mxu0 0
    %6398 = vmatpush.bf16.msra.mxu0 0
    %6399 = vmatpush.bf16.msra.mxu0 0
    %6400 = vmatpush.bf16.msra.mxu0 0
    %6401 = vmatpush.bf16.msra.mxu0 0
    %6402 = vmatpush.bf16.msra.mxu0 0
    %6403 = vmatpush.bf16.msra.mxu0 %v6370
    %6404 = vmatpush.bf16.msra.mxu0 %v6369
    %6405 = vmatmul.bf16.gmra.mxu0 %v6374
    %v6406 = vpop.f32.mrf.mxu0
    %v6407 = vadd.f32 %v6359, %v6406
    %v6408 = vpop.f32.mrf.mxu0
    %v6409 = vadd.f32 %v6359, %v6408
    %6410 = vmatmul.bf16.gmra.mxu0 %v6377
    %v6411 = vpop.f32.mrf.mxu0
    %v6412 = vadd.f32 %v6359, %v6411
    %v6413 = vpop.f32.mrf.mxu0
    %v6414 = vadd.f32 %v6359, %v6413
    %6415 = vmatmul.bf16.gmra.mxu0 %v6380
    %v6416 = vpop.f32.mrf.mxu0
    %v6417 = vadd.f32 %v6359, %v6416
    %v6418 = vpop.f32.mrf.mxu0
    %v6419 = vadd.f32 %v6359, %v6418
    %6420 = vmatmul.bf16.gmra.mxu0 %v6383
    %v6421 = vpop.f32.mrf.mxu0
    %v6422 = vadd.f32 %v6359, %v6421
    %v6423 = vpop.f32.mrf.mxu0
    %v6424 = vadd.f32 %v6359, %v6423
    %6425 = vmatmul.bf16.gmra.mxu0 %v6386
    %v6426 = vpop.f32.mrf.mxu0
    %v6427 = vadd.f32 %v6359, %v6426
    %v6428 = vpop.f32.mrf.mxu0
    %v6429 = vadd.f32 %v6359, %v6428
    %6430 = vmatmul.bf16.gmra.mxu0 %v6389
    %v6431 = vpop.f32.mrf.mxu0
    %v6432 = vadd.f32 %v6359, %v6431
    %v6433 = vpop.f32.mrf.mxu0
    %v6434 = vadd.f32 %v6359, %v6433
    %6435 = vmatmul.bf16.gmra.mxu0 %v6392
    %v6436 = vpop.f32.mrf.mxu0
    %v6437 = vadd.f32 %v6359, %v6436
    %v6438 = vpop.f32.mrf.mxu0
    %v6439 = vadd.f32 %v6359, %v6438
    %6440 = vmatmul.bf16.gmra.mxu0 %v6395
    %v6441 = vpop.f32.mrf.mxu0
    %v6442 = vadd.f32 %v6359, %v6441
    %v6443 = vpop.f32.mrf.mxu0
    %v6444 = vadd.f32 %v6359, %v6443
    %6445 = vdwg.mxu0
    %v6446 = vadd.f32 %v3874, %v6407
    %v6447 = vadd.f32 %v3875, %v6409
    %v6448 = vadd.f32 %v3876, %v6412
    %v6449 = vadd.f32 %v3877, %v6414
    %v6450 = vadd.f32 %v3878, %v6417
    %v6451 = vadd.f32 %v3879, %v6419
    %v6452 = vadd.f32 %v3880, %v6422
    %v6453 = vadd.f32 %v3881, %v6424
    %v6454 = vadd.f32 %v3882, %v6427
    %v6455 = vadd.f32 %v3883, %v6429
    %v6456 = vadd.f32 %v3884, %v6432
    %v6457 = vadd.f32 %v3885, %v6434
    %v6458 = vadd.f32 %v3886, %v6437
    %v6459 = vadd.f32 %v3887, %v6439
    %v6460 = vadd.f32 %v3888, %v6442
    %v6461 = vadd.f32 %v3889, %v6444
    %s6462 = scalar_lea.vmem %s13, 1
    %v6463 = vld [vmem:[%s6462] sm:$0x1]
    %s6464 = scalar_lea.vmem %s14, 1
    %v6465 = vld [vmem:[%s6464] sm:$0x1]
    %v6466 = vsel %vm291, %v6446, 0.0
    %6467 = vadd.xlane.f32.xlu0 %v6466
    %v6468 = vpop.xlane.xlu0 %6467
    %v6469 = vsel %vm291, %v6447, 0.0
    %6470 = vadd.xlane.f32.xlu0 %v6469
    %v6471 = vpop.xlane.xlu0 %6470
    %v6472 = vsel %vm291, %v6448, 0.0
    %6473 = vadd.xlane.f32.xlu0 %v6472
    %v6474 = vpop.xlane.xlu0 %6473
    %v6475 = vsel %vm291, %v6449, 0.0
    %6476 = vadd.xlane.f32.xlu0 %v6475
    %v6477 = vpop.xlane.xlu0 %6476
    %v6478 = vsel %vm291, %v6450, 0.0
    %6479 = vadd.xlane.f32.xlu0 %v6478
    %v6480 = vpop.xlane.xlu0 %6479
    %v6481 = vsel %vm291, %v6451, 0.0
    %6482 = vadd.xlane.f32.xlu0 %v6481
    %v6483 = vpop.xlane.xlu0 %6482
    %v6484 = vsel %vm291, %v6452, 0.0
    %6485 = vadd.xlane.f32.xlu0 %v6484
    %v6486 = vpop.xlane.xlu0 %6485
    %v6487 = vsel %vm291, %v6453, 0.0
    %6488 = vadd.xlane.f32.xlu0 %v6487
    %v6489 = vpop.xlane.xlu0 %6488
    %v6490 = vsel %vm291, %v6454, 0.0
    %6491 = vadd.xlane.f32.xlu0 %v6490
    %v6492 = vpop.xlane.xlu0 %6491
    %v6493 = vsel %vm291, %v6455, 0.0
    %6494 = vadd.xlane.f32.xlu0 %v6493
    %v6495 = vpop.xlane.xlu0 %6494
    %v6496 = vsel %vm291, %v6456, 0.0
    %6497 = vadd.xlane.f32.xlu0 %v6496
    %v6498 = vpop.xlane.xlu0 %6497
    %v6499 = vsel %vm291, %v6457, 0.0
    %6500 = vadd.xlane.f32.xlu0 %v6499
    %v6501 = vpop.xlane.xlu0 %6500
    %v6502 = vsel %vm291, %v6458, 0.0
    %6503 = vadd.xlane.f32.xlu0 %v6502
    %v6504 = vpop.xlane.xlu0 %6503
    %v6505 = vsel %vm291, %v6459, 0.0
    %6506 = vadd.xlane.f32.xlu0 %v6505
    %v6507 = vpop.xlane.xlu0 %6506
    %v6508 = vsel %vm291, %v6460, 0.0
    %6509 = vadd.xlane.f32.xlu0 %v6508
    %v6510 = vpop.xlane.xlu0 %6509
    %v6511 = vsel %vm291, %v6461, 0.0
    %6512 = vadd.xlane.f32.xlu0 %v6511
    %v6513 = vpop.xlane.xlu0 %6512
    %v6514 = vmul.f32 %v6468, %v2897
    %v6515 = vmul.f32 %v6471, %v2897
    %v6516 = vmul.f32 %v6474, %v2897
    %v6517 = vmul.f32 %v6477, %v2897
    %v6518 = vmul.f32 %v6480, %v2897
    %v6519 = vmul.f32 %v6483, %v2897
    %v6520 = vmul.f32 %v6486, %v2897
    %v6521 = vmul.f32 %v6489, %v2897
    %v6522 = vmul.f32 %v6492, %v2897
    %v6523 = vmul.f32 %v6495, %v2897
    %v6524 = vmul.f32 %v6498, %v2897
    %v6525 = vmul.f32 %v6501, %v2897
    %v6526 = vmul.f32 %v6504, %v2897
    %v6527 = vmul.f32 %v6507, %v2897
    %v6528 = vmul.f32 %v6510, %v2897
    %v6529 = vmul.f32 %v6513, %v2897
    %v6530 = vsub.f32 %v6446, %v6514
    %v6531 = vsub.f32 %v6447, %v6515
    %v6532 = vsub.f32 %v6448, %v6516
    %v6533 = vsub.f32 %v6449, %v6517
    %v6534 = vsub.f32 %v6450, %v6518
    %v6535 = vsub.f32 %v6451, %v6519
    %v6536 = vsub.f32 %v6452, %v6520
    %v6537 = vsub.f32 %v6453, %v6521
    %v6538 = vsub.f32 %v6454, %v6522
    %v6539 = vsub.f32 %v6455, %v6523
    %v6540 = vsub.f32 %v6456, %v6524
    %v6541 = vsub.f32 %v6457, %v6525
    %v6542 = vsub.f32 %v6458, %v6526
    %v6543 = vsub.f32 %v6459, %v6527
    %v6544 = vsub.f32 %v6460, %v6528
    %v6545 = vsub.f32 %v6461, %v6529
    %v6546 = vmul.f32 %v6530, %v6530
    %v6547 = vmul.f32 %v6531, %v6531
    %v6548 = vmul.f32 %v6532, %v6532
    %v6549 = vmul.f32 %v6533, %v6533
    %v6550 = vmul.f32 %v6534, %v6534
    %v6551 = vmul.f32 %v6535, %v6535
    %v6552 = vmul.f32 %v6536, %v6536
    %v6553 = vmul.f32 %v6537, %v6537
    %v6554 = vmul.f32 %v6538, %v6538
    %v6555 = vmul.f32 %v6539, %v6539
    %v6556 = vmul.f32 %v6540, %v6540
    %v6557 = vmul.f32 %v6541, %v6541
    %v6558 = vmul.f32 %v6542, %v6542
    %v6559 = vmul.f32 %v6543, %v6543
    %v6560 = vmul.f32 %v6544, %v6544
    %v6561 = vmul.f32 %v6545, %v6545
    %v6562 = vsel %vm291, %v6546, 0.0
    %6563 = vadd.xlane.f32.xlu0 %v6562
    %v6564 = vpop.xlane.xlu0 %6563
    %v6565 = vsel %vm291, %v6547, 0.0
    %6566 = vadd.xlane.f32.xlu0 %v6565
    %v6567 = vpop.xlane.xlu0 %6566
    %v6568 = vsel %vm291, %v6548, 0.0
    %6569 = vadd.xlane.f32.xlu0 %v6568
    %v6570 = vpop.xlane.xlu0 %6569
    %v6571 = vsel %vm291, %v6549, 0.0
    %6572 = vadd.xlane.f32.xlu0 %v6571
    %v6573 = vpop.xlane.xlu0 %6572
    %v6574 = vsel %vm291, %v6550, 0.0
    %6575 = vadd.xlane.f32.xlu0 %v6574
    %v6576 = vpop.xlane.xlu0 %6575
    %v6577 = vsel %vm291, %v6551, 0.0
    %6578 = vadd.xlane.f32.xlu0 %v6577
    %v6579 = vpop.xlane.xlu0 %6578
    %v6580 = vsel %vm291, %v6552, 0.0
    %6581 = vadd.xlane.f32.xlu0 %v6580
    %v6582 = vpop.xlane.xlu0 %6581
    %v6583 = vsel %vm291, %v6553, 0.0
    %6584 = vadd.xlane.f32.xlu0 %v6583
    %v6585 = vpop.xlane.xlu0 %6584
    %v6586 = vsel %vm291, %v6554, 0.0
    %6587 = vadd.xlane.f32.xlu0 %v6586
    %v6588 = vpop.xlane.xlu0 %6587
    %v6589 = vsel %vm291, %v6555, 0.0
    %6590 = vadd.xlane.f32.xlu0 %v6589
    %v6591 = vpop.xlane.xlu0 %6590
    %v6592 = vsel %vm291, %v6556, 0.0
    %6593 = vadd.xlane.f32.xlu0 %v6592
    %v6594 = vpop.xlane.xlu0 %6593
    %v6595 = vsel %vm291, %v6557, 0.0
    %6596 = vadd.xlane.f32.xlu0 %v6595
    %v6597 = vpop.xlane.xlu0 %6596
    %v6598 = vsel %vm291, %v6558, 0.0
    %6599 = vadd.xlane.f32.xlu0 %v6598
    %v6600 = vpop.xlane.xlu0 %6599
    %v6601 = vsel %vm291, %v6559, 0.0
    %6602 = vadd.xlane.f32.xlu0 %v6601
    %v6603 = vpop.xlane.xlu0 %6602
    %v6604 = vsel %vm291, %v6560, 0.0
    %6605 = vadd.xlane.f32.xlu0 %v6604
    %v6606 = vpop.xlane.xlu0 %6605
    %v6607 = vsel %vm291, %v6561, 0.0
    %6608 = vadd.xlane.f32.xlu0 %v6607
    %v6609 = vpop.xlane.xlu0 %6608
    %v6610 = vmul.f32 %v6564, %v2897
    %v6611 = vmul.f32 %v6567, %v2897
    %v6612 = vmul.f32 %v6570, %v2897
    %v6613 = vmul.f32 %v6573, %v2897
    %v6614 = vmul.f32 %v6576, %v2897
    %v6615 = vmul.f32 %v6579, %v2897
    %v6616 = vmul.f32 %v6582, %v2897
    %v6617 = vmul.f32 %v6585, %v2897
    %v6618 = vmul.f32 %v6588, %v2897
    %v6619 = vmul.f32 %v6591, %v2897
    %v6620 = vmul.f32 %v6594, %v2897
    %v6621 = vmul.f32 %v6597, %v2897
    %v6622 = vmul.f32 %v6600, %v2897
    %v6623 = vmul.f32 %v6603, %v2897
    %v6624 = vmul.f32 %v6606, %v2897
    %v6625 = vmul.f32 %v6609, %v2897
    %v6626 = vadd.f32 %v6610, 1e-05
    %v6627 = vadd.f32 %v6611, 1e-05
    %v6628 = vadd.f32 %v6612, 1e-05
    %v6629 = vadd.f32 %v6613, 1e-05
    %v6630 = vadd.f32 %v6614, 1e-05
    %v6631 = vadd.f32 %v6615, 1e-05
    %v6632 = vadd.f32 %v6616, 1e-05
    %v6633 = vadd.f32 %v6617, 1e-05
    %v6634 = vadd.f32 %v6618, 1e-05
    %v6635 = vadd.f32 %v6619, 1e-05
    %v6636 = vadd.f32 %v6620, 1e-05
    %v6637 = vadd.f32 %v6621, 1e-05
    %v6638 = vadd.f32 %v6622, 1e-05
    %v6639 = vadd.f32 %v6623, 1e-05
    %v6640 = vadd.f32 %v6624, 1e-05
    %v6641 = vadd.f32 %v6625, 1e-05
    %v6642 = vrsqrt.pop %v6626
    %v6643 = vmul.f32 %v6642, %v6626
    %v6644 = vmul.f32 %v6643, %v6642
    %v6645 = vmul.f32 0.5, %v6644
    %v6646 = vsub.f32 1.5, %v6645
    %v6647 = vmul.f32 %v6642, %v6646
    %vm6648 = vweird.f32 %v6626
    %vm6649 = vweird.f32 %v6642
    %vm6650 = vmor %vm6648, %vm6649
    %v6651 = vsel %vm6650, %v6642, %v6647
    %v6652 = vrsqrt.pop %v6627
    %v6653 = vmul.f32 %v6652, %v6627
    %v6654 = vmul.f32 %v6653, %v6652
    %v6655 = vmul.f32 0.5, %v6654
    %v6656 = vsub.f32 1.5, %v6655
    %v6657 = vmul.f32 %v6652, %v6656
    %vm6658 = vweird.f32 %v6627
    %vm6659 = vweird.f32 %v6652
    %vm6660 = vmor %vm6658, %vm6659
    %v6661 = vsel %vm6660, %v6652, %v6657
    %v6662 = vrsqrt.pop %v6628
    %v6663 = vmul.f32 %v6662, %v6628
    %v6664 = vmul.f32 %v6663, %v6662
    %v6665 = vmul.f32 0.5, %v6664
    %v6666 = vsub.f32 1.5, %v6665
    %v6667 = vmul.f32 %v6662, %v6666
    %vm6668 = vweird.f32 %v6628
    %vm6669 = vweird.f32 %v6662
    %vm6670 = vmor %vm6668, %vm6669
    %v6671 = vsel %vm6670, %v6662, %v6667
    %v6672 = vrsqrt.pop %v6629
    %v6673 = vmul.f32 %v6672, %v6629
    %v6674 = vmul.f32 %v6673, %v6672
    %v6675 = vmul.f32 0.5, %v6674
    %v6676 = vsub.f32 1.5, %v6675
    %v6677 = vmul.f32 %v6672, %v6676
    %vm6678 = vweird.f32 %v6629
    %vm6679 = vweird.f32 %v6672
    %vm6680 = vmor %vm6678, %vm6679
    %v6681 = vsel %vm6680, %v6672, %v6677
    %v6682 = vrsqrt.pop %v6630
    %v6683 = vmul.f32 %v6682, %v6630
    %v6684 = vmul.f32 %v6683, %v6682
    %v6685 = vmul.f32 0.5, %v6684
    %v6686 = vsub.f32 1.5, %v6685
    %v6687 = vmul.f32 %v6682, %v6686
    %vm6688 = vweird.f32 %v6630
    %vm6689 = vweird.f32 %v6682
    %vm6690 = vmor %vm6688, %vm6689
    %v6691 = vsel %vm6690, %v6682, %v6687
    %v6692 = vrsqrt.pop %v6631
    %v6693 = vmul.f32 %v6692, %v6631
    %v6694 = vmul.f32 %v6693, %v6692
    %v6695 = vmul.f32 0.5, %v6694
    %v6696 = vsub.f32 1.5, %v6695
    %v6697 = vmul.f32 %v6692, %v6696
    %vm6698 = vweird.f32 %v6631
    %vm6699 = vweird.f32 %v6692
    %vm6700 = vmor %vm6698, %vm6699
    %v6701 = vsel %vm6700, %v6692, %v6697
    %v6702 = vrsqrt.pop %v6632
    %v6703 = vmul.f32 %v6702, %v6632
    %v6704 = vmul.f32 %v6703, %v6702
    %v6705 = vmul.f32 0.5, %v6704
    %v6706 = vsub.f32 1.5, %v6705
    %v6707 = vmul.f32 %v6702, %v6706
    %vm6708 = vweird.f32 %v6632
    %vm6709 = vweird.f32 %v6702
    %vm6710 = vmor %vm6708, %vm6709
    %v6711 = vsel %vm6710, %v6702, %v6707
    %v6712 = vrsqrt.pop %v6633
    %v6713 = vmul.f32 %v6712, %v6633
    %v6714 = vmul.f32 %v6713, %v6712
    %v6715 = vmul.f32 0.5, %v6714
    %v6716 = vsub.f32 1.5, %v6715
    %v6717 = vmul.f32 %v6712, %v6716
    %vm6718 = vweird.f32 %v6633
    %vm6719 = vweird.f32 %v6712
    %vm6720 = vmor %vm6718, %vm6719
    %v6721 = vsel %vm6720, %v6712, %v6717
    %v6722 = vrsqrt.pop %v6634
    %v6723 = vmul.f32 %v6722, %v6634
    %v6724 = vmul.f32 %v6723, %v6722
    %v6725 = vmul.f32 0.5, %v6724
    %v6726 = vsub.f32 1.5, %v6725
    %v6727 = vmul.f32 %v6722, %v6726
    %vm6728 = vweird.f32 %v6634
    %vm6729 = vweird.f32 %v6722
    %vm6730 = vmor %vm6728, %vm6729
    %v6731 = vsel %vm6730, %v6722, %v6727
    %v6732 = vrsqrt.pop %v6635
    %v6733 = vmul.f32 %v6732, %v6635
    %v6734 = vmul.f32 %v6733, %v6732
    %v6735 = vmul.f32 0.5, %v6734
    %v6736 = vsub.f32 1.5, %v6735
    %v6737 = vmul.f32 %v6732, %v6736
    %vm6738 = vweird.f32 %v6635
    %vm6739 = vweird.f32 %v6732
    %vm6740 = vmor %vm6738, %vm6739
    %v6741 = vsel %vm6740, %v6732, %v6737
    %v6742 = vrsqrt.pop %v6636
    %v6743 = vmul.f32 %v6742, %v6636
    %v6744 = vmul.f32 %v6743, %v6742
    %v6745 = vmul.f32 0.5, %v6744
    %v6746 = vsub.f32 1.5, %v6745
    %v6747 = vmul.f32 %v6742, %v6746
    %vm6748 = vweird.f32 %v6636
    %vm6749 = vweird.f32 %v6742
    %vm6750 = vmor %vm6748, %vm6749
    %v6751 = vsel %vm6750, %v6742, %v6747
    %v6752 = vrsqrt.pop %v6637
    %v6753 = vmul.f32 %v6752, %v6637
    %v6754 = vmul.f32 %v6753, %v6752
    %v6755 = vmul.f32 0.5, %v6754
    %v6756 = vsub.f32 1.5, %v6755
    %v6757 = vmul.f32 %v6752, %v6756
    %vm6758 = vweird.f32 %v6637
    %vm6759 = vweird.f32 %v6752
    %vm6760 = vmor %vm6758, %vm6759
    %v6761 = vsel %vm6760, %v6752, %v6757
    %v6762 = vrsqrt.pop %v6638
    %v6763 = vmul.f32 %v6762, %v6638
    %v6764 = vmul.f32 %v6763, %v6762
    %v6765 = vmul.f32 0.5, %v6764
    %v6766 = vsub.f32 1.5, %v6765
    %v6767 = vmul.f32 %v6762, %v6766
    %vm6768 = vweird.f32 %v6638
    %vm6769 = vweird.f32 %v6762
    %vm6770 = vmor %vm6768, %vm6769
    %v6771 = vsel %vm6770, %v6762, %v6767
    %v6772 = vrsqrt.pop %v6639
    %v6773 = vmul.f32 %v6772, %v6639
    %v6774 = vmul.f32 %v6773, %v6772
    %v6775 = vmul.f32 0.5, %v6774
    %v6776 = vsub.f32 1.5, %v6775
    %v6777 = vmul.f32 %v6772, %v6776
    %vm6778 = vweird.f32 %v6639
    %vm6779 = vweird.f32 %v6772
    %vm6780 = vmor %vm6778, %vm6779
    %v6781 = vsel %vm6780, %v6772, %v6777
    %v6782 = vrsqrt.pop %v6640
    %v6783 = vmul.f32 %v6782, %v6640
    %v6784 = vmul.f32 %v6783, %v6782
    %v6785 = vmul.f32 0.5, %v6784
    %v6786 = vsub.f32 1.5, %v6785
    %v6787 = vmul.f32 %v6782, %v6786
    %vm6788 = vweird.f32 %v6640
    %vm6789 = vweird.f32 %v6782
    %vm6790 = vmor %vm6788, %vm6789
    %v6791 = vsel %vm6790, %v6782, %v6787
    %v6792 = vrsqrt.pop %v6641
    %v6793 = vmul.f32 %v6792, %v6641
    %v6794 = vmul.f32 %v6793, %v6792
    %v6795 = vmul.f32 0.5, %v6794
    %v6796 = vsub.f32 1.5, %v6795
    %v6797 = vmul.f32 %v6792, %v6796
    %vm6798 = vweird.f32 %v6641
    %vm6799 = vweird.f32 %v6792
    %vm6800 = vmor %vm6798, %vm6799
    %v6801 = vsel %vm6800, %v6792, %v6797
    %v6802 = vmul.f32 %v6530, %v6651
    %v6803 = vmul.f32 %v6531, %v6661
    %v6804 = vmul.f32 %v6532, %v6671
    %v6805 = vmul.f32 %v6533, %v6681
    %v6806 = vmul.f32 %v6534, %v6691
    %v6807 = vmul.f32 %v6535, %v6701
    %v6808 = vmul.f32 %v6536, %v6711
    %v6809 = vmul.f32 %v6537, %v6721
    %v6810 = vmul.f32 %v6538, %v6731
    %v6811 = vmul.f32 %v6539, %v6741
    %v6812 = vmul.f32 %v6540, %v6751
    %v6813 = vmul.f32 %v6541, %v6761
    %v6814 = vmul.f32 %v6542, %v6771
    %v6815 = vmul.f32 %v6543, %v6781
    %v6816 = vmul.f32 %v6544, %v6791
    %v6817 = vmul.f32 %v6545, %v6801
    %v6819 = vperm.slane %v6463, 0
    %v6821 = vmul.f32 %v6802, %v6819
    %v6822 = vmul.f32 %v6803, %v6819
    %v6823 = vmul.f32 %v6804, %v6819
    %v6824 = vmul.f32 %v6805, %v6819
    %v6825 = vmul.f32 %v6806, %v6819
    %v6826 = vmul.f32 %v6807, %v6819
    %v6827 = vmul.f32 %v6808, %v6819
    %v6828 = vmul.f32 %v6809, %v6819
    %v6829 = vmul.f32 %v6810, %v6819
    %v6830 = vmul.f32 %v6811, %v6819
    %v6831 = vmul.f32 %v6812, %v6819
    %v6832 = vmul.f32 %v6813, %v6819
    %v6833 = vmul.f32 %v6814, %v6819
    %v6834 = vmul.f32 %v6815, %v6819
    %v6835 = vmul.f32 %v6816, %v6819
    %v6836 = vmul.f32 %v6817, %v6819
    %v6838 = vperm.slane %v6465, 0
    %v6840 = vadd.f32 %v6821, %v6838
    %v6841 = vadd.f32 %v6822, %v6838
    %v6842 = vadd.f32 %v6823, %v6838
    %v6843 = vadd.f32 %v6824, %v6838
    %v6844 = vadd.f32 %v6825, %v6838
    %v6845 = vadd.f32 %v6826, %v6838
    %v6846 = vadd.f32 %v6827, %v6838
    %v6847 = vadd.f32 %v6828, %v6838
    %v6848 = vadd.f32 %v6829, %v6838
    %v6849 = vadd.f32 %v6830, %v6838
    %v6850 = vadd.f32 %v6831, %v6838
    %v6851 = vadd.f32 %v6832, %v6838
    %v6852 = vadd.f32 %v6833, %v6838
    %v6853 = vadd.f32 %v6834, %v6838
    %v6854 = vadd.f32 %v6835, %v6838
    %v6855 = vadd.f32 %v6836, %v6838
    %v6856 = vpack.c.bf16 %v6841, %v6840
    %v6857 = vpack.c.bf16 %v6843, %v6842
    %v6858 = vpack.c.bf16 %v6845, %v6844
    %v6859 = vpack.c.bf16 %v6847, %v6846
    %v6860 = vpack.c.bf16 %v6849, %v6848
    %v6861 = vpack.c.bf16 %v6851, %v6850
    %v6862 = vpack.c.bf16 %v6853, %v6852
    %v6863 = vpack.c.bf16 %v6855, %v6854
    %s6864 = scalar_lea.vmem %s17, 16
    %v6865 = vld [vmem:[%s6864] sm:$0xf]
    %v6866 = vld [vmem:[%s6864 + $0x4] sm:$0xf]
    %v6867 = vld [vmem:[%s6864 + $0x8] sm:$0xf]
    %v6868 = vld [vmem:[%s6864 + $0xc] sm:$0xf]
    %s6869 = scalar_lea.vmem %s18, 1
    %v6870 = vld [vmem:[%s6869] sm:$0x1]
    %v6872 = vperm.slane %v6870, 0
    %v6878 = vunpack.c.l.b16 %v6865
    %v6879 = vunpack.c.l.b16 %v6866
    %v6880 = vunpack.c.l.b16 %v6867
    %v6881 = vunpack.c.l.b16 %v6868
    %v6882 = vpack.c.b16 %v6879, %v6878
    %v6883 = vpack.c.b16 %v6881, %v6880
    %v6887 = vsel %vm291, %v6856, 0
    %v6890 = vsel %vm291, %v6857, 0
    %v6893 = vsel %vm291, %v6858, 0
    %v6896 = vsel %vm291, %v6859, 0
    %v6899 = vsel %vm291, %v6860, 0
    %v6902 = vsel %vm291, %v6861, 0
    %v6905 = vsel %vm291, %v6862, 0
    %v6908 = vsel %vm291, %v6863, 0
    %6910 = vmatpush.bf16.msra.mxu0 0
    %6911 = vmatpush.bf16.msra.mxu0 0
    %6912 = vmatpush.bf16.msra.mxu0 0
    %6913 = vmatpush.bf16.msra.mxu0 0
    %6914 = vmatpush.bf16.msra.mxu0 0
    %6915 = vmatpush.bf16.msra.mxu0 0
    %6916 = vmatpush.bf16.msra.mxu0 %v6883
    %6917 = vmatpush.bf16.msra.mxu0 %v6882
    %6918 = vmatmul.bf16.gmra.mxu0 %v6887
    %v6919 = vpop.f32.mrf.mxu0
    %v6920 = vadd.f32 %v6872, %v6919
    %v6921 = vpop.f32.mrf.mxu0
    %v6922 = vadd.f32 %v6872, %v6921
    %6923 = vmatmul.bf16.gmra.mxu0 %v6890
    %v6924 = vpop.f32.mrf.mxu0
    %v6925 = vadd.f32 %v6872, %v6924
    %v6926 = vpop.f32.mrf.mxu0
    %v6927 = vadd.f32 %v6872, %v6926
    %6928 = vmatmul.bf16.gmra.mxu0 %v6893
    %v6929 = vpop.f32.mrf.mxu0
    %v6930 = vadd.f32 %v6872, %v6929
    %v6931 = vpop.f32.mrf.mxu0
    %v6932 = vadd.f32 %v6872, %v6931
    %6933 = vmatmul.bf16.gmra.mxu0 %v6896
    %v6934 = vpop.f32.mrf.mxu0
    %v6935 = vadd.f32 %v6872, %v6934
    %v6936 = vpop.f32.mrf.mxu0
    %v6937 = vadd.f32 %v6872, %v6936
    %6938 = vmatmul.bf16.gmra.mxu0 %v6899
    %v6939 = vpop.f32.mrf.mxu0
    %v6940 = vadd.f32 %v6872, %v6939
    %v6941 = vpop.f32.mrf.mxu0
    %v6942 = vadd.f32 %v6872, %v6941
    %6943 = vmatmul.bf16.gmra.mxu0 %v6902
    %v6944 = vpop.f32.mrf.mxu0
    %v6945 = vadd.f32 %v6872, %v6944
    %v6946 = vpop.f32.mrf.mxu0
    %v6947 = vadd.f32 %v6872, %v6946
    %6948 = vmatmul.bf16.gmra.mxu0 %v6905
    %v6949 = vpop.f32.mrf.mxu0
    %v6950 = vadd.f32 %v6872, %v6949
    %v6951 = vpop.f32.mrf.mxu0
    %v6952 = vadd.f32 %v6872, %v6951
    %6953 = vmatmul.bf16.gmra.mxu0 %v6908
    %v6954 = vpop.f32.mrf.mxu0
    %v6955 = vadd.f32 %v6872, %v6954
    %v6956 = vpop.f32.mrf.mxu0
    %v6957 = vadd.f32 %v6872, %v6956
    %6958 = vdwg.mxu0
    %v6959 = vmax.f32 %v6920, 0.0
    %v6960 = vmax.f32 %v6922, 0.0
    %v6961 = vmax.f32 %v6925, 0.0
    %v6962 = vmax.f32 %v6927, 0.0
    %v6963 = vmax.f32 %v6930, 0.0
    %v6964 = vmax.f32 %v6932, 0.0
    %v6965 = vmax.f32 %v6935, 0.0
    %v6966 = vmax.f32 %v6937, 0.0
    %v6967 = vmax.f32 %v6940, 0.0
    %v6968 = vmax.f32 %v6942, 0.0
    %v6969 = vmax.f32 %v6945, 0.0
    %v6970 = vmax.f32 %v6947, 0.0
    %v6971 = vmax.f32 %v6950, 0.0
    %v6972 = vmax.f32 %v6952, 0.0
    %v6973 = vmax.f32 %v6955, 0.0
    %v6974 = vmax.f32 %v6957, 0.0
    %v6975 = vpack.c.bf16 %v6960, %v6959
    %v6976 = vpack.c.bf16 %v6962, %v6961
    %v6977 = vpack.c.bf16 %v6964, %v6963
    %v6978 = vpack.c.bf16 %v6966, %v6965
    %v6979 = vpack.c.bf16 %v6968, %v6967
    %v6980 = vpack.c.bf16 %v6970, %v6969
    %v6981 = vpack.c.bf16 %v6972, %v6971
    %v6982 = vpack.c.bf16 %v6974, %v6973
    %s6983 = scalar_lea.vmem %s19, 64
    %v6984 = vld [vmem:[%s6983] sm:$0xf]
    %v6985 = vld [vmem:[%s6983 + $0x4] sm:$0xf]
    %v6986 = vld [vmem:[%s6983 + $0x8] sm:$0xf]
    %v6987 = vld [vmem:[%s6983 + $0xc] sm:$0xf]
    %v6988 = vld [vmem:[%s6983 + $0x10] sm:$0xf]
    %v6989 = vld [vmem:[%s6983 + $0x14] sm:$0xf]
    %v6990 = vld [vmem:[%s6983 + $0x18] sm:$0xf]
    %v6991 = vld [vmem:[%s6983 + $0x1c] sm:$0xf]
    %v6992 = vld [vmem:[%s6983 + $0x20] sm:$0xf]
    %v6993 = vld [vmem:[%s6983 + $0x24] sm:$0xf]
    %v6994 = vld [vmem:[%s6983 + $0x28] sm:$0xf]
    %v6995 = vld [vmem:[%s6983 + $0x2c] sm:$0xf]
    %v6996 = vld [vmem:[%s6983 + $0x30] sm:$0xf]
    %v6997 = vld [vmem:[%s6983 + $0x34] sm:$0xf]
    %v6998 = vld [vmem:[%s6983 + $0x38] sm:$0xf]
    %v6999 = vld [vmem:[%s6983 + $0x3c] sm:$0xf]
    %s7000 = scalar_lea.vmem %s20, 1
    %v7001 = vld [vmem:[%s7000] sm:$0x1]
    %v7003 = vperm.slane %v7001, 0
    %v7021 = vunpack.c.l.b16 %v6984
    %v7022 = vunpack.c.l.b16 %v6985
    %v7023 = vunpack.c.l.b16 %v6986
    %v7024 = vunpack.c.l.b16 %v6987
    %v7025 = vunpack.c.l.b16 %v6988
    %v7026 = vunpack.c.l.b16 %v6989
    %v7027 = vunpack.c.l.b16 %v6990
    %v7028 = vunpack.c.l.b16 %v6991
    %v7029 = vunpack.c.l.b16 %v6992
    %v7030 = vunpack.c.l.b16 %v6993
    %v7031 = vunpack.c.l.b16 %v6994
    %v7032 = vunpack.c.l.b16 %v6995
    %v7033 = vunpack.c.l.b16 %v6996
    %v7034 = vunpack.c.l.b16 %v6997
    %v7035 = vunpack.c.l.b16 %v6998
    %v7036 = vunpack.c.l.b16 %v6999
    %v7037 = vpack.c.b16 %v7022, %v7021
    %v7038 = vpack.c.b16 %v7024, %v7023
    %v7039 = vpack.c.b16 %v7026, %v7025
    %v7040 = vpack.c.b16 %v7028, %v7027
    %v7041 = vpack.c.b16 %v7030, %v7029
    %v7042 = vpack.c.b16 %v7032, %v7031
    %v7043 = vpack.c.b16 %v7034, %v7033
    %v7044 = vpack.c.b16 %v7036, %v7035
    %7053 = vmatpush.bf16.msra.mxu0 %v7044
    %7054 = vmatpush.bf16.msra.mxu0 %v7043
    %7055 = vmatpush.bf16.msra.mxu0 %v7042
    %7056 = vmatpush.bf16.msra.mxu0 %v7041
    %7057 = vmatpush.bf16.msra.mxu0 %v7040
    %7058 = vmatpush.bf16.msra.mxu0 %v7039
    %7059 = vmatpush.bf16.msra.mxu0 %v7038
    %7060 = vmatpush.bf16.msra.mxu0 %v7037
    %7061 = vmatmul.bf16.gmra.mxu0 %v6975
    %v7062 = vpop.f32.mrf.mxu0
    %v7063 = vadd.f32 %v7003, %v7062
    %v7064 = vpop.f32.mrf.mxu0
    %v7065 = vadd.f32 %v7003, %v7064
    %7066 = vmatmul.bf16.gmra.mxu0 %v6976
    %v7067 = vpop.f32.mrf.mxu0
    %v7068 = vadd.f32 %v7003, %v7067
    %v7069 = vpop.f32.mrf.mxu0
    %v7070 = vadd.f32 %v7003, %v7069
    %7071 = vmatmul.bf16.gmra.mxu0 %v6977
    %v7072 = vpop.f32.mrf.mxu0
    %v7073 = vadd.f32 %v7003, %v7072
    %v7074 = vpop.f32.mrf.mxu0
    %v7075 = vadd.f32 %v7003, %v7074
    %7076 = vmatmul.bf16.gmra.mxu0 %v6978
    %v7077 = vpop.f32.mrf.mxu0
    %v7078 = vadd.f32 %v7003, %v7077
    %v7079 = vpop.f32.mrf.mxu0
    %v7080 = vadd.f32 %v7003, %v7079
    %7081 = vmatmul.bf16.gmra.mxu0 %v6979
    %v7082 = vpop.f32.mrf.mxu0
    %v7083 = vadd.f32 %v7003, %v7082
    %v7084 = vpop.f32.mrf.mxu0
    %v7085 = vadd.f32 %v7003, %v7084
    %7086 = vmatmul.bf16.gmra.mxu0 %v6980
    %v7087 = vpop.f32.mrf.mxu0
    %v7088 = vadd.f32 %v7003, %v7087
    %v7089 = vpop.f32.mrf.mxu0
    %v7090 = vadd.f32 %v7003, %v7089
    %7091 = vmatmul.bf16.gmra.mxu0 %v6981
    %v7092 = vpop.f32.mrf.mxu0
    %v7093 = vadd.f32 %v7003, %v7092
    %v7094 = vpop.f32.mrf.mxu0
    %v7095 = vadd.f32 %v7003, %v7094
    %7096 = vmatmul.bf16.gmra.mxu0 %v6982
    %v7097 = vpop.f32.mrf.mxu0
    %v7098 = vadd.f32 %v7003, %v7097
    %v7099 = vpop.f32.mrf.mxu0
    %v7100 = vadd.f32 %v7003, %v7099
    %7101 = vdwg.mxu0
    %v7102 = vadd.f32 %v6840, %v7063
    %v7103 = vadd.f32 %v6841, %v7065
    %v7104 = vadd.f32 %v6842, %v7068
    %v7105 = vadd.f32 %v6843, %v7070
    %v7106 = vadd.f32 %v6844, %v7073
    %v7107 = vadd.f32 %v6845, %v7075
    %v7108 = vadd.f32 %v6846, %v7078
    %v7109 = vadd.f32 %v6847, %v7080
    %v7110 = vadd.f32 %v6848, %v7083
    %v7111 = vadd.f32 %v6849, %v7085
    %v7112 = vadd.f32 %v6850, %v7088
    %v7113 = vadd.f32 %v6851, %v7090
    %v7114 = vadd.f32 %v6852, %v7093
    %v7115 = vadd.f32 %v6853, %v7095
    %v7116 = vadd.f32 %v6854, %v7098
    %v7117 = vadd.f32 %v6855, %v7100
    %s7118 = scalar_lea.vmem %s15, 1
    %v7119 = vld [vmem:[%s7118] sm:$0x1]
    %s7120 = scalar_lea.vmem %s16, 1
    %v7121 = vld [vmem:[%s7120] sm:$0x1]
    %v7122 = vsel %vm291, %v7102, 0.0
    %7123 = vadd.xlane.f32.xlu0 %v7122
    %v7124 = vpop.xlane.xlu0 %7123
    %v7125 = vsel %vm291, %v7103, 0.0
    %7126 = vadd.xlane.f32.xlu0 %v7125
    %v7127 = vpop.xlane.xlu0 %7126
    %v7128 = vsel %vm291, %v7104, 0.0
    %7129 = vadd.xlane.f32.xlu0 %v7128
    %v7130 = vpop.xlane.xlu0 %7129
    %v7131 = vsel %vm291, %v7105, 0.0
    %7132 = vadd.xlane.f32.xlu0 %v7131
    %v7133 = vpop.xlane.xlu0 %7132
    %v7134 = vsel %vm291, %v7106, 0.0
    %7135 = vadd.xlane.f32.xlu0 %v7134
    %v7136 = vpop.xlane.xlu0 %7135
    %v7137 = vsel %vm291, %v7107, 0.0
    %7138 = vadd.xlane.f32.xlu0 %v7137
    %v7139 = vpop.xlane.xlu0 %7138
    %v7140 = vsel %vm291, %v7108, 0.0
    %7141 = vadd.xlane.f32.xlu0 %v7140
    %v7142 = vpop.xlane.xlu0 %7141
    %v7143 = vsel %vm291, %v7109, 0.0
    %7144 = vadd.xlane.f32.xlu0 %v7143
    %v7145 = vpop.xlane.xlu0 %7144
    %v7146 = vsel %vm291, %v7110, 0.0
    %7147 = vadd.xlane.f32.xlu0 %v7146
    %v7148 = vpop.xlane.xlu0 %7147
    %v7149 = vsel %vm291, %v7111, 0.0
    %7150 = vadd.xlane.f32.xlu0 %v7149
    %v7151 = vpop.xlane.xlu0 %7150
    %v7152 = vsel %vm291, %v7112, 0.0
    %7153 = vadd.xlane.f32.xlu0 %v7152
    %v7154 = vpop.xlane.xlu0 %7153
    %v7155 = vsel %vm291, %v7113, 0.0
    %7156 = vadd.xlane.f32.xlu0 %v7155
    %v7157 = vpop.xlane.xlu0 %7156
    %v7158 = vsel %vm291, %v7114, 0.0
    %7159 = vadd.xlane.f32.xlu0 %v7158
    %v7160 = vpop.xlane.xlu0 %7159
    %v7161 = vsel %vm291, %v7115, 0.0
    %7162 = vadd.xlane.f32.xlu0 %v7161
    %v7163 = vpop.xlane.xlu0 %7162
    %v7164 = vsel %vm291, %v7116, 0.0
    %7165 = vadd.xlane.f32.xlu0 %v7164
    %v7166 = vpop.xlane.xlu0 %7165
    %v7167 = vsel %vm291, %v7117, 0.0
    %7168 = vadd.xlane.f32.xlu0 %v7167
    %v7169 = vpop.xlane.xlu0 %7168
    %v7170 = vmul.f32 %v7124, %v2897
    %v7171 = vmul.f32 %v7127, %v2897
    %v7172 = vmul.f32 %v7130, %v2897
    %v7173 = vmul.f32 %v7133, %v2897
    %v7174 = vmul.f32 %v7136, %v2897
    %v7175 = vmul.f32 %v7139, %v2897
    %v7176 = vmul.f32 %v7142, %v2897
    %v7177 = vmul.f32 %v7145, %v2897
    %v7178 = vmul.f32 %v7148, %v2897
    %v7179 = vmul.f32 %v7151, %v2897
    %v7180 = vmul.f32 %v7154, %v2897
    %v7181 = vmul.f32 %v7157, %v2897
    %v7182 = vmul.f32 %v7160, %v2897
    %v7183 = vmul.f32 %v7163, %v2897
    %v7184 = vmul.f32 %v7166, %v2897
    %v7185 = vmul.f32 %v7169, %v2897
    %v7186 = vsub.f32 %v7102, %v7170
    %v7187 = vsub.f32 %v7103, %v7171
    %v7188 = vsub.f32 %v7104, %v7172
    %v7189 = vsub.f32 %v7105, %v7173
    %v7190 = vsub.f32 %v7106, %v7174
    %v7191 = vsub.f32 %v7107, %v7175
    %v7192 = vsub.f32 %v7108, %v7176
    %v7193 = vsub.f32 %v7109, %v7177
    %v7194 = vsub.f32 %v7110, %v7178
    %v7195 = vsub.f32 %v7111, %v7179
    %v7196 = vsub.f32 %v7112, %v7180
    %v7197 = vsub.f32 %v7113, %v7181
    %v7198 = vsub.f32 %v7114, %v7182
    %v7199 = vsub.f32 %v7115, %v7183
    %v7200 = vsub.f32 %v7116, %v7184
    %v7201 = vsub.f32 %v7117, %v7185
    %v7202 = vmul.f32 %v7186, %v7186
    %v7203 = vmul.f32 %v7187, %v7187
    %v7204 = vmul.f32 %v7188, %v7188
    %v7205 = vmul.f32 %v7189, %v7189
    %v7206 = vmul.f32 %v7190, %v7190
    %v7207 = vmul.f32 %v7191, %v7191
    %v7208 = vmul.f32 %v7192, %v7192
    %v7209 = vmul.f32 %v7193, %v7193
    %v7210 = vmul.f32 %v7194, %v7194
    %v7211 = vmul.f32 %v7195, %v7195
    %v7212 = vmul.f32 %v7196, %v7196
    %v7213 = vmul.f32 %v7197, %v7197
    %v7214 = vmul.f32 %v7198, %v7198
    %v7215 = vmul.f32 %v7199, %v7199
    %v7216 = vmul.f32 %v7200, %v7200
    %v7217 = vmul.f32 %v7201, %v7201
    %v7218 = vsel %vm291, %v7202, 0.0
    %7219 = vadd.xlane.f32.xlu0 %v7218
    %v7220 = vpop.xlane.xlu0 %7219
    %v7221 = vsel %vm291, %v7203, 0.0
    %7222 = vadd.xlane.f32.xlu0 %v7221
    %v7223 = vpop.xlane.xlu0 %7222
    %v7224 = vsel %vm291, %v7204, 0.0
    %7225 = vadd.xlane.f32.xlu0 %v7224
    %v7226 = vpop.xlane.xlu0 %7225
    %v7227 = vsel %vm291, %v7205, 0.0
    %7228 = vadd.xlane.f32.xlu0 %v7227
    %v7229 = vpop.xlane.xlu0 %7228
    %v7230 = vsel %vm291, %v7206, 0.0
    %7231 = vadd.xlane.f32.xlu0 %v7230
    %v7232 = vpop.xlane.xlu0 %7231
    %v7233 = vsel %vm291, %v7207, 0.0
    %7234 = vadd.xlane.f32.xlu0 %v7233
    %v7235 = vpop.xlane.xlu0 %7234
    %v7236 = vsel %vm291, %v7208, 0.0
    %7237 = vadd.xlane.f32.xlu0 %v7236
    %v7238 = vpop.xlane.xlu0 %7237
    %v7239 = vsel %vm291, %v7209, 0.0
    %7240 = vadd.xlane.f32.xlu0 %v7239
    %v7241 = vpop.xlane.xlu0 %7240
    %v7242 = vsel %vm291, %v7210, 0.0
    %7243 = vadd.xlane.f32.xlu0 %v7242
    %v7244 = vpop.xlane.xlu0 %7243
    %v7245 = vsel %vm291, %v7211, 0.0
    %7246 = vadd.xlane.f32.xlu0 %v7245
    %v7247 = vpop.xlane.xlu0 %7246
    %v7248 = vsel %vm291, %v7212, 0.0
    %7249 = vadd.xlane.f32.xlu0 %v7248
    %v7250 = vpop.xlane.xlu0 %7249
    %v7251 = vsel %vm291, %v7213, 0.0
    %7252 = vadd.xlane.f32.xlu0 %v7251
    %v7253 = vpop.xlane.xlu0 %7252
    %v7254 = vsel %vm291, %v7214, 0.0
    %7255 = vadd.xlane.f32.xlu0 %v7254
    %v7256 = vpop.xlane.xlu0 %7255
    %v7257 = vsel %vm291, %v7215, 0.0
    %7258 = vadd.xlane.f32.xlu0 %v7257
    %v7259 = vpop.xlane.xlu0 %7258
    %v7260 = vsel %vm291, %v7216, 0.0
    %7261 = vadd.xlane.f32.xlu0 %v7260
    %v7262 = vpop.xlane.xlu0 %7261
    %v7263 = vsel %vm291, %v7217, 0.0
    %7264 = vadd.xlane.f32.xlu0 %v7263
    %v7265 = vpop.xlane.xlu0 %7264
    %v7266 = vmul.f32 %v7220, %v2897
    %v7267 = vmul.f32 %v7223, %v2897
    %v7268 = vmul.f32 %v7226, %v2897
    %v7269 = vmul.f32 %v7229, %v2897
    %v7270 = vmul.f32 %v7232, %v2897
    %v7271 = vmul.f32 %v7235, %v2897
    %v7272 = vmul.f32 %v7238, %v2897
    %v7273 = vmul.f32 %v7241, %v2897
    %v7274 = vmul.f32 %v7244, %v2897
    %v7275 = vmul.f32 %v7247, %v2897
    %v7276 = vmul.f32 %v7250, %v2897
    %v7277 = vmul.f32 %v7253, %v2897
    %v7278 = vmul.f32 %v7256, %v2897
    %v7279 = vmul.f32 %v7259, %v2897
    %v7280 = vmul.f32 %v7262, %v2897
    %v7281 = vmul.f32 %v7265, %v2897
    %v7282 = vadd.f32 %v7266, 1e-05
    %v7283 = vadd.f32 %v7267, 1e-05
    %v7284 = vadd.f32 %v7268, 1e-05
    %v7285 = vadd.f32 %v7269, 1e-05
    %v7286 = vadd.f32 %v7270, 1e-05
    %v7287 = vadd.f32 %v7271, 1e-05
    %v7288 = vadd.f32 %v7272, 1e-05
    %v7289 = vadd.f32 %v7273, 1e-05
    %v7290 = vadd.f32 %v7274, 1e-05
    %v7291 = vadd.f32 %v7275, 1e-05
    %v7292 = vadd.f32 %v7276, 1e-05
    %v7293 = vadd.f32 %v7277, 1e-05
    %v7294 = vadd.f32 %v7278, 1e-05
    %v7295 = vadd.f32 %v7279, 1e-05
    %v7296 = vadd.f32 %v7280, 1e-05
    %v7297 = vadd.f32 %v7281, 1e-05
    %v7298 = vrsqrt.pop %v7282
    %v7299 = vmul.f32 %v7298, %v7282
    %v7300 = vmul.f32 %v7299, %v7298
    %v7301 = vmul.f32 0.5, %v7300
    %v7302 = vsub.f32 1.5, %v7301
    %v7303 = vmul.f32 %v7298, %v7302
    %vm7304 = vweird.f32 %v7282
    %vm7305 = vweird.f32 %v7298
    %vm7306 = vmor %vm7304, %vm7305
    %v7307 = vsel %vm7306, %v7298, %v7303
    %v7308 = vrsqrt.pop %v7283
    %v7309 = vmul.f32 %v7308, %v7283
    %v7310 = vmul.f32 %v7309, %v7308
    %v7311 = vmul.f32 0.5, %v7310
    %v7312 = vsub.f32 1.5, %v7311
    %v7313 = vmul.f32 %v7308, %v7312
    %vm7314 = vweird.f32 %v7283
    %vm7315 = vweird.f32 %v7308
    %vm7316 = vmor %vm7314, %vm7315
    %v7317 = vsel %vm7316, %v7308, %v7313
    %v7318 = vrsqrt.pop %v7284
    %v7319 = vmul.f32 %v7318, %v7284
    %v7320 = vmul.f32 %v7319, %v7318
    %v7321 = vmul.f32 0.5, %v7320
    %v7322 = vsub.f32 1.5, %v7321
    %v7323 = vmul.f32 %v7318, %v7322
    %vm7324 = vweird.f32 %v7284
    %vm7325 = vweird.f32 %v7318
    %vm7326 = vmor %vm7324, %vm7325
    %v7327 = vsel %vm7326, %v7318, %v7323
    %v7328 = vrsqrt.pop %v7285
    %v7329 = vmul.f32 %v7328, %v7285
    %v7330 = vmul.f32 %v7329, %v7328
    %v7331 = vmul.f32 0.5, %v7330
    %v7332 = vsub.f32 1.5, %v7331
    %v7333 = vmul.f32 %v7328, %v7332
    %vm7334 = vweird.f32 %v7285
    %vm7335 = vweird.f32 %v7328
    %vm7336 = vmor %vm7334, %vm7335
    %v7337 = vsel %vm7336, %v7328, %v7333
    %v7338 = vrsqrt.pop %v7286
    %v7339 = vmul.f32 %v7338, %v7286
    %v7340 = vmul.f32 %v7339, %v7338
    %v7341 = vmul.f32 0.5, %v7340
    %v7342 = vsub.f32 1.5, %v7341
    %v7343 = vmul.f32 %v7338, %v7342
    %vm7344 = vweird.f32 %v7286
    %vm7345 = vweird.f32 %v7338
    %vm7346 = vmor %vm7344, %vm7345
    %v7347 = vsel %vm7346, %v7338, %v7343
    %v7348 = vrsqrt.pop %v7287
    %v7349 = vmul.f32 %v7348, %v7287
    %v7350 = vmul.f32 %v7349, %v7348
    %v7351 = vmul.f32 0.5, %v7350
    %v7352 = vsub.f32 1.5, %v7351
    %v7353 = vmul.f32 %v7348, %v7352
    %vm7354 = vweird.f32 %v7287
    %vm7355 = vweird.f32 %v7348
    %vm7356 = vmor %vm7354, %vm7355
    %v7357 = vsel %vm7356, %v7348, %v7353
    %v7358 = vrsqrt.pop %v7288
    %v7359 = vmul.f32 %v7358, %v7288
    %v7360 = vmul.f32 %v7359, %v7358
    %v7361 = vmul.f32 0.5, %v7360
    %v7362 = vsub.f32 1.5, %v7361
    %v7363 = vmul.f32 %v7358, %v7362
    %vm7364 = vweird.f32 %v7288
    %vm7365 = vweird.f32 %v7358
    %vm7366 = vmor %vm7364, %vm7365
    %v7367 = vsel %vm7366, %v7358, %v7363
    %v7368 = vrsqrt.pop %v7289
    %v7369 = vmul.f32 %v7368, %v7289
    %v7370 = vmul.f32 %v7369, %v7368
    %v7371 = vmul.f32 0.5, %v7370
    %v7372 = vsub.f32 1.5, %v7371
    %v7373 = vmul.f32 %v7368, %v7372
    %vm7374 = vweird.f32 %v7289
    %vm7375 = vweird.f32 %v7368
    %vm7376 = vmor %vm7374, %vm7375
    %v7377 = vsel %vm7376, %v7368, %v7373
    %v7378 = vrsqrt.pop %v7290
    %v7379 = vmul.f32 %v7378, %v7290
    %v7380 = vmul.f32 %v7379, %v7378
    %v7381 = vmul.f32 0.5, %v7380
    %v7382 = vsub.f32 1.5, %v7381
    %v7383 = vmul.f32 %v7378, %v7382
    %vm7384 = vweird.f32 %v7290
    %vm7385 = vweird.f32 %v7378
    %vm7386 = vmor %vm7384, %vm7385
    %v7387 = vsel %vm7386, %v7378, %v7383
    %v7388 = vrsqrt.pop %v7291
    %v7389 = vmul.f32 %v7388, %v7291
    %v7390 = vmul.f32 %v7389, %v7388
    %v7391 = vmul.f32 0.5, %v7390
    %v7392 = vsub.f32 1.5, %v7391
    %v7393 = vmul.f32 %v7388, %v7392
    %vm7394 = vweird.f32 %v7291
    %vm7395 = vweird.f32 %v7388
    %vm7396 = vmor %vm7394, %vm7395
    %v7397 = vsel %vm7396, %v7388, %v7393
    %v7398 = vrsqrt.pop %v7292
    %v7399 = vmul.f32 %v7398, %v7292
    %v7400 = vmul.f32 %v7399, %v7398
    %v7401 = vmul.f32 0.5, %v7400
    %v7402 = vsub.f32 1.5, %v7401
    %v7403 = vmul.f32 %v7398, %v7402
    %vm7404 = vweird.f32 %v7292
    %vm7405 = vweird.f32 %v7398
    %vm7406 = vmor %vm7404, %vm7405
    %v7407 = vsel %vm7406, %v7398, %v7403
    %v7408 = vrsqrt.pop %v7293
    %v7409 = vmul.f32 %v7408, %v7293
    %v7410 = vmul.f32 %v7409, %v7408
    %v7411 = vmul.f32 0.5, %v7410
    %v7412 = vsub.f32 1.5, %v7411
    %v7413 = vmul.f32 %v7408, %v7412
    %vm7414 = vweird.f32 %v7293
    %vm7415 = vweird.f32 %v7408
    %vm7416 = vmor %vm7414, %vm7415
    %v7417 = vsel %vm7416, %v7408, %v7413
    %v7418 = vrsqrt.pop %v7294
    %v7419 = vmul.f32 %v7418, %v7294
    %v7420 = vmul.f32 %v7419, %v7418
    %v7421 = vmul.f32 0.5, %v7420
    %v7422 = vsub.f32 1.5, %v7421
    %v7423 = vmul.f32 %v7418, %v7422
    %vm7424 = vweird.f32 %v7294
    %vm7425 = vweird.f32 %v7418
    %vm7426 = vmor %vm7424, %vm7425
    %v7427 = vsel %vm7426, %v7418, %v7423
    %v7428 = vrsqrt.pop %v7295
    %v7429 = vmul.f32 %v7428, %v7295
    %v7430 = vmul.f32 %v7429, %v7428
    %v7431 = vmul.f32 0.5, %v7430
    %v7432 = vsub.f32 1.5, %v7431
    %v7433 = vmul.f32 %v7428, %v7432
    %vm7434 = vweird.f32 %v7295
    %vm7435 = vweird.f32 %v7428
    %vm7436 = vmor %vm7434, %vm7435
    %v7437 = vsel %vm7436, %v7428, %v7433
    %v7438 = vrsqrt.pop %v7296
    %v7439 = vmul.f32 %v7438, %v7296
    %v7440 = vmul.f32 %v7439, %v7438
    %v7441 = vmul.f32 0.5, %v7440
    %v7442 = vsub.f32 1.5, %v7441
    %v7443 = vmul.f32 %v7438, %v7442
    %vm7444 = vweird.f32 %v7296
    %vm7445 = vweird.f32 %v7438
    %vm7446 = vmor %vm7444, %vm7445
    %v7447 = vsel %vm7446, %v7438, %v7443
    %v7448 = vrsqrt.pop %v7297
    %v7449 = vmul.f32 %v7448, %v7297
    %v7450 = vmul.f32 %v7449, %v7448
    %v7451 = vmul.f32 0.5, %v7450
    %v7452 = vsub.f32 1.5, %v7451
    %v7453 = vmul.f32 %v7448, %v7452
    %vm7454 = vweird.f32 %v7297
    %vm7455 = vweird.f32 %v7448
    %vm7456 = vmor %vm7454, %vm7455
    %v7457 = vsel %vm7456, %v7448, %v7453
    %v7458 = vmul.f32 %v7186, %v7307
    %v7459 = vmul.f32 %v7187, %v7317
    %v7460 = vmul.f32 %v7188, %v7327
    %v7461 = vmul.f32 %v7189, %v7337
    %v7462 = vmul.f32 %v7190, %v7347
    %v7463 = vmul.f32 %v7191, %v7357
    %v7464 = vmul.f32 %v7192, %v7367
    %v7465 = vmul.f32 %v7193, %v7377
    %v7466 = vmul.f32 %v7194, %v7387
    %v7467 = vmul.f32 %v7195, %v7397
    %v7468 = vmul.f32 %v7196, %v7407
    %v7469 = vmul.f32 %v7197, %v7417
    %v7470 = vmul.f32 %v7198, %v7427
    %v7471 = vmul.f32 %v7199, %v7437
    %v7472 = vmul.f32 %v7200, %v7447
    %v7473 = vmul.f32 %v7201, %v7457
    %v7475 = vperm.slane %v7119, 0
    %v7477 = vmul.f32 %v7458, %v7475
    %v7478 = vmul.f32 %v7459, %v7475
    %v7479 = vmul.f32 %v7460, %v7475
    %v7480 = vmul.f32 %v7461, %v7475
    %v7481 = vmul.f32 %v7462, %v7475
    %v7482 = vmul.f32 %v7463, %v7475
    %v7483 = vmul.f32 %v7464, %v7475
    %v7484 = vmul.f32 %v7465, %v7475
    %v7485 = vmul.f32 %v7466, %v7475
    %v7486 = vmul.f32 %v7467, %v7475
    %v7487 = vmul.f32 %v7468, %v7475
    %v7488 = vmul.f32 %v7469, %v7475
    %v7489 = vmul.f32 %v7470, %v7475
    %v7490 = vmul.f32 %v7471, %v7475
    %v7491 = vmul.f32 %v7472, %v7475
    %v7492 = vmul.f32 %v7473, %v7475
    %v7494 = vperm.slane %v7121, 0
    %v7496 = vadd.f32 %v7477, %v7494
    %v7497 = vadd.f32 %v7478, %v7494
    %v7498 = vadd.f32 %v7479, %v7494
    %v7499 = vadd.f32 %v7480, %v7494
    %v7500 = vadd.f32 %v7481, %v7494
    %v7501 = vadd.f32 %v7482, %v7494
    %v7502 = vadd.f32 %v7483, %v7494
    %v7503 = vadd.f32 %v7484, %v7494
    %v7504 = vadd.f32 %v7485, %v7494
    %v7505 = vadd.f32 %v7486, %v7494
    %v7506 = vadd.f32 %v7487, %v7494
    %v7507 = vadd.f32 %v7488, %v7494
    %v7508 = vadd.f32 %v7489, %v7494
    %v7509 = vadd.f32 %v7490, %v7494
    %v7510 = vadd.f32 %v7491, %v7494
    %v7511 = vadd.f32 %v7492, %v7494
    %v7512 = vld [vmem:[%s23] sm:$0x1]
    %v7513 = vpack.c.bf16 %v7497, %v7496
    %v7514 = vpack.c.bf16 %v7499, %v7498
    %v7515 = vpack.c.bf16 %v7501, %v7500
    %v7516 = vpack.c.bf16 %v7503, %v7502
    %v7517 = vpack.c.bf16 %v7505, %v7504
    %v7518 = vpack.c.bf16 %v7507, %v7506
    %v7519 = vpack.c.bf16 %v7509, %v7508
    %v7520 = vpack.c.bf16 %v7511, %v7510
    %7521 = vmatpush.bf16.msra.mxu0 %v7520
    %7522 = vmatpush.bf16.msra.mxu0 %v7519
    %7523 = vmatpush.bf16.msra.mxu0 %v7518
    %7524 = vmatpush.bf16.msra.mxu0 %v7517
    %7525 = vmatpush.bf16.msra.mxu0 %v7516
    %7526 = vmatpush.bf16.msra.mxu0 %v7515
    %7527 = vmatpush.bf16.msra.mxu0 %v7514
    %7528 = vmatpush.bf16.msra.mxu0 %v7513
    %7529 = vmatmul.bf16.gmra.mxu0 %v7512
    %v7530 = vpop.f32.mrf.mxu0
    %v7531 = vadd.f32 0.0, %v7530
    %v7532 = vpop.f32.mrf.mxu0
    %7533 = vdwg.mxu0
    %v7534 = vpack.c.bf16 %v7531, %v7531
    %v7535 = vld [vmem:[%s21] sm:$0xff]
    %v7536 = vld [vmem:[%s21 + $0x8] sm:$0xff]
    %v7537 = vld [vmem:[%s21 + $0x10] sm:$0xff]
    %v7538 = vld [vmem:[%s21 + $0x18] sm:$0xff]
    %v7539 = vld [vmem:[%s22] sm:$0x3]
    %v7541 = vperm.slane %v7539, 0
    %v7542 = vperm.slane %v7539, 1
    %v7549 = vunpack.c.l.b16 %v7535
    %v7550 = vunpack.c.h.b16 %v7535
    %v7551 = vunpack.c.l.b16 %v7536
    %v7552 = vunpack.c.h.b16 %v7536
    %v7553 = vunpack.c.l.b16 %v7537
    %v7554 = vunpack.c.h.b16 %v7537
    %v7555 = vunpack.c.l.b16 %v7538
    %v7556 = vunpack.c.h.b16 %v7538
    %v7557 = vpack.c.b16 %v7551, %v7549
    %v7558 = vpack.c.b16 %v7552, %v7550
    %v7559 = vpack.c.b16 %v7555, %v7553
    %v7560 = vpack.c.b16 %v7556, %v7554
    %v7566 = vsel %vm291, %v7534, 0
    %7568 = vmatpush.bf16.msra.mxu0 0
    %7569 = vmatpush.bf16.msra.mxu0 0
    %7570 = vmatpush.bf16.msra.mxu0 0
    %7571 = vmatpush.bf16.msra.mxu0 0
    %7572 = vmatpush.bf16.msra.mxu0 0
    %7573 = vmatpush.bf16.msra.mxu0 0
    %7574 = vmatpush.bf16.msra.mxu0 %v7559
    %7575 = vmatpush.bf16.msra.mxu0 %v7557
    %7576 = vmatmul.bf16.gmra.mxu0 %v7566
    %v7577 = vpop.f32.mrf.mxu0
    %v7578 = vadd.f32 %v7541, %v7577
    %v7579 = vpop.f32.mrf.mxu0
    %7580 = vdwg.mxu0
    %7581 = vmatpush.bf16.msra.mxu0 0
    %7582 = vmatpush.bf16.msra.mxu0 0
    %7583 = vmatpush.bf16.msra.mxu0 0
    %7584 = vmatpush.bf16.msra.mxu0 0
    %7585 = vmatpush.bf16.msra.mxu0 0
    %7586 = vmatpush.bf16.msra.mxu0 0
    %7587 = vmatpush.bf16.msra.mxu0 %v7560
    %7588 = vmatpush.bf16.msra.mxu0 %v7558
    %7589 = vmatmul.bf16.gmra.mxu0 %v7566
    %v7590 = vpop.f32.mrf.mxu0
    %v7591 = vadd.f32 %v7542, %v7590
    %v7592 = vpop.f32.mrf.mxu0
    %7593 = vdwg.mxu0
    %v7596 = vrot.slane %v7591, 6
    %vm7597 = vcmask 1041408
    %v7598 = vsel %vm7597, %v7578, %v7596
    %7600 = vst [vmem:[#allocation2] sm:$0xf] %v7598
    // Predicated region
    $region98: #{tpu_custom_call.1} parent=1 // pred_check
      _
    $region99: #{tpu_custom_call.1} parent=1 // pred_check_branch
      %7602 = sbr.rel (0) target = $region101
    $region100: #{tpu_custom_call.1} parent=1 // pred_region
      %7604 = vsyncadd [#allocation3], 0
      %s7606 = sshll.u32 [#allocation2], 4
      %s7607 = int_to_ptr.vmem [resolvable:$true] %s7606
      %s7608 = sshll.u32 %s24, 4
      %s7609 = int_to_ptr.hbm [resolvable:$true] %s7608
      %7611 = dma.vmem_to_hbm [thread:$0]  %s7607, 64, %s7609, [#allocation3]
    $region101: #{tpu_custom_call.1} parent=1 // pred_fallthru
      _
    // Predicated region
    $region102: #{tpu_custom_call.1} parent=1 // pred_check
      _
    $region103: #{tpu_custom_call.1} parent=1 // pred_check_branch
      %7613 = sbr.rel (0) target = $region105
    $region104: #{tpu_custom_call.1} parent=1 // pred_region
      %7615 = dma.done [#allocation3], 64
    $region105: #{tpu_custom_call.1} parent=1 // pred_fallthru
      _
    %7616 = vsyncpa [#allocation3], 1

</llo_original>
